<compile_context>
chip_gen: v7x
topology: tpu7x:2x2x1
jax: 0.10.0
libtpu: 0.0.40
codegen_flags: <defaults>
</compile_context>

<pallas_src>
import functools

import jax
import jax.numpy as jnp
from jax import lax
from jax.experimental import pallas as pl
from jax.experimental.pallas import tpu as pltpu


# ----------------------------------------------------------------------------
# Pallas kernels
# ----------------------------------------------------------------------------
def _edge_conv_kernel(nq_ref, xt_ref, qf_ref, xf_ref, *args, k, n_mlp, fuse_fc):
    """One (batch, M-tile) block of EdgeConv (+ optional fused fc).

    nq_ref : (1, tM, 3)  query xyz (sampled points)
    xt_ref : (1, 3, N)   source xyz, transposed (xyz channels on sublanes)
    qf_ref : (1, tM, C)  query features (already augmented with xyz if use_xyz)
    xf_ref : (1, N, C)   source features (already augmented with xyz if use_xyz)
    args   : w1a(C,H1) f32, w1d(C,H1) f32 (=W1b-W1a), b1(1,H1) f32,
             [w_i(H,H') bf16, b_i(1,H') f32]*,
             [fc_wT(out_ch,H_last) f32, fc_bT(out_ch,1) f32]  (if fuse_fc)
             then output ref(s).
    """
    if fuse_fc:
        out_geo_ref, out_fc_ref = args[-2], args[-1]
        w_refs = args[:-2]
    else:
        out_ref = args[-1]
        w_refs = args[:-1]

    q = nq_ref[0]            # (tM, 3) f32
    xt = xt_ref[0]           # (3, N)  f32
    qf = qf_ref[0]           # (tM, C) f32
    xf = xf_ref[0]           # (N, C)  f32

    tm = q.shape[0]
    n = xt.shape[-1]

    # ---- pairwise squared distances, pure VPU (avoid a K=3 MXU matmul) ----
    d0 = q[:, 0:1] - xt[0:1, :]
    d1 = q[:, 1:2] - xt[1:2, :]
    d2 = q[:, 2:3] - xt[2:3, :]
    dist = d0 * d0 + d1 * d1 + d2 * d2                    # (tM, N) f32, >= 0

    # ---- KNN: single packed (quantized-dist, col-id) int32 key per pass ----
    nb_bits = max(1, (n - 1).bit_length())
    low_mask = (1 << nb_bits) - 1
    col_ids = lax.broadcasted_iota(jnp.int32, (tm, n), 1)
    # dist >= 0 so its f32 bit pattern is monotone as int32; clear the low
    # mantissa bits and OR in the column id -> lexicographic (dist, col) key.
    key = (pltpu.bitcast(dist, jnp.int32) & jnp.int32(~low_mask)) | col_ids
    int_max = jnp.int32(2 ** 31 - 1)

    onehots = []
    for _ in range(k):                                    # k is small & static
        minkey = jnp.min(key, axis=-1, keepdims=True)     # one XLU reduce/pass
        sel = key == minkey                               # exactly one per row
        onehots.append(jnp.where(sel, 1.0, 0.0).astype(jnp.bfloat16))
        key = jnp.where(sel, int_max, key)                # exact masking
    onehot = jnp.concatenate(onehots, axis=0)             # (k*tM, N) bf16

    # ---- phase 2: batched gather + shared MLP on all k*tM rows at once ----
    w1a = w_refs[0][...]                                  # (C, H1) f32
    w1d = w_refs[1][...]                                  # (C, H1) f32
    b1 = w_refs[2][...]                                   # (1, H1) f32

    # MLP layer 1 fused through the one-hot gather (layer 1 is linear).
    xf_w1a = jnp.dot(xf, w1a, preferred_element_type=jnp.float32)      # (N, H1)
    base = jnp.dot(qf, w1d, preferred_element_type=jnp.float32) + b1   # (tM, H1)
    base_k = jnp.concatenate([base] * k, axis=0)                       # (k*tM, H1)

    h = jnp.dot(onehot, xf_w1a.astype(jnp.bfloat16),
                preferred_element_type=jnp.float32) + base_k
    h = jnp.maximum(h, 0.0)

    wi = 3
    for _ in range(n_mlp - 1):
        w = w_refs[wi][...]                               # (H, H') bf16
        b = w_refs[wi + 1][...]                           # (1, H') f32
        h = jnp.maximum(
            jnp.dot(h.astype(jnp.bfloat16), w,
                    preferred_element_type=jnp.float32) + b, 0.0)
        wi += 2

    # ---- running max over the k neighbors (static, sublane-aligned slices) --
    out = h[0:tm]
    for i in range(1, k):
        out = jnp.maximum(out, h[i * tm:(i + 1) * tm])    # (tM, Cout) f32

    if fuse_fc:
        fc_wt = w_refs[wi][...]                           # (out_ch, Cout) f32
        fc_bt = w_refs[wi + 1][...]                       # (out_ch, 1)    f32
        geo_t = jnp.transpose(out)                        # (Cout, tM) lane-dense
        out_geo_ref[0] = geo_t
        out_fc_ref[0] = (jnp.dot(fc_wt, geo_t, preferred_element_type=jnp.float32)
                         + fc_bt)                         # (out_ch, tM)
    else:
        out_ref[0] = out                                  # channel-last for next layer


# ----------------------------------------------------------------------------
# Wrapper (pallas_call glue)
# ----------------------------------------------------------------------------
def edge_conv_apply(new_xyz, xyz_t, new_feat_aug, feat_aug, mlp_params, k,
                    fc_params=None):
    """new_xyz (B,M,3), xyz_t (B,3,N), feats channel-last.

    Returns (B, M, Cout) channel-last, or (geo (B,Cout,M), fc (B,out_ch,M))
    when fc_params is given (last layer, fused fc, lane-dense outputs).
    """
    B, M, _ = new_xyz.shape
    n_mlp = 1 + (len(mlp_params) - 3) // 2
    cout = mlp_params[-1].shape[-1]

    # Derived kernel params: fuse layer-1 halves, bf16 weights for the big
    # stacked matmuls (biases & layer-1 precompute weights stay f32).
    w1a, w1b, b1 = mlp_params[0], mlp_params[1], mlp_params[2]
    kernel_params = [w1a, w1b - w1a, b1]
    for i in range(3, len(mlp_params), 2):
        kernel_params.append(mlp_params[i].astype(jnp.bfloat16))
        kernel_params.append(mlp_params[i + 1])

    fuse_fc = fc_params is not None
    if fuse_fc:
        fc_w, fc_b = fc_params
        out_ch = fc_w.shape[-1]
        kernel_params += [jnp.transpose(fc_w), fc_b.reshape(-1, 1)]

    # M tiling: full tile at demo sizes; 256-wide tiles for production point
    # counts so the O(M*N) dist/one-hot buffers stay inside v7x's VMEM.
    if M > 512 and M % 256 == 0:
        tM = 256
    else:
        tM = M
    grid = (B, M // tM)

    def m_tiled(shape):
        return pl.BlockSpec((1, tM, shape[-1]), lambda b, m: (b, m, 0))

    def full_src(shape):
        return pl.BlockSpec((1,) + tuple(shape[1:]), lambda b, m: (b, 0, 0))

    def w_spec(shape):
        return pl.BlockSpec(tuple(shape), lambda b, m: (0, 0))

    in_specs = [m_tiled(new_xyz.shape), full_src(xyz_t.shape),
                m_tiled(new_feat_aug.shape), full_src(feat_aug.shape)]
    in_specs += [w_spec(p.shape) for p in kernel_params]

    kernel = functools.partial(_edge_conv_kernel, k=k, n_mlp=n_mlp,
                               fuse_fc=fuse_fc)

    if fuse_fc:
        out_shape = (jax.ShapeDtypeStruct((B, cout, M), jnp.float32),
                     jax.ShapeDtypeStruct((B, out_ch, M), jnp.float32))
        out_specs = (pl.BlockSpec((1, cout, tM), lambda b, m: (b, 0, m)),
                     pl.BlockSpec((1, out_ch, tM), lambda b, m: (b, 0, m)))
    else:
        out_shape = jax.ShapeDtypeStruct((B, M, cout), jnp.float32)
        out_specs = pl.BlockSpec((1, tM, cout), lambda b, m: (b, m, 0))

    return pl.pallas_call(
        kernel,
        out_shape=out_shape,
        grid=grid,
        in_specs=in_specs,
        out_specs=out_specs,
        compiler_params=pltpu.CompilerParams(
            dimension_semantics=("parallel", "parallel")),
    )(new_xyz, xyz_t, new_feat_aug, feat_aug, *kernel_params)


# ----------------------------------------------------------------------------
# Parameter init (deterministic, synthetic; BN folded in eval mode)
# ----------------------------------------------------------------------------
def init_params(key, layers_cfg, out_channels):
    params = {'layers': []}
    for lc in layers_cfg:
        mlps = list(lc['mlps'])
        c0 = mlps[0] * 2 + (6 if lc['use_xyz'] else 0)   # EdgeConv.__init__ mutation
        dims = [c0] + mlps[1:]
        mlp_params = []
        for li in range(len(dims) - 1):
            key, k1, k2, k3, k4 = jax.random.split(key, 5)
            cin, cout = dims[li], dims[li + 1]
            w = jax.random.normal(k1, (cin, cout), jnp.float32) / jnp.sqrt(float(cin))
            b = 0.1 * jax.random.normal(k2, (cout,), jnp.float32)
            gamma = 1.0 + 0.1 * jax.random.normal(k3, (cout,), jnp.float32)
            beta = 0.1 * jax.random.normal(k4, (cout,), jnp.float32)
            # Fold BatchNorm (eval mode, running_mean=0, running_var=1, eps=1e-5).
            scale = gamma / jnp.sqrt(1.0 + 1e-5)
            w_eff = w * scale[None, :]
            b_eff = b * scale + beta
            if li == 0:
                half = cin // 2
                mlp_params += [w_eff[:half], w_eff[half:], b_eff[None, :]]
            else:
                mlp_params += [w_eff, b_eff[None, :]]
        params['layers'].append({'mlp_params': mlp_params,
                                 'nsample': lc['nsample'],
                                 'use_xyz': lc['use_xyz']})
    key, k1, k2 = jax.random.split(key, 3)
    c_last = layers_cfg[-1]['mlps'][-1]
    params['fc_w'] = (jax.random.normal(k1, (c_last, out_channels), jnp.float32)
                      / jnp.sqrt(float(c_last)))
    params['fc_b'] = 0.1 * jax.random.normal(k2, (out_channels,), jnp.float32)
    return params


# ----------------------------------------------------------------------------
# DGCNN forward (glue around the Pallas kernels)
# ----------------------------------------------------------------------------
def dgcnn_forward(pcd, params, downsample_ratios):
    B, npts, D = pcd.shape
    xyz = pcd[..., :3]                                    # (B, N, 3)
    feat = pcd[..., 3:] if D > 3 else None                # channel-last internally

    n_layers = len(params['layers'])
    l_xyz, l_feat, l_idxs = [xyz], [feat], []
    geo_t = fc_t = None
    for i, layer in enumerate(params['layers']):
        npoints = npts // downsample_ratios[i]
        cur_xyz, cur_feat = l_xyz[i], l_feat[i]

        # sample_method == 'Range'
        # TODO(synk): FPS sampling branch (pointnet2 furthest_point_sample) not implemented.
        sample_idx = jnp.tile(jnp.arange(npoints, dtype=jnp.int32)[None], (B, 1))
        new_xyz = cur_xyz[:, :npoints]
        new_feat = cur_feat[:, :npoints] if cur_feat is not None else None

        if layer['use_xyz']:
            feat_aug = (jnp.concatenate([cur_feat, cur_xyz], axis=-1)
                        if cur_feat is not None else cur_xyz)
            nf_aug = (jnp.concatenate([new_feat, new_xyz], axis=-1)
                      if new_feat is not None else new_xyz)
        else:
            feat_aug, nf_aug = cur_feat, new_feat

        xyz_t = jnp.transpose(cur_xyz, (0, 2, 1))         # (B, 3, N) for the kernel

        if i == n_layers - 1:
            # Last layer: fuse the final 1x1 Conv1d fc; lane-dense (B, C, M) outputs.
            geo_t, fc_t = edge_conv_apply(
                new_xyz, xyz_t, nf_aug, feat_aug, layer['mlp_params'],
                layer['nsample'], fc_params=(params['fc_w'], params['fc_b']))
            l_feat.append(None)
        else:
            out = edge_conv_apply(new_xyz, xyz_t, nf_aug, feat_aug,
                                  layer['mlp_params'], layer['nsample'])
            l_feat.append(out)                            # (B, npoints, Cout)
        l_xyz.append(new_xyz)
        l_idxs.append(sample_idx)

    # Compose sample indices back to original-point indices.
    idx = l_idxs[0]
    for i in range(1, len(l_idxs)):
        idx = jnp.take_along_axis(idx, l_idxs[i], axis=1)

    return dict(
        xyz=l_xyz[-1],                                    # (B, M, 3)
        feat=fc_t,                                        # (B, out_channels, M)
        idx=idx.astype(jnp.int32),                        # PyTorch returns int64; x64 off in JAX
        geo_feat=geo_t,                                   # (B, C_last, M)
    )


# ----------------------------------------------------------------------------
if __name__ == "__main__":
    layers_cfg = [
        {'mlps': [0, 32, 32], 'use_xyz': True, 'nsample': 8, 'sample_method': 'Range'},
        {'mlps': [32, 32, 32], 'use_xyz': True, 'nsample': 8, 'sample_method': 'Range'},
        {'mlps': [32, 32, 32], 'use_xyz': True, 'nsample': 8, 'sample_method': 'Range'},
    ]
    downsample_ratios = [1, 2, 4]
    out_channels = 32

    key = jax.random.PRNGKey(0)
    key, pkey, dkey = jax.random.split(key, 3)
    params = init_params(pkey, layers_cfg, out_channels)

    B, N = 2, 128
    pcd = jax.random.normal(dkey, (B, N, 3), jnp.float32)

    fwd = jax.jit(lambda pc: dgcnn_forward(pc, params, downsample_ratios))
    out = fwd(pcd)
    jax.tree_util.tree_map(jax.block_until_ready, out)

    assert out['xyz'].shape == (B, N // downsample_ratios[-1], 3)
    assert out['feat'].shape == (B, out_channels, N // downsample_ratios[-1])
    assert out['geo_feat'].shape == (B, layers_cfg[-1]['mlps'][-1], N // downsample_ratios[-1])
    assert out['idx'].shape == (B, N // downsample_ratios[-1])
    print("KERNEL_OK")
</pallas_src>

<mosaic_0001>
module attributes {stable_mosaic.version = 11 : i64} {
  func.func @_edge_conv_kernel(%arg0: i32, %arg1: i32, %arg2: memref<1x128x3xf32, #tpu.memory_space<vmem>>, %arg3: memref<1x3x128xf32, #tpu.memory_space<vmem>>, %arg4: memref<1x128x3xf32, #tpu.memory_space<vmem>>, %arg5: memref<1x128x3xf32, #tpu.memory_space<vmem>>, %arg6: memref<3x32xf32, #tpu.memory_space<vmem>>, %arg7: memref<3x32xf32, #tpu.memory_space<vmem>>, %arg8: memref<1x32xf32, #tpu.memory_space<vmem>>, %arg9: memref<32x32xbf16, #tpu.memory_space<vmem>>, %arg10: memref<1x32xf32, #tpu.memory_space<vmem>>, %arg11: memref<1x128x32xf32, #tpu.memory_space<vmem>>) attributes {dimension_semantics = [#tpu.dimension_semantics<parallel>, #tpu.dimension_semantics<parallel>], iteration_bounds = array<i64: 2, 1>, scalar_prefetch = 0 : i64, scratch_operands = 0 : i64, tpu.core_type = #tpu.core_type<tc>, window_params = [{transform_indices = @transform_0, window_bounds = array<i64: 1, 128, 3>}, {transform_indices = @transform_1, window_bounds = array<i64: 1, 3, 128>}, {transform_indices = @transform_2, window_bounds = array<i64: 1, 128, 3>}, {transform_indices = @transform_3, window_bounds = array<i64: 1, 128, 3>}, {pipeline_mode = #tpu.pipeline_mode<synchronous>, transform_indices = @transform_4, window_bounds = array<i64: 3, 32>}, {pipeline_mode = #tpu.pipeline_mode<synchronous>, transform_indices = @transform_5, window_bounds = array<i64: 3, 32>}, {pipeline_mode = #tpu.pipeline_mode<synchronous>, transform_indices = @transform_6, window_bounds = array<i64: 1, 32>}, {pipeline_mode = #tpu.pipeline_mode<synchronous>, transform_indices = @transform_7, window_bounds = array<i64: 32, 32>}, {pipeline_mode = #tpu.pipeline_mode<synchronous>, transform_indices = @transform_8, window_bounds = array<i64: 1, 32>}, {transform_indices = @transform_9, window_bounds = array<i64: 1, 128, 32>}]} {
    %c0 = arith.constant 0 : index
    %c0_0 = arith.constant 0 : index
    %c0_1 = arith.constant 0 : index
    %0 = vector.load %arg2[%c0, %c0_0, %c0_1] : memref<1x128x3xf32, #tpu.memory_space<vmem>>, vector<1x128x3xf32>
    %1 = vector.shape_cast %0 : vector<1x128x3xf32> to vector<128x3xf32>
    %c0_2 = arith.constant 0 : index
    %c0_3 = arith.constant 0 : index
    %c0_4 = arith.constant 0 : index
    %2 = vector.load %arg3[%c0_2, %c0_3, %c0_4] : memref<1x3x128xf32, #tpu.memory_space<vmem>>, vector<1x3x128xf32>
    %3 = vector.shape_cast %2 : vector<1x3x128xf32> to vector<3x128xf32>
    %c0_5 = arith.constant 0 : index
    %c0_6 = arith.constant 0 : index
    %c0_7 = arith.constant 0 : index
    %4 = vector.load %arg4[%c0_5, %c0_6, %c0_7] : memref<1x128x3xf32, #tpu.memory_space<vmem>>, vector<1x128x3xf32>
    %5 = vector.shape_cast %4 : vector<1x128x3xf32> to vector<128x3xf32>
    %c0_8 = arith.constant 0 : index
    %c0_9 = arith.constant 0 : index
    %c0_10 = arith.constant 0 : index
    %6 = vector.load %arg5[%c0_8, %c0_9, %c0_10] : memref<1x128x3xf32, #tpu.memory_space<vmem>>, vector<1x128x3xf32>
    %7 = vector.shape_cast %6 : vector<1x128x3xf32> to vector<128x3xf32>
    %8 = vector.extract_strided_slice %1 {offsets = [0, 0], sizes = [128, 1], strides = [1, 1]} : vector<128x3xf32> to vector<128x1xf32>
    %9 = vector.extract_strided_slice %3 {offsets = [0, 0], sizes = [1, 128], strides = [1, 1]} : vector<3x128xf32> to vector<1x128xf32>
    %10 = vector.broadcast %8 : vector<128x1xf32> to vector<128x128xf32>
    %11 = vector.broadcast %9 : vector<1x128xf32> to vector<128x128xf32>
    %12 = arith.subf %10, %11 : vector<128x128xf32>
    %13 = vector.extract_strided_slice %1 {offsets = [0, 1], sizes = [128, 1], strides = [1, 1]} : vector<128x3xf32> to vector<128x1xf32>
    %14 = vector.extract_strided_slice %3 {offsets = [1, 0], sizes = [1, 128], strides = [1, 1]} : vector<3x128xf32> to vector<1x128xf32>
    %15 = vector.broadcast %13 : vector<128x1xf32> to vector<128x128xf32>
    %16 = vector.broadcast %14 : vector<1x128xf32> to vector<128x128xf32>
    %17 = arith.subf %15, %16 : vector<128x128xf32>
    %18 = vector.extract_strided_slice %1 {offsets = [0, 2], sizes = [128, 1], strides = [1, 1]} : vector<128x3xf32> to vector<128x1xf32>
    %19 = vector.extract_strided_slice %3 {offsets = [2, 0], sizes = [1, 128], strides = [1, 1]} : vector<3x128xf32> to vector<1x128xf32>
    %20 = vector.broadcast %18 : vector<128x1xf32> to vector<128x128xf32>
    %21 = vector.broadcast %19 : vector<1x128xf32> to vector<128x128xf32>
    %22 = arith.subf %20, %21 : vector<128x128xf32>
    %23 = arith.mulf %12, %12 : vector<128x128xf32>
    %24 = arith.mulf %17, %17 : vector<128x128xf32>
    %25 = arith.addf %23, %24 : vector<128x128xf32>
    %26 = arith.mulf %22, %22 : vector<128x128xf32>
    %27 = arith.addf %25, %26 : vector<128x128xf32>
    %28 = tpu.iota {dimensions = array<i32: 1>} : vector<128x128xi32>
    %29 = tpu.bitcast %27 : vector<128x128xf32> -> vector<128x128xi32>
    %c-128_i32 = arith.constant -128 : i32
    %30 = vector.broadcast %c-128_i32 : i32 to vector<128x128xi32>
    %31 = arith.andi %29, %30 : vector<128x128xi32>
    %32 = arith.ori %31, %28 : vector<128x128xi32>
    %cst = arith.constant dense<2147483647> : vector<128xi32>
    %33 = vector.multi_reduction <minsi>, %32, %cst [1] : vector<128x128xi32> to vector<128xi32>
    %34 = vector.shape_cast %33 : vector<128xi32> to vector<128x1xi32>
    %35 = vector.broadcast %34 : vector<128x1xi32> to vector<128x128xi32>
    %36 = arith.cmpi eq, %32, %35 : vector<128x128xi32>
    %cst_11 = arith.constant 1.000000e+00 : f32
    %cst_12 = arith.constant 0.000000e+00 : f32
    %37 = vector.broadcast %cst_11 : f32 to vector<128x128xf32>
    %38 = vector.broadcast %cst_12 : f32 to vector<128x128xf32>
    %39 = arith.select %36, %37, %38 : vector<128x128xi1>, vector<128x128xf32>
    %40 = arith.truncf %39 : vector<128x128xf32> to vector<128x128xbf16>
    %c2147483647_i32 = arith.constant 2147483647 : i32
    %41 = vector.broadcast %c2147483647_i32 : i32 to vector<128x128xi32>
    %42 = arith.select %36, %41, %32 : vector<128x128xi1>, vector<128x128xi32>
    %cst_13 = arith.constant dense<2147483647> : vector<128xi32>
    %43 = vector.multi_reduction <minsi>, %42, %cst_13 [1] : vector<128x128xi32> to vector<128xi32>
    %44 = vector.shape_cast %43 : vector<128xi32> to vector<128x1xi32>
    %45 = vector.broadcast %44 : vector<128x1xi32> to vector<128x128xi32>
    %46 = arith.cmpi eq, %42, %45 : vector<128x128xi32>
    %cst_14 = arith.constant 1.000000e+00 : f32
    %cst_15 = arith.constant 0.000000e+00 : f32
    %47 = vector.broadcast %cst_14 : f32 to vector<128x128xf32>
    %48 = vector.broadcast %cst_15 : f32 to vector<128x128xf32>
    %49 = arith.select %46, %47, %48 : vector<128x128xi1>, vector<128x128xf32>
    %50 = arith.truncf %49 : vector<128x128xf32> to vector<128x128xbf16>
    %c2147483647_i32_16 = arith.constant 2147483647 : i32
    %51 = vector.broadcast %c2147483647_i32_16 : i32 to vector<128x128xi32>
    %52 = arith.select %46, %51, %42 : vector<128x128xi1>, vector<128x128xi32>
    %cst_17 = arith.constant dense<2147483647> : vector<128xi32>
    %53 = vector.multi_reduction <minsi>, %52, %cst_17 [1] : vector<128x128xi32> to vector<128xi32>
    %54 = vector.shape_cast %53 : vector<128xi32> to vector<128x1xi32>
    %55 = vector.broadcast %54 : vector<128x1xi32> to vector<128x128xi32>
    %56 = arith.cmpi eq, %52, %55 : vector<128x128xi32>
    %cst_18 = arith.constant 1.000000e+00 : f32
    %cst_19 = arith.constant 0.000000e+00 : f32
    %57 = vector.broadcast %cst_18 : f32 to vector<128x128xf32>
    %58 = vector.broadcast %cst_19 : f32 to vector<128x128xf32>
    %59 = arith.select %56, %57, %58 : vector<128x128xi1>, vector<128x128xf32>
    %60 = arith.truncf %59 : vector<128x128xf32> to vector<128x128xbf16>
    %c2147483647_i32_20 = arith.constant 2147483647 : i32
    %61 = vector.broadcast %c2147483647_i32_20 : i32 to vector<128x128xi32>
    %62 = arith.select %56, %61, %52 : vector<128x128xi1>, vector<128x128xi32>
    %cst_21 = arith.constant dense<2147483647> : vector<128xi32>
    %63 = vector.multi_reduction <minsi>, %62, %cst_21 [1] : vector<128x128xi32> to vector<128xi32>
    %64 = vector.shape_cast %63 : vector<128xi32> to vector<128x1xi32>
    %65 = vector.broadcast %64 : vector<128x1xi32> to vector<128x128xi32>
    %66 = arith.cmpi eq, %62, %65 : vector<128x128xi32>
    %cst_22 = arith.constant 1.000000e+00 : f32
    %cst_23 = arith.constant 0.000000e+00 : f32
    %67 = vector.broadcast %cst_22 : f32 to vector<128x128xf32>
    %68 = vector.broadcast %cst_23 : f32 to vector<128x128xf32>
    %69 = arith.select %66, %67, %68 : vector<128x128xi1>, vector<128x128xf32>
    %70 = arith.truncf %69 : vector<128x128xf32> to vector<128x128xbf16>
    %c2147483647_i32_24 = arith.constant 2147483647 : i32
    %71 = vector.broadcast %c2147483647_i32_24 : i32 to vector<128x128xi32>
    %72 = arith.select %66, %71, %62 : vector<128x128xi1>, vector<128x128xi32>
    %cst_25 = arith.constant dense<2147483647> : vector<128xi32>
    %73 = vector.multi_reduction <minsi>, %72, %cst_25 [1] : vector<128x128xi32> to vector<128xi32>
    %74 = vector.shape_cast %73 : vector<128xi32> to vector<128x1xi32>
    %75 = vector.broadcast %74 : vector<128x1xi32> to vector<128x128xi32>
    %76 = arith.cmpi eq, %72, %75 : vector<128x128xi32>
    %cst_26 = arith.constant 1.000000e+00 : f32
    %cst_27 = arith.constant 0.000000e+00 : f32
    %77 = vector.broadcast %cst_26 : f32 to vector<128x128xf32>
    %78 = vector.broadcast %cst_27 : f32 to vector<128x128xf32>
    %79 = arith.select %76, %77, %78 : vector<128x128xi1>, vector<128x128xf32>
    %80 = arith.truncf %79 : vector<128x128xf32> to vector<128x128xbf16>
    %c2147483647_i32_28 = arith.constant 2147483647 : i32
    %81 = vector.broadcast %c2147483647_i32_28 : i32 to vector<128x128xi32>
    %82 = arith.select %76, %81, %72 : vector<128x128xi1>, vector<128x128xi32>
    %cst_29 = arith.constant dense<2147483647> : vector<128xi32>
    %83 = vector.multi_reduction <minsi>, %82, %cst_29 [1] : vector<128x128xi32> to vector<128xi32>
    %84 = vector.shape_cast %83 : vector<128xi32> to vector<128x1xi32>
    %85 = vector.broadcast %84 : vector<128x1xi32> to vector<128x128xi32>
    %86 = arith.cmpi eq, %82, %85 : vector<128x128xi32>
    %cst_30 = arith.constant 1.000000e+00 : f32
    %cst_31 = arith.constant 0.000000e+00 : f32
    %87 = vector.broadcast %cst_30 : f32 to vector<128x128xf32>
    %88 = vector.broadcast %cst_31 : f32 to vector<128x128xf32>
    %89 = arith.select %86, %87, %88 : vector<128x128xi1>, vector<128x128xf32>
    %90 = arith.truncf %89 : vector<128x128xf32> to vector<128x128xbf16>
    %c2147483647_i32_32 = arith.constant 2147483647 : i32
    %91 = vector.broadcast %c2147483647_i32_32 : i32 to vector<128x128xi32>
    %92 = arith.select %86, %91, %82 : vector<128x128xi1>, vector<128x128xi32>
    %cst_33 = arith.constant dense<2147483647> : vector<128xi32>
    %93 = vector.multi_reduction <minsi>, %92, %cst_33 [1] : vector<128x128xi32> to vector<128xi32>
    %94 = vector.shape_cast %93 : vector<128xi32> to vector<128x1xi32>
    %95 = vector.broadcast %94 : vector<128x1xi32> to vector<128x128xi32>
    %96 = arith.cmpi eq, %92, %95 : vector<128x128xi32>
    %cst_34 = arith.constant 1.000000e+00 : f32
    %cst_35 = arith.constant 0.000000e+00 : f32
    %97 = vector.broadcast %cst_34 : f32 to vector<128x128xf32>
    %98 = vector.broadcast %cst_35 : f32 to vector<128x128xf32>
    %99 = arith.select %96, %97, %98 : vector<128x128xi1>, vector<128x128xf32>
    %100 = arith.truncf %99 : vector<128x128xf32> to vector<128x128xbf16>
    %c2147483647_i32_36 = arith.constant 2147483647 : i32
    %101 = vector.broadcast %c2147483647_i32_36 : i32 to vector<128x128xi32>
    %102 = arith.select %96, %101, %92 : vector<128x128xi1>, vector<128x128xi32>
    %cst_37 = arith.constant dense<2147483647> : vector<128xi32>
    %103 = vector.multi_reduction <minsi>, %102, %cst_37 [1] : vector<128x128xi32> to vector<128xi32>
    %104 = vector.shape_cast %103 : vector<128xi32> to vector<128x1xi32>
    %105 = vector.broadcast %104 : vector<128x1xi32> to vector<128x128xi32>
    %106 = arith.cmpi eq, %102, %105 : vector<128x128xi32>
    %cst_38 = arith.constant 1.000000e+00 : f32
    %cst_39 = arith.constant 0.000000e+00 : f32
    %107 = vector.broadcast %cst_38 : f32 to vector<128x128xf32>
    %108 = vector.broadcast %cst_39 : f32 to vector<128x128xf32>
    %109 = arith.select %106, %107, %108 : vector<128x128xi1>, vector<128x128xf32>
    %110 = arith.truncf %109 : vector<128x128xf32> to vector<128x128xbf16>
    %111 = tpu.concatenate %40, %50, %60, %70, %80, %90, %100, %110 in 0 : vector<128x128xbf16>, vector<128x128xbf16>, vector<128x128xbf16>, vector<128x128xbf16>, vector<128x128xbf16>, vector<128x128xbf16>, vector<128x128xbf16>, vector<128x128xbf16> -> vector<1024x128xbf16>
    %c0_40 = arith.constant 0 : index
    %c0_41 = arith.constant 0 : index
    %112 = vector.load %arg6[%c0_40, %c0_41] : memref<3x32xf32, #tpu.memory_space<vmem>>, vector<3x32xf32>
    %c0_42 = arith.constant 0 : index
    %c0_43 = arith.constant 0 : index
    %113 = vector.load %arg7[%c0_42, %c0_43] : memref<3x32xf32, #tpu.memory_space<vmem>>, vector<3x32xf32>
    %c0_44 = arith.constant 0 : index
    %c0_45 = arith.constant 0 : index
    %114 = vector.load %arg8[%c0_44, %c0_45] : memref<1x32xf32, #tpu.memory_space<vmem>>, vector<1x32xf32>
    %cst_46 = arith.constant dense<0.000000e+00> : vector<128x32xf32>
    %115 = tpu.matmul %7, %112, %cst_46 {dimension_numbers = #tpu.dot_dimension_numbers<[1], [0], [0], [1], [0, 0, 1, 1], [], []>} : vector<128x3xf32>, vector<3x32xf32>, vector<128x32xf32> -> vector<128x32xf32>
    %cst_47 = arith.constant dense<0.000000e+00> : vector<128x32xf32>
    %116 = tpu.matmul %5, %113, %cst_47 {dimension_numbers = #tpu.dot_dimension_numbers<[1], [0], [0], [1], [0, 0, 1, 1], [], []>} : vector<128x3xf32>, vector<3x32xf32>, vector<128x32xf32> -> vector<128x32xf32>
    %117 = vector.broadcast %114 : vector<1x32xf32> to vector<128x32xf32>
    %118 = arith.addf %116, %117 : vector<128x32xf32>
    %119 = tpu.concatenate %118, %118, %118, %118, %118, %118, %118, %118 in 0 : vector<128x32xf32>, vector<128x32xf32>, vector<128x32xf32>, vector<128x32xf32>, vector<128x32xf32>, vector<128x32xf32>, vector<128x32xf32>, vector<128x32xf32> -> vector<1024x32xf32>
    %120 = arith.truncf %115 : vector<128x32xf32> to vector<128x32xbf16>
    %cst_48 = arith.constant dense<0.000000e+00> : vector<1024x32xf32>
    %121 = tpu.matmul %111, %120, %cst_48 {dimension_numbers = #tpu.dot_dimension_numbers<[1], [0], [0], [1], [0, 0, 1, 1], [], []>} : vector<1024x128xbf16>, vector<128x32xbf16>, vector<1024x32xf32> -> vector<1024x32xf32>
    %122 = arith.addf %121, %119 : vector<1024x32xf32>
    %cst_49 = arith.constant 0.000000e+00 : f32
    %123 = vector.broadcast %cst_49 : f32 to vector<1024x32xf32>
    %124 = arith.maximumf %122, %123 : vector<1024x32xf32>
    %c0_50 = arith.constant 0 : index
    %c0_51 = arith.constant 0 : index
    %125 = vector.load %arg9[%c0_50, %c0_51] : memref<32x32xbf16, #tpu.memory_space<vmem>>, vector<32x32xbf16>
    %c0_52 = arith.constant 0 : index
    %c0_53 = arith.constant 0 : index
    %126 = vector.load %arg10[%c0_52, %c0_53] : memref<1x32xf32, #tpu.memory_space<vmem>>, vector<1x32xf32>
    %127 = arith.truncf %124 : vector<1024x32xf32> to vector<1024x32xbf16>
    %cst_54 = arith.constant dense<0.000000e+00> : vector<1024x32xf32>
    %128 = tpu.matmul %127, %125, %cst_54 {dimension_numbers = #tpu.dot_dimension_numbers<[1], [0], [0], [1], [0, 0, 1, 1], [], []>} : vector<1024x32xbf16>, vector<32x32xbf16>, vector<1024x32xf32> -> vector<1024x32xf32>
    %129 = vector.broadcast %126 : vector<1x32xf32> to vector<1024x32xf32>
    %130 = arith.addf %128, %129 : vector<1024x32xf32>
    %cst_55 = arith.constant 0.000000e+00 : f32
    %131 = vector.broadcast %cst_55 : f32 to vector<1024x32xf32>
    %132 = arith.maximumf %130, %131 : vector<1024x32xf32>
    %133 = vector.extract_strided_slice %132 {offsets = [0, 0], sizes = [128, 32], strides = [1, 1]} : vector<1024x32xf32> to vector<128x32xf32>
    %134 = vector.extract_strided_slice %132 {offsets = [128, 0], sizes = [128, 32], strides = [1, 1]} : vector<1024x32xf32> to vector<128x32xf32>
    %135 = arith.maximumf %133, %134 : vector<128x32xf32>
    %136 = vector.extract_strided_slice %132 {offsets = [256, 0], sizes = [128, 32], strides = [1, 1]} : vector<1024x32xf32> to vector<128x32xf32>
    %137 = arith.maximumf %135, %136 : vector<128x32xf32>
    %138 = vector.extract_strided_slice %132 {offsets = [384, 0], sizes = [128, 32], strides = [1, 1]} : vector<1024x32xf32> to vector<128x32xf32>
    %139 = arith.maximumf %137, %138 : vector<128x32xf32>
    %140 = vector.extract_strided_slice %132 {offsets = [512, 0], sizes = [128, 32], strides = [1, 1]} : vector<1024x32xf32> to vector<128x32xf32>
    %141 = arith.maximumf %139, %140 : vector<128x32xf32>
    %142 = vector.extract_strided_slice %132 {offsets = [640, 0], sizes = [128, 32], strides = [1, 1]} : vector<1024x32xf32> to vector<128x32xf32>
    %143 = arith.maximumf %141, %142 : vector<128x32xf32>
    %144 = vector.extract_strided_slice %132 {offsets = [768, 0], sizes = [128, 32], strides = [1, 1]} : vector<1024x32xf32> to vector<128x32xf32>
    %145 = arith.maximumf %143, %144 : vector<128x32xf32>
    %146 = vector.extract_strided_slice %132 {offsets = [896, 0], sizes = [128, 32], strides = [1, 1]} : vector<1024x32xf32> to vector<128x32xf32>
    %147 = arith.maximumf %145, %146 : vector<128x32xf32>
    %c0_56 = arith.constant 0 : index
    %c0_57 = arith.constant 0 : index
    %c0_58 = arith.constant 0 : index
    %148 = vector.load %arg11[%c0_56, %c0_57, %c0_58] : memref<1x128x32xf32, #tpu.memory_space<vmem>>, vector<1x128x32xf32>
    %149 = vector.shape_cast %148 : vector<1x128x32xf32> to vector<128x32xf32>
    %150 = vector.shape_cast %147 : vector<128x32xf32> to vector<1x128x32xf32>
    tpu.vector_store %arg11[%c0_56, %c0_57, %c0_58], %150 {strides = array<i32>} : memref<1x128x32xf32, #tpu.memory_space<vmem>>, vector<1x128x32xf32>,
    return
  }
  func.func @transform_0(%arg0: i32, %arg1: i32) -> (i32, i32, i32) {
    %c0_i32 = arith.constant 0 : i32
    %c0_i32_0 = arith.constant 0 : i32
    return %arg0, %arg1, %c0_i32 : i32, i32, i32
  }
  func.func @transform_1(%arg0: i32, %arg1: i32) -> (i32, i32, i32) {
    %c0_i32 = arith.constant 0 : i32
    %c0_i32_0 = arith.constant 0 : i32
    %c0_i32_1 = arith.constant 0 : i32
    return %arg0, %c0_i32, %c0_i32_0 : i32, i32, i32
  }
  func.func @transform_2(%arg0: i32, %arg1: i32) -> (i32, i32, i32) {
    %c0_i32 = arith.constant 0 : i32
    %c0_i32_0 = arith.constant 0 : i32
    return %arg0, %arg1, %c0_i32 : i32, i32, i32
  }
  func.func @transform_3(%arg0: i32, %arg1: i32) -> (i32, i32, i32) {
    %c0_i32 = arith.constant 0 : i32
    %c0_i32_0 = arith.constant 0 : i32
    %c0_i32_1 = arith.constant 0 : i32
    return %arg0, %c0_i32, %c0_i32_0 : i32, i32, i32
  }
  func.func @transform_4(%arg0: i32, %arg1: i32) -> (i32, i32) {
    %c0_i32 = arith.constant 0 : i32
    %c0_i32_0 = arith.constant 0 : i32
    %c0_i32_1 = arith.constant 0 : i32
    return %c0_i32, %c0_i32_0 : i32, i32
  }
  func.func @transform_5(%arg0: i32, %arg1: i32) -> (i32, i32) {
    %c0_i32 = arith.constant 0 : i32
    %c0_i32_0 = arith.constant 0 : i32
    %c0_i32_1 = arith.constant 0 : i32
    return %c0_i32, %c0_i32_0 : i32, i32
  }
  func.func @transform_6(%arg0: i32, %arg1: i32) -> (i32, i32) {
    %c0_i32 = arith.constant 0 : i32
    %c0_i32_0 = arith.constant 0 : i32
    %c0_i32_1 = arith.constant 0 : i32
    return %c0_i32, %c0_i32_0 : i32, i32
  }
  func.func @transform_7(%arg0: i32, %arg1: i32) -> (i32, i32) {
    %c0_i32 = arith.constant 0 : i32
    %c0_i32_0 = arith.constant 0 : i32
    %c0_i32_1 = arith.constant 0 : i32
    return %c0_i32, %c0_i32_0 : i32, i32
  }
  func.func @transform_8(%arg0: i32, %arg1: i32) -> (i32, i32) {
    %c0_i32 = arith.constant 0 : i32
    %c0_i32_0 = arith.constant 0 : i32
    %c0_i32_1 = arith.constant 0 : i32
    return %c0_i32, %c0_i32_0 : i32, i32
  }
  func.func @transform_9(%arg0: i32, %arg1: i32) -> (i32, i32, i32) {
    %c0_i32 = arith.constant 0 : i32
    %c0_i32_0 = arith.constant 0 : i32
    return %arg0, %arg1, %c0_i32 : i32, i32, i32
  }
}

module attributes {stable_mosaic.version = 11 : i64} {
  func.func @_edge_conv_kernel(%arg0: i32, %arg1: i32, %arg2: memref<1x64x3xf32, #tpu.memory_space<vmem>>, %arg3: memref<1x3x128xf32, #tpu.memory_space<vmem>>, %arg4: memref<1x64x35xf32, #tpu.memory_space<vmem>>, %arg5: memref<1x128x35xf32, #tpu.memory_space<vmem>>, %arg6: memref<35x32xf32, #tpu.memory_space<vmem>>, %arg7: memref<35x32xf32, #tpu.memory_space<vmem>>, %arg8: memref<1x32xf32, #tpu.memory_space<vmem>>, %arg9: memref<32x32xbf16, #tpu.memory_space<vmem>>, %arg10: memref<1x32xf32, #tpu.memory_space<vmem>>, %arg11: memref<1x64x32xf32, #tpu.memory_space<vmem>>) attributes {dimension_semantics = [#tpu.dimension_semantics<parallel>, #tpu.dimension_semantics<parallel>], iteration_bounds = array<i64: 2, 1>, scalar_prefetch = 0 : i64, scratch_operands = 0 : i64, tpu.core_type = #tpu.core_type<tc>, window_params = [{transform_indices = @transform_0, window_bounds = array<i64: 1, 64, 3>}, {transform_indices = @transform_1, window_bounds = array<i64: 1, 3, 128>}, {transform_indices = @transform_2, window_bounds = array<i64: 1, 64, 35>}, {transform_indices = @transform_3, window_bounds = array<i64: 1, 128, 35>}, {pipeline_mode = #tpu.pipeline_mode<synchronous>, transform_indices = @transform_4, window_bounds = array<i64: 35, 32>}, {pipeline_mode = #tpu.pipeline_mode<synchronous>, transform_indices = @transform_5, window_bounds = array<i64: 35, 32>}, {pipeline_mode = #tpu.pipeline_mode<synchronous>, transform_indices = @transform_6, window_bounds = array<i64: 1, 32>}, {pipeline_mode = #tpu.pipeline_mode<synchronous>, transform_indices = @transform_7, window_bounds = array<i64: 32, 32>}, {pipeline_mode = #tpu.pipeline_mode<synchronous>, transform_indices = @transform_8, window_bounds = array<i64: 1, 32>}, {transform_indices = @transform_9, window_bounds = array<i64: 1, 64, 32>}]} {
    %c0 = arith.constant 0 : index
    %c0_0 = arith.constant 0 : index
    %c0_1 = arith.constant 0 : index
    %0 = vector.load %arg2[%c0, %c0_0, %c0_1] : memref<1x64x3xf32, #tpu.memory_space<vmem>>, vector<1x64x3xf32>
    %1 = vector.shape_cast %0 : vector<1x64x3xf32> to vector<64x3xf32>
    %c0_2 = arith.constant 0 : index
    %c0_3 = arith.constant 0 : index
    %c0_4 = arith.constant 0 : index
    %2 = vector.load %arg3[%c0_2, %c0_3, %c0_4] : memref<1x3x128xf32, #tpu.memory_space<vmem>>, vector<1x3x128xf32>
    %3 = vector.shape_cast %2 : vector<1x3x128xf32> to vector<3x128xf32>
    %c0_5 = arith.constant 0 : index
    %c0_6 = arith.constant 0 : index
    %c0_7 = arith.constant 0 : index
    %4 = vector.load %arg4[%c0_5, %c0_6, %c0_7] : memref<1x64x35xf32, #tpu.memory_space<vmem>>, vector<1x64x35xf32>
    %5 = vector.shape_cast %4 : vector<1x64x35xf32> to vector<64x35xf32>
    %c0_8 = arith.constant 0 : index
    %c0_9 = arith.constant 0 : index
    %c0_10 = arith.constant 0 : index
    %6 = vector.load %arg5[%c0_8, %c0_9, %c0_10] : memref<1x128x35xf32, #tpu.memory_space<vmem>>, vector<1x128x35xf32>
    %7 = vector.shape_cast %6 : vector<1x128x35xf32> to vector<128x35xf32>
    %8 = vector.extract_strided_slice %1 {offsets = [0, 0], sizes = [64, 1], strides = [1, 1]} : vector<64x3xf32> to vector<64x1xf32>
    %9 = vector.extract_strided_slice %3 {offsets = [0, 0], sizes = [1, 128], strides = [1, 1]} : vector<3x128xf32> to vector<1x128xf32>
    %10 = vector.broadcast %8 : vector<64x1xf32> to vector<64x128xf32>
    %11 = vector.broadcast %9 : vector<1x128xf32> to vector<64x128xf32>
    %12 = arith.subf %10, %11 : vector<64x128xf32>
    %13 = vector.extract_strided_slice %1 {offsets = [0, 1], sizes = [64, 1], strides = [1, 1]} : vector<64x3xf32> to vector<64x1xf32>
    %14 = vector.extract_strided_slice %3 {offsets = [1, 0], sizes = [1, 128], strides = [1, 1]} : vector<3x128xf32> to vector<1x128xf32>
    %15 = vector.broadcast %13 : vector<64x1xf32> to vector<64x128xf32>
    %16 = vector.broadcast %14 : vector<1x128xf32> to vector<64x128xf32>
    %17 = arith.subf %15, %16 : vector<64x128xf32>
    %18 = vector.extract_strided_slice %1 {offsets = [0, 2], sizes = [64, 1], strides = [1, 1]} : vector<64x3xf32> to vector<64x1xf32>
    %19 = vector.extract_strided_slice %3 {offsets = [2, 0], sizes = [1, 128], strides = [1, 1]} : vector<3x128xf32> to vector<1x128xf32>
    %20 = vector.broadcast %18 : vector<64x1xf32> to vector<64x128xf32>
    %21 = vector.broadcast %19 : vector<1x128xf32> to vector<64x128xf32>
    %22 = arith.subf %20, %21 : vector<64x128xf32>
    %23 = arith.mulf %12, %12 : vector<64x128xf32>
    %24 = arith.mulf %17, %17 : vector<64x128xf32>
    %25 = arith.addf %23, %24 : vector<64x128xf32>
    %26 = arith.mulf %22, %22 : vector<64x128xf32>
    %27 = arith.addf %25, %26 : vector<64x128xf32>
    %28 = tpu.iota {dimensions = array<i32: 1>} : vector<64x128xi32>
    %29 = tpu.bitcast %27 : vector<64x128xf32> -> vector<64x128xi32>
    %c-128_i32 = arith.constant -128 : i32
    %30 = vector.broadcast %c-128_i32 : i32 to vector<64x128xi32>
    %31 = arith.andi %29, %30 : vector<64x128xi32>
    %32 = arith.ori %31, %28 : vector<64x128xi32>
    %cst = arith.constant dense<2147483647> : vector<64xi32>
    %33 = vector.multi_reduction <minsi>, %32, %cst [1] : vector<64x128xi32> to vector<64xi32>
    %34 = vector.shape_cast %33 : vector<64xi32> to vector<64x1xi32>
    %35 = vector.broadcast %34 : vector<64x1xi32> to vector<64x128xi32>
    %36 = arith.cmpi eq, %32, %35 : vector<64x128xi32>
    %cst_11 = arith.constant 1.000000e+00 : f32
    %cst_12 = arith.constant 0.000000e+00 : f32
    %37 = vector.broadcast %cst_11 : f32 to vector<64x128xf32>
    %38 = vector.broadcast %cst_12 : f32 to vector<64x128xf32>
    %39 = arith.select %36, %37, %38 : vector<64x128xi1>, vector<64x128xf32>
    %40 = arith.truncf %39 : vector<64x128xf32> to vector<64x128xbf16>
    %c2147483647_i32 = arith.constant 2147483647 : i32
    %41 = vector.broadcast %c2147483647_i32 : i32 to vector<64x128xi32>
    %42 = arith.select %36, %41, %32 : vector<64x128xi1>, vector<64x128xi32>
    %cst_13 = arith.constant dense<2147483647> : vector<64xi32>
    %43 = vector.multi_reduction <minsi>, %42, %cst_13 [1] : vector<64x128xi32> to vector<64xi32>
    %44 = vector.shape_cast %43 : vector<64xi32> to vector<64x1xi32>
    %45 = vector.broadcast %44 : vector<64x1xi32> to vector<64x128xi32>
    %46 = arith.cmpi eq, %42, %45 : vector<64x128xi32>
    %cst_14 = arith.constant 1.000000e+00 : f32
    %cst_15 = arith.constant 0.000000e+00 : f32
    %47 = vector.broadcast %cst_14 : f32 to vector<64x128xf32>
    %48 = vector.broadcast %cst_15 : f32 to vector<64x128xf32>
    %49 = arith.select %46, %47, %48 : vector<64x128xi1>, vector<64x128xf32>
    %50 = arith.truncf %49 : vector<64x128xf32> to vector<64x128xbf16>
    %c2147483647_i32_16 = arith.constant 2147483647 : i32
    %51 = vector.broadcast %c2147483647_i32_16 : i32 to vector<64x128xi32>
    %52 = arith.select %46, %51, %42 : vector<64x128xi1>, vector<64x128xi32>
    %cst_17 = arith.constant dense<2147483647> : vector<64xi32>
    %53 = vector.multi_reduction <minsi>, %52, %cst_17 [1] : vector<64x128xi32> to vector<64xi32>
    %54 = vector.shape_cast %53 : vector<64xi32> to vector<64x1xi32>
    %55 = vector.broadcast %54 : vector<64x1xi32> to vector<64x128xi32>
    %56 = arith.cmpi eq, %52, %55 : vector<64x128xi32>
    %cst_18 = arith.constant 1.000000e+00 : f32
    %cst_19 = arith.constant 0.000000e+00 : f32
    %57 = vector.broadcast %cst_18 : f32 to vector<64x128xf32>
    %58 = vector.broadcast %cst_19 : f32 to vector<64x128xf32>
    %59 = arith.select %56, %57, %58 : vector<64x128xi1>, vector<64x128xf32>
    %60 = arith.truncf %59 : vector<64x128xf32> to vector<64x128xbf16>
    %c2147483647_i32_20 = arith.constant 2147483647 : i32
    %61 = vector.broadcast %c2147483647_i32_20 : i32 to vector<64x128xi32>
    %62 = arith.select %56, %61, %52 : vector<64x128xi1>, vector<64x128xi32>
    %cst_21 = arith.constant dense<2147483647> : vector<64xi32>
    %63 = vector.multi_reduction <minsi>, %62, %cst_21 [1] : vector<64x128xi32> to vector<64xi32>
    %64 = vector.shape_cast %63 : vector<64xi32> to vector<64x1xi32>
    %65 = vector.broadcast %64 : vector<64x1xi32> to vector<64x128xi32>
    %66 = arith.cmpi eq, %62, %65 : vector<64x128xi32>
    %cst_22 = arith.constant 1.000000e+00 : f32
    %cst_23 = arith.constant 0.000000e+00 : f32
    %67 = vector.broadcast %cst_22 : f32 to vector<64x128xf32>
    %68 = vector.broadcast %cst_23 : f32 to vector<64x128xf32>
    %69 = arith.select %66, %67, %68 : vector<64x128xi1>, vector<64x128xf32>
    %70 = arith.truncf %69 : vector<64x128xf32> to vector<64x128xbf16>
    %c2147483647_i32_24 = arith.constant 2147483647 : i32
    %71 = vector.broadcast %c2147483647_i32_24 : i32 to vector<64x128xi32>
    %72 = arith.select %66, %71, %62 : vector<64x128xi1>, vector<64x128xi32>
    %cst_25 = arith.constant dense<2147483647> : vector<64xi32>
    %73 = vector.multi_reduction <minsi>, %72, %cst_25 [1] : vector<64x128xi32> to vector<64xi32>
    %74 = vector.shape_cast %73 : vector<64xi32> to vector<64x1xi32>
    %75 = vector.broadcast %74 : vector<64x1xi32> to vector<64x128xi32>
    %76 = arith.cmpi eq, %72, %75 : vector<64x128xi32>
    %cst_26 = arith.constant 1.000000e+00 : f32
    %cst_27 = arith.constant 0.000000e+00 : f32
    %77 = vector.broadcast %cst_26 : f32 to vector<64x128xf32>
    %78 = vector.broadcast %cst_27 : f32 to vector<64x128xf32>
    %79 = arith.select %76, %77, %78 : vector<64x128xi1>, vector<64x128xf32>
    %80 = arith.truncf %79 : vector<64x128xf32> to vector<64x128xbf16>
    %c2147483647_i32_28 = arith.constant 2147483647 : i32
    %81 = vector.broadcast %c2147483647_i32_28 : i32 to vector<64x128xi32>
    %82 = arith.select %76, %81, %72 : vector<64x128xi1>, vector<64x128xi32>
    %cst_29 = arith.constant dense<2147483647> : vector<64xi32>
    %83 = vector.multi_reduction <minsi>, %82, %cst_29 [1] : vector<64x128xi32> to vector<64xi32>
    %84 = vector.shape_cast %83 : vector<64xi32> to vector<64x1xi32>
    %85 = vector.broadcast %84 : vector<64x1xi32> to vector<64x128xi32>
    %86 = arith.cmpi eq, %82, %85 : vector<64x128xi32>
    %cst_30 = arith.constant 1.000000e+00 : f32
    %cst_31 = arith.constant 0.000000e+00 : f32
    %87 = vector.broadcast %cst_30 : f32 to vector<64x128xf32>
    %88 = vector.broadcast %cst_31 : f32 to vector<64x128xf32>
    %89 = arith.select %86, %87, %88 : vector<64x128xi1>, vector<64x128xf32>
    %90 = arith.truncf %89 : vector<64x128xf32> to vector<64x128xbf16>
    %c2147483647_i32_32 = arith.constant 2147483647 : i32
    %91 = vector.broadcast %c2147483647_i32_32 : i32 to vector<64x128xi32>
    %92 = arith.select %86, %91, %82 : vector<64x128xi1>, vector<64x128xi32>
    %cst_33 = arith.constant dense<2147483647> : vector<64xi32>
    %93 = vector.multi_reduction <minsi>, %92, %cst_33 [1] : vector<64x128xi32> to vector<64xi32>
    %94 = vector.shape_cast %93 : vector<64xi32> to vector<64x1xi32>
    %95 = vector.broadcast %94 : vector<64x1xi32> to vector<64x128xi32>
    %96 = arith.cmpi eq, %92, %95 : vector<64x128xi32>
    %cst_34 = arith.constant 1.000000e+00 : f32
    %cst_35 = arith.constant 0.000000e+00 : f32
    %97 = vector.broadcast %cst_34 : f32 to vector<64x128xf32>
    %98 = vector.broadcast %cst_35 : f32 to vector<64x128xf32>
    %99 = arith.select %96, %97, %98 : vector<64x128xi1>, vector<64x128xf32>
    %100 = arith.truncf %99 : vector<64x128xf32> to vector<64x128xbf16>
    %c2147483647_i32_36 = arith.constant 2147483647 : i32
    %101 = vector.broadcast %c2147483647_i32_36 : i32 to vector<64x128xi32>
    %102 = arith.select %96, %101, %92 : vector<64x128xi1>, vector<64x128xi32>
    %cst_37 = arith.constant dense<2147483647> : vector<64xi32>
    %103 = vector.multi_reduction <minsi>, %102, %cst_37 [1] : vector<64x128xi32> to vector<64xi32>
    %104 = vector.shape_cast %103 : vector<64xi32> to vector<64x1xi32>
    %105 = vector.broadcast %104 : vector<64x1xi32> to vector<64x128xi32>
    %106 = arith.cmpi eq, %102, %105 : vector<64x128xi32>
    %cst_38 = arith.constant 1.000000e+00 : f32
    %cst_39 = arith.constant 0.000000e+00 : f32
    %107 = vector.broadcast %cst_38 : f32 to vector<64x128xf32>
    %108 = vector.broadcast %cst_39 : f32 to vector<64x128xf32>
    %109 = arith.select %106, %107, %108 : vector<64x128xi1>, vector<64x128xf32>
    %110 = arith.truncf %109 : vector<64x128xf32> to vector<64x128xbf16>
    %111 = tpu.concatenate %40, %50, %60, %70, %80, %90, %100, %110 in 0 : vector<64x128xbf16>, vector<64x128xbf16>, vector<64x128xbf16>, vector<64x128xbf16>, vector<64x128xbf16>, vector<64x128xbf16>, vector<64x128xbf16>, vector<64x128xbf16> -> vector<512x128xbf16>
    %c0_40 = arith.constant 0 : index
    %c0_41 = arith.constant 0 : index
    %112 = vector.load %arg6[%c0_40, %c0_41] : memref<35x32xf32, #tpu.memory_space<vmem>>, vector<35x32xf32>
    %c0_42 = arith.constant 0 : index
    %c0_43 = arith.constant 0 : index
    %113 = vector.load %arg7[%c0_42, %c0_43] : memref<35x32xf32, #tpu.memory_space<vmem>>, vector<35x32xf32>
    %c0_44 = arith.constant 0 : index
    %c0_45 = arith.constant 0 : index
    %114 = vector.load %arg8[%c0_44, %c0_45] : memref<1x32xf32, #tpu.memory_space<vmem>>, vector<1x32xf32>
    %cst_46 = arith.constant dense<0.000000e+00> : vector<128x32xf32>
    %115 = tpu.matmul %7, %112, %cst_46 {dimension_numbers = #tpu.dot_dimension_numbers<[1], [0], [0], [1], [0, 0, 1, 1], [], []>} : vector<128x35xf32>, vector<35x32xf32>, vector<128x32xf32> -> vector<128x32xf32>
    %cst_47 = arith.constant dense<0.000000e+00> : vector<64x32xf32>
    %116 = tpu.matmul %5, %113, %cst_47 {dimension_numbers = #tpu.dot_dimension_numbers<[1], [0], [0], [1], [0, 0, 1, 1], [], []>} : vector<64x35xf32>, vector<35x32xf32>, vector<64x32xf32> -> vector<64x32xf32>
    %117 = vector.broadcast %114 : vector<1x32xf32> to vector<64x32xf32>
    %118 = arith.addf %116, %117 : vector<64x32xf32>
    %119 = tpu.concatenate %118, %118, %118, %118, %118, %118, %118, %118 in 0 : vector<64x32xf32>, vector<64x32xf32>, vector<64x32xf32>, vector<64x32xf32>, vector<64x32xf32>, vector<64x32xf32>, vector<64x32xf32>, vector<64x32xf32> -> vector<512x32xf32>
    %120 = arith.truncf %115 : vector<128x32xf32> to vector<128x32xbf16>
    %cst_48 = arith.constant dense<0.000000e+00> : vector<512x32xf32>
    %121 = tpu.matmul %111, %120, %cst_48 {dimension_numbers = #tpu.dot_dimension_numbers<[1], [0], [0], [1], [0, 0, 1, 1], [], []>} : vector<512x128xbf16>, vector<128x32xbf16>, vector<512x32xf32> -> vector<512x32xf32>
    %122 = arith.addf %121, %119 : vector<512x32xf32>
    %cst_49 = arith.constant 0.000000e+00 : f32
    %123 = vector.broadcast %cst_49 : f32 to vector<512x32xf32>
    %124 = arith.maximumf %122, %123 : vector<512x32xf32>
    %c0_50 = arith.constant 0 : index
    %c0_51 = arith.constant 0 : index
    %125 = vector.load %arg9[%c0_50, %c0_51] : memref<32x32xbf16, #tpu.memory_space<vmem>>, vector<32x32xbf16>
    %c0_52 = arith.constant 0 : index
    %c0_53 = arith.constant 0 : index
    %126 = vector.load %arg10[%c0_52, %c0_53] : memref<1x32xf32, #tpu.memory_space<vmem>>, vector<1x32xf32>
    %127 = arith.truncf %124 : vector<512x32xf32> to vector<512x32xbf16>
    %cst_54 = arith.constant dense<0.000000e+00> : vector<512x32xf32>
    %128 = tpu.matmul %127, %125, %cst_54 {dimension_numbers = #tpu.dot_dimension_numbers<[1], [0], [0], [1], [0, 0, 1, 1], [], []>} : vector<512x32xbf16>, vector<32x32xbf16>, vector<512x32xf32> -> vector<512x32xf32>
    %129 = vector.broadcast %126 : vector<1x32xf32> to vector<512x32xf32>
    %130 = arith.addf %128, %129 : vector<512x32xf32>
    %cst_55 = arith.constant 0.000000e+00 : f32
    %131 = vector.broadcast %cst_55 : f32 to vector<512x32xf32>
    %132 = arith.maximumf %130, %131 : vector<512x32xf32>
    %133 = vector.extract_strided_slice %132 {offsets = [0, 0], sizes = [64, 32], strides = [1, 1]} : vector<512x32xf32> to vector<64x32xf32>
    %134 = vector.extract_strided_slice %132 {offsets = [64, 0], sizes = [64, 32], strides = [1, 1]} : vector<512x32xf32> to vector<64x32xf32>
    %135 = arith.maximumf %133, %134 : vector<64x32xf32>
    %136 = vector.extract_strided_slice %132 {offsets = [128, 0], sizes = [64, 32], strides = [1, 1]} : vector<512x32xf32> to vector<64x32xf32>
    %137 = arith.maximumf %135, %136 : vector<64x32xf32>
    %138 = vector.extract_strided_slice %132 {offsets = [192, 0], sizes = [64, 32], strides = [1, 1]} : vector<512x32xf32> to vector<64x32xf32>
    %139 = arith.maximumf %137, %138 : vector<64x32xf32>
    %140 = vector.extract_strided_slice %132 {offsets = [256, 0], sizes = [64, 32], strides = [1, 1]} : vector<512x32xf32> to vector<64x32xf32>
    %141 = arith.maximumf %139, %140 : vector<64x32xf32>
    %142 = vector.extract_strided_slice %132 {offsets = [320, 0], sizes = [64, 32], strides = [1, 1]} : vector<512x32xf32> to vector<64x32xf32>
    %143 = arith.maximumf %141, %142 : vector<64x32xf32>
    %144 = vector.extract_strided_slice %132 {offsets = [384, 0], sizes = [64, 32], strides = [1, 1]} : vector<512x32xf32> to vector<64x32xf32>
    %145 = arith.maximumf %143, %144 : vector<64x32xf32>
    %146 = vector.extract_strided_slice %132 {offsets = [448, 0], sizes = [64, 32], strides = [1, 1]} : vector<512x32xf32> to vector<64x32xf32>
    %147 = arith.maximumf %145, %146 : vector<64x32xf32>
    %c0_56 = arith.constant 0 : index
    %c0_57 = arith.constant 0 : index
    %c0_58 = arith.constant 0 : index
    %148 = vector.load %arg11[%c0_56, %c0_57, %c0_58] : memref<1x64x32xf32, #tpu.memory_space<vmem>>, vector<1x64x32xf32>
    %149 = vector.shape_cast %148 : vector<1x64x32xf32> to vector<64x32xf32>
    %150 = vector.shape_cast %147 : vector<64x32xf32> to vector<1x64x32xf32>
    tpu.vector_store %arg11[%c0_56, %c0_57, %c0_58], %150 {strides = array<i32>} : memref<1x64x32xf32, #tpu.memory_space<vmem>>, vector<1x64x32xf32>,
    return
  }
  func.func @transform_0(%arg0: i32, %arg1: i32) -> (i32, i32, i32) {
    %c0_i32 = arith.constant 0 : i32
    %c0_i32_0 = arith.constant 0 : i32
    return %arg0, %arg1, %c0_i32 : i32, i32, i32
  }
  func.func @transform_1(%arg0: i32, %arg1: i32) -> (i32, i32, i32) {
    %c0_i32 = arith.constant 0 : i32
    %c0_i32_0 = arith.constant 0 : i32
    %c0_i32_1 = arith.constant 0 : i32
    return %arg0, %c0_i32, %c0_i32_0 : i32, i32, i32
  }
  func.func @transform_2(%arg0: i32, %arg1: i32) -> (i32, i32, i32) {
    %c0_i32 = arith.constant 0 : i32
    %c0_i32_0 = arith.constant 0 : i32
    return %arg0, %arg1, %c0_i32 : i32, i32, i32
  }
  func.func @transform_3(%arg0: i32, %arg1: i32) -> (i32, i32, i32) {
    %c0_i32 = arith.constant 0 : i32
    %c0_i32_0 = arith.constant 0 : i32
    %c0_i32_1 = arith.constant 0 : i32
    return %arg0, %c0_i32, %c0_i32_0 : i32, i32, i32
  }
  func.func @transform_4(%arg0: i32, %arg1: i32) -> (i32, i32) {
    %c0_i32 = arith.constant 0 : i32
    %c0_i32_0 = arith.constant 0 : i32
    %c0_i32_1 = arith.constant 0 : i32
    return %c0_i32, %c0_i32_0 : i32, i32
  }
  func.func @transform_5(%arg0: i32, %arg1: i32) -> (i32, i32) {
    %c0_i32 = arith.constant 0 : i32
    %c0_i32_0 = arith.constant 0 : i32
    %c0_i32_1 = arith.constant 0 : i32
    return %c0_i32, %c0_i32_0 : i32, i32
  }
  func.func @transform_6(%arg0: i32, %arg1: i32) -> (i32, i32) {
    %c0_i32 = arith.constant 0 : i32
    %c0_i32_0 = arith.constant 0 : i32
    %c0_i32_1 = arith.constant 0 : i32
    return %c0_i32, %c0_i32_0 : i32, i32
  }
  func.func @transform_7(%arg0: i32, %arg1: i32) -> (i32, i32) {
    %c0_i32 = arith.constant 0 : i32
    %c0_i32_0 = arith.constant 0 : i32
    %c0_i32_1 = arith.constant 0 : i32
    return %c0_i32, %c0_i32_0 : i32, i32
  }
  func.func @transform_8(%arg0: i32, %arg1: i32) -> (i32, i32) {
    %c0_i32 = arith.constant 0 : i32
    %c0_i32_0 = arith.constant 0 : i32
    %c0_i32_1 = arith.constant 0 : i32
    return %c0_i32, %c0_i32_0 : i32, i32
  }
  func.func @transform_9(%arg0: i32, %arg1: i32) -> (i32, i32, i32) {
    %c0_i32 = arith.constant 0 : i32
    %c0_i32_0 = arith.constant 0 : i32
    return %arg0, %arg1, %c0_i32 : i32, i32, i32
  }
}

module attributes {stable_mosaic.version = 11 : i64} {
  func.func @_edge_conv_kernel(%arg0: i32, %arg1: i32, %arg2: memref<1x32x3xf32, #tpu.memory_space<vmem>>, %arg3: memref<1x3x64xf32, #tpu.memory_space<vmem>>, %arg4: memref<1x32x35xf32, #tpu.memory_space<vmem>>, %arg5: memref<1x64x35xf32, #tpu.memory_space<vmem>>, %arg6: memref<35x32xf32, #tpu.memory_space<vmem>>, %arg7: memref<35x32xf32, #tpu.memory_space<vmem>>, %arg8: memref<1x32xf32, #tpu.memory_space<vmem>>, %arg9: memref<32x32xbf16, #tpu.memory_space<vmem>>, %arg10: memref<1x32xf32, #tpu.memory_space<vmem>>, %arg11: memref<32x32xf32, #tpu.memory_space<vmem>>, %arg12: memref<32x1xf32, #tpu.memory_space<vmem>>, %arg13: memref<1x32x32xf32, #tpu.memory_space<vmem>>, %arg14: memref<1x32x32xf32, #tpu.memory_space<vmem>>) attributes {dimension_semantics = [#tpu.dimension_semantics<parallel>, #tpu.dimension_semantics<parallel>], iteration_bounds = array<i64: 2, 1>, scalar_prefetch = 0 : i64, scratch_operands = 0 : i64, tpu.core_type = #tpu.core_type<tc>, window_params = [{transform_indices = @transform_0, window_bounds = array<i64: 1, 32, 3>}, {transform_indices = @transform_1, window_bounds = array<i64: 1, 3, 64>}, {transform_indices = @transform_2, window_bounds = array<i64: 1, 32, 35>}, {transform_indices = @transform_3, window_bounds = array<i64: 1, 64, 35>}, {pipeline_mode = #tpu.pipeline_mode<synchronous>, transform_indices = @transform_4, window_bounds = array<i64: 35, 32>}, {pipeline_mode = #tpu.pipeline_mode<synchronous>, transform_indices = @transform_5, window_bounds = array<i64: 35, 32>}, {pipeline_mode = #tpu.pipeline_mode<synchronous>, transform_indices = @transform_6, window_bounds = array<i64: 1, 32>}, {pipeline_mode = #tpu.pipeline_mode<synchronous>, transform_indices = @transform_7, window_bounds = array<i64: 32, 32>}, {pipeline_mode = #tpu.pipeline_mode<synchronous>, transform_indices = @transform_8, window_bounds = array<i64: 1, 32>}, {pipeline_mode = #tpu.pipeline_mode<synchronous>, transform_indices = @transform_9, window_bounds = array<i64: 32, 32>}, {pipeline_mode = #tpu.pipeline_mode<synchronous>, transform_indices = @transform_10, window_bounds = array<i64: 32, 1>}, {transform_indices = @transform_11, window_bounds = array<i64: 1, 32, 32>}, {transform_indices = @transform_12, window_bounds = array<i64: 1, 32, 32>}]} {
    %c0 = arith.constant 0 : index
    %c0_0 = arith.constant 0 : index
    %c0_1 = arith.constant 0 : index
    %0 = vector.load %arg2[%c0, %c0_0, %c0_1] : memref<1x32x3xf32, #tpu.memory_space<vmem>>, vector<1x32x3xf32>
    %1 = vector.shape_cast %0 : vector<1x32x3xf32> to vector<32x3xf32>
    %c0_2 = arith.constant 0 : index
    %c0_3 = arith.constant 0 : index
    %c0_4 = arith.constant 0 : index
    %2 = vector.load %arg3[%c0_2, %c0_3, %c0_4] : memref<1x3x64xf32, #tpu.memory_space<vmem>>, vector<1x3x64xf32>
    %3 = vector.shape_cast %2 : vector<1x3x64xf32> to vector<3x64xf32>
    %c0_5 = arith.constant 0 : index
    %c0_6 = arith.constant 0 : index
    %c0_7 = arith.constant 0 : index
    %4 = vector.load %arg4[%c0_5, %c0_6, %c0_7] : memref<1x32x35xf32, #tpu.memory_space<vmem>>, vector<1x32x35xf32>
    %5 = vector.shape_cast %4 : vector<1x32x35xf32> to vector<32x35xf32>
    %c0_8 = arith.constant 0 : index
    %c0_9 = arith.constant 0 : index
    %c0_10 = arith.constant 0 : index
    %6 = vector.load %arg5[%c0_8, %c0_9, %c0_10] : memref<1x64x35xf32, #tpu.memory_space<vmem>>, vector<1x64x35xf32>
    %7 = vector.shape_cast %6 : vector<1x64x35xf32> to vector<64x35xf32>
    %8 = vector.extract_strided_slice %1 {offsets = [0, 0], sizes = [32, 1], strides = [1, 1]} : vector<32x3xf32> to vector<32x1xf32>
    %9 = vector.extract_strided_slice %3 {offsets = [0, 0], sizes = [1, 64], strides = [1, 1]} : vector<3x64xf32> to vector<1x64xf32>
    %10 = vector.broadcast %8 : vector<32x1xf32> to vector<32x64xf32>
    %11 = vector.broadcast %9 : vector<1x64xf32> to vector<32x64xf32>
    %12 = arith.subf %10, %11 : vector<32x64xf32>
    %13 = vector.extract_strided_slice %1 {offsets = [0, 1], sizes = [32, 1], strides = [1, 1]} : vector<32x3xf32> to vector<32x1xf32>
    %14 = vector.extract_strided_slice %3 {offsets = [1, 0], sizes = [1, 64], strides = [1, 1]} : vector<3x64xf32> to vector<1x64xf32>
    %15 = vector.broadcast %13 : vector<32x1xf32> to vector<32x64xf32>
    %16 = vector.broadcast %14 : vector<1x64xf32> to vector<32x64xf32>
    %17 = arith.subf %15, %16 : vector<32x64xf32>
    %18 = vector.extract_strided_slice %1 {offsets = [0, 2], sizes = [32, 1], strides = [1, 1]} : vector<32x3xf32> to vector<32x1xf32>
    %19 = vector.extract_strided_slice %3 {offsets = [2, 0], sizes = [1, 64], strides = [1, 1]} : vector<3x64xf32> to vector<1x64xf32>
    %20 = vector.broadcast %18 : vector<32x1xf32> to vector<32x64xf32>
    %21 = vector.broadcast %19 : vector<1x64xf32> to vector<32x64xf32>
    %22 = arith.subf %20, %21 : vector<32x64xf32>
    %23 = arith.mulf %12, %12 : vector<32x64xf32>
    %24 = arith.mulf %17, %17 : vector<32x64xf32>
    %25 = arith.addf %23, %24 : vector<32x64xf32>
    %26 = arith.mulf %22, %22 : vector<32x64xf32>
    %27 = arith.addf %25, %26 : vector<32x64xf32>
    %28 = tpu.iota {dimensions = array<i32: 1>} : vector<32x64xi32>
    %29 = tpu.bitcast %27 : vector<32x64xf32> -> vector<32x64xi32>
    %c-64_i32 = arith.constant -64 : i32
    %30 = vector.broadcast %c-64_i32 : i32 to vector<32x64xi32>
    %31 = arith.andi %29, %30 : vector<32x64xi32>
    %32 = arith.ori %31, %28 : vector<32x64xi32>
    %cst = arith.constant dense<2147483647> : vector<32xi32>
    %33 = vector.multi_reduction <minsi>, %32, %cst [1] : vector<32x64xi32> to vector<32xi32>
    %34 = vector.shape_cast %33 : vector<32xi32> to vector<32x1xi32>
    %35 = vector.broadcast %34 : vector<32x1xi32> to vector<32x64xi32>
    %36 = arith.cmpi eq, %32, %35 : vector<32x64xi32>
    %cst_11 = arith.constant 1.000000e+00 : f32
    %cst_12 = arith.constant 0.000000e+00 : f32
    %37 = vector.broadcast %cst_11 : f32 to vector<32x64xf32>
    %38 = vector.broadcast %cst_12 : f32 to vector<32x64xf32>
    %39 = arith.select %36, %37, %38 : vector<32x64xi1>, vector<32x64xf32>
    %40 = arith.truncf %39 : vector<32x64xf32> to vector<32x64xbf16>
    %c2147483647_i32 = arith.constant 2147483647 : i32
    %41 = vector.broadcast %c2147483647_i32 : i32 to vector<32x64xi32>
    %42 = arith.select %36, %41, %32 : vector<32x64xi1>, vector<32x64xi32>
    %cst_13 = arith.constant dense<2147483647> : vector<32xi32>
    %43 = vector.multi_reduction <minsi>, %42, %cst_13 [1] : vector<32x64xi32> to vector<32xi32>
    %44 = vector.shape_cast %43 : vector<32xi32> to vector<32x1xi32>
    %45 = vector.broadcast %44 : vector<32x1xi32> to vector<32x64xi32>
    %46 = arith.cmpi eq, %42, %45 : vector<32x64xi32>
    %cst_14 = arith.constant 1.000000e+00 : f32
    %cst_15 = arith.constant 0.000000e+00 : f32
    %47 = vector.broadcast %cst_14 : f32 to vector<32x64xf32>
    %48 = vector.broadcast %cst_15 : f32 to vector<32x64xf32>
    %49 = arith.select %46, %47, %48 : vector<32x64xi1>, vector<32x64xf32>
    %50 = arith.truncf %49 : vector<32x64xf32> to vector<32x64xbf16>
    %c2147483647_i32_16 = arith.constant 2147483647 : i32
    %51 = vector.broadcast %c2147483647_i32_16 : i32 to vector<32x64xi32>
    %52 = arith.select %46, %51, %42 : vector<32x64xi1>, vector<32x64xi32>
    %cst_17 = arith.constant dense<2147483647> : vector<32xi32>
    %53 = vector.multi_reduction <minsi>, %52, %cst_17 [1] : vector<32x64xi32> to vector<32xi32>
    %54 = vector.shape_cast %53 : vector<32xi32> to vector<32x1xi32>
    %55 = vector.broadcast %54 : vector<32x1xi32> to vector<32x64xi32>
    %56 = arith.cmpi eq, %52, %55 : vector<32x64xi32>
    %cst_18 = arith.constant 1.000000e+00 : f32
    %cst_19 = arith.constant 0.000000e+00 : f32
    %57 = vector.broadcast %cst_18 : f32 to vector<32x64xf32>
    %58 = vector.broadcast %cst_19 : f32 to vector<32x64xf32>
    %59 = arith.select %56, %57, %58 : vector<32x64xi1>, vector<32x64xf32>
    %60 = arith.truncf %59 : vector<32x64xf32> to vector<32x64xbf16>
    %c2147483647_i32_20 = arith.constant 2147483647 : i32
    %61 = vector.broadcast %c2147483647_i32_20 : i32 to vector<32x64xi32>
    %62 = arith.select %56, %61, %52 : vector<32x64xi1>, vector<32x64xi32>
    %cst_21 = arith.constant dense<2147483647> : vector<32xi32>
    %63 = vector.multi_reduction <minsi>, %62, %cst_21 [1] : vector<32x64xi32> to vector<32xi32>
    %64 = vector.shape_cast %63 : vector<32xi32> to vector<32x1xi32>
    %65 = vector.broadcast %64 : vector<32x1xi32> to vector<32x64xi32>
    %66 = arith.cmpi eq, %62, %65 : vector<32x64xi32>
    %cst_22 = arith.constant 1.000000e+00 : f32
    %cst_23 = arith.constant 0.000000e+00 : f32
    %67 = vector.broadcast %cst_22 : f32 to vector<32x64xf32>
    %68 = vector.broadcast %cst_23 : f32 to vector<32x64xf32>
    %69 = arith.select %66, %67, %68 : vector<32x64xi1>, vector<32x64xf32>
    %70 = arith.truncf %69 : vector<32x64xf32> to vector<32x64xbf16>
    %c2147483647_i32_24 = arith.constant 2147483647 : i32
    %71 = vector.broadcast %c2147483647_i32_24 : i32 to vector<32x64xi32>
    %72 = arith.select %66, %71, %62 : vector<32x64xi1>, vector<32x64xi32>
    %cst_25 = arith.constant dense<2147483647> : vector<32xi32>
    %73 = vector.multi_reduction <minsi>, %72, %cst_25 [1] : vector<32x64xi32> to vector<32xi32>
    %74 = vector.shape_cast %73 : vector<32xi32> to vector<32x1xi32>
    %75 = vector.broadcast %74 : vector<32x1xi32> to vector<32x64xi32>
    %76 = arith.cmpi eq, %72, %75 : vector<32x64xi32>
    %cst_26 = arith.constant 1.000000e+00 : f32
    %cst_27 = arith.constant 0.000000e+00 : f32
    %77 = vector.broadcast %cst_26 : f32 to vector<32x64xf32>
    %78 = vector.broadcast %cst_27 : f32 to vector<32x64xf32>
    %79 = arith.select %76, %77, %78 : vector<32x64xi1>, vector<32x64xf32>
    %80 = arith.truncf %79 : vector<32x64xf32> to vector<32x64xbf16>
    %c2147483647_i32_28 = arith.constant 2147483647 : i32
    %81 = vector.broadcast %c2147483647_i32_28 : i32 to vector<32x64xi32>
    %82 = arith.select %76, %81, %72 : vector<32x64xi1>, vector<32x64xi32>
    %cst_29 = arith.constant dense<2147483647> : vector<32xi32>
    %83 = vector.multi_reduction <minsi>, %82, %cst_29 [1] : vector<32x64xi32> to vector<32xi32>
    %84 = vector.shape_cast %83 : vector<32xi32> to vector<32x1xi32>
    %85 = vector.broadcast %84 : vector<32x1xi32> to vector<32x64xi32>
    %86 = arith.cmpi eq, %82, %85 : vector<32x64xi32>
    %cst_30 = arith.constant 1.000000e+00 : f32
    %cst_31 = arith.constant 0.000000e+00 : f32
    %87 = vector.broadcast %cst_30 : f32 to vector<32x64xf32>
    %88 = vector.broadcast %cst_31 : f32 to vector<32x64xf32>
    %89 = arith.select %86, %87, %88 : vector<32x64xi1>, vector<32x64xf32>
    %90 = arith.truncf %89 : vector<32x64xf32> to vector<32x64xbf16>
    %c2147483647_i32_32 = arith.constant 2147483647 : i32
    %91 = vector.broadcast %c2147483647_i32_32 : i32 to vector<32x64xi32>
    %92 = arith.select %86, %91, %82 : vector<32x64xi1>, vector<32x64xi32>
    %cst_33 = arith.constant dense<2147483647> : vector<32xi32>
    %93 = vector.multi_reduction <minsi>, %92, %cst_33 [1] : vector<32x64xi32> to vector<32xi32>
    %94 = vector.shape_cast %93 : vector<32xi32> to vector<32x1xi32>
    %95 = vector.broadcast %94 : vector<32x1xi32> to vector<32x64xi32>
    %96 = arith.cmpi eq, %92, %95 : vector<32x64xi32>
    %cst_34 = arith.constant 1.000000e+00 : f32
    %cst_35 = arith.constant 0.000000e+00 : f32
    %97 = vector.broadcast %cst_34 : f32 to vector<32x64xf32>
    %98 = vector.broadcast %cst_35 : f32 to vector<32x64xf32>
    %99 = arith.select %96, %97, %98 : vector<32x64xi1>, vector<32x64xf32>
    %100 = arith.truncf %99 : vector<32x64xf32> to vector<32x64xbf16>
    %c2147483647_i32_36 = arith.constant 2147483647 : i32
    %101 = vector.broadcast %c2147483647_i32_36 : i32 to vector<32x64xi32>
    %102 = arith.select %96, %101, %92 : vector<32x64xi1>, vector<32x64xi32>
    %cst_37 = arith.constant dense<2147483647> : vector<32xi32>
    %103 = vector.multi_reduction <minsi>, %102, %cst_37 [1] : vector<32x64xi32> to vector<32xi32>
    %104 = vector.shape_cast %103 : vector<32xi32> to vector<32x1xi32>
    %105 = vector.broadcast %104 : vector<32x1xi32> to vector<32x64xi32>
    %106 = arith.cmpi eq, %102, %105 : vector<32x64xi32>
    %cst_38 = arith.constant 1.000000e+00 : f32
    %cst_39 = arith.constant 0.000000e+00 : f32
    %107 = vector.broadcast %cst_38 : f32 to vector<32x64xf32>
    %108 = vector.broadcast %cst_39 : f32 to vector<32x64xf32>
    %109 = arith.select %106, %107, %108 : vector<32x64xi1>, vector<32x64xf32>
    %110 = arith.truncf %109 : vector<32x64xf32> to vector<32x64xbf16>
    %111 = tpu.concatenate %40, %50, %60, %70, %80, %90, %100, %110 in 0 : vector<32x64xbf16>, vector<32x64xbf16>, vector<32x64xbf16>, vector<32x64xbf16>, vector<32x64xbf16>, vector<32x64xbf16>, vector<32x64xbf16>, vector<32x64xbf16> -> vector<256x64xbf16>
    %c0_40 = arith.constant 0 : index
    %c0_41 = arith.constant 0 : index
    %112 = vector.load %arg6[%c0_40, %c0_41] : memref<35x32xf32, #tpu.memory_space<vmem>>, vector<35x32xf32>
    %c0_42 = arith.constant 0 : index
    %c0_43 = arith.constant 0 : index
    %113 = vector.load %arg7[%c0_42, %c0_43] : memref<35x32xf32, #tpu.memory_space<vmem>>, vector<35x32xf32>
    %c0_44 = arith.constant 0 : index
    %c0_45 = arith.constant 0 : index
    %114 = vector.load %arg8[%c0_44, %c0_45] : memref<1x32xf32, #tpu.memory_space<vmem>>, vector<1x32xf32>
    %cst_46 = arith.constant dense<0.000000e+00> : vector<64x32xf32>
    %115 = tpu.matmul %7, %112, %cst_46 {dimension_numbers = #tpu.dot_dimension_numbers<[1], [0], [0], [1], [0, 0, 1, 1], [], []>} : vector<64x35xf32>, vector<35x32xf32>, vector<64x32xf32> -> vector<64x32xf32>
    %cst_47 = arith.constant dense<0.000000e+00> : vector<32x32xf32>
    %116 = tpu.matmul %5, %113, %cst_47 {dimension_numbers = #tpu.dot_dimension_numbers<[1], [0], [0], [1], [0, 0, 1, 1], [], []>} : vector<32x35xf32>, vector<35x32xf32>, vector<32x32xf32> -> vector<32x32xf32>
    %117 = vector.broadcast %114 : vector<1x32xf32> to vector<32x32xf32>
    %118 = arith.addf %116, %117 : vector<32x32xf32>
    %119 = tpu.concatenate %118, %118, %118, %118, %118, %118, %118, %118 in 0 : vector<32x32xf32>, vector<32x32xf32>, vector<32x32xf32>, vector<32x32xf32>, vector<32x32xf32>, vector<32x32xf32>, vector<32x32xf32>, vector<32x32xf32> -> vector<256x32xf32>
    %120 = arith.truncf %115 : vector<64x32xf32> to vector<64x32xbf16>
    %cst_48 = arith.constant dense<0.000000e+00> : vector<256x32xf32>
    %121 = tpu.matmul %111, %120, %cst_48 {dimension_numbers = #tpu.dot_dimension_numbers<[1], [0], [0], [1], [0, 0, 1, 1], [], []>} : vector<256x64xbf16>, vector<64x32xbf16>, vector<256x32xf32> -> vector<256x32xf32>
    %122 = arith.addf %121, %119 : vector<256x32xf32>
    %cst_49 = arith.constant 0.000000e+00 : f32
    %123 = vector.broadcast %cst_49 : f32 to vector<256x32xf32>
    %124 = arith.maximumf %122, %123 : vector<256x32xf32>
    %c0_50 = arith.constant 0 : index
    %c0_51 = arith.constant 0 : index
    %125 = vector.load %arg9[%c0_50, %c0_51] : memref<32x32xbf16, #tpu.memory_space<vmem>>, vector<32x32xbf16>
    %c0_52 = arith.constant 0 : index
    %c0_53 = arith.constant 0 : index
    %126 = vector.load %arg10[%c0_52, %c0_53] : memref<1x32xf32, #tpu.memory_space<vmem>>, vector<1x32xf32>
    %127 = arith.truncf %124 : vector<256x32xf32> to vector<256x32xbf16>
    %cst_54 = arith.constant dense<0.000000e+00> : vector<256x32xf32>
    %128 = tpu.matmul %127, %125, %cst_54 {dimension_numbers = #tpu.dot_dimension_numbers<[1], [0], [0], [1], [0, 0, 1, 1], [], []>} : vector<256x32xbf16>, vector<32x32xbf16>, vector<256x32xf32> -> vector<256x32xf32>
    %129 = vector.broadcast %126 : vector<1x32xf32> to vector<256x32xf32>
    %130 = arith.addf %128, %129 : vector<256x32xf32>
    %cst_55 = arith.constant 0.000000e+00 : f32
    %131 = vector.broadcast %cst_55 : f32 to vector<256x32xf32>
    %132 = arith.maximumf %130, %131 : vector<256x32xf32>
    %133 = vector.extract_strided_slice %132 {offsets = [0, 0], sizes = [32, 32], strides = [1, 1]} : vector<256x32xf32> to vector<32x32xf32>
    %134 = vector.extract_strided_slice %132 {offsets = [32, 0], sizes = [32, 32], strides = [1, 1]} : vector<256x32xf32> to vector<32x32xf32>
    %135 = arith.maximumf %133, %134 : vector<32x32xf32>
    %136 = vector.extract_strided_slice %132 {offsets = [64, 0], sizes = [32, 32], strides = [1, 1]} : vector<256x32xf32> to vector<32x32xf32>
    %137 = arith.maximumf %135, %136 : vector<32x32xf32>
    %138 = vector.extract_strided_slice %132 {offsets = [96, 0], sizes = [32, 32], strides = [1, 1]} : vector<256x32xf32> to vector<32x32xf32>
    %139 = arith.maximumf %137, %138 : vector<32x32xf32>
    %140 = vector.extract_strided_slice %132 {offsets = [128, 0], sizes = [32, 32], strides = [1, 1]} : vector<256x32xf32> to vector<32x32xf32>
    %141 = arith.maximumf %139, %140 : vector<32x32xf32>
    %142 = vector.extract_strided_slice %132 {offsets = [160, 0], sizes = [32, 32], strides = [1, 1]} : vector<256x32xf32> to vector<32x32xf32>
    %143 = arith.maximumf %141, %142 : vector<32x32xf32>
    %144 = vector.extract_strided_slice %132 {offsets = [192, 0], sizes = [32, 32], strides = [1, 1]} : vector<256x32xf32> to vector<32x32xf32>
    %145 = arith.maximumf %143, %144 : vector<32x32xf32>
    %146 = vector.extract_strided_slice %132 {offsets = [224, 0], sizes = [32, 32], strides = [1, 1]} : vector<256x32xf32> to vector<32x32xf32>
    %147 = arith.maximumf %145, %146 : vector<32x32xf32>
    %c0_56 = arith.constant 0 : index
    %c0_57 = arith.constant 0 : index
    %148 = vector.load %arg11[%c0_56, %c0_57] : memref<32x32xf32, #tpu.memory_space<vmem>>, vector<32x32xf32>
    %c0_58 = arith.constant 0 : index
    %c0_59 = arith.constant 0 : index
    %149 = vector.load %arg12[%c0_58, %c0_59] : memref<32x1xf32, #tpu.memory_space<vmem>>, vector<32x1xf32>
    %150 = tpu.transpose %147, [1, 0] : vector<32x32xf32> -> vector<32x32xf32>
    %c0_60 = arith.constant 0 : index
    %c0_61 = arith.constant 0 : index
    %c0_62 = arith.constant 0 : index
    %151 = vector.load %arg13[%c0_60, %c0_61, %c0_62] : memref<1x32x32xf32, #tpu.memory_space<vmem>>, vector<1x32x32xf32>
    %152 = vector.shape_cast %151 : vector<1x32x32xf32> to vector<32x32xf32>
    %153 = vector.shape_cast %150 : vector<32x32xf32> to vector<1x32x32xf32>
    tpu.vector_store %arg13[%c0_60, %c0_61, %c0_62], %153 {strides = array<i32>} : memref<1x32x32xf32, #tpu.memory_space<vmem>>, vector<1x32x32xf32>,
    %cst_63 = arith.constant dense<0.000000e+00> : vector<32x32xf32>
    %154 = tpu.matmul %148, %150, %cst_63 {dimension_numbers = #tpu.dot_dimension_numbers<[1], [0], [0], [1], [0, 0, 1, 1], [], []>} : vector<32x32xf32>, vector<32x32xf32>, vector<32x32xf32> -> vector<32x32xf32>
    %155 = vector.broadcast %149 : vector<32x1xf32> to vector<32x32xf32>
    %156 = arith.addf %154, %155 : vector<32x32xf32>
    %c0_64 = arith.constant 0 : index
    %c0_65 = arith.constant 0 : index
    %c0_66 = arith.constant 0 : index
    %157 = vector.load %arg14[%c0_64, %c0_65, %c0_66] : memref<1x32x32xf32, #tpu.memory_space<vmem>>, vector<1x32x32xf32>
    %158 = vector.shape_cast %157 : vector<1x32x32xf32> to vector<32x32xf32>
    %159 = vector.shape_cast %156 : vector<32x32xf32> to vector<1x32x32xf32>
    tpu.vector_store %arg14[%c0_64, %c0_65, %c0_66], %159 {strides = array<i32>} : memref<1x32x32xf32, #tpu.memory_space<vmem>>, vector<1x32x32xf32>,
    return
  }
  func.func @transform_0(%arg0: i32, %arg1: i32) -> (i32, i32, i32) {
    %c0_i32 = arith.constant 0 : i32
    %c0_i32_0 = arith.constant 0 : i32
    return %arg0, %arg1, %c0_i32 : i32, i32, i32
  }
  func.func @transform_1(%arg0: i32, %arg1: i32) -> (i32, i32, i32) {
    %c0_i32 = arith.constant 0 : i32
    %c0_i32_0 = arith.constant 0 : i32
    %c0_i32_1 = arith.constant 0 : i32
    return %arg0, %c0_i32, %c0_i32_0 : i32, i32, i32
  }
  func.func @transform_2(%arg0: i32, %arg1: i32) -> (i32, i32, i32) {
    %c0_i32 = arith.constant 0 : i32
    %c0_i32_0 = arith.constant 0 : i32
    return %arg0, %arg1, %c0_i32 : i32, i32, i32
  }
  func.func @transform_3(%arg0: i32, %arg1: i32) -> (i32, i32, i32) {
    %c0_i32 = arith.constant 0 : i32
    %c0_i32_0 = arith.constant 0 : i32
    %c0_i32_1 = arith.constant 0 : i32
    return %arg0, %c0_i32, %c0_i32_0 : i32, i32, i32
  }
  func.func @transform_4(%arg0: i32, %arg1: i32) -> (i32, i32) {
    %c0_i32 = arith.constant 0 : i32
    %c0_i32_0 = arith.constant 0 : i32
    %c0_i32_1 = arith.constant 0 : i32
    return %c0_i32, %c0_i32_0 : i32, i32
  }
  func.func @transform_5(%arg0: i32, %arg1: i32) -> (i32, i32) {
    %c0_i32 = arith.constant 0 : i32
    %c0_i32_0 = arith.constant 0 : i32
    %c0_i32_1 = arith.constant 0 : i32
    return %c0_i32, %c0_i32_0 : i32, i32
  }
  func.func @transform_6(%arg0: i32, %arg1: i32) -> (i32, i32) {
    %c0_i32 = arith.constant 0 : i32
    %c0_i32_0 = arith.constant 0 : i32
    %c0_i32_1 = arith.constant 0 : i32
    return %c0_i32, %c0_i32_0 : i32, i32
  }
  func.func @transform_7(%arg0: i32, %arg1: i32) -> (i32, i32) {
    %c0_i32 = arith.constant 0 : i32
    %c0_i32_0 = arith.constant 0 : i32
    %c0_i32_1 = arith.constant 0 : i32
    return %c0_i32, %c0_i32_0 : i32, i32
  }
  func.func @transform_8(%arg0: i32, %arg1: i32) -> (i32, i32) {
    %c0_i32 = arith.constant 0 : i32
    %c0_i32_0 = arith.constant 0 : i32
    %c0_i32_1 = arith.constant 0 : i32
    return %c0_i32, %c0_i32_0 : i32, i32
  }
  func.func @transform_9(%arg0: i32, %arg1: i32) -> (i32, i32) {
    %c0_i32 = arith.constant 0 : i32
    %c0_i32_0 = arith.constant 0 : i32
    %c0_i32_1 = arith.constant 0 : i32
    return %c0_i32, %c0_i32_0 : i32, i32
  }
  func.func @transform_10(%arg0: i32, %arg1: i32) -> (i32, i32) {
    %c0_i32 = arith.constant 0 : i32
    %c0_i32_0 = arith.constant 0 : i32
    %c0_i32_1 = arith.constant 0 : i32
    return %c0_i32, %c0_i32_0 : i32, i32
  }
  func.func @transform_11(%arg0: i32, %arg1: i32) -> (i32, i32, i32) {
    %c0_i32 = arith.constant 0 : i32
    %c0_i32_0 = arith.constant 0 : i32
    return %arg0, %c0_i32, %arg1 : i32, i32, i32
  }
  func.func @transform_12(%arg0: i32, %arg1: i32) -> (i32, i32, i32) {
    %c0_i32 = arith.constant 0 : i32
    %c0_i32_0 = arith.constant 0 : i32
    return %arg0, %c0_i32, %arg1 : i32, i32, i32
  }
}

</mosaic_0001>

<llo_original>
// kernel: _lambda_.4
$region0: #{_lambda_.4}
  #allocation0 [shape = 'u32[]', space=smem, size = 0x4, offset = 0x4, fixed_abs, tag = 'smem constant byte address 0x4 - core index']
  #allocation1 [shape = 'u32[144,128]{1,0:T(1,128)}', space=vmem, size = 0x12000, scoped, tag = 'internal scratch']
  %s0 = inlined_call_operand.vmem [shape: f32[2,64,3], index: 0, kind: input, shape index: {}]
  %s1 = inlined_call_operand.vmem [shape: f32[2,3,128], index: 1, kind: input, shape index: {}]
  %s2 = inlined_call_operand.vmem [shape: f32[2,64,35], index: 2, kind: input, shape index: {}]
  %s3 = inlined_call_operand.vmem [shape: f32[2,128,35], index: 3, kind: input, shape index: {}]
  %s4 = inlined_call_operand.vmem [shape: f32[35,32], index: 4, kind: input, shape index: {}]
  %s5 = inlined_call_operand.vmem [shape: f32[35,32], index: 5, kind: input, shape index: {}]
  %s6 = inlined_call_operand.vmem [shape: f32[1,32], index: 6, kind: input, shape index: {}]
  %s7 = inlined_call_operand.vmem [shape: bf16[32,32], index: 7, kind: input, shape index: {}]
  %s8 = inlined_call_operand.vmem [shape: f32[1,32], index: 8, kind: input, shape index: {}]
  %s9 = inlined_call_operand.vmem [shape: f32[2,64,32], index: 9, kind: output, shape index: {}]
  %s10 = sld [smem:[#allocation0]]
  $region69: #{_lambda_.4} parent=0
    _
  %s12 = ssub.s32 1, %s10
  %s13 = scalar_select 0, %s12, %s10
  loop: start=0, step=1, limit=4
  $region2: #{_lambda_.4} parent=0 // loop_pre_header
    _
  $region3: #{_lambda_.4} parent=0 // loop_header
    %s15 = sphi 0, %s19
    %p16 = scmp.ge.s32.totalorder %s15, 4
    %s22 = sphi 0, %s34
    %s23 = sphi 0, %s30
    %s24 = sphi 0, %s22
    %s25 = sphi 0, %s23
    %s26 = sphi 0, %s24
    %s27 = sphi 0, %s25
    %s39 = sphi 0, %s41
    %s42 = sphi 0, %s39
    %s43 = sphi 0, %s42
    %s59 = sphi 0, %s43
    %s65 = sphi 0, %s67
    %s68 = sphi 0, %s65
    %s69 = sphi 0, %s68
    %s85 = sphi 0, %s69
    %s93 = sphi 0, %s95
    %s96 = sphi 0, %s93
    %s97 = sphi 0, %s96
    %s113 = sphi 0, %s97
    %s119 = sphi 0, %s121
    %s122 = sphi 0, %s119
    %s123 = sphi 0, %s122
    %s139 = sphi 0, %s123
    %s143 = sphi 0, %s143
    %s145 = sphi 0, %s143
    %s146 = sphi 0, %s145
    %s160 = sphi 0, %s146
    %s164 = sphi 0, %s164
    %s166 = sphi 0, %s164
    %s167 = sphi 0, %s166
    %s181 = sphi 0, %s167
    %s185 = sphi 0, %s185
    %s187 = sphi 0, %s185
    %s188 = sphi 0, %s187
    %s202 = sphi 0, %s188
    %s206 = sphi 0, %s206
    %s208 = sphi 0, %s206
    %s209 = sphi 0, %s208
    %s223 = sphi 0, %s209
    %s227 = sphi 0, %s227
    %s229 = sphi 0, %s227
    %s230 = sphi 0, %s229
    %s244 = sphi 0, %s230
    %s252 = sphi 0, %s254
    %s255 = sphi 0, %s252
    %s256 = sphi 0, %s255
    %s272 = sphi 0, %s256
  $region4: #{_lambda_.4} parent=0 // loop_header_branch
    %18 = sbr.rel (%p16) target = $region8
  $region5: #{_lambda_.4} parent=0 // loop_body
    %s20 = ssub.s32 %s15, 1
    %s21 = ssub.s32 %s15, 2
    %s28 = sadd.s32 1, %s23
    %p29 = scmp.ge.s32.totalorder %s28, 1
    %s30 = scalar_select %p29, 0, %s28
    %s31 = sadd.s32 1, %s22
    %s32 = scalar_select %p29, %s31, %s22
    %p33 = scmp.ge.s32.totalorder %s32, 2
    %s34 = scalar_select %p33, 0, %s32
    %s35 = ssub.s32 %s22, %s34
    %s36 = ssub.s32 %s23, %s30
    %s37 = sor.u32 %s35, %s36
    %p38 = scmp.eq.s32.totalorder %s37, 0
    %s40 = sadd.s32 %s39, 1
    %s41 = scalar_select %p38, %s39, %s40
    %p44 = pneg %p38
    %p45 = scmp.eq.s32.totalorder %s15, 1
    %p46 = por %p44, %p45
    %p47 = scmp.ne.s32.totalorder %s39, %s42
    %p48 = scmp.eq.s32.totalorder %s15, 0
    %p49 = por %p47, %p48
    %p50 = scmp.ne.s32.totalorder %s39, %s42
    %p51 = scmp.eq.s32.totalorder %s20, 1
    %p52 = por %p50, %p51
    %p53 = scmp.ne.s32.totalorder %s42, %s43
    %p54 = scmp.eq.s32.totalorder %s20, 0
    %p55 = por %p53, %p54
    %p56 = scmp.ne.s32.totalorder %s42, %s43
    %p57 = scmp.eq.s32.totalorder %s21, 1
    %p58 = por %p56, %p57
    %p60 = scmp.ne.s32.totalorder %s43, %s59
    %p61 = scmp.eq.s32.totalorder %s21, 0
    %p62 = por %p60, %p61
    %s63 = ssub.s32 %s22, %s34
    %p64 = scmp.eq.s32.totalorder %s63, 0
    %s66 = sadd.s32 %s65, 1
    %s67 = scalar_select %p64, %s65, %s66
    %p70 = pneg %p64
    %p71 = scmp.eq.s32.totalorder %s15, 1
    %p72 = por %p70, %p71
    %p73 = scmp.ne.s32.totalorder %s65, %s68
    %p74 = scmp.eq.s32.totalorder %s15, 0
    %p75 = por %p73, %p74
    %p76 = scmp.ne.s32.totalorder %s65, %s68
    %p77 = scmp.eq.s32.totalorder %s20, 1
    %p78 = por %p76, %p77
    %p79 = scmp.ne.s32.totalorder %s68, %s69
    %p80 = scmp.eq.s32.totalorder %s20, 0
    %p81 = por %p79, %p80
    %p82 = scmp.ne.s32.totalorder %s68, %s69
    %p83 = scmp.eq.s32.totalorder %s21, 1
    %p84 = por %p82, %p83
    %p86 = scmp.ne.s32.totalorder %s69, %s85
    %p87 = scmp.eq.s32.totalorder %s21, 0
    %p88 = por %p86, %p87
    %s89 = ssub.s32 %s22, %s34
    %s90 = ssub.s32 %s23, %s30
    %s91 = sor.u32 %s89, %s90
    %p92 = scmp.eq.s32.totalorder %s91, 0
    %s94 = sadd.s32 %s93, 1
    %s95 = scalar_select %p92, %s93, %s94
    %p98 = pneg %p92
    %p99 = scmp.eq.s32.totalorder %s15, 1
    %p100 = por %p98, %p99
    %p101 = scmp.ne.s32.totalorder %s93, %s96
    %p102 = scmp.eq.s32.totalorder %s15, 0
    %p103 = por %p101, %p102
    %p104 = scmp.ne.s32.totalorder %s93, %s96
    %p105 = scmp.eq.s32.totalorder %s20, 1
    %p106 = por %p104, %p105
    %p107 = scmp.ne.s32.totalorder %s96, %s97
    %p108 = scmp.eq.s32.totalorder %s20, 0
    %p109 = por %p107, %p108
    %p110 = scmp.ne.s32.totalorder %s96, %s97
    %p111 = scmp.eq.s32.totalorder %s21, 1
    %p112 = por %p110, %p111
    %p114 = scmp.ne.s32.totalorder %s97, %s113
    %p115 = scmp.eq.s32.totalorder %s21, 0
    %p116 = por %p114, %p115
    %s117 = ssub.s32 %s22, %s34
    %p118 = scmp.eq.s32.totalorder %s117, 0
    %s120 = sadd.s32 %s119, 1
    %s121 = scalar_select %p118, %s119, %s120
    %p124 = pneg %p118
    %p125 = scmp.eq.s32.totalorder %s15, 1
    %p126 = por %p124, %p125
    %p127 = scmp.ne.s32.totalorder %s119, %s122
    %p128 = scmp.eq.s32.totalorder %s15, 0
    %p129 = por %p127, %p128
    %p130 = scmp.ne.s32.totalorder %s119, %s122
    %p131 = scmp.eq.s32.totalorder %s20, 1
    %p132 = por %p130, %p131
    %p133 = scmp.ne.s32.totalorder %s122, %s123
    %p134 = scmp.eq.s32.totalorder %s20, 0
    %p135 = por %p133, %p134
    %p136 = scmp.ne.s32.totalorder %s122, %s123
    %p137 = scmp.eq.s32.totalorder %s21, 1
    %p138 = por %p136, %p137
    %p140 = scmp.ne.s32.totalorder %s123, %s139
    %p141 = scmp.eq.s32.totalorder %s21, 0
    %p142 = por %p140, %p141
    %s144 = sadd.s32 %s143, 1
    %p147 = scmp.eq.s32.totalorder %s15, 1
    %p148 = scmp.ne.s32.totalorder %s143, %s145
    %p149 = scmp.eq.s32.totalorder %s15, 0
    %p150 = por %p148, %p149
    %p151 = scmp.ne.s32.totalorder %s143, %s145
    %p152 = scmp.eq.s32.totalorder %s20, 1
    %p153 = por %p151, %p152
    %p154 = scmp.ne.s32.totalorder %s145, %s146
    %p155 = scmp.eq.s32.totalorder %s20, 0
    %p156 = por %p154, %p155
    %p157 = scmp.ne.s32.totalorder %s145, %s146
    %p158 = scmp.eq.s32.totalorder %s21, 1
    %p159 = por %p157, %p158
    %p161 = scmp.ne.s32.totalorder %s146, %s160
    %p162 = scmp.eq.s32.totalorder %s21, 0
    %p163 = por %p161, %p162
    %s165 = sadd.s32 %s164, 1
    %p168 = scmp.eq.s32.totalorder %s15, 1
    %p169 = scmp.ne.s32.totalorder %s164, %s166
    %p170 = scmp.eq.s32.totalorder %s15, 0
    %p171 = por %p169, %p170
    %p172 = scmp.ne.s32.totalorder %s164, %s166
    %p173 = scmp.eq.s32.totalorder %s20, 1
    %p174 = por %p172, %p173
    %p175 = scmp.ne.s32.totalorder %s166, %s167
    %p176 = scmp.eq.s32.totalorder %s20, 0
    %p177 = por %p175, %p176
    %p178 = scmp.ne.s32.totalorder %s166, %s167
    %p179 = scmp.eq.s32.totalorder %s21, 1
    %p180 = por %p178, %p179
    %p182 = scmp.ne.s32.totalorder %s167, %s181
    %p183 = scmp.eq.s32.totalorder %s21, 0
    %p184 = por %p182, %p183
    %s186 = sadd.s32 %s185, 1
    %p189 = scmp.eq.s32.totalorder %s15, 1
    %p190 = scmp.ne.s32.totalorder %s185, %s187
    %p191 = scmp.eq.s32.totalorder %s15, 0
    %p192 = por %p190, %p191
    %p193 = scmp.ne.s32.totalorder %s185, %s187
    %p194 = scmp.eq.s32.totalorder %s20, 1
    %p195 = por %p193, %p194
    %p196 = scmp.ne.s32.totalorder %s187, %s188
    %p197 = scmp.eq.s32.totalorder %s20, 0
    %p198 = por %p196, %p197
    %p199 = scmp.ne.s32.totalorder %s187, %s188
    %p200 = scmp.eq.s32.totalorder %s21, 1
    %p201 = por %p199, %p200
    %p203 = scmp.ne.s32.totalorder %s188, %s202
    %p204 = scmp.eq.s32.totalorder %s21, 0
    %p205 = por %p203, %p204
    %s207 = sadd.s32 %s206, 1
    %p210 = scmp.eq.s32.totalorder %s15, 1
    %p211 = scmp.ne.s32.totalorder %s206, %s208
    %p212 = scmp.eq.s32.totalorder %s15, 0
    %p213 = por %p211, %p212
    %p214 = scmp.ne.s32.totalorder %s206, %s208
    %p215 = scmp.eq.s32.totalorder %s20, 1
    %p216 = por %p214, %p215
    %p217 = scmp.ne.s32.totalorder %s208, %s209
    %p218 = scmp.eq.s32.totalorder %s20, 0
    %p219 = por %p217, %p218
    %p220 = scmp.ne.s32.totalorder %s208, %s209
    %p221 = scmp.eq.s32.totalorder %s21, 1
    %p222 = por %p220, %p221
    %p224 = scmp.ne.s32.totalorder %s209, %s223
    %p225 = scmp.eq.s32.totalorder %s21, 0
    %p226 = por %p224, %p225
    %s228 = sadd.s32 %s227, 1
    %p231 = scmp.eq.s32.totalorder %s15, 1
    %p232 = scmp.ne.s32.totalorder %s227, %s229
    %p233 = scmp.eq.s32.totalorder %s15, 0
    %p234 = por %p232, %p233
    %p235 = scmp.ne.s32.totalorder %s227, %s229
    %p236 = scmp.eq.s32.totalorder %s20, 1
    %p237 = por %p235, %p236
    %p238 = scmp.ne.s32.totalorder %s229, %s230
    %p239 = scmp.eq.s32.totalorder %s20, 0
    %p240 = por %p238, %p239
    %p241 = scmp.ne.s32.totalorder %s229, %s230
    %p242 = scmp.eq.s32.totalorder %s21, 1
    %p243 = por %p241, %p242
    %p245 = scmp.ne.s32.totalorder %s230, %s244
    %p246 = scmp.eq.s32.totalorder %s21, 0
    %p247 = por %p245, %p246
    %s248 = ssub.s32 %s22, %s34
    %s249 = ssub.s32 %s23, %s30
    %s250 = sor.u32 %s248, %s249
    %p251 = scmp.eq.s32.totalorder %s250, 0
    %s253 = sadd.s32 %s252, 1
    %s254 = scalar_select %p251, %s252, %s253
    %p257 = pneg %p251
    %p258 = scmp.eq.s32.totalorder %s15, 1
    %p259 = por %p257, %p258
    %p260 = scmp.ne.s32.totalorder %s252, %s255
    %p261 = scmp.eq.s32.totalorder %s15, 0
    %p262 = por %p260, %p261
    %p263 = scmp.ne.s32.totalorder %s252, %s255
    %p264 = scmp.eq.s32.totalorder %s20, 1
    %p265 = por %p263, %p264
    %p266 = scmp.ne.s32.totalorder %s255, %s256
    %p267 = scmp.eq.s32.totalorder %s20, 0
    %p268 = por %p266, %p267
    %p269 = scmp.ne.s32.totalorder %s255, %s256
    %p270 = scmp.eq.s32.totalorder %s21, 1
    %p271 = por %p269, %p270
    %p273 = scmp.ne.s32.totalorder %s256, %s272
    %p274 = scmp.eq.s32.totalorder %s21, 0
    %p275 = por %p273, %p274
    %p276 = scmp.le.s32.totalorder 1, %s15
    %p277 = scmp.lt.s32.totalorder %s15, 3
    %p278 = pnand %p276, %p277
    %p279 = pneg %p278
    // Predicated region
    $region9: #{_lambda_.4} parent=5 // pred_check
      _
    $region10: #{_lambda_.4} parent=5 // pred_check_branch
      %281 = sbr.rel (%p278) target = $region12
    $region11: #{_lambda_.4} parent=5 // pred_region
      %s282 = ssub.s32 %s15, 1
      // Predicated region
      $region13: #{_lambda_.4} parent=11 // pred_check
        %p283 = pneg %p156
      $region14: #{_lambda_.4} parent=11 // pred_check_branch
        %285 = sbr.rel (%p283) target = $region16
      $region15: #{_lambda_.4} parent=11 // pred_region
        _
      $region16: #{_lambda_.4} parent=11 // pred_fallthru
        _
      // Predicated region
      $region17: #{_lambda_.4} parent=11 // pred_check
        %p286 = pneg %p177
      $region18: #{_lambda_.4} parent=11 // pred_check_branch
        %288 = sbr.rel (%p286) target = $region20
      $region19: #{_lambda_.4} parent=11 // pred_region
        _
      $region20: #{_lambda_.4} parent=11 // pred_fallthru
        _
      // Predicated region
      $region21: #{_lambda_.4} parent=11 // pred_check
        %p289 = pneg %p198
      $region22: #{_lambda_.4} parent=11 // pred_check_branch
        %291 = sbr.rel (%p289) target = $region24
      $region23: #{_lambda_.4} parent=11 // pred_region
        _
      $region24: #{_lambda_.4} parent=11 // pred_fallthru
        _
      // Predicated region
      $region25: #{_lambda_.4} parent=11 // pred_check
        %p292 = pneg %p219
      $region26: #{_lambda_.4} parent=11 // pred_check_branch
        %294 = sbr.rel (%p292) target = $region28
      $region27: #{_lambda_.4} parent=11 // pred_region
        _
      $region28: #{_lambda_.4} parent=11 // pred_fallthru
        _
      // Predicated region
      $region29: #{_lambda_.4} parent=11 // pred_check
        %p295 = pneg %p240
      $region30: #{_lambda_.4} parent=11 // pred_check_branch
        %297 = sbr.rel (%p295) target = $region32
      $region31: #{_lambda_.4} parent=11 // pred_region
        _
      $region32: #{_lambda_.4} parent=11 // pred_fallthru
        _
    $region12: #{_lambda_.4} parent=5 // pred_fallthru
      _
    %p298 = scmp.lt.s32.totalorder %s15, 2
    // Predicated region
    $region33: #{_lambda_.4} parent=5 // pred_check
      %p299 = pneg %p298
    $region34: #{_lambda_.4} parent=5 // pred_check_branch
      %301 = sbr.rel (%p299) target = $region36
    $region35: #{_lambda_.4} parent=5 // pred_region
      // Predicated region
      $region37: #{_lambda_.4} parent=35 // pred_check
        %p302 = pneg %p49
      $region38: #{_lambda_.4} parent=35 // pred_check_branch
        %304 = sbr.rel (%p302) target = $region40
      $region39: #{_lambda_.4} parent=35 // pred_region
        %s305 = smul.u32 8, %s23
        %p306 = scmp.lt.s32.totalorder %s22, 1
        %s307 = scalar_select %p306, %s22, 1
        %p308 = scmp.lt.s32.totalorder %s305, 7
        %s309 = scalar_select %p308, %s305, 7
        %s310 = smul.addr %s307, 8
        %s311 = sadd.s32 %s309, %s310
        %s312 = smul.addr %s311, 8
        %s313 = scalar_lea.vmem %s0, %s312
        %s314 = smul.u32 8, %s23
      $region40: #{_lambda_.4} parent=35 // pred_fallthru
        _
      // Predicated region
      $region41: #{_lambda_.4} parent=35 // pred_check
        %p315 = pneg %p75
      $region42: #{_lambda_.4} parent=35 // pred_check_branch
        %317 = sbr.rel (%p315) target = $region44
      $region43: #{_lambda_.4} parent=35 // pred_region
        %p318 = scmp.lt.s32.totalorder %s22, 1
        %s319 = scalar_select %p318, %s22, 1
        %s320 = smul.addr %s319, 4
        %s321 = scalar_lea.vmem %s1, %s320
      $region44: #{_lambda_.4} parent=35 // pred_fallthru
        _
      // Predicated region
      $region45: #{_lambda_.4} parent=35 // pred_check
        %p322 = pneg %p103
      $region46: #{_lambda_.4} parent=35 // pred_check_branch
        %324 = sbr.rel (%p322) target = $region48
      $region47: #{_lambda_.4} parent=35 // pred_region
        %s325 = smul.u32 8, %s23
        %p326 = scmp.lt.s32.totalorder %s22, 1
        %s327 = scalar_select %p326, %s22, 1
        %p328 = scmp.lt.s32.totalorder %s325, 7
        %s329 = scalar_select %p328, %s325, 7
        %s330 = smul.addr %s327, 8
        %s331 = sadd.s32 %s329, %s330
        %s332 = smul.addr %s331, 8
        %s333 = scalar_lea.vmem %s2, %s332
        %s334 = smul.u32 8, %s23
      $region48: #{_lambda_.4} parent=35 // pred_fallthru
        _
      // Predicated region
      $region49: #{_lambda_.4} parent=35 // pred_check
        %p335 = pneg %p129
      $region50: #{_lambda_.4} parent=35 // pred_check_branch
        %337 = sbr.rel (%p335) target = $region52
      $region51: #{_lambda_.4} parent=35 // pred_region
        %p338 = scmp.lt.s32.totalorder %s22, 1
        %s339 = scalar_select %p338, %s22, 1
        %s340 = smul.addr %s339, 16
        %s341 = smul.addr %s340, 8
        %s342 = scalar_lea.vmem %s3, %s341
      $region52: #{_lambda_.4} parent=35 // pred_fallthru
        _
    $region36: #{_lambda_.4} parent=5 // pred_fallthru
      _
    %p343 = scmp.le.s32.totalorder 1, %s15
    %p344 = scmp.lt.s32.totalorder %s15, 3
    %p345 = pnand %p343, %p344
    %p346 = pneg %p345
    // Predicated region
    $region53: #{_lambda_.4} parent=5 // pred_check
      _
    $region54: #{_lambda_.4} parent=5 // pred_check_branch
      %348 = sbr.rel (%p345) target = $region56
    $region55: #{_lambda_.4} parent=5 // pred_region
      %s349 = ssub.s32 %s15, 1
      %s350 = smul.u32 8, %s25
      %p351 = scmp.lt.s32.totalorder %s24, 1
      %s352 = scalar_select %p351, %s24, 1
      %p353 = scmp.lt.s32.totalorder %s350, 7
      %s354 = scalar_select %p353, %s350, 7
      %s355 = smul.addr %s352, 8
      %s356 = sadd.s32 %s354, %s355
      %s357 = smul.addr %s356, 8
      %s358 = scalar_lea.vmem %s0, %s357
      %p359 = pneg %p55
      %p360 = pneg %p52
      %p361 = scmp.lt.s32.totalorder %s24, 1
      %s362 = scalar_select %p361, %s24, 1
      %s363 = smul.addr %s362, 4
      %s364 = scalar_lea.vmem %s1, %s363
      %p365 = pneg %p81
      %p366 = pneg %p78
      %s367 = smul.u32 8, %s25
      %p368 = scmp.lt.s32.totalorder %s24, 1
      %s369 = scalar_select %p368, %s24, 1
      %p370 = scmp.lt.s32.totalorder %s367, 7
      %s371 = scalar_select %p370, %s367, 7
      %s372 = smul.addr %s369, 8
      %s373 = sadd.s32 %s371, %s372
      %s374 = smul.addr %s373, 8
      %s375 = scalar_lea.vmem %s2, %s374
      %p376 = pneg %p109
      %p377 = pneg %p106
      %p378 = scmp.lt.s32.totalorder %s24, 1
      %s379 = scalar_select %p378, %s24, 1
      %s380 = smul.addr %s379, 16
      %s381 = smul.addr %s380, 8
      %s382 = scalar_lea.vmem %s3, %s381
      %p383 = pneg %p135
      %p384 = pneg %p132
      %p385 = pneg %p156
      %p386 = pneg %p153
      %p387 = pneg %p177
      %p388 = pneg %p174
      %p389 = pneg %p198
      %p390 = pneg %p195
      %p391 = pneg %p219
      %p392 = pneg %p216
      %p393 = pneg %p240
      %p394 = pneg %p237
      %p395 = pneg %p268
      %p396 = pneg %p265
      %s397 = smul.u32 8, %s25
      %p398 = scmp.lt.s32.totalorder %s24, 1
      %s399 = scalar_select %p398, %s24, 1
      %p400 = scmp.lt.s32.totalorder %s397, 7
      %s401 = scalar_select %p400, %s397, 7
      %s402 = smul.addr %s399, 8
      %s403 = sadd.s32 %s401, %s402
      %s404 = smul.addr %s403, 8
      %s405 = scalar_lea.vmem %s9, %s404
      %s406 = smul.u32 8, %s25
      %p407 = scmp.lt.s32.totalorder %s24, 1
      %s408 = scalar_select %p407, %s24, 1
      %p409 = scmp.lt.s32.totalorder %s406, 7
      %s410 = scalar_select %p409, %s406, 7
      %s411 = smul.addr %s408, 8
      %s412 = sadd.s32 %s410, %s411
      %s413 = smul.addr %s412, 8
      %s414 = scalar_lea.vmem %s0, %s413
      %s415 = smul.u32 8, %s25
      %p416 = scmp.lt.s32.totalorder %s24, 1
      %s417 = scalar_select %p416, %s24, 1
      %s418 = smul.addr %s417, 4
      %s419 = scalar_lea.vmem %s1, %s418
      %s420 = smul.u32 8, %s25
      %p421 = scmp.lt.s32.totalorder %s24, 1
      %s422 = scalar_select %p421, %s24, 1
      %p423 = scmp.lt.s32.totalorder %s420, 7
      %s424 = scalar_select %p423, %s420, 7
      %s425 = smul.addr %s422, 8
      %s426 = sadd.s32 %s424, %s425
      %s427 = smul.addr %s426, 8
      %s428 = scalar_lea.vmem %s2, %s427
      %s429 = smul.u32 8, %s25
      %p430 = scmp.lt.s32.totalorder %s24, 1
      %s431 = scalar_select %p430, %s24, 1
      %s432 = smul.addr %s431, 16
      %s433 = smul.addr %s432, 8
      %s434 = scalar_lea.vmem %s3, %s433
      %s435 = smul.u32 8, %s25
      %p436 = scmp.lt.s32.totalorder %s24, 1
      %s437 = scalar_select %p436, %s24, 1
      %p438 = scmp.lt.s32.totalorder %s435, 7
      %s439 = scalar_select %p438, %s435, 7
      %s440 = smul.addr %s437, 8
      %s441 = sadd.s32 %s439, %s440
      %s442 = smul.addr %s441, 8
      %s443 = scalar_lea.vmem %s9, %s442
      %s444 = smul.u32 8, %s25
      %v446 = vld [vmem:[%s414] sm:$0xff]
      %v447 = vld [vmem:[%s414 + $0x8] sm:$0xff]
      %v448 = vld [vmem:[%s414 + $0x10] sm:$0xff]
      %v449 = vld [vmem:[%s414 + $0x18] sm:$0xff]
      %v450 = vld [vmem:[%s414 + $0x20] sm:$0xff]
      %v451 = vld [vmem:[%s414 + $0x28] sm:$0xff]
      %v452 = vld [vmem:[%s414 + $0x30] sm:$0xff]
      %v453 = vld [vmem:[%s414 + $0x38] sm:$0xff]
      %v454 = vld [vmem:[%s419] sm:$0x7]
      %v455 = vld [vmem:[%s428] sm:$0xff]
      %v456 = vld [vmem:[%s428 + $0x8] sm:$0xff]
      %v457 = vld [vmem:[%s428 + $0x10] sm:$0xff]
      %v458 = vld [vmem:[%s428 + $0x18] sm:$0xff]
      %v459 = vld [vmem:[%s428 + $0x20] sm:$0xff]
      %v460 = vld [vmem:[%s428 + $0x28] sm:$0xff]
      %v461 = vld [vmem:[%s428 + $0x30] sm:$0xff]
      %v462 = vld [vmem:[%s428 + $0x38] sm:$0xff]
      %v463 = vld [vmem:[%s434] sm:$0xff]
      %v464 = vld [vmem:[%s434 + $0x8] sm:$0xff]
      %v465 = vld [vmem:[%s434 + $0x10] sm:$0xff]
      %v466 = vld [vmem:[%s434 + $0x18] sm:$0xff]
      %v467 = vld [vmem:[%s434 + $0x20] sm:$0xff]
      %v468 = vld [vmem:[%s434 + $0x28] sm:$0xff]
      %v469 = vld [vmem:[%s434 + $0x30] sm:$0xff]
      %v470 = vld [vmem:[%s434 + $0x38] sm:$0xff]
      %v471 = vld [vmem:[%s434 + $0x40] sm:$0xff]
      %v472 = vld [vmem:[%s434 + $0x48] sm:$0xff]
      %v473 = vld [vmem:[%s434 + $0x50] sm:$0xff]
      %v474 = vld [vmem:[%s434 + $0x58] sm:$0xff]
      %v475 = vld [vmem:[%s434 + $0x60] sm:$0xff]
      %v476 = vld [vmem:[%s434 + $0x68] sm:$0xff]
      %v477 = vld [vmem:[%s434 + $0x70] sm:$0xff]
      %v478 = vld [vmem:[%s434 + $0x78] sm:$0xff]
      %480 = vset.pattern.permute.xlu0 0
      %481 = vperm.xlu0 %480, %v446
      %v482 = vpop.permute.xlu0 %481
      %485 = vset.pattern.permute.xlu0 0
      %486 = vperm.xlu0 %485, %v447
      %v487 = vpop.permute.xlu0 %486
      %490 = vset.pattern.permute.xlu0 0
      %491 = vperm.xlu0 %490, %v448
      %v492 = vpop.permute.xlu0 %491
      %495 = vset.pattern.permute.xlu0 0
      %496 = vperm.xlu0 %495, %v449
      %v497 = vpop.permute.xlu0 %496
      %500 = vset.pattern.permute.xlu0 0
      %501 = vperm.xlu0 %500, %v450
      %v502 = vpop.permute.xlu0 %501
      %505 = vset.pattern.permute.xlu0 0
      %506 = vperm.xlu0 %505, %v451
      %v507 = vpop.permute.xlu0 %506
      %510 = vset.pattern.permute.xlu0 0
      %511 = vperm.xlu0 %510, %v452
      %v512 = vpop.permute.xlu0 %511
      %515 = vset.pattern.permute.xlu0 0
      %516 = vperm.xlu0 %515, %v453
      %v517 = vpop.permute.xlu0 %516
      %v519 = vlaneseq
      %v520 = vshrl.u32 %v519, 7
      %v521 = vsub.s32 0, %v520
      %v522 = vrot.slane %v454, %v521
      %v523 = vsub.f32 %v482, %v522
      %v524 = vsub.f32 %v487, %v522
      %v525 = vsub.f32 %v492, %v522
      %v526 = vsub.f32 %v497, %v522
      %v527 = vsub.f32 %v502, %v522
      %v528 = vsub.f32 %v507, %v522
      %v529 = vsub.f32 %v512, %v522
      %v530 = vsub.f32 %v517, %v522
      %531 = vset.pattern.permute.xlu0 1
      %532 = vperm.xlu0 %531, %v446
      %v533 = vpop.permute.xlu0 %532
      %535 = vset.pattern.permute.xlu0 1
      %536 = vperm.xlu0 %535, %v447
      %v537 = vpop.permute.xlu0 %536
      %539 = vset.pattern.permute.xlu0 1
      %540 = vperm.xlu0 %539, %v448
      %v541 = vpop.permute.xlu0 %540
      %543 = vset.pattern.permute.xlu0 1
      %544 = vperm.xlu0 %543, %v449
      %v545 = vpop.permute.xlu0 %544
      %547 = vset.pattern.permute.xlu0 1
      %548 = vperm.xlu0 %547, %v450
      %v549 = vpop.permute.xlu0 %548
      %551 = vset.pattern.permute.xlu0 1
      %552 = vperm.xlu0 %551, %v451
      %v553 = vpop.permute.xlu0 %552
      %555 = vset.pattern.permute.xlu0 1
      %556 = vperm.xlu0 %555, %v452
      %v557 = vpop.permute.xlu0 %556
      %559 = vset.pattern.permute.xlu0 1
      %560 = vperm.xlu0 %559, %v453
      %v561 = vpop.permute.xlu0 %560
      %v563 = vlaneseq
      %v564 = vshrl.u32 %v563, 7
      %v565 = vsub.s32 1, %v564
      %v566 = vrot.slane %v454, %v565
      %v567 = vsub.f32 %v533, %v566
      %v568 = vsub.f32 %v537, %v566
      %v569 = vsub.f32 %v541, %v566
      %v570 = vsub.f32 %v545, %v566
      %v571 = vsub.f32 %v549, %v566
      %v572 = vsub.f32 %v553, %v566
      %v573 = vsub.f32 %v557, %v566
      %v574 = vsub.f32 %v561, %v566
      %575 = vset.pattern.permute.xlu0 2
      %576 = vperm.xlu0 %575, %v446
      %v577 = vpop.permute.xlu0 %576
      %579 = vset.pattern.permute.xlu0 2
      %580 = vperm.xlu0 %579, %v447
      %v581 = vpop.permute.xlu0 %580
      %583 = vset.pattern.permute.xlu0 2
      %584 = vperm.xlu0 %583, %v448
      %v585 = vpop.permute.xlu0 %584
      %587 = vset.pattern.permute.xlu0 2
      %588 = vperm.xlu0 %587, %v449
      %v589 = vpop.permute.xlu0 %588
      %591 = vset.pattern.permute.xlu0 2
      %592 = vperm.xlu0 %591, %v450
      %v593 = vpop.permute.xlu0 %592
      %595 = vset.pattern.permute.xlu0 2
      %596 = vperm.xlu0 %595, %v451
      %v597 = vpop.permute.xlu0 %596
      %599 = vset.pattern.permute.xlu0 2
      %600 = vperm.xlu0 %599, %v452
      %v601 = vpop.permute.xlu0 %600
      %603 = vset.pattern.permute.xlu0 2
      %604 = vperm.xlu0 %603, %v453
      %v605 = vpop.permute.xlu0 %604
      %v607 = vlaneseq
      %v608 = vshrl.u32 %v607, 7
      %v609 = vsub.s32 2, %v608
      %v610 = vrot.slane %v454, %v609
      %v611 = vsub.f32 %v577, %v610
      %v612 = vsub.f32 %v581, %v610
      %v613 = vsub.f32 %v585, %v610
      %v614 = vsub.f32 %v589, %v610
      %v615 = vsub.f32 %v593, %v610
      %v616 = vsub.f32 %v597, %v610
      %v617 = vsub.f32 %v601, %v610
      %v618 = vsub.f32 %v605, %v610
      %v619 = vmul.f32 %v523, %v523
      %v620 = vmul.f32 %v524, %v524
      %v621 = vmul.f32 %v525, %v525
      %v622 = vmul.f32 %v526, %v526
      %v623 = vmul.f32 %v527, %v527
      %v624 = vmul.f32 %v528, %v528
      %v625 = vmul.f32 %v529, %v529
      %v626 = vmul.f32 %v530, %v530
      %v627 = vmul.f32 %v567, %v567
      %v628 = vmul.f32 %v568, %v568
      %v629 = vmul.f32 %v569, %v569
      %v630 = vmul.f32 %v570, %v570
      %v631 = vmul.f32 %v571, %v571
      %v632 = vmul.f32 %v572, %v572
      %v633 = vmul.f32 %v573, %v573
      %v634 = vmul.f32 %v574, %v574
      %v635 = vadd.f32 %v619, %v627
      %v636 = vadd.f32 %v620, %v628
      %v637 = vadd.f32 %v621, %v629
      %v638 = vadd.f32 %v622, %v630
      %v639 = vadd.f32 %v623, %v631
      %v640 = vadd.f32 %v624, %v632
      %v641 = vadd.f32 %v625, %v633
      %v642 = vadd.f32 %v626, %v634
      %v643 = vmul.f32 %v611, %v611
      %v644 = vmul.f32 %v612, %v612
      %v645 = vmul.f32 %v613, %v613
      %v646 = vmul.f32 %v614, %v614
      %v647 = vmul.f32 %v615, %v615
      %v648 = vmul.f32 %v616, %v616
      %v649 = vmul.f32 %v617, %v617
      %v650 = vmul.f32 %v618, %v618
      %v651 = vadd.f32 %v635, %v643
      %v652 = vadd.f32 %v636, %v644
      %v653 = vadd.f32 %v637, %v645
      %v654 = vadd.f32 %v638, %v646
      %v655 = vadd.f32 %v639, %v647
      %v656 = vadd.f32 %v640, %v648
      %v657 = vadd.f32 %v641, %v649
      %v658 = vadd.f32 %v642, %v650
      %v659 = vlaneseq
      %v660 = vand.u32 %v659, 127
      %v669 = vand.u32 %v651, 4294967168
      %v670 = vand.u32 %v652, 4294967168
      %v671 = vand.u32 %v653, 4294967168
      %v672 = vand.u32 %v654, 4294967168
      %v673 = vand.u32 %v655, 4294967168
      %v674 = vand.u32 %v656, 4294967168
      %v675 = vand.u32 %v657, 4294967168
      %v676 = vand.u32 %v658, 4294967168
      %v677 = vor.u32 %v669, %v660
      %v678 = vor.u32 %v670, %v660
      %v679 = vor.u32 %v671, %v660
      %v680 = vor.u32 %v672, %v660
      %v681 = vor.u32 %v673, %v660
      %v682 = vor.u32 %v674, %v660
      %v683 = vor.u32 %v675, %v660
      %v684 = vor.u32 %v676, %v660
      %v685 = vand.u32 %v677, 65535
      %v686 = vshra.s32 %v677, 16
      %v687 = vcvt.s32.f32 %v685
      %v688 = vcvt.s32.f32 %v686
      %689 = vmin.xlane.f32.xlu0 %v688
      %v690 = vpop.xlane.xlu0 %689
      %vm691 = vcmp.eq.f32.partialorder %v688, %v690
      %v692 = vsel %vm691, %v687, inf
      %693 = vmin.xlane.f32.xlu0 %v692
      %v694 = vpop.xlane.xlu0 %693
      %v695 = vcvt.f32.s32 %v694
      %v696 = vcvt.f32.s32 %v690
      %v697 = vshll.u32 %v696, 16
      %v698 = vadd.s32 %v697, %v695
      %v699 = vand.u32 %v678, 65535
      %v700 = vshra.s32 %v678, 16
      %v701 = vcvt.s32.f32 %v699
      %v702 = vcvt.s32.f32 %v700
      %703 = vmin.xlane.f32.xlu0 %v702
      %v704 = vpop.xlane.xlu0 %703
      %vm705 = vcmp.eq.f32.partialorder %v702, %v704
      %v706 = vsel %vm705, %v701, inf
      %707 = vmin.xlane.f32.xlu0 %v706
      %v708 = vpop.xlane.xlu0 %707
      %v709 = vcvt.f32.s32 %v708
      %v710 = vcvt.f32.s32 %v704
      %v711 = vshll.u32 %v710, 16
      %v712 = vadd.s32 %v711, %v709
      %v713 = vand.u32 %v679, 65535
      %v714 = vshra.s32 %v679, 16
      %v715 = vcvt.s32.f32 %v713
      %v716 = vcvt.s32.f32 %v714
      %717 = vmin.xlane.f32.xlu0 %v716
      %v718 = vpop.xlane.xlu0 %717
      %vm719 = vcmp.eq.f32.partialorder %v716, %v718
      %v720 = vsel %vm719, %v715, inf
      %721 = vmin.xlane.f32.xlu0 %v720
      %v722 = vpop.xlane.xlu0 %721
      %v723 = vcvt.f32.s32 %v722
      %v724 = vcvt.f32.s32 %v718
      %v725 = vshll.u32 %v724, 16
      %v726 = vadd.s32 %v725, %v723
      %v727 = vand.u32 %v680, 65535
      %v728 = vshra.s32 %v680, 16
      %v729 = vcvt.s32.f32 %v727
      %v730 = vcvt.s32.f32 %v728
      %731 = vmin.xlane.f32.xlu0 %v730
      %v732 = vpop.xlane.xlu0 %731
      %vm733 = vcmp.eq.f32.partialorder %v730, %v732
      %v734 = vsel %vm733, %v729, inf
      %735 = vmin.xlane.f32.xlu0 %v734
      %v736 = vpop.xlane.xlu0 %735
      %v737 = vcvt.f32.s32 %v736
      %v738 = vcvt.f32.s32 %v732
      %v739 = vshll.u32 %v738, 16
      %v740 = vadd.s32 %v739, %v737
      %v741 = vand.u32 %v681, 65535
      %v742 = vshra.s32 %v681, 16
      %v743 = vcvt.s32.f32 %v741
      %v744 = vcvt.s32.f32 %v742
      %745 = vmin.xlane.f32.xlu0 %v744
      %v746 = vpop.xlane.xlu0 %745
      %vm747 = vcmp.eq.f32.partialorder %v744, %v746
      %v748 = vsel %vm747, %v743, inf
      %749 = vmin.xlane.f32.xlu0 %v748
      %v750 = vpop.xlane.xlu0 %749
      %v751 = vcvt.f32.s32 %v750
      %v752 = vcvt.f32.s32 %v746
      %v753 = vshll.u32 %v752, 16
      %v754 = vadd.s32 %v753, %v751
      %v755 = vand.u32 %v682, 65535
      %v756 = vshra.s32 %v682, 16
      %v757 = vcvt.s32.f32 %v755
      %v758 = vcvt.s32.f32 %v756
      %759 = vmin.xlane.f32.xlu0 %v758
      %v760 = vpop.xlane.xlu0 %759
      %vm761 = vcmp.eq.f32.partialorder %v758, %v760
      %v762 = vsel %vm761, %v757, inf
      %763 = vmin.xlane.f32.xlu0 %v762
      %v764 = vpop.xlane.xlu0 %763
      %v765 = vcvt.f32.s32 %v764
      %v766 = vcvt.f32.s32 %v760
      %v767 = vshll.u32 %v766, 16
      %v768 = vadd.s32 %v767, %v765
      %v769 = vand.u32 %v683, 65535
      %v770 = vshra.s32 %v683, 16
      %v771 = vcvt.s32.f32 %v769
      %v772 = vcvt.s32.f32 %v770
      %773 = vmin.xlane.f32.xlu0 %v772
      %v774 = vpop.xlane.xlu0 %773
      %vm775 = vcmp.eq.f32.partialorder %v772, %v774
      %v776 = vsel %vm775, %v771, inf
      %777 = vmin.xlane.f32.xlu0 %v776
      %v778 = vpop.xlane.xlu0 %777
      %v779 = vcvt.f32.s32 %v778
      %v780 = vcvt.f32.s32 %v774
      %v781 = vshll.u32 %v780, 16
      %v782 = vadd.s32 %v781, %v779
      %v783 = vand.u32 %v684, 65535
      %v784 = vshra.s32 %v684, 16
      %v785 = vcvt.s32.f32 %v783
      %v786 = vcvt.s32.f32 %v784
      %787 = vmin.xlane.f32.xlu0 %v786
      %v788 = vpop.xlane.xlu0 %787
      %vm789 = vcmp.eq.f32.partialorder %v786, %v788
      %v790 = vsel %vm789, %v785, inf
      %791 = vmin.xlane.f32.xlu0 %v790
      %v792 = vpop.xlane.xlu0 %791
      %v793 = vcvt.f32.s32 %v792
      %v794 = vcvt.f32.s32 %v788
      %v795 = vshll.u32 %v794, 16
      %v796 = vadd.s32 %v795, %v793
      %vm797 = vcmp.eq.s32.totalorder %v677, %v698
      %vm798 = vcmp.eq.s32.totalorder %v678, %v712
      %vm799 = vcmp.eq.s32.totalorder %v679, %v726
      %vm800 = vcmp.eq.s32.totalorder %v680, %v740
      %vm801 = vcmp.eq.s32.totalorder %v681, %v754
      %vm802 = vcmp.eq.s32.totalorder %v682, %v768
      %vm803 = vcmp.eq.s32.totalorder %v683, %v782
      %vm804 = vcmp.eq.s32.totalorder %v684, %v796
      %v805 = vsel %vm797, 1.0, 0.0
      %v806 = vsel %vm798, 1.0, 0.0
      %v807 = vsel %vm799, 1.0, 0.0
      %v808 = vsel %vm800, 1.0, 0.0
      %v809 = vsel %vm801, 1.0, 0.0
      %v810 = vsel %vm802, 1.0, 0.0
      %v811 = vsel %vm803, 1.0, 0.0
      %v812 = vsel %vm804, 1.0, 0.0
      %v813 = vpack.c.bf16 %v806, %v805
      %v814 = vpack.c.bf16 %v808, %v807
      %v815 = vpack.c.bf16 %v810, %v809
      %v816 = vpack.c.bf16 %v812, %v811
      %v817 = vsel %vm797, 2147483647, %v677
      %v818 = vsel %vm798, 2147483647, %v678
      %v819 = vsel %vm799, 2147483647, %v679
      %v820 = vsel %vm800, 2147483647, %v680
      %v821 = vsel %vm801, 2147483647, %v681
      %v822 = vsel %vm802, 2147483647, %v682
      %v823 = vsel %vm803, 2147483647, %v683
      %v824 = vsel %vm804, 2147483647, %v684
      %v825 = vand.u32 %v817, 65535
      %v826 = vshra.s32 %v817, 16
      %v827 = vcvt.s32.f32 %v825
      %v828 = vcvt.s32.f32 %v826
      %829 = vmin.xlane.f32.xlu0 %v828
      %v830 = vpop.xlane.xlu0 %829
      %vm831 = vcmp.eq.f32.partialorder %v828, %v830
      %v832 = vsel %vm831, %v827, inf
      %833 = vmin.xlane.f32.xlu0 %v832
      %v834 = vpop.xlane.xlu0 %833
      %v835 = vcvt.f32.s32 %v834
      %v836 = vcvt.f32.s32 %v830
      %v837 = vshll.u32 %v836, 16
      %v838 = vadd.s32 %v837, %v835
      %v839 = vand.u32 %v818, 65535
      %v840 = vshra.s32 %v818, 16
      %v841 = vcvt.s32.f32 %v839
      %v842 = vcvt.s32.f32 %v840
      %843 = vmin.xlane.f32.xlu0 %v842
      %v844 = vpop.xlane.xlu0 %843
      %vm845 = vcmp.eq.f32.partialorder %v842, %v844
      %v846 = vsel %vm845, %v841, inf
      %847 = vmin.xlane.f32.xlu0 %v846
      %v848 = vpop.xlane.xlu0 %847
      %v849 = vcvt.f32.s32 %v848
      %v850 = vcvt.f32.s32 %v844
      %v851 = vshll.u32 %v850, 16
      %v852 = vadd.s32 %v851, %v849
      %v853 = vand.u32 %v819, 65535
      %v854 = vshra.s32 %v819, 16
      %v855 = vcvt.s32.f32 %v853
      %v856 = vcvt.s32.f32 %v854
      %857 = vmin.xlane.f32.xlu0 %v856
      %v858 = vpop.xlane.xlu0 %857
      %vm859 = vcmp.eq.f32.partialorder %v856, %v858
      %v860 = vsel %vm859, %v855, inf
      %861 = vmin.xlane.f32.xlu0 %v860
      %v862 = vpop.xlane.xlu0 %861
      %v863 = vcvt.f32.s32 %v862
      %v864 = vcvt.f32.s32 %v858
      %v865 = vshll.u32 %v864, 16
      %v866 = vadd.s32 %v865, %v863
      %v867 = vand.u32 %v820, 65535
      %v868 = vshra.s32 %v820, 16
      %v869 = vcvt.s32.f32 %v867
      %v870 = vcvt.s32.f32 %v868
      %871 = vmin.xlane.f32.xlu0 %v870
      %v872 = vpop.xlane.xlu0 %871
      %vm873 = vcmp.eq.f32.partialorder %v870, %v872
      %v874 = vsel %vm873, %v869, inf
      %875 = vmin.xlane.f32.xlu0 %v874
      %v876 = vpop.xlane.xlu0 %875
      %v877 = vcvt.f32.s32 %v876
      %v878 = vcvt.f32.s32 %v872
      %v879 = vshll.u32 %v878, 16
      %v880 = vadd.s32 %v879, %v877
      %v881 = vand.u32 %v821, 65535
      %v882 = vshra.s32 %v821, 16
      %v883 = vcvt.s32.f32 %v881
      %v884 = vcvt.s32.f32 %v882
      %885 = vmin.xlane.f32.xlu0 %v884
      %v886 = vpop.xlane.xlu0 %885
      %vm887 = vcmp.eq.f32.partialorder %v884, %v886
      %v888 = vsel %vm887, %v883, inf
      %889 = vmin.xlane.f32.xlu0 %v888
      %v890 = vpop.xlane.xlu0 %889
      %v891 = vcvt.f32.s32 %v890
      %v892 = vcvt.f32.s32 %v886
      %v893 = vshll.u32 %v892, 16
      %v894 = vadd.s32 %v893, %v891
      %v895 = vand.u32 %v822, 65535
      %v896 = vshra.s32 %v822, 16
      %v897 = vcvt.s32.f32 %v895
      %v898 = vcvt.s32.f32 %v896
      %899 = vmin.xlane.f32.xlu0 %v898
      %v900 = vpop.xlane.xlu0 %899
      %vm901 = vcmp.eq.f32.partialorder %v898, %v900
      %v902 = vsel %vm901, %v897, inf
      %903 = vmin.xlane.f32.xlu0 %v902
      %v904 = vpop.xlane.xlu0 %903
      %v905 = vcvt.f32.s32 %v904
      %v906 = vcvt.f32.s32 %v900
      %v907 = vshll.u32 %v906, 16
      %v908 = vadd.s32 %v907, %v905
      %v909 = vand.u32 %v823, 65535
      %v910 = vshra.s32 %v823, 16
      %v911 = vcvt.s32.f32 %v909
      %v912 = vcvt.s32.f32 %v910
      %913 = vmin.xlane.f32.xlu0 %v912
      %v914 = vpop.xlane.xlu0 %913
      %vm915 = vcmp.eq.f32.partialorder %v912, %v914
      %v916 = vsel %vm915, %v911, inf
      %917 = vmin.xlane.f32.xlu0 %v916
      %v918 = vpop.xlane.xlu0 %917
      %v919 = vcvt.f32.s32 %v918
      %v920 = vcvt.f32.s32 %v914
      %v921 = vshll.u32 %v920, 16
      %v922 = vadd.s32 %v921, %v919
      %v923 = vand.u32 %v824, 65535
      %v924 = vshra.s32 %v824, 16
      %v925 = vcvt.s32.f32 %v923
      %v926 = vcvt.s32.f32 %v924
      %927 = vmin.xlane.f32.xlu0 %v926
      %v928 = vpop.xlane.xlu0 %927
      %vm929 = vcmp.eq.f32.partialorder %v926, %v928
      %v930 = vsel %vm929, %v925, inf
      %931 = vmin.xlane.f32.xlu0 %v930
      %v932 = vpop.xlane.xlu0 %931
      %v933 = vcvt.f32.s32 %v932
      %v934 = vcvt.f32.s32 %v928
      %v935 = vshll.u32 %v934, 16
      %v936 = vadd.s32 %v935, %v933
      %vm937 = vcmp.eq.s32.totalorder %v817, %v838
      %vm938 = vcmp.eq.s32.totalorder %v818, %v852
      %vm939 = vcmp.eq.s32.totalorder %v819, %v866
      %vm940 = vcmp.eq.s32.totalorder %v820, %v880
      %vm941 = vcmp.eq.s32.totalorder %v821, %v894
      %vm942 = vcmp.eq.s32.totalorder %v822, %v908
      %vm943 = vcmp.eq.s32.totalorder %v823, %v922
      %vm944 = vcmp.eq.s32.totalorder %v824, %v936
      %v945 = vsel %vm937, 1.0, 0.0
      %v946 = vsel %vm938, 1.0, 0.0
      %v947 = vsel %vm939, 1.0, 0.0
      %v948 = vsel %vm940, 1.0, 0.0
      %v949 = vsel %vm941, 1.0, 0.0
      %v950 = vsel %vm942, 1.0, 0.0
      %v951 = vsel %vm943, 1.0, 0.0
      %v952 = vsel %vm944, 1.0, 0.0
      %v953 = vpack.c.bf16 %v946, %v945
      %v954 = vpack.c.bf16 %v948, %v947
      %v955 = vpack.c.bf16 %v950, %v949
      %v956 = vpack.c.bf16 %v952, %v951
      %v957 = vsel %vm937, 2147483647, %v817
      %v958 = vsel %vm938, 2147483647, %v818
      %v959 = vsel %vm939, 2147483647, %v819
      %v960 = vsel %vm940, 2147483647, %v820
      %v961 = vsel %vm941, 2147483647, %v821
      %v962 = vsel %vm942, 2147483647, %v822
      %v963 = vsel %vm943, 2147483647, %v823
      %v964 = vsel %vm944, 2147483647, %v824
      %v965 = vand.u32 %v957, 65535
      %v966 = vshra.s32 %v957, 16
      %v967 = vcvt.s32.f32 %v965
      %v968 = vcvt.s32.f32 %v966
      %969 = vmin.xlane.f32.xlu0 %v968
      %v970 = vpop.xlane.xlu0 %969
      %vm971 = vcmp.eq.f32.partialorder %v968, %v970
      %v972 = vsel %vm971, %v967, inf
      %973 = vmin.xlane.f32.xlu0 %v972
      %v974 = vpop.xlane.xlu0 %973
      %v975 = vcvt.f32.s32 %v974
      %v976 = vcvt.f32.s32 %v970
      %v977 = vshll.u32 %v976, 16
      %v978 = vadd.s32 %v977, %v975
      %v979 = vand.u32 %v958, 65535
      %v980 = vshra.s32 %v958, 16
      %v981 = vcvt.s32.f32 %v979
      %v982 = vcvt.s32.f32 %v980
      %983 = vmin.xlane.f32.xlu0 %v982
      %v984 = vpop.xlane.xlu0 %983
      %vm985 = vcmp.eq.f32.partialorder %v982, %v984
      %v986 = vsel %vm985, %v981, inf
      %987 = vmin.xlane.f32.xlu0 %v986
      %v988 = vpop.xlane.xlu0 %987
      %v989 = vcvt.f32.s32 %v988
      %v990 = vcvt.f32.s32 %v984
      %v991 = vshll.u32 %v990, 16
      %v992 = vadd.s32 %v991, %v989
      %v993 = vand.u32 %v959, 65535
      %v994 = vshra.s32 %v959, 16
      %v995 = vcvt.s32.f32 %v993
      %v996 = vcvt.s32.f32 %v994
      %997 = vmin.xlane.f32.xlu0 %v996
      %v998 = vpop.xlane.xlu0 %997
      %vm999 = vcmp.eq.f32.partialorder %v996, %v998
      %v1000 = vsel %vm999, %v995, inf
      %1001 = vmin.xlane.f32.xlu0 %v1000
      %v1002 = vpop.xlane.xlu0 %1001
      %v1003 = vcvt.f32.s32 %v1002
      %v1004 = vcvt.f32.s32 %v998
      %v1005 = vshll.u32 %v1004, 16
      %v1006 = vadd.s32 %v1005, %v1003
      %v1007 = vand.u32 %v960, 65535
      %v1008 = vshra.s32 %v960, 16
      %v1009 = vcvt.s32.f32 %v1007
      %v1010 = vcvt.s32.f32 %v1008
      %1011 = vmin.xlane.f32.xlu0 %v1010
      %v1012 = vpop.xlane.xlu0 %1011
      %vm1013 = vcmp.eq.f32.partialorder %v1010, %v1012
      %v1014 = vsel %vm1013, %v1009, inf
      %1015 = vmin.xlane.f32.xlu0 %v1014
      %v1016 = vpop.xlane.xlu0 %1015
      %v1017 = vcvt.f32.s32 %v1016
      %v1018 = vcvt.f32.s32 %v1012
      %v1019 = vshll.u32 %v1018, 16
      %v1020 = vadd.s32 %v1019, %v1017
      %v1021 = vand.u32 %v961, 65535
      %v1022 = vshra.s32 %v961, 16
      %v1023 = vcvt.s32.f32 %v1021
      %v1024 = vcvt.s32.f32 %v1022
      %1025 = vmin.xlane.f32.xlu0 %v1024
      %v1026 = vpop.xlane.xlu0 %1025
      %vm1027 = vcmp.eq.f32.partialorder %v1024, %v1026
      %v1028 = vsel %vm1027, %v1023, inf
      %1029 = vmin.xlane.f32.xlu0 %v1028
      %v1030 = vpop.xlane.xlu0 %1029
      %v1031 = vcvt.f32.s32 %v1030
      %v1032 = vcvt.f32.s32 %v1026
      %v1033 = vshll.u32 %v1032, 16
      %v1034 = vadd.s32 %v1033, %v1031
      %v1035 = vand.u32 %v962, 65535
      %v1036 = vshra.s32 %v962, 16
      %v1037 = vcvt.s32.f32 %v1035
      %v1038 = vcvt.s32.f32 %v1036
      %1039 = vmin.xlane.f32.xlu0 %v1038
      %v1040 = vpop.xlane.xlu0 %1039
      %vm1041 = vcmp.eq.f32.partialorder %v1038, %v1040
      %v1042 = vsel %vm1041, %v1037, inf
      %1043 = vmin.xlane.f32.xlu0 %v1042
      %v1044 = vpop.xlane.xlu0 %1043
      %v1045 = vcvt.f32.s32 %v1044
      %v1046 = vcvt.f32.s32 %v1040
      %v1047 = vshll.u32 %v1046, 16
      %v1048 = vadd.s32 %v1047, %v1045
      %v1049 = vand.u32 %v963, 65535
      %v1050 = vshra.s32 %v963, 16
      %v1051 = vcvt.s32.f32 %v1049
      %v1052 = vcvt.s32.f32 %v1050
      %1053 = vmin.xlane.f32.xlu0 %v1052
      %v1054 = vpop.xlane.xlu0 %1053
      %vm1055 = vcmp.eq.f32.partialorder %v1052, %v1054
      %v1056 = vsel %vm1055, %v1051, inf
      %1057 = vmin.xlane.f32.xlu0 %v1056
      %v1058 = vpop.xlane.xlu0 %1057
      %v1059 = vcvt.f32.s32 %v1058
      %v1060 = vcvt.f32.s32 %v1054
      %v1061 = vshll.u32 %v1060, 16
      %v1062 = vadd.s32 %v1061, %v1059
      %v1063 = vand.u32 %v964, 65535
      %v1064 = vshra.s32 %v964, 16
      %v1065 = vcvt.s32.f32 %v1063
      %v1066 = vcvt.s32.f32 %v1064
      %1067 = vmin.xlane.f32.xlu0 %v1066
      %v1068 = vpop.xlane.xlu0 %1067
      %vm1069 = vcmp.eq.f32.partialorder %v1066, %v1068
      %v1070 = vsel %vm1069, %v1065, inf
      %1071 = vmin.xlane.f32.xlu0 %v1070
      %v1072 = vpop.xlane.xlu0 %1071
      %v1073 = vcvt.f32.s32 %v1072
      %v1074 = vcvt.f32.s32 %v1068
      %v1075 = vshll.u32 %v1074, 16
      %v1076 = vadd.s32 %v1075, %v1073
      %vm1077 = vcmp.eq.s32.totalorder %v957, %v978
      %vm1078 = vcmp.eq.s32.totalorder %v958, %v992
      %vm1079 = vcmp.eq.s32.totalorder %v959, %v1006
      %vm1080 = vcmp.eq.s32.totalorder %v960, %v1020
      %vm1081 = vcmp.eq.s32.totalorder %v961, %v1034
      %vm1082 = vcmp.eq.s32.totalorder %v962, %v1048
      %vm1083 = vcmp.eq.s32.totalorder %v963, %v1062
      %vm1084 = vcmp.eq.s32.totalorder %v964, %v1076
      %v1085 = vsel %vm1077, 1.0, 0.0
      %v1086 = vsel %vm1078, 1.0, 0.0
      %v1087 = vsel %vm1079, 1.0, 0.0
      %v1088 = vsel %vm1080, 1.0, 0.0
      %v1089 = vsel %vm1081, 1.0, 0.0
      %v1090 = vsel %vm1082, 1.0, 0.0
      %v1091 = vsel %vm1083, 1.0, 0.0
      %v1092 = vsel %vm1084, 1.0, 0.0
      %v1093 = vpack.c.bf16 %v1086, %v1085
      %v1094 = vpack.c.bf16 %v1088, %v1087
      %v1095 = vpack.c.bf16 %v1090, %v1089
      %v1096 = vpack.c.bf16 %v1092, %v1091
      %v1097 = vsel %vm1077, 2147483647, %v957
      %v1098 = vsel %vm1078, 2147483647, %v958
      %v1099 = vsel %vm1079, 2147483647, %v959
      %v1100 = vsel %vm1080, 2147483647, %v960
      %v1101 = vsel %vm1081, 2147483647, %v961
      %v1102 = vsel %vm1082, 2147483647, %v962
      %v1103 = vsel %vm1083, 2147483647, %v963
      %v1104 = vsel %vm1084, 2147483647, %v964
      %v1105 = vand.u32 %v1097, 65535
      %v1106 = vshra.s32 %v1097, 16
      %v1107 = vcvt.s32.f32 %v1105
      %v1108 = vcvt.s32.f32 %v1106
      %1109 = vmin.xlane.f32.xlu0 %v1108
      %v1110 = vpop.xlane.xlu0 %1109
      %vm1111 = vcmp.eq.f32.partialorder %v1108, %v1110
      %v1112 = vsel %vm1111, %v1107, inf
      %1113 = vmin.xlane.f32.xlu0 %v1112
      %v1114 = vpop.xlane.xlu0 %1113
      %v1115 = vcvt.f32.s32 %v1114
      %v1116 = vcvt.f32.s32 %v1110
      %v1117 = vshll.u32 %v1116, 16
      %v1118 = vadd.s32 %v1117, %v1115
      %v1119 = vand.u32 %v1098, 65535
      %v1120 = vshra.s32 %v1098, 16
      %v1121 = vcvt.s32.f32 %v1119
      %v1122 = vcvt.s32.f32 %v1120
      %1123 = vmin.xlane.f32.xlu0 %v1122
      %v1124 = vpop.xlane.xlu0 %1123
      %vm1125 = vcmp.eq.f32.partialorder %v1122, %v1124
      %v1126 = vsel %vm1125, %v1121, inf
      %1127 = vmin.xlane.f32.xlu0 %v1126
      %v1128 = vpop.xlane.xlu0 %1127
      %v1129 = vcvt.f32.s32 %v1128
      %v1130 = vcvt.f32.s32 %v1124
      %v1131 = vshll.u32 %v1130, 16
      %v1132 = vadd.s32 %v1131, %v1129
      %v1133 = vand.u32 %v1099, 65535
      %v1134 = vshra.s32 %v1099, 16
      %v1135 = vcvt.s32.f32 %v1133
      %v1136 = vcvt.s32.f32 %v1134
      %1137 = vmin.xlane.f32.xlu0 %v1136
      %v1138 = vpop.xlane.xlu0 %1137
      %vm1139 = vcmp.eq.f32.partialorder %v1136, %v1138
      %v1140 = vsel %vm1139, %v1135, inf
      %1141 = vmin.xlane.f32.xlu0 %v1140
      %v1142 = vpop.xlane.xlu0 %1141
      %v1143 = vcvt.f32.s32 %v1142
      %v1144 = vcvt.f32.s32 %v1138
      %v1145 = vshll.u32 %v1144, 16
      %v1146 = vadd.s32 %v1145, %v1143
      %v1147 = vand.u32 %v1100, 65535
      %v1148 = vshra.s32 %v1100, 16
      %v1149 = vcvt.s32.f32 %v1147
      %v1150 = vcvt.s32.f32 %v1148
      %1151 = vmin.xlane.f32.xlu0 %v1150
      %v1152 = vpop.xlane.xlu0 %1151
      %vm1153 = vcmp.eq.f32.partialorder %v1150, %v1152
      %v1154 = vsel %vm1153, %v1149, inf
      %1155 = vmin.xlane.f32.xlu0 %v1154
      %v1156 = vpop.xlane.xlu0 %1155
      %v1157 = vcvt.f32.s32 %v1156
      %v1158 = vcvt.f32.s32 %v1152
      %v1159 = vshll.u32 %v1158, 16
      %v1160 = vadd.s32 %v1159, %v1157
      %v1161 = vand.u32 %v1101, 65535
      %v1162 = vshra.s32 %v1101, 16
      %v1163 = vcvt.s32.f32 %v1161
      %v1164 = vcvt.s32.f32 %v1162
      %1165 = vmin.xlane.f32.xlu0 %v1164
      %v1166 = vpop.xlane.xlu0 %1165
      %vm1167 = vcmp.eq.f32.partialorder %v1164, %v1166
      %v1168 = vsel %vm1167, %v1163, inf
      %1169 = vmin.xlane.f32.xlu0 %v1168
      %v1170 = vpop.xlane.xlu0 %1169
      %v1171 = vcvt.f32.s32 %v1170
      %v1172 = vcvt.f32.s32 %v1166
      %v1173 = vshll.u32 %v1172, 16
      %v1174 = vadd.s32 %v1173, %v1171
      %v1175 = vand.u32 %v1102, 65535
      %v1176 = vshra.s32 %v1102, 16
      %v1177 = vcvt.s32.f32 %v1175
      %v1178 = vcvt.s32.f32 %v1176
      %1179 = vmin.xlane.f32.xlu0 %v1178
      %v1180 = vpop.xlane.xlu0 %1179
      %vm1181 = vcmp.eq.f32.partialorder %v1178, %v1180
      %v1182 = vsel %vm1181, %v1177, inf
      %1183 = vmin.xlane.f32.xlu0 %v1182
      %v1184 = vpop.xlane.xlu0 %1183
      %v1185 = vcvt.f32.s32 %v1184
      %v1186 = vcvt.f32.s32 %v1180
      %v1187 = vshll.u32 %v1186, 16
      %v1188 = vadd.s32 %v1187, %v1185
      %v1189 = vand.u32 %v1103, 65535
      %v1190 = vshra.s32 %v1103, 16
      %v1191 = vcvt.s32.f32 %v1189
      %v1192 = vcvt.s32.f32 %v1190
      %1193 = vmin.xlane.f32.xlu0 %v1192
      %v1194 = vpop.xlane.xlu0 %1193
      %vm1195 = vcmp.eq.f32.partialorder %v1192, %v1194
      %v1196 = vsel %vm1195, %v1191, inf
      %1197 = vmin.xlane.f32.xlu0 %v1196
      %v1198 = vpop.xlane.xlu0 %1197
      %v1199 = vcvt.f32.s32 %v1198
      %v1200 = vcvt.f32.s32 %v1194
      %v1201 = vshll.u32 %v1200, 16
      %v1202 = vadd.s32 %v1201, %v1199
      %v1203 = vand.u32 %v1104, 65535
      %v1204 = vshra.s32 %v1104, 16
      %v1205 = vcvt.s32.f32 %v1203
      %v1206 = vcvt.s32.f32 %v1204
      %1207 = vmin.xlane.f32.xlu0 %v1206
      %v1208 = vpop.xlane.xlu0 %1207
      %vm1209 = vcmp.eq.f32.partialorder %v1206, %v1208
      %v1210 = vsel %vm1209, %v1205, inf
      %1211 = vmin.xlane.f32.xlu0 %v1210
      %v1212 = vpop.xlane.xlu0 %1211
      %v1213 = vcvt.f32.s32 %v1212
      %v1214 = vcvt.f32.s32 %v1208
      %v1215 = vshll.u32 %v1214, 16
      %v1216 = vadd.s32 %v1215, %v1213
      %vm1217 = vcmp.eq.s32.totalorder %v1097, %v1118
      %vm1218 = vcmp.eq.s32.totalorder %v1098, %v1132
      %vm1219 = vcmp.eq.s32.totalorder %v1099, %v1146
      %vm1220 = vcmp.eq.s32.totalorder %v1100, %v1160
      %vm1221 = vcmp.eq.s32.totalorder %v1101, %v1174
      %vm1222 = vcmp.eq.s32.totalorder %v1102, %v1188
      %vm1223 = vcmp.eq.s32.totalorder %v1103, %v1202
      %vm1224 = vcmp.eq.s32.totalorder %v1104, %v1216
      %v1225 = vsel %vm1217, 1.0, 0.0
      %v1226 = vsel %vm1218, 1.0, 0.0
      %v1227 = vsel %vm1219, 1.0, 0.0
      %v1228 = vsel %vm1220, 1.0, 0.0
      %v1229 = vsel %vm1221, 1.0, 0.0
      %v1230 = vsel %vm1222, 1.0, 0.0
      %v1231 = vsel %vm1223, 1.0, 0.0
      %v1232 = vsel %vm1224, 1.0, 0.0
      %v1233 = vpack.c.bf16 %v1226, %v1225
      %v1234 = vpack.c.bf16 %v1228, %v1227
      %v1235 = vpack.c.bf16 %v1230, %v1229
      %v1236 = vpack.c.bf16 %v1232, %v1231
      %v1237 = vsel %vm1217, 2147483647, %v1097
      %v1238 = vsel %vm1218, 2147483647, %v1098
      %v1239 = vsel %vm1219, 2147483647, %v1099
      %v1240 = vsel %vm1220, 2147483647, %v1100
      %v1241 = vsel %vm1221, 2147483647, %v1101
      %v1242 = vsel %vm1222, 2147483647, %v1102
      %v1243 = vsel %vm1223, 2147483647, %v1103
      %v1244 = vsel %vm1224, 2147483647, %v1104
      %v1245 = vand.u32 %v1237, 65535
      %v1246 = vshra.s32 %v1237, 16
      %v1247 = vcvt.s32.f32 %v1245
      %v1248 = vcvt.s32.f32 %v1246
      %1249 = vmin.xlane.f32.xlu0 %v1248
      %v1250 = vpop.xlane.xlu0 %1249
      %vm1251 = vcmp.eq.f32.partialorder %v1248, %v1250
      %v1252 = vsel %vm1251, %v1247, inf
      %1253 = vmin.xlane.f32.xlu0 %v1252
      %v1254 = vpop.xlane.xlu0 %1253
      %v1255 = vcvt.f32.s32 %v1254
      %v1256 = vcvt.f32.s32 %v1250
      %v1257 = vshll.u32 %v1256, 16
      %v1258 = vadd.s32 %v1257, %v1255
      %v1259 = vand.u32 %v1238, 65535
      %v1260 = vshra.s32 %v1238, 16
      %v1261 = vcvt.s32.f32 %v1259
      %v1262 = vcvt.s32.f32 %v1260
      %1263 = vmin.xlane.f32.xlu0 %v1262
      %v1264 = vpop.xlane.xlu0 %1263
      %vm1265 = vcmp.eq.f32.partialorder %v1262, %v1264
      %v1266 = vsel %vm1265, %v1261, inf
      %1267 = vmin.xlane.f32.xlu0 %v1266
      %v1268 = vpop.xlane.xlu0 %1267
      %v1269 = vcvt.f32.s32 %v1268
      %v1270 = vcvt.f32.s32 %v1264
      %v1271 = vshll.u32 %v1270, 16
      %v1272 = vadd.s32 %v1271, %v1269
      %v1273 = vand.u32 %v1239, 65535
      %v1274 = vshra.s32 %v1239, 16
      %v1275 = vcvt.s32.f32 %v1273
      %v1276 = vcvt.s32.f32 %v1274
      %1277 = vmin.xlane.f32.xlu0 %v1276
      %v1278 = vpop.xlane.xlu0 %1277
      %vm1279 = vcmp.eq.f32.partialorder %v1276, %v1278
      %v1280 = vsel %vm1279, %v1275, inf
      %1281 = vmin.xlane.f32.xlu0 %v1280
      %v1282 = vpop.xlane.xlu0 %1281
      %v1283 = vcvt.f32.s32 %v1282
      %v1284 = vcvt.f32.s32 %v1278
      %v1285 = vshll.u32 %v1284, 16
      %v1286 = vadd.s32 %v1285, %v1283
      %v1287 = vand.u32 %v1240, 65535
      %v1288 = vshra.s32 %v1240, 16
      %v1289 = vcvt.s32.f32 %v1287
      %v1290 = vcvt.s32.f32 %v1288
      %1291 = vmin.xlane.f32.xlu0 %v1290
      %v1292 = vpop.xlane.xlu0 %1291
      %vm1293 = vcmp.eq.f32.partialorder %v1290, %v1292
      %v1294 = vsel %vm1293, %v1289, inf
      %1295 = vmin.xlane.f32.xlu0 %v1294
      %v1296 = vpop.xlane.xlu0 %1295
      %v1297 = vcvt.f32.s32 %v1296
      %v1298 = vcvt.f32.s32 %v1292
      %v1299 = vshll.u32 %v1298, 16
      %v1300 = vadd.s32 %v1299, %v1297
      %v1301 = vand.u32 %v1241, 65535
      %v1302 = vshra.s32 %v1241, 16
      %v1303 = vcvt.s32.f32 %v1301
      %v1304 = vcvt.s32.f32 %v1302
      %1305 = vmin.xlane.f32.xlu0 %v1304
      %v1306 = vpop.xlane.xlu0 %1305
      %vm1307 = vcmp.eq.f32.partialorder %v1304, %v1306
      %v1308 = vsel %vm1307, %v1303, inf
      %1309 = vmin.xlane.f32.xlu0 %v1308
      %v1310 = vpop.xlane.xlu0 %1309
      %v1311 = vcvt.f32.s32 %v1310
      %v1312 = vcvt.f32.s32 %v1306
      %v1313 = vshll.u32 %v1312, 16
      %v1314 = vadd.s32 %v1313, %v1311
      %v1315 = vand.u32 %v1242, 65535
      %v1316 = vshra.s32 %v1242, 16
      %v1317 = vcvt.s32.f32 %v1315
      %v1318 = vcvt.s32.f32 %v1316
      %1319 = vmin.xlane.f32.xlu0 %v1318
      %v1320 = vpop.xlane.xlu0 %1319
      %vm1321 = vcmp.eq.f32.partialorder %v1318, %v1320
      %v1322 = vsel %vm1321, %v1317, inf
      %1323 = vmin.xlane.f32.xlu0 %v1322
      %v1324 = vpop.xlane.xlu0 %1323
      %v1325 = vcvt.f32.s32 %v1324
      %v1326 = vcvt.f32.s32 %v1320
      %v1327 = vshll.u32 %v1326, 16
      %v1328 = vadd.s32 %v1327, %v1325
      %v1329 = vand.u32 %v1243, 65535
      %v1330 = vshra.s32 %v1243, 16
      %v1331 = vcvt.s32.f32 %v1329
      %v1332 = vcvt.s32.f32 %v1330
      %1333 = vmin.xlane.f32.xlu0 %v1332
      %v1334 = vpop.xlane.xlu0 %1333
      %vm1335 = vcmp.eq.f32.partialorder %v1332, %v1334
      %v1336 = vsel %vm1335, %v1331, inf
      %1337 = vmin.xlane.f32.xlu0 %v1336
      %v1338 = vpop.xlane.xlu0 %1337
      %v1339 = vcvt.f32.s32 %v1338
      %v1340 = vcvt.f32.s32 %v1334
      %v1341 = vshll.u32 %v1340, 16
      %v1342 = vadd.s32 %v1341, %v1339
      %v1343 = vand.u32 %v1244, 65535
      %v1344 = vshra.s32 %v1244, 16
      %v1345 = vcvt.s32.f32 %v1343
      %v1346 = vcvt.s32.f32 %v1344
      %1347 = vmin.xlane.f32.xlu0 %v1346
      %v1348 = vpop.xlane.xlu0 %1347
      %vm1349 = vcmp.eq.f32.partialorder %v1346, %v1348
      %v1350 = vsel %vm1349, %v1345, inf
      %1351 = vmin.xlane.f32.xlu0 %v1350
      %v1352 = vpop.xlane.xlu0 %1351
      %v1353 = vcvt.f32.s32 %v1352
      %v1354 = vcvt.f32.s32 %v1348
      %v1355 = vshll.u32 %v1354, 16
      %v1356 = vadd.s32 %v1355, %v1353
      %vm1357 = vcmp.eq.s32.totalorder %v1237, %v1258
      %vm1358 = vcmp.eq.s32.totalorder %v1238, %v1272
      %vm1359 = vcmp.eq.s32.totalorder %v1239, %v1286
      %vm1360 = vcmp.eq.s32.totalorder %v1240, %v1300
      %vm1361 = vcmp.eq.s32.totalorder %v1241, %v1314
      %vm1362 = vcmp.eq.s32.totalorder %v1242, %v1328
      %vm1363 = vcmp.eq.s32.totalorder %v1243, %v1342
      %vm1364 = vcmp.eq.s32.totalorder %v1244, %v1356
      %v1365 = vsel %vm1357, 1.0, 0.0
      %v1366 = vsel %vm1358, 1.0, 0.0
      %v1367 = vsel %vm1359, 1.0, 0.0
      %v1368 = vsel %vm1360, 1.0, 0.0
      %v1369 = vsel %vm1361, 1.0, 0.0
      %v1370 = vsel %vm1362, 1.0, 0.0
      %v1371 = vsel %vm1363, 1.0, 0.0
      %v1372 = vsel %vm1364, 1.0, 0.0
      %v1373 = vpack.c.bf16 %v1366, %v1365
      %v1374 = vpack.c.bf16 %v1368, %v1367
      %v1375 = vpack.c.bf16 %v1370, %v1369
      %v1376 = vpack.c.bf16 %v1372, %v1371
      %v1377 = vsel %vm1357, 2147483647, %v1237
      %v1378 = vsel %vm1358, 2147483647, %v1238
      %v1379 = vsel %vm1359, 2147483647, %v1239
      %v1380 = vsel %vm1360, 2147483647, %v1240
      %v1381 = vsel %vm1361, 2147483647, %v1241
      %v1382 = vsel %vm1362, 2147483647, %v1242
      %v1383 = vsel %vm1363, 2147483647, %v1243
      %v1384 = vsel %vm1364, 2147483647, %v1244
      %v1385 = vand.u32 %v1377, 65535
      %v1386 = vshra.s32 %v1377, 16
      %v1387 = vcvt.s32.f32 %v1385
      %v1388 = vcvt.s32.f32 %v1386
      %1389 = vmin.xlane.f32.xlu0 %v1388
      %v1390 = vpop.xlane.xlu0 %1389
      %vm1391 = vcmp.eq.f32.partialorder %v1388, %v1390
      %v1392 = vsel %vm1391, %v1387, inf
      %1393 = vmin.xlane.f32.xlu0 %v1392
      %v1394 = vpop.xlane.xlu0 %1393
      %v1395 = vcvt.f32.s32 %v1394
      %v1396 = vcvt.f32.s32 %v1390
      %v1397 = vshll.u32 %v1396, 16
      %v1398 = vadd.s32 %v1397, %v1395
      %v1399 = vand.u32 %v1378, 65535
      %v1400 = vshra.s32 %v1378, 16
      %v1401 = vcvt.s32.f32 %v1399
      %v1402 = vcvt.s32.f32 %v1400
      %1403 = vmin.xlane.f32.xlu0 %v1402
      %v1404 = vpop.xlane.xlu0 %1403
      %vm1405 = vcmp.eq.f32.partialorder %v1402, %v1404
      %v1406 = vsel %vm1405, %v1401, inf
      %1407 = vmin.xlane.f32.xlu0 %v1406
      %v1408 = vpop.xlane.xlu0 %1407
      %v1409 = vcvt.f32.s32 %v1408
      %v1410 = vcvt.f32.s32 %v1404
      %v1411 = vshll.u32 %v1410, 16
      %v1412 = vadd.s32 %v1411, %v1409
      %v1413 = vand.u32 %v1379, 65535
      %v1414 = vshra.s32 %v1379, 16
      %v1415 = vcvt.s32.f32 %v1413
      %v1416 = vcvt.s32.f32 %v1414
      %1417 = vmin.xlane.f32.xlu0 %v1416
      %v1418 = vpop.xlane.xlu0 %1417
      %vm1419 = vcmp.eq.f32.partialorder %v1416, %v1418
      %v1420 = vsel %vm1419, %v1415, inf
      %1421 = vmin.xlane.f32.xlu0 %v1420
      %v1422 = vpop.xlane.xlu0 %1421
      %v1423 = vcvt.f32.s32 %v1422
      %v1424 = vcvt.f32.s32 %v1418
      %v1425 = vshll.u32 %v1424, 16
      %v1426 = vadd.s32 %v1425, %v1423
      %v1427 = vand.u32 %v1380, 65535
      %v1428 = vshra.s32 %v1380, 16
      %v1429 = vcvt.s32.f32 %v1427
      %v1430 = vcvt.s32.f32 %v1428
      %1431 = vmin.xlane.f32.xlu0 %v1430
      %v1432 = vpop.xlane.xlu0 %1431
      %vm1433 = vcmp.eq.f32.partialorder %v1430, %v1432
      %v1434 = vsel %vm1433, %v1429, inf
      %1435 = vmin.xlane.f32.xlu0 %v1434
      %v1436 = vpop.xlane.xlu0 %1435
      %v1437 = vcvt.f32.s32 %v1436
      %v1438 = vcvt.f32.s32 %v1432
      %v1439 = vshll.u32 %v1438, 16
      %v1440 = vadd.s32 %v1439, %v1437
      %v1441 = vand.u32 %v1381, 65535
      %v1442 = vshra.s32 %v1381, 16
      %v1443 = vcvt.s32.f32 %v1441
      %v1444 = vcvt.s32.f32 %v1442
      %1445 = vmin.xlane.f32.xlu0 %v1444
      %v1446 = vpop.xlane.xlu0 %1445
      %vm1447 = vcmp.eq.f32.partialorder %v1444, %v1446
      %v1448 = vsel %vm1447, %v1443, inf
      %1449 = vmin.xlane.f32.xlu0 %v1448
      %v1450 = vpop.xlane.xlu0 %1449
      %v1451 = vcvt.f32.s32 %v1450
      %v1452 = vcvt.f32.s32 %v1446
      %v1453 = vshll.u32 %v1452, 16
      %v1454 = vadd.s32 %v1453, %v1451
      %v1455 = vand.u32 %v1382, 65535
      %v1456 = vshra.s32 %v1382, 16
      %v1457 = vcvt.s32.f32 %v1455
      %v1458 = vcvt.s32.f32 %v1456
      %1459 = vmin.xlane.f32.xlu0 %v1458
      %v1460 = vpop.xlane.xlu0 %1459
      %vm1461 = vcmp.eq.f32.partialorder %v1458, %v1460
      %v1462 = vsel %vm1461, %v1457, inf
      %1463 = vmin.xlane.f32.xlu0 %v1462
      %v1464 = vpop.xlane.xlu0 %1463
      %v1465 = vcvt.f32.s32 %v1464
      %v1466 = vcvt.f32.s32 %v1460
      %v1467 = vshll.u32 %v1466, 16
      %v1468 = vadd.s32 %v1467, %v1465
      %v1469 = vand.u32 %v1383, 65535
      %v1470 = vshra.s32 %v1383, 16
      %v1471 = vcvt.s32.f32 %v1469
      %v1472 = vcvt.s32.f32 %v1470
      %1473 = vmin.xlane.f32.xlu0 %v1472
      %v1474 = vpop.xlane.xlu0 %1473
      %vm1475 = vcmp.eq.f32.partialorder %v1472, %v1474
      %v1476 = vsel %vm1475, %v1471, inf
      %1477 = vmin.xlane.f32.xlu0 %v1476
      %v1478 = vpop.xlane.xlu0 %1477
      %v1479 = vcvt.f32.s32 %v1478
      %v1480 = vcvt.f32.s32 %v1474
      %v1481 = vshll.u32 %v1480, 16
      %v1482 = vadd.s32 %v1481, %v1479
      %v1483 = vand.u32 %v1384, 65535
      %v1484 = vshra.s32 %v1384, 16
      %v1485 = vcvt.s32.f32 %v1483
      %v1486 = vcvt.s32.f32 %v1484
      %1487 = vmin.xlane.f32.xlu0 %v1486
      %v1488 = vpop.xlane.xlu0 %1487
      %vm1489 = vcmp.eq.f32.partialorder %v1486, %v1488
      %v1490 = vsel %vm1489, %v1485, inf
      %1491 = vmin.xlane.f32.xlu0 %v1490
      %v1492 = vpop.xlane.xlu0 %1491
      %v1493 = vcvt.f32.s32 %v1492
      %v1494 = vcvt.f32.s32 %v1488
      %v1495 = vshll.u32 %v1494, 16
      %v1496 = vadd.s32 %v1495, %v1493
      %vm1497 = vcmp.eq.s32.totalorder %v1377, %v1398
      %vm1498 = vcmp.eq.s32.totalorder %v1378, %v1412
      %vm1499 = vcmp.eq.s32.totalorder %v1379, %v1426
      %vm1500 = vcmp.eq.s32.totalorder %v1380, %v1440
      %vm1501 = vcmp.eq.s32.totalorder %v1381, %v1454
      %vm1502 = vcmp.eq.s32.totalorder %v1382, %v1468
      %vm1503 = vcmp.eq.s32.totalorder %v1383, %v1482
      %vm1504 = vcmp.eq.s32.totalorder %v1384, %v1496
      %v1505 = vsel %vm1497, 1.0, 0.0
      %v1506 = vsel %vm1498, 1.0, 0.0
      %v1507 = vsel %vm1499, 1.0, 0.0
      %v1508 = vsel %vm1500, 1.0, 0.0
      %v1509 = vsel %vm1501, 1.0, 0.0
      %v1510 = vsel %vm1502, 1.0, 0.0
      %v1511 = vsel %vm1503, 1.0, 0.0
      %v1512 = vsel %vm1504, 1.0, 0.0
      %v1513 = vpack.c.bf16 %v1506, %v1505
      %v1514 = vpack.c.bf16 %v1508, %v1507
      %v1515 = vpack.c.bf16 %v1510, %v1509
      %v1516 = vpack.c.bf16 %v1512, %v1511
      %v1517 = vsel %vm1497, 2147483647, %v1377
      %v1518 = vsel %vm1498, 2147483647, %v1378
      %v1519 = vsel %vm1499, 2147483647, %v1379
      %v1520 = vsel %vm1500, 2147483647, %v1380
      %v1521 = vsel %vm1501, 2147483647, %v1381
      %v1522 = vsel %vm1502, 2147483647, %v1382
      %v1523 = vsel %vm1503, 2147483647, %v1383
      %v1524 = vsel %vm1504, 2147483647, %v1384
      %v1525 = vand.u32 %v1517, 65535
      %v1526 = vshra.s32 %v1517, 16
      %v1527 = vcvt.s32.f32 %v1525
      %v1528 = vcvt.s32.f32 %v1526
      %1529 = vmin.xlane.f32.xlu0 %v1528
      %v1530 = vpop.xlane.xlu0 %1529
      %vm1531 = vcmp.eq.f32.partialorder %v1528, %v1530
      %v1532 = vsel %vm1531, %v1527, inf
      %1533 = vmin.xlane.f32.xlu0 %v1532
      %v1534 = vpop.xlane.xlu0 %1533
      %v1535 = vcvt.f32.s32 %v1534
      %v1536 = vcvt.f32.s32 %v1530
      %v1537 = vshll.u32 %v1536, 16
      %v1538 = vadd.s32 %v1537, %v1535
      %v1539 = vand.u32 %v1518, 65535
      %v1540 = vshra.s32 %v1518, 16
      %v1541 = vcvt.s32.f32 %v1539
      %v1542 = vcvt.s32.f32 %v1540
      %1543 = vmin.xlane.f32.xlu0 %v1542
      %v1544 = vpop.xlane.xlu0 %1543
      %vm1545 = vcmp.eq.f32.partialorder %v1542, %v1544
      %v1546 = vsel %vm1545, %v1541, inf
      %1547 = vmin.xlane.f32.xlu0 %v1546
      %v1548 = vpop.xlane.xlu0 %1547
      %v1549 = vcvt.f32.s32 %v1548
      %v1550 = vcvt.f32.s32 %v1544
      %v1551 = vshll.u32 %v1550, 16
      %v1552 = vadd.s32 %v1551, %v1549
      %v1553 = vand.u32 %v1519, 65535
      %v1554 = vshra.s32 %v1519, 16
      %v1555 = vcvt.s32.f32 %v1553
      %v1556 = vcvt.s32.f32 %v1554
      %1557 = vmin.xlane.f32.xlu0 %v1556
      %v1558 = vpop.xlane.xlu0 %1557
      %vm1559 = vcmp.eq.f32.partialorder %v1556, %v1558
      %v1560 = vsel %vm1559, %v1555, inf
      %1561 = vmin.xlane.f32.xlu0 %v1560
      %v1562 = vpop.xlane.xlu0 %1561
      %v1563 = vcvt.f32.s32 %v1562
      %v1564 = vcvt.f32.s32 %v1558
      %v1565 = vshll.u32 %v1564, 16
      %v1566 = vadd.s32 %v1565, %v1563
      %v1567 = vand.u32 %v1520, 65535
      %v1568 = vshra.s32 %v1520, 16
      %v1569 = vcvt.s32.f32 %v1567
      %v1570 = vcvt.s32.f32 %v1568
      %1571 = vmin.xlane.f32.xlu0 %v1570
      %v1572 = vpop.xlane.xlu0 %1571
      %vm1573 = vcmp.eq.f32.partialorder %v1570, %v1572
      %v1574 = vsel %vm1573, %v1569, inf
      %1575 = vmin.xlane.f32.xlu0 %v1574
      %v1576 = vpop.xlane.xlu0 %1575
      %v1577 = vcvt.f32.s32 %v1576
      %v1578 = vcvt.f32.s32 %v1572
      %v1579 = vshll.u32 %v1578, 16
      %v1580 = vadd.s32 %v1579, %v1577
      %v1581 = vand.u32 %v1521, 65535
      %v1582 = vshra.s32 %v1521, 16
      %v1583 = vcvt.s32.f32 %v1581
      %v1584 = vcvt.s32.f32 %v1582
      %1585 = vmin.xlane.f32.xlu0 %v1584
      %v1586 = vpop.xlane.xlu0 %1585
      %vm1587 = vcmp.eq.f32.partialorder %v1584, %v1586
      %v1588 = vsel %vm1587, %v1583, inf
      %1589 = vmin.xlane.f32.xlu0 %v1588
      %v1590 = vpop.xlane.xlu0 %1589
      %v1591 = vcvt.f32.s32 %v1590
      %v1592 = vcvt.f32.s32 %v1586
      %v1593 = vshll.u32 %v1592, 16
      %v1594 = vadd.s32 %v1593, %v1591
      %v1595 = vand.u32 %v1522, 65535
      %v1596 = vshra.s32 %v1522, 16
      %v1597 = vcvt.s32.f32 %v1595
      %v1598 = vcvt.s32.f32 %v1596
      %1599 = vmin.xlane.f32.xlu0 %v1598
      %v1600 = vpop.xlane.xlu0 %1599
      %vm1601 = vcmp.eq.f32.partialorder %v1598, %v1600
      %v1602 = vsel %vm1601, %v1597, inf
      %1603 = vmin.xlane.f32.xlu0 %v1602
      %v1604 = vpop.xlane.xlu0 %1603
      %v1605 = vcvt.f32.s32 %v1604
      %v1606 = vcvt.f32.s32 %v1600
      %v1607 = vshll.u32 %v1606, 16
      %v1608 = vadd.s32 %v1607, %v1605
      %v1609 = vand.u32 %v1523, 65535
      %v1610 = vshra.s32 %v1523, 16
      %v1611 = vcvt.s32.f32 %v1609
      %v1612 = vcvt.s32.f32 %v1610
      %1613 = vmin.xlane.f32.xlu0 %v1612
      %v1614 = vpop.xlane.xlu0 %1613
      %vm1615 = vcmp.eq.f32.partialorder %v1612, %v1614
      %v1616 = vsel %vm1615, %v1611, inf
      %1617 = vmin.xlane.f32.xlu0 %v1616
      %v1618 = vpop.xlane.xlu0 %1617
      %v1619 = vcvt.f32.s32 %v1618
      %v1620 = vcvt.f32.s32 %v1614
      %v1621 = vshll.u32 %v1620, 16
      %v1622 = vadd.s32 %v1621, %v1619
      %v1623 = vand.u32 %v1524, 65535
      %v1624 = vshra.s32 %v1524, 16
      %v1625 = vcvt.s32.f32 %v1623
      %v1626 = vcvt.s32.f32 %v1624
      %1627 = vmin.xlane.f32.xlu0 %v1626
      %v1628 = vpop.xlane.xlu0 %1627
      %vm1629 = vcmp.eq.f32.partialorder %v1626, %v1628
      %v1630 = vsel %vm1629, %v1625, inf
      %1631 = vmin.xlane.f32.xlu0 %v1630
      %v1632 = vpop.xlane.xlu0 %1631
      %v1633 = vcvt.f32.s32 %v1632
      %v1634 = vcvt.f32.s32 %v1628
      %v1635 = vshll.u32 %v1634, 16
      %v1636 = vadd.s32 %v1635, %v1633
      %vm1637 = vcmp.eq.s32.totalorder %v1517, %v1538
      %vm1638 = vcmp.eq.s32.totalorder %v1518, %v1552
      %vm1639 = vcmp.eq.s32.totalorder %v1519, %v1566
      %vm1640 = vcmp.eq.s32.totalorder %v1520, %v1580
      %vm1641 = vcmp.eq.s32.totalorder %v1521, %v1594
      %vm1642 = vcmp.eq.s32.totalorder %v1522, %v1608
      %vm1643 = vcmp.eq.s32.totalorder %v1523, %v1622
      %vm1644 = vcmp.eq.s32.totalorder %v1524, %v1636
      %v1645 = vsel %vm1637, 1.0, 0.0
      %v1646 = vsel %vm1638, 1.0, 0.0
      %v1647 = vsel %vm1639, 1.0, 0.0
      %v1648 = vsel %vm1640, 1.0, 0.0
      %v1649 = vsel %vm1641, 1.0, 0.0
      %v1650 = vsel %vm1642, 1.0, 0.0
      %v1651 = vsel %vm1643, 1.0, 0.0
      %v1652 = vsel %vm1644, 1.0, 0.0
      %v1653 = vpack.c.bf16 %v1646, %v1645
      %v1654 = vpack.c.bf16 %v1648, %v1647
      %v1655 = vpack.c.bf16 %v1650, %v1649
      %v1656 = vpack.c.bf16 %v1652, %v1651
      %v1657 = vsel %vm1637, 2147483647, %v1517
      %v1658 = vsel %vm1638, 2147483647, %v1518
      %v1659 = vsel %vm1639, 2147483647, %v1519
      %v1660 = vsel %vm1640, 2147483647, %v1520
      %v1661 = vsel %vm1641, 2147483647, %v1521
      %v1662 = vsel %vm1642, 2147483647, %v1522
      %v1663 = vsel %vm1643, 2147483647, %v1523
      %v1664 = vsel %vm1644, 2147483647, %v1524
      %v1665 = vand.u32 %v1657, 65535
      %v1666 = vshra.s32 %v1657, 16
      %v1667 = vcvt.s32.f32 %v1665
      %v1668 = vcvt.s32.f32 %v1666
      %1669 = vmin.xlane.f32.xlu0 %v1668
      %v1670 = vpop.xlane.xlu0 %1669
      %vm1671 = vcmp.eq.f32.partialorder %v1668, %v1670
      %v1672 = vsel %vm1671, %v1667, inf
      %1673 = vmin.xlane.f32.xlu0 %v1672
      %v1674 = vpop.xlane.xlu0 %1673
      %v1675 = vcvt.f32.s32 %v1674
      %v1676 = vcvt.f32.s32 %v1670
      %v1677 = vshll.u32 %v1676, 16
      %v1678 = vadd.s32 %v1677, %v1675
      %v1679 = vand.u32 %v1658, 65535
      %v1680 = vshra.s32 %v1658, 16
      %v1681 = vcvt.s32.f32 %v1679
      %v1682 = vcvt.s32.f32 %v1680
      %1683 = vmin.xlane.f32.xlu0 %v1682
      %v1684 = vpop.xlane.xlu0 %1683
      %vm1685 = vcmp.eq.f32.partialorder %v1682, %v1684
      %v1686 = vsel %vm1685, %v1681, inf
      %1687 = vmin.xlane.f32.xlu0 %v1686
      %v1688 = vpop.xlane.xlu0 %1687
      %v1689 = vcvt.f32.s32 %v1688
      %v1690 = vcvt.f32.s32 %v1684
      %v1691 = vshll.u32 %v1690, 16
      %v1692 = vadd.s32 %v1691, %v1689
      %v1693 = vand.u32 %v1659, 65535
      %v1694 = vshra.s32 %v1659, 16
      %v1695 = vcvt.s32.f32 %v1693
      %v1696 = vcvt.s32.f32 %v1694
      %1697 = vmin.xlane.f32.xlu0 %v1696
      %v1698 = vpop.xlane.xlu0 %1697
      %vm1699 = vcmp.eq.f32.partialorder %v1696, %v1698
      %v1700 = vsel %vm1699, %v1695, inf
      %1701 = vmin.xlane.f32.xlu0 %v1700
      %v1702 = vpop.xlane.xlu0 %1701
      %v1703 = vcvt.f32.s32 %v1702
      %v1704 = vcvt.f32.s32 %v1698
      %v1705 = vshll.u32 %v1704, 16
      %v1706 = vadd.s32 %v1705, %v1703
      %v1707 = vand.u32 %v1660, 65535
      %v1708 = vshra.s32 %v1660, 16
      %v1709 = vcvt.s32.f32 %v1707
      %v1710 = vcvt.s32.f32 %v1708
      %1711 = vmin.xlane.f32.xlu0 %v1710
      %v1712 = vpop.xlane.xlu0 %1711
      %vm1713 = vcmp.eq.f32.partialorder %v1710, %v1712
      %v1714 = vsel %vm1713, %v1709, inf
      %1715 = vmin.xlane.f32.xlu0 %v1714
      %v1716 = vpop.xlane.xlu0 %1715
      %v1717 = vcvt.f32.s32 %v1716
      %v1718 = vcvt.f32.s32 %v1712
      %v1719 = vshll.u32 %v1718, 16
      %v1720 = vadd.s32 %v1719, %v1717
      %v1721 = vand.u32 %v1661, 65535
      %v1722 = vshra.s32 %v1661, 16
      %v1723 = vcvt.s32.f32 %v1721
      %v1724 = vcvt.s32.f32 %v1722
      %1725 = vmin.xlane.f32.xlu0 %v1724
      %v1726 = vpop.xlane.xlu0 %1725
      %vm1727 = vcmp.eq.f32.partialorder %v1724, %v1726
      %v1728 = vsel %vm1727, %v1723, inf
      %1729 = vmin.xlane.f32.xlu0 %v1728
      %v1730 = vpop.xlane.xlu0 %1729
      %v1731 = vcvt.f32.s32 %v1730
      %v1732 = vcvt.f32.s32 %v1726
      %v1733 = vshll.u32 %v1732, 16
      %v1734 = vadd.s32 %v1733, %v1731
      %v1735 = vand.u32 %v1662, 65535
      %v1736 = vshra.s32 %v1662, 16
      %v1737 = vcvt.s32.f32 %v1735
      %v1738 = vcvt.s32.f32 %v1736
      %1739 = vmin.xlane.f32.xlu0 %v1738
      %v1740 = vpop.xlane.xlu0 %1739
      %vm1741 = vcmp.eq.f32.partialorder %v1738, %v1740
      %v1742 = vsel %vm1741, %v1737, inf
      %1743 = vmin.xlane.f32.xlu0 %v1742
      %v1744 = vpop.xlane.xlu0 %1743
      %v1745 = vcvt.f32.s32 %v1744
      %v1746 = vcvt.f32.s32 %v1740
      %v1747 = vshll.u32 %v1746, 16
      %v1748 = vadd.s32 %v1747, %v1745
      %v1749 = vand.u32 %v1663, 65535
      %v1750 = vshra.s32 %v1663, 16
      %v1751 = vcvt.s32.f32 %v1749
      %v1752 = vcvt.s32.f32 %v1750
      %1753 = vmin.xlane.f32.xlu0 %v1752
      %v1754 = vpop.xlane.xlu0 %1753
      %vm1755 = vcmp.eq.f32.partialorder %v1752, %v1754
      %v1756 = vsel %vm1755, %v1751, inf
      %1757 = vmin.xlane.f32.xlu0 %v1756
      %v1758 = vpop.xlane.xlu0 %1757
      %v1759 = vcvt.f32.s32 %v1758
      %v1760 = vcvt.f32.s32 %v1754
      %v1761 = vshll.u32 %v1760, 16
      %v1762 = vadd.s32 %v1761, %v1759
      %v1763 = vand.u32 %v1664, 65535
      %v1764 = vshra.s32 %v1664, 16
      %v1765 = vcvt.s32.f32 %v1763
      %v1766 = vcvt.s32.f32 %v1764
      %1767 = vmin.xlane.f32.xlu0 %v1766
      %v1768 = vpop.xlane.xlu0 %1767
      %vm1769 = vcmp.eq.f32.partialorder %v1766, %v1768
      %v1770 = vsel %vm1769, %v1765, inf
      %1771 = vmin.xlane.f32.xlu0 %v1770
      %v1772 = vpop.xlane.xlu0 %1771
      %v1773 = vcvt.f32.s32 %v1772
      %v1774 = vcvt.f32.s32 %v1768
      %v1775 = vshll.u32 %v1774, 16
      %v1776 = vadd.s32 %v1775, %v1773
      %vm1777 = vcmp.eq.s32.totalorder %v1657, %v1678
      %vm1778 = vcmp.eq.s32.totalorder %v1658, %v1692
      %vm1779 = vcmp.eq.s32.totalorder %v1659, %v1706
      %vm1780 = vcmp.eq.s32.totalorder %v1660, %v1720
      %vm1781 = vcmp.eq.s32.totalorder %v1661, %v1734
      %vm1782 = vcmp.eq.s32.totalorder %v1662, %v1748
      %vm1783 = vcmp.eq.s32.totalorder %v1663, %v1762
      %vm1784 = vcmp.eq.s32.totalorder %v1664, %v1776
      %v1785 = vsel %vm1777, 1.0, 0.0
      %v1786 = vsel %vm1778, 1.0, 0.0
      %v1787 = vsel %vm1779, 1.0, 0.0
      %v1788 = vsel %vm1780, 1.0, 0.0
      %v1789 = vsel %vm1781, 1.0, 0.0
      %v1790 = vsel %vm1782, 1.0, 0.0
      %v1791 = vsel %vm1783, 1.0, 0.0
      %v1792 = vsel %vm1784, 1.0, 0.0
      %v1793 = vpack.c.bf16 %v1786, %v1785
      %v1794 = vpack.c.bf16 %v1788, %v1787
      %v1795 = vpack.c.bf16 %v1790, %v1789
      %v1796 = vpack.c.bf16 %v1792, %v1791
      %v1797 = vld [vmem:[%s4] sm:$0xff]
      %v1798 = vld [vmem:[%s4 + $0x8] sm:$0xff]
      %v1799 = vld [vmem:[%s4 + $0x10] sm:$0xff]
      %v1800 = vld [vmem:[%s4 + $0x18] sm:$0xff]
      %v1801 = vld [vmem:[%s4 + $0x20] sm:$0x7]
      %v1802 = vld [vmem:[%s5] sm:$0xff]
      %v1803 = vld [vmem:[%s5 + $0x8] sm:$0xff]
      %v1804 = vld [vmem:[%s5 + $0x10] sm:$0xff]
      %v1805 = vld [vmem:[%s5 + $0x18] sm:$0xff]
      %v1806 = vld [vmem:[%s5 + $0x20] sm:$0x7]
      %v1807 = vld [vmem:[%s6] sm:$0x1]
      %vm1808 = vcmask 285696
      %v1810 = vsel %vm1808, %v463, 0
      %v1813 = vsel %vm1808, %v464, 0
      %v1816 = vsel %vm1808, %v465, 0
      %v1819 = vsel %vm1808, %v466, 0
      %v1822 = vsel %vm1808, %v467, 0
      %v1825 = vsel %vm1808, %v468, 0
      %v1828 = vsel %vm1808, %v469, 0
      %v1831 = vsel %vm1808, %v470, 0
      %v1834 = vsel %vm1808, %v471, 0
      %v1837 = vsel %vm1808, %v472, 0
      %v1840 = vsel %vm1808, %v473, 0
      %v1843 = vsel %vm1808, %v474, 0
      %v1846 = vsel %vm1808, %v475, 0
      %v1849 = vsel %vm1808, %v476, 0
      %v1852 = vsel %vm1808, %v477, 0
      %v1855 = vsel %vm1808, %v478, 0
      %vm1857 = vcmask 1042432
      %v1859 = vsel %vm1857, %v1801, 0
      %1861 = vmatprep.subr.mxu0 0.0
      %1862 = vmatpush1.msra.mxu0 %v1797
      %1863 = vmatprep.subr.mxu0 0.0
      %1864 = vmatpush1.msra.mxu0 %v1798
      %1865 = vmatprep.subr.mxu0 0.0
      %1866 = vmatpush1.msra.mxu0 %v1799
      %1867 = vmatprep.subr.mxu0 0.0
      %1868 = vmatpush1.msra.mxu0 %v1800
      %1869 = vmatprep.subr.mxu0 0.0
      %1870 = vmatpush1.msra.mxu0 %v1859
      %1871 = vmatprep.subr.mxu0 0.0
      %1872 = vmatpush1.msra.mxu0 0.0
      %1873 = vmatprep.subr.mxu0 0.0
      %1874 = vmatpush1.msra.mxu0 0.0
      %1875 = vmatprep.subr.mxu0 0.0
      %1876 = vmatpush1.msra.mxu0 0.0
      %1877 = vmatprep.subr.mxu0 0.0
      %1878 = vmatpush1.msra.mxu0 0.0
      %1879 = vmatprep.subr.mxu0 0.0
      %1880 = vmatpush1.msra.mxu0 0.0
      %1881 = vmatprep.subr.mxu0 0.0
      %1882 = vmatpush1.msra.mxu0 0.0
      %1883 = vmatprep.subr.mxu0 0.0
      %1884 = vmatpush1.msra.mxu0 0.0
      %1885 = vmatprep.subr.mxu0 0.0
      %1886 = vmatpush1.msra.mxu0 0.0
      %1887 = vmatprep.subr.mxu0 0.0
      %1888 = vmatpush1.msra.mxu0 0.0
      %1889 = vmatprep.subr.mxu0 0.0
      %1890 = vmatpush1.msra.mxu0 0.0
      %1891 = vmatprep.subr.mxu0 0.0
      %1892 = vmatpush1.msra.mxu0 0.0
      %1893 = vmatprep.subr.mxu0 0.0
      %1894 = vmatpush1.msra.mxu0 0.0
      %1895 = vmatprep.subr.mxu0 0.0
      %1896 = vmatpush1.msra.mxu0 0.0
      %1897 = vmatprep.subr.mxu0 0.0
      %1898 = vmatpush1.msra.mxu0 0.0
      %1899 = vmatprep.subr.mxu0 0.0
      %1900 = vmatpush1.msra.mxu0 0.0
      %1901 = vmatprep.subr.mxu0 0.0
      %1902 = vmatpush1.msra.mxu0 0.0
      %1903 = vmatprep.subr.mxu0 0.0
      %1904 = vmatpush1.msra.mxu0 0.0
      %1905 = vmatprep.subr.mxu0 0.0
      %1906 = vmatpush1.msra.mxu0 0.0
      %1907 = vmatprep.subr.mxu0 0.0
      %1908 = vmatpush1.msra.mxu0 0.0
      %1909 = vmatprep.subr.mxu0 0.0
      %1910 = vmatpush1.msra.mxu0 0.0
      %1911 = vmatprep.subr.mxu0 0.0
      %1912 = vmatpush1.msra.mxu0 0.0
      %1913 = vmatprep.subr.mxu0 0.0
      %1914 = vmatpush1.msra.mxu0 0.0
      %1915 = vmatprep.subr.mxu0 0.0
      %1916 = vmatpush1.msra.mxu0 0.0
      %1917 = vmatprep.subr.mxu0 0.0
      %1918 = vmatpush1.msra.mxu0 0.0
      %1919 = vmatprep.subr.mxu0 0.0
      %1920 = vmatpush1.msra.mxu0 0.0
      %1921 = vmatprep.subr.mxu0 0.0
      %1922 = vmatpush1.msra.mxu0 0.0
      %1923 = vmatprep.subr.mxu0 0.0
      %1924 = vmatpush1.msra.mxu0 0.0
      %1925 = vmatprep.mubr.f32.mxu0 0.0
      %1926 = vmatmul.mubr.f32.gmra.mrb[0].mxu0 %v1810
      %v1927 = vpop.f32.mrb[0].mxu0
      %v1928 = vadd.f32 0.0, %v1927
      %v1929 = vpop.f32.mrb[0].mxu0
      %1930 = vmatprep.mubr.f32.mxu0 0.0
      %1931 = vmatmul.mubr.f32.gmra.mrb[0].mxu0 %v1813
      %v1932 = vpop.f32.mrb[0].mxu0
      %v1933 = vadd.f32 0.0, %v1932
      %v1934 = vpop.f32.mrb[0].mxu0
      %1935 = vmatprep.mubr.f32.mxu0 0.0
      %1936 = vmatmul.mubr.f32.gmra.mrb[0].mxu0 %v1816
      %v1937 = vpop.f32.mrb[0].mxu0
      %v1938 = vadd.f32 0.0, %v1937
      %v1939 = vpop.f32.mrb[0].mxu0
      %1940 = vmatprep.mubr.f32.mxu0 0.0
      %1941 = vmatmul.mubr.f32.gmra.mrb[0].mxu0 %v1819
      %v1942 = vpop.f32.mrb[0].mxu0
      %v1943 = vadd.f32 0.0, %v1942
      %v1944 = vpop.f32.mrb[0].mxu0
      %1945 = vmatprep.mubr.f32.mxu0 0.0
      %1946 = vmatmul.mubr.f32.gmra.mrb[0].mxu0 %v1822
      %v1947 = vpop.f32.mrb[0].mxu0
      %v1948 = vadd.f32 0.0, %v1947
      %v1949 = vpop.f32.mrb[0].mxu0
      %1950 = vmatprep.mubr.f32.mxu0 0.0
      %1951 = vmatmul.mubr.f32.gmra.mrb[0].mxu0 %v1825
      %v1952 = vpop.f32.mrb[0].mxu0
      %v1953 = vadd.f32 0.0, %v1952
      %v1954 = vpop.f32.mrb[0].mxu0
      %1955 = vmatprep.mubr.f32.mxu0 0.0
      %1956 = vmatmul.mubr.f32.gmra.mrb[0].mxu0 %v1828
      %v1957 = vpop.f32.mrb[0].mxu0
      %v1958 = vadd.f32 0.0, %v1957
      %v1959 = vpop.f32.mrb[0].mxu0
      %1960 = vmatprep.mubr.f32.mxu0 0.0
      %1961 = vmatmul.mubr.f32.gmra.mrb[0].mxu0 %v1831
      %v1962 = vpop.f32.mrb[0].mxu0
      %v1963 = vadd.f32 0.0, %v1962
      %v1964 = vpop.f32.mrb[0].mxu0
      %1965 = vmatprep.mubr.f32.mxu0 0.0
      %1966 = vmatmul.mubr.f32.gmra.mrb[0].mxu0 %v1834
      %v1967 = vpop.f32.mrb[0].mxu0
      %v1968 = vadd.f32 0.0, %v1967
      %v1969 = vpop.f32.mrb[0].mxu0
      %1970 = vmatprep.mubr.f32.mxu0 0.0
      %1971 = vmatmul.mubr.f32.gmra.mrb[0].mxu0 %v1837
      %v1972 = vpop.f32.mrb[0].mxu0
      %v1973 = vadd.f32 0.0, %v1972
      %v1974 = vpop.f32.mrb[0].mxu0
      %1975 = vmatprep.mubr.f32.mxu0 0.0
      %1976 = vmatmul.mubr.f32.gmra.mrb[0].mxu0 %v1840
      %v1977 = vpop.f32.mrb[0].mxu0
      %v1978 = vadd.f32 0.0, %v1977
      %v1979 = vpop.f32.mrb[0].mxu0
      %1980 = vmatprep.mubr.f32.mxu0 0.0
      %1981 = vmatmul.mubr.f32.gmra.mrb[0].mxu0 %v1843
      %v1982 = vpop.f32.mrb[0].mxu0
      %v1983 = vadd.f32 0.0, %v1982
      %v1984 = vpop.f32.mrb[0].mxu0
      %1985 = vmatprep.mubr.f32.mxu0 0.0
      %1986 = vmatmul.mubr.f32.gmra.mrb[0].mxu0 %v1846
      %v1987 = vpop.f32.mrb[0].mxu0
      %v1988 = vadd.f32 0.0, %v1987
      %v1989 = vpop.f32.mrb[0].mxu0
      %1990 = vmatprep.mubr.f32.mxu0 0.0
      %1991 = vmatmul.mubr.f32.gmra.mrb[0].mxu0 %v1849
      %v1992 = vpop.f32.mrb[0].mxu0
      %v1993 = vadd.f32 0.0, %v1992
      %v1994 = vpop.f32.mrb[0].mxu0
      %1995 = vmatprep.mubr.f32.mxu0 0.0
      %1996 = vmatmul.mubr.f32.gmra.mrb[0].mxu0 %v1852
      %v1997 = vpop.f32.mrb[0].mxu0
      %v1998 = vadd.f32 0.0, %v1997
      %v1999 = vpop.f32.mrb[0].mxu0
      %2000 = vmatprep.mubr.f32.mxu0 0.0
      %2001 = vmatmul.mubr.f32.gmra.mrb[0].mxu0 %v1855
      %v2002 = vpop.f32.mrb[0].mxu0
      %v2003 = vadd.f32 0.0, %v2002
      %v2004 = vpop.f32.mrb[0].mxu0
      %2005 = vdwg.mxu0
      %v2007 = vlaneseq
      %v2008 = vshrl.u32 %v2007, 7
      %v2009 = vsub.s32 0, %v2008
      %v2010 = vrot.slane %v1807, %v2009
      %v2013 = vsel %vm1808, %v455, 0
      %v2016 = vsel %vm1808, %v456, 0
      %v2019 = vsel %vm1808, %v457, 0
      %v2022 = vsel %vm1808, %v458, 0
      %v2025 = vsel %vm1808, %v459, 0
      %v2028 = vsel %vm1808, %v460, 0
      %v2031 = vsel %vm1808, %v461, 0
      %v2034 = vsel %vm1808, %v462, 0
      %v2037 = vsel %vm1857, %v1806, 0
      %2039 = vmatprep.subr.mxu0 0.0
      %2040 = vmatpush1.msra.mxu0 %v1802
      %2041 = vmatprep.subr.mxu0 0.0
      %2042 = vmatpush1.msra.mxu0 %v1803
      %2043 = vmatprep.subr.mxu0 0.0
      %2044 = vmatpush1.msra.mxu0 %v1804
      %2045 = vmatprep.subr.mxu0 0.0
      %2046 = vmatpush1.msra.mxu0 %v1805
      %2047 = vmatprep.subr.mxu0 0.0
      %2048 = vmatpush1.msra.mxu0 %v2037
      %2049 = vmatprep.subr.mxu0 0.0
      %2050 = vmatpush1.msra.mxu0 0.0
      %2051 = vmatprep.subr.mxu0 0.0
      %2052 = vmatpush1.msra.mxu0 0.0
      %2053 = vmatprep.subr.mxu0 0.0
      %2054 = vmatpush1.msra.mxu0 0.0
      %2055 = vmatprep.subr.mxu0 0.0
      %2056 = vmatpush1.msra.mxu0 0.0
      %2057 = vmatprep.subr.mxu0 0.0
      %2058 = vmatpush1.msra.mxu0 0.0
      %2059 = vmatprep.subr.mxu0 0.0
      %2060 = vmatpush1.msra.mxu0 0.0
      %2061 = vmatprep.subr.mxu0 0.0
      %2062 = vmatpush1.msra.mxu0 0.0
      %2063 = vmatprep.subr.mxu0 0.0
      %2064 = vmatpush1.msra.mxu0 0.0
      %2065 = vmatprep.subr.mxu0 0.0
      %2066 = vmatpush1.msra.mxu0 0.0
      %2067 = vmatprep.subr.mxu0 0.0
      %2068 = vmatpush1.msra.mxu0 0.0
      %2069 = vmatprep.subr.mxu0 0.0
      %2070 = vmatpush1.msra.mxu0 0.0
      %2071 = vmatprep.subr.mxu0 0.0
      %2072 = vmatpush1.msra.mxu0 0.0
      %2073 = vmatprep.subr.mxu0 0.0
      %2074 = vmatpush1.msra.mxu0 0.0
      %2075 = vmatprep.subr.mxu0 0.0
      %2076 = vmatpush1.msra.mxu0 0.0
      %2077 = vmatprep.subr.mxu0 0.0
      %2078 = vmatpush1.msra.mxu0 0.0
      %2079 = vmatprep.subr.mxu0 0.0
      %2080 = vmatpush1.msra.mxu0 0.0
      %2081 = vmatprep.subr.mxu0 0.0
      %2082 = vmatpush1.msra.mxu0 0.0
      %2083 = vmatprep.subr.mxu0 0.0
      %2084 = vmatpush1.msra.mxu0 0.0
      %2085 = vmatprep.subr.mxu0 0.0
      %2086 = vmatpush1.msra.mxu0 0.0
      %2087 = vmatprep.subr.mxu0 0.0
      %2088 = vmatpush1.msra.mxu0 0.0
      %2089 = vmatprep.subr.mxu0 0.0
      %2090 = vmatpush1.msra.mxu0 0.0
      %2091 = vmatprep.subr.mxu0 0.0
      %2092 = vmatpush1.msra.mxu0 0.0
      %2093 = vmatprep.subr.mxu0 0.0
      %2094 = vmatpush1.msra.mxu0 0.0
      %2095 = vmatprep.subr.mxu0 0.0
      %2096 = vmatpush1.msra.mxu0 0.0
      %2097 = vmatprep.subr.mxu0 0.0
      %2098 = vmatpush1.msra.mxu0 0.0
      %2099 = vmatprep.subr.mxu0 0.0
      %2100 = vmatpush1.msra.mxu0 0.0
      %2101 = vmatprep.subr.mxu0 0.0
      %2102 = vmatpush1.msra.mxu0 0.0
      %2103 = vmatprep.mubr.f32.mxu0 0.0
      %2104 = vmatmul.mubr.f32.gmra.mrb[0].mxu0 %v2013
      %v2105 = vpop.f32.mrb[0].mxu0
      %v2106 = vadd.f32 %v2010, %v2105
      %v2107 = vpop.f32.mrb[0].mxu0
      %2108 = vmatprep.mubr.f32.mxu0 0.0
      %2109 = vmatmul.mubr.f32.gmra.mrb[0].mxu0 %v2016
      %v2110 = vpop.f32.mrb[0].mxu0
      %v2111 = vadd.f32 %v2010, %v2110
      %v2112 = vpop.f32.mrb[0].mxu0
      %2113 = vmatprep.mubr.f32.mxu0 0.0
      %2114 = vmatmul.mubr.f32.gmra.mrb[0].mxu0 %v2019
      %v2115 = vpop.f32.mrb[0].mxu0
      %v2116 = vadd.f32 %v2010, %v2115
      %v2117 = vpop.f32.mrb[0].mxu0
      %2118 = vmatprep.mubr.f32.mxu0 0.0
      %2119 = vmatmul.mubr.f32.gmra.mrb[0].mxu0 %v2022
      %v2120 = vpop.f32.mrb[0].mxu0
      %v2121 = vadd.f32 %v2010, %v2120
      %v2122 = vpop.f32.mrb[0].mxu0
      %2123 = vmatprep.mubr.f32.mxu0 0.0
      %2124 = vmatmul.mubr.f32.gmra.mrb[0].mxu0 %v2025
      %v2125 = vpop.f32.mrb[0].mxu0
      %v2126 = vadd.f32 %v2010, %v2125
      %v2127 = vpop.f32.mrb[0].mxu0
      %2128 = vmatprep.mubr.f32.mxu0 0.0
      %2129 = vmatmul.mubr.f32.gmra.mrb[0].mxu0 %v2028
      %v2130 = vpop.f32.mrb[0].mxu0
      %v2131 = vadd.f32 %v2010, %v2130
      %v2132 = vpop.f32.mrb[0].mxu0
      %2133 = vmatprep.mubr.f32.mxu0 0.0
      %2134 = vmatmul.mubr.f32.gmra.mrb[0].mxu0 %v2031
      %v2135 = vpop.f32.mrb[0].mxu0
      %v2136 = vadd.f32 %v2010, %v2135
      %v2137 = vpop.f32.mrb[0].mxu0
      %2138 = vmatprep.mubr.f32.mxu0 0.0
      %2139 = vmatmul.mubr.f32.gmra.mrb[0].mxu0 %v2034
      %v2140 = vpop.f32.mrb[0].mxu0
      %v2141 = vadd.f32 %v2010, %v2140
      %v2142 = vpop.f32.mrb[0].mxu0
      %2143 = vdwg.mxu0
      %v2144 = vpack.c.bf16 %v1933, %v1928
      %v2145 = vpack.c.bf16 %v1943, %v1938
      %v2146 = vpack.c.bf16 %v1953, %v1948
      %v2147 = vpack.c.bf16 %v1963, %v1958
      %v2148 = vpack.c.bf16 %v1973, %v1968
      %v2149 = vpack.c.bf16 %v1983, %v1978
      %v2150 = vpack.c.bf16 %v1993, %v1988
      %v2151 = vpack.c.bf16 %v2003, %v1998
      %2152 = vmatprep.subr.bf16.mxu0 0
      %2153 = vmatpush1.bf16.msra.mxu0 %v2144
      %2154 = vmatprep.subr.bf16.mxu0 0
      %2155 = vmatpush1.bf16.msra.mxu0 %v2145
      %2156 = vmatprep.subr.bf16.mxu0 0
      %2157 = vmatpush1.bf16.msra.mxu0 %v2146
      %2158 = vmatprep.subr.bf16.mxu0 0
      %2159 = vmatpush1.bf16.msra.mxu0 %v2147
      %2160 = vmatprep.subr.bf16.mxu0 0
      %2161 = vmatpush1.bf16.msra.mxu0 %v2148
      %2162 = vmatprep.subr.bf16.mxu0 0
      %2163 = vmatpush1.bf16.msra.mxu0 %v2149
      %2164 = vmatprep.subr.bf16.mxu0 0
      %2165 = vmatpush1.bf16.msra.mxu0 %v2150
      %2166 = vmatprep.subr.bf16.mxu0 0
      %2167 = vmatpush1.bf16.msra.mxu0 %v2151
      %2168 = vmatprep.subr.bf16.mxu0 0
      %2169 = vmatpush1.bf16.msra.mxu0 0
      %2170 = vmatprep.subr.bf16.mxu0 0
      %2171 = vmatpush1.bf16.msra.mxu0 0
      %2172 = vmatprep.subr.bf16.mxu0 0
      %2173 = vmatpush1.bf16.msra.mxu0 0
      %2174 = vmatprep.subr.bf16.mxu0 0
      %2175 = vmatpush1.bf16.msra.mxu0 0
      %2176 = vmatprep.subr.bf16.mxu0 0
      %2177 = vmatpush1.bf16.msra.mxu0 0
      %2178 = vmatprep.subr.bf16.mxu0 0
      %2179 = vmatpush1.bf16.msra.mxu0 0
      %2180 = vmatprep.subr.bf16.mxu0 0
      %2181 = vmatpush1.bf16.msra.mxu0 0
      %2182 = vmatprep.subr.bf16.mxu0 0
      %2183 = vmatpush1.bf16.msra.mxu0 0
      %2184 = vmatprep.mubr.bf16.mxu0 0
      %2185 = vmatmul.mubr.bf16.gmra.mrb[0].mxu0 %v813
      %v2186 = vpop.f32.mrb[0].mxu0
      %v2187 = vadd.f32 %v2106, %v2186
      %v2188 = vpop.f32.mrb[0].mxu0
      %v2189 = vpop.f32.mrb[0].mxu0
      %v2190 = vadd.f32 %v2111, %v2189
      %v2191 = vpop.f32.mrb[0].mxu0
      %2192 = vmatprep.mubr.bf16.mxu0 0
      %2193 = vmatmul.mubr.bf16.gmra.mrb[0].mxu0 %v814
      %v2194 = vpop.f32.mrb[0].mxu0
      %v2195 = vadd.f32 %v2116, %v2194
      %v2196 = vpop.f32.mrb[0].mxu0
      %v2197 = vpop.f32.mrb[0].mxu0
      %v2198 = vadd.f32 %v2121, %v2197
      %v2199 = vpop.f32.mrb[0].mxu0
      %2200 = vmatprep.mubr.bf16.mxu0 0
      %2201 = vmatmul.mubr.bf16.gmra.mrb[0].mxu0 %v815
      %v2202 = vpop.f32.mrb[0].mxu0
      %v2203 = vadd.f32 %v2126, %v2202
      %v2204 = vpop.f32.mrb[0].mxu0
      %v2205 = vpop.f32.mrb[0].mxu0
      %v2206 = vadd.f32 %v2131, %v2205
      %v2207 = vpop.f32.mrb[0].mxu0
      %2208 = vmatprep.mubr.bf16.mxu0 0
      %2209 = vmatmul.mubr.bf16.gmra.mrb[0].mxu0 %v816
      %v2210 = vpop.f32.mrb[0].mxu0
      %v2211 = vadd.f32 %v2136, %v2210
      %v2212 = vpop.f32.mrb[0].mxu0
      %v2213 = vpop.f32.mrb[0].mxu0
      %v2214 = vadd.f32 %v2141, %v2213
      %v2215 = vpop.f32.mrb[0].mxu0
      %2216 = vmatprep.mubr.bf16.mxu0 0
      %2217 = vmatmul.mubr.bf16.gmra.mrb[0].mxu0 %v953
      %v2218 = vpop.f32.mrb[0].mxu0
      %v2219 = vadd.f32 %v2106, %v2218
      %v2220 = vpop.f32.mrb[0].mxu0
      %v2221 = vpop.f32.mrb[0].mxu0
      %v2222 = vadd.f32 %v2111, %v2221
      %v2223 = vpop.f32.mrb[0].mxu0
      %2224 = vmatprep.mubr.bf16.mxu0 0
      %2225 = vmatmul.mubr.bf16.gmra.mrb[0].mxu0 %v954
      %v2226 = vpop.f32.mrb[0].mxu0
      %v2227 = vadd.f32 %v2116, %v2226
      %v2228 = vpop.f32.mrb[0].mxu0
      %v2229 = vpop.f32.mrb[0].mxu0
      %v2230 = vadd.f32 %v2121, %v2229
      %v2231 = vpop.f32.mrb[0].mxu0
      %2232 = vmatprep.mubr.bf16.mxu0 0
      %2233 = vmatmul.mubr.bf16.gmra.mrb[0].mxu0 %v955
      %v2234 = vpop.f32.mrb[0].mxu0
      %v2235 = vadd.f32 %v2126, %v2234
      %v2236 = vpop.f32.mrb[0].mxu0
      %v2237 = vpop.f32.mrb[0].mxu0
      %v2238 = vadd.f32 %v2131, %v2237
      %v2239 = vpop.f32.mrb[0].mxu0
      %2240 = vmatprep.mubr.bf16.mxu0 0
      %2241 = vmatmul.mubr.bf16.gmra.mrb[0].mxu0 %v956
      %v2242 = vpop.f32.mrb[0].mxu0
      %v2243 = vadd.f32 %v2136, %v2242
      %v2244 = vpop.f32.mrb[0].mxu0
      %v2245 = vpop.f32.mrb[0].mxu0
      %v2246 = vadd.f32 %v2141, %v2245
      %v2247 = vpop.f32.mrb[0].mxu0
      %2248 = vmatprep.mubr.bf16.mxu0 0
      %2249 = vmatmul.mubr.bf16.gmra.mrb[0].mxu0 %v1093
      %v2250 = vpop.f32.mrb[0].mxu0
      %v2251 = vadd.f32 %v2106, %v2250
      %v2252 = vpop.f32.mrb[0].mxu0
      %v2253 = vpop.f32.mrb[0].mxu0
      %v2254 = vadd.f32 %v2111, %v2253
      %v2255 = vpop.f32.mrb[0].mxu0
      %2256 = vmatprep.mubr.bf16.mxu0 0
      %2257 = vmatmul.mubr.bf16.gmra.mrb[0].mxu0 %v1094
      %v2258 = vpop.f32.mrb[0].mxu0
      %v2259 = vadd.f32 %v2116, %v2258
      %v2260 = vpop.f32.mrb[0].mxu0
      %v2261 = vpop.f32.mrb[0].mxu0
      %v2262 = vadd.f32 %v2121, %v2261
      %v2263 = vpop.f32.mrb[0].mxu0
      %2264 = vmatprep.mubr.bf16.mxu0 0
      %2265 = vmatmul.mubr.bf16.gmra.mrb[0].mxu0 %v1095
      %v2266 = vpop.f32.mrb[0].mxu0
      %v2267 = vadd.f32 %v2126, %v2266
      %v2268 = vpop.f32.mrb[0].mxu0
      %v2269 = vpop.f32.mrb[0].mxu0
      %v2270 = vadd.f32 %v2131, %v2269
      %v2271 = vpop.f32.mrb[0].mxu0
      %2272 = vmatprep.mubr.bf16.mxu0 0
      %2273 = vmatmul.mubr.bf16.gmra.mrb[0].mxu0 %v1096
      %v2274 = vpop.f32.mrb[0].mxu0
      %v2275 = vadd.f32 %v2136, %v2274
      %v2276 = vpop.f32.mrb[0].mxu0
      %v2277 = vpop.f32.mrb[0].mxu0
      %v2278 = vadd.f32 %v2141, %v2277
      %v2279 = vpop.f32.mrb[0].mxu0
      %2280 = vmatprep.mubr.bf16.mxu0 0
      %2281 = vmatmul.mubr.bf16.gmra.mrb[0].mxu0 %v1233
      %v2282 = vpop.f32.mrb[0].mxu0
      %v2283 = vadd.f32 %v2106, %v2282
      %v2284 = vpop.f32.mrb[0].mxu0
      %v2285 = vpop.f32.mrb[0].mxu0
      %v2286 = vadd.f32 %v2111, %v2285
      %v2287 = vpop.f32.mrb[0].mxu0
      %2288 = vmatprep.mubr.bf16.mxu0 0
      %2289 = vmatmul.mubr.bf16.gmra.mrb[0].mxu0 %v1234
      %v2290 = vpop.f32.mrb[0].mxu0
      %v2291 = vadd.f32 %v2116, %v2290
      %v2292 = vpop.f32.mrb[0].mxu0
      %v2293 = vpop.f32.mrb[0].mxu0
      %v2294 = vadd.f32 %v2121, %v2293
      %v2295 = vpop.f32.mrb[0].mxu0
      %2296 = vmatprep.mubr.bf16.mxu0 0
      %2297 = vmatmul.mubr.bf16.gmra.mrb[0].mxu0 %v1235
      %v2298 = vpop.f32.mrb[0].mxu0
      %v2299 = vadd.f32 %v2126, %v2298
      %v2300 = vpop.f32.mrb[0].mxu0
      %v2301 = vpop.f32.mrb[0].mxu0
      %v2302 = vadd.f32 %v2131, %v2301
      %v2303 = vpop.f32.mrb[0].mxu0
      %2304 = vmatprep.mubr.bf16.mxu0 0
      %2305 = vmatmul.mubr.bf16.gmra.mrb[0].mxu0 %v1236
      %v2306 = vpop.f32.mrb[0].mxu0
      %v2307 = vadd.f32 %v2136, %v2306
      %v2308 = vpop.f32.mrb[0].mxu0
      %v2309 = vpop.f32.mrb[0].mxu0
      %v2310 = vadd.f32 %v2141, %v2309
      %v2311 = vpop.f32.mrb[0].mxu0
      %2312 = vmatprep.mubr.bf16.mxu0 0
      %2313 = vmatmul.mubr.bf16.gmra.mrb[0].mxu0 %v1373
      %v2314 = vpop.f32.mrb[0].mxu0
      %v2315 = vadd.f32 %v2106, %v2314
      %v2316 = vpop.f32.mrb[0].mxu0
      %v2317 = vpop.f32.mrb[0].mxu0
      %v2318 = vadd.f32 %v2111, %v2317
      %v2319 = vpop.f32.mrb[0].mxu0
      %2320 = vmatprep.mubr.bf16.mxu0 0
      %2321 = vmatmul.mubr.bf16.gmra.mrb[0].mxu0 %v1374
      %v2322 = vpop.f32.mrb[0].mxu0
      %v2323 = vadd.f32 %v2116, %v2322
      %v2324 = vpop.f32.mrb[0].mxu0
      %v2325 = vpop.f32.mrb[0].mxu0
      %v2326 = vadd.f32 %v2121, %v2325
      %v2327 = vpop.f32.mrb[0].mxu0
      %2328 = vmatprep.mubr.bf16.mxu0 0
      %2329 = vmatmul.mubr.bf16.gmra.mrb[0].mxu0 %v1375
      %v2330 = vpop.f32.mrb[0].mxu0
      %v2331 = vadd.f32 %v2126, %v2330
      %v2332 = vpop.f32.mrb[0].mxu0
      %v2333 = vpop.f32.mrb[0].mxu0
      %v2334 = vadd.f32 %v2131, %v2333
      %v2335 = vpop.f32.mrb[0].mxu0
      %2336 = vmatprep.mubr.bf16.mxu0 0
      %2337 = vmatmul.mubr.bf16.gmra.mrb[0].mxu0 %v1376
      %v2338 = vpop.f32.mrb[0].mxu0
      %v2339 = vadd.f32 %v2136, %v2338
      %v2340 = vpop.f32.mrb[0].mxu0
      %v2341 = vpop.f32.mrb[0].mxu0
      %v2342 = vadd.f32 %v2141, %v2341
      %v2343 = vpop.f32.mrb[0].mxu0
      %2344 = vmatprep.mubr.bf16.mxu0 0
      %2345 = vmatmul.mubr.bf16.gmra.mrb[0].mxu0 %v1513
      %v2346 = vpop.f32.mrb[0].mxu0
      %v2347 = vadd.f32 %v2106, %v2346
      %v2348 = vpop.f32.mrb[0].mxu0
      %v2349 = vpop.f32.mrb[0].mxu0
      %v2350 = vadd.f32 %v2111, %v2349
      %v2351 = vpop.f32.mrb[0].mxu0
      %2352 = vmatprep.mubr.bf16.mxu0 0
      %2353 = vmatmul.mubr.bf16.gmra.mrb[0].mxu0 %v1514
      %v2354 = vpop.f32.mrb[0].mxu0
      %v2355 = vadd.f32 %v2116, %v2354
      %v2356 = vpop.f32.mrb[0].mxu0
      %v2357 = vpop.f32.mrb[0].mxu0
      %v2358 = vadd.f32 %v2121, %v2357
      %v2359 = vpop.f32.mrb[0].mxu0
      %2360 = vmatprep.mubr.bf16.mxu0 0
      %2361 = vmatmul.mubr.bf16.gmra.mrb[0].mxu0 %v1515
      %v2362 = vpop.f32.mrb[0].mxu0
      %v2363 = vadd.f32 %v2126, %v2362
      %v2364 = vpop.f32.mrb[0].mxu0
      %v2365 = vpop.f32.mrb[0].mxu0
      %v2366 = vadd.f32 %v2131, %v2365
      %v2367 = vpop.f32.mrb[0].mxu0
      %2368 = vmatprep.mubr.bf16.mxu0 0
      %2369 = vmatmul.mubr.bf16.gmra.mrb[0].mxu0 %v1516
      %v2370 = vpop.f32.mrb[0].mxu0
      %v2371 = vadd.f32 %v2136, %v2370
      %v2372 = vpop.f32.mrb[0].mxu0
      %v2373 = vpop.f32.mrb[0].mxu0
      %v2374 = vadd.f32 %v2141, %v2373
      %v2375 = vpop.f32.mrb[0].mxu0
      %2376 = vmatprep.mubr.bf16.mxu0 0
      %2377 = vmatmul.mubr.bf16.gmra.mrb[0].mxu0 %v1653
      %v2378 = vpop.f32.mrb[0].mxu0
      %v2379 = vadd.f32 %v2106, %v2378
      %v2380 = vpop.f32.mrb[0].mxu0
      %v2381 = vpop.f32.mrb[0].mxu0
      %v2382 = vadd.f32 %v2111, %v2381
      %v2383 = vpop.f32.mrb[0].mxu0
      %2384 = vmatprep.mubr.bf16.mxu0 0
      %2385 = vmatmul.mubr.bf16.gmra.mrb[0].mxu0 %v1654
      %v2386 = vpop.f32.mrb[0].mxu0
      %v2387 = vadd.f32 %v2116, %v2386
      %v2388 = vpop.f32.mrb[0].mxu0
      %v2389 = vpop.f32.mrb[0].mxu0
      %v2390 = vadd.f32 %v2121, %v2389
      %v2391 = vpop.f32.mrb[0].mxu0
      %2392 = vmatprep.mubr.bf16.mxu0 0
      %2393 = vmatmul.mubr.bf16.gmra.mrb[0].mxu0 %v1655
      %v2394 = vpop.f32.mrb[0].mxu0
      %v2395 = vadd.f32 %v2126, %v2394
      %v2396 = vpop.f32.mrb[0].mxu0
      %v2397 = vpop.f32.mrb[0].mxu0
      %v2398 = vadd.f32 %v2131, %v2397
      %v2399 = vpop.f32.mrb[0].mxu0
      %2400 = vmatprep.mubr.bf16.mxu0 0
      %2401 = vmatmul.mubr.bf16.gmra.mrb[0].mxu0 %v1656
      %v2402 = vpop.f32.mrb[0].mxu0
      %v2403 = vadd.f32 %v2136, %v2402
      %v2404 = vpop.f32.mrb[0].mxu0
      %v2405 = vpop.f32.mrb[0].mxu0
      %v2406 = vadd.f32 %v2141, %v2405
      %v2407 = vpop.f32.mrb[0].mxu0
      %2408 = vmatprep.mubr.bf16.mxu0 0
      %2409 = vmatmul.mubr.bf16.gmra.mrb[0].mxu0 %v1793
      %v2410 = vpop.f32.mrb[0].mxu0
      %v2411 = vadd.f32 %v2106, %v2410
      %v2412 = vpop.f32.mrb[0].mxu0
      %v2413 = vpop.f32.mrb[0].mxu0
      %v2414 = vadd.f32 %v2111, %v2413
      %v2415 = vpop.f32.mrb[0].mxu0
      %2416 = vmatprep.mubr.bf16.mxu0 0
      %2417 = vmatmul.mubr.bf16.gmra.mrb[0].mxu0 %v1794
      %v2418 = vpop.f32.mrb[0].mxu0
      %v2419 = vadd.f32 %v2116, %v2418
      %v2420 = vpop.f32.mrb[0].mxu0
      %v2421 = vpop.f32.mrb[0].mxu0
      %v2422 = vadd.f32 %v2121, %v2421
      %v2423 = vpop.f32.mrb[0].mxu0
      %2424 = vmatprep.mubr.bf16.mxu0 0
      %2425 = vmatmul.mubr.bf16.gmra.mrb[0].mxu0 %v1795
      %v2426 = vpop.f32.mrb[0].mxu0
      %v2427 = vadd.f32 %v2126, %v2426
      %v2428 = vpop.f32.mrb[0].mxu0
      %v2429 = vpop.f32.mrb[0].mxu0
      %v2430 = vadd.f32 %v2131, %v2429
      %v2431 = vpop.f32.mrb[0].mxu0
      %2432 = vmatprep.mubr.bf16.mxu0 0
      %2433 = vmatmul.mubr.bf16.gmra.mrb[0].mxu0 %v1796
      %v2434 = vpop.f32.mrb[0].mxu0
      %v2435 = vadd.f32 %v2136, %v2434
      %v2436 = vpop.f32.mrb[0].mxu0
      %v2437 = vpop.f32.mrb[0].mxu0
      %v2438 = vadd.f32 %v2141, %v2437
      %v2439 = vpop.f32.mrb[0].mxu0
      %2440 = vdwg.mxu0
      %v2441 = vmax.f32 %v2187, 0.0
      %v2442 = vmax.f32 %v2190, 0.0
      %v2443 = vmax.f32 %v2195, 0.0
      %v2444 = vmax.f32 %v2198, 0.0
      %v2445 = vmax.f32 %v2203, 0.0
      %v2446 = vmax.f32 %v2206, 0.0
      %v2447 = vmax.f32 %v2211, 0.0
      %v2448 = vmax.f32 %v2214, 0.0
      %v2449 = vmax.f32 %v2219, 0.0
      %v2450 = vmax.f32 %v2222, 0.0
      %v2451 = vmax.f32 %v2227, 0.0
      %v2452 = vmax.f32 %v2230, 0.0
      %v2453 = vmax.f32 %v2235, 0.0
      %v2454 = vmax.f32 %v2238, 0.0
      %v2455 = vmax.f32 %v2243, 0.0
      %v2456 = vmax.f32 %v2246, 0.0
      %v2457 = vmax.f32 %v2251, 0.0
      %v2458 = vmax.f32 %v2254, 0.0
      %v2459 = vmax.f32 %v2259, 0.0
      %v2460 = vmax.f32 %v2262, 0.0
      %v2461 = vmax.f32 %v2267, 0.0
      %v2462 = vmax.f32 %v2270, 0.0
      %v2463 = vmax.f32 %v2275, 0.0
      %v2464 = vmax.f32 %v2278, 0.0
      %v2465 = vmax.f32 %v2283, 0.0
      %v2466 = vmax.f32 %v2286, 0.0
      %v2467 = vmax.f32 %v2291, 0.0
      %v2468 = vmax.f32 %v2294, 0.0
      %v2469 = vmax.f32 %v2299, 0.0
      %v2470 = vmax.f32 %v2302, 0.0
      %v2471 = vmax.f32 %v2307, 0.0
      %v2472 = vmax.f32 %v2310, 0.0
      %v2473 = vmax.f32 %v2315, 0.0
      %v2474 = vmax.f32 %v2318, 0.0
      %v2475 = vmax.f32 %v2323, 0.0
      %v2476 = vmax.f32 %v2326, 0.0
      %v2477 = vmax.f32 %v2331, 0.0
      %v2478 = vmax.f32 %v2334, 0.0
      %v2479 = vmax.f32 %v2339, 0.0
      %v2480 = vmax.f32 %v2342, 0.0
      %v2481 = vmax.f32 %v2347, 0.0
      %v2482 = vmax.f32 %v2350, 0.0
      %v2483 = vmax.f32 %v2355, 0.0
      %v2484 = vmax.f32 %v2358, 0.0
      %v2485 = vmax.f32 %v2363, 0.0
      %v2486 = vmax.f32 %v2366, 0.0
      %v2487 = vmax.f32 %v2371, 0.0
      %v2488 = vmax.f32 %v2374, 0.0
      %v2489 = vmax.f32 %v2379, 0.0
      %v2490 = vmax.f32 %v2382, 0.0
      %v2491 = vmax.f32 %v2387, 0.0
      %v2492 = vmax.f32 %v2390, 0.0
      %v2493 = vmax.f32 %v2395, 0.0
      %v2494 = vmax.f32 %v2398, 0.0
      %v2495 = vmax.f32 %v2403, 0.0
      %v2496 = vmax.f32 %v2406, 0.0
      %v2497 = vmax.f32 %v2411, 0.0
      %v2498 = vmax.f32 %v2414, 0.0
      %v2499 = vmax.f32 %v2419, 0.0
      %v2500 = vmax.f32 %v2422, 0.0
      %v2501 = vmax.f32 %v2427, 0.0
      %v2502 = vmax.f32 %v2430, 0.0
      %v2503 = vmax.f32 %v2435, 0.0
      %v2504 = vmax.f32 %v2438, 0.0
      %v2505 = vld [vmem:[%s7] sm:$0xf]
      %v2506 = vld [vmem:[%s7 + $0x4] sm:$0xf]
      %v2507 = vld [vmem:[%s7 + $0x8] sm:$0xf]
      %v2508 = vld [vmem:[%s7 + $0xc] sm:$0xf]
      %v2509 = vld [vmem:[%s8] sm:$0x1]
      %v2510 = vpack.c.bf16 %v2442, %v2441
      %v2511 = vpack.c.bf16 %v2444, %v2443
      %v2512 = vpack.c.bf16 %v2446, %v2445
      %v2513 = vpack.c.bf16 %v2448, %v2447
      %v2514 = vpack.c.bf16 %v2450, %v2449
      %v2515 = vpack.c.bf16 %v2452, %v2451
      %v2516 = vpack.c.bf16 %v2454, %v2453
      %v2517 = vpack.c.bf16 %v2456, %v2455
      %v2518 = vpack.c.bf16 %v2458, %v2457
      %v2519 = vpack.c.bf16 %v2460, %v2459
      %v2520 = vpack.c.bf16 %v2462, %v2461
      %v2521 = vpack.c.bf16 %v2464, %v2463
      %v2522 = vpack.c.bf16 %v2466, %v2465
      %v2523 = vpack.c.bf16 %v2468, %v2467
      %v2524 = vpack.c.bf16 %v2470, %v2469
      %v2525 = vpack.c.bf16 %v2472, %v2471
      %v2526 = vpack.c.bf16 %v2474, %v2473
      %v2527 = vpack.c.bf16 %v2476, %v2475
      %v2528 = vpack.c.bf16 %v2478, %v2477
      %v2529 = vpack.c.bf16 %v2480, %v2479
      %v2530 = vpack.c.bf16 %v2482, %v2481
      %v2531 = vpack.c.bf16 %v2484, %v2483
      %v2532 = vpack.c.bf16 %v2486, %v2485
      %v2533 = vpack.c.bf16 %v2488, %v2487
      %v2534 = vpack.c.bf16 %v2490, %v2489
      %v2535 = vpack.c.bf16 %v2492, %v2491
      %v2536 = vpack.c.bf16 %v2494, %v2493
      %v2537 = vpack.c.bf16 %v2496, %v2495
      %v2538 = vpack.c.bf16 %v2498, %v2497
      %v2539 = vpack.c.bf16 %v2500, %v2499
      %v2540 = vpack.c.bf16 %v2502, %v2501
      %v2541 = vpack.c.bf16 %v2504, %v2503
      %v2543 = vlaneseq
      %v2544 = vshrl.u32 %v2543, 7
      %v2545 = vsub.s32 0, %v2544
      %v2546 = vrot.slane %v2509, %v2545
      %v2552 = vunpack.c.l.b16 %v2505
      %v2553 = vunpack.c.l.b16 %v2506
      %v2554 = vunpack.c.l.b16 %v2507
      %v2555 = vunpack.c.l.b16 %v2508
      %v2556 = vpack.c.b16 %v2553, %v2552
      %v2557 = vpack.c.b16 %v2555, %v2554
      %vm2560 = vcmask 261120
      %v2562 = vsel %vm2560, %v2510, 0
      %v2565 = vsel %vm2560, %v2511, 0
      %v2568 = vsel %vm2560, %v2512, 0
      %v2571 = vsel %vm2560, %v2513, 0
      %v2574 = vsel %vm2560, %v2514, 0
      %v2577 = vsel %vm2560, %v2515, 0
      %v2580 = vsel %vm2560, %v2516, 0
      %v2583 = vsel %vm2560, %v2517, 0
      %v2586 = vsel %vm2560, %v2518, 0
      %v2589 = vsel %vm2560, %v2519, 0
      %v2592 = vsel %vm2560, %v2520, 0
      %v2595 = vsel %vm2560, %v2521, 0
      %v2598 = vsel %vm2560, %v2522, 0
      %v2601 = vsel %vm2560, %v2523, 0
      %v2604 = vsel %vm2560, %v2524, 0
      %v2607 = vsel %vm2560, %v2525, 0
      %v2610 = vsel %vm2560, %v2526, 0
      %v2613 = vsel %vm2560, %v2527, 0
      %v2616 = vsel %vm2560, %v2528, 0
      %v2619 = vsel %vm2560, %v2529, 0
      %v2622 = vsel %vm2560, %v2530, 0
      %v2625 = vsel %vm2560, %v2531, 0
      %v2628 = vsel %vm2560, %v2532, 0
      %v2631 = vsel %vm2560, %v2533, 0
      %v2634 = vsel %vm2560, %v2534, 0
      %v2637 = vsel %vm2560, %v2535, 0
      %v2640 = vsel %vm2560, %v2536, 0
      %v2643 = vsel %vm2560, %v2537, 0
      %v2646 = vsel %vm2560, %v2538, 0
      %v2649 = vsel %vm2560, %v2539, 0
      %v2652 = vsel %vm2560, %v2540, 0
      %v2655 = vsel %vm2560, %v2541, 0
      %2657 = vmatprep.subr.bf16.mxu0 0
      %2658 = vmatpush1.bf16.msra.mxu0 %v2556
      %2659 = vmatprep.subr.bf16.mxu0 0
      %2660 = vmatpush1.bf16.msra.mxu0 %v2557
      %2661 = vmatprep.subr.bf16.mxu0 0
      %2662 = vmatpush1.bf16.msra.mxu0 0
      %2663 = vmatprep.subr.bf16.mxu0 0
      %2664 = vmatpush1.bf16.msra.mxu0 0
      %2665 = vmatprep.subr.bf16.mxu0 0
      %2666 = vmatpush1.bf16.msra.mxu0 0
      %2667 = vmatprep.subr.bf16.mxu0 0
      %2668 = vmatpush1.bf16.msra.mxu0 0
      %2669 = vmatprep.subr.bf16.mxu0 0
      %2670 = vmatpush1.bf16.msra.mxu0 0
      %2671 = vmatprep.subr.bf16.mxu0 0
      %2672 = vmatpush1.bf16.msra.mxu0 0
      %2673 = vmatprep.subr.bf16.mxu0 0
      %2674 = vmatpush1.bf16.msra.mxu0 0
      %2675 = vmatprep.subr.bf16.mxu0 0
      %2676 = vmatpush1.bf16.msra.mxu0 0
      %2677 = vmatprep.subr.bf16.mxu0 0
      %2678 = vmatpush1.bf16.msra.mxu0 0
      %2679 = vmatprep.subr.bf16.mxu0 0
      %2680 = vmatpush1.bf16.msra.mxu0 0
      %2681 = vmatprep.subr.bf16.mxu0 0
      %2682 = vmatpush1.bf16.msra.mxu0 0
      %2683 = vmatprep.subr.bf16.mxu0 0
      %2684 = vmatpush1.bf16.msra.mxu0 0
      %2685 = vmatprep.subr.bf16.mxu0 0
      %2686 = vmatpush1.bf16.msra.mxu0 0
      %2687 = vmatprep.subr.bf16.mxu0 0
      %2688 = vmatpush1.bf16.msra.mxu0 0
      %2689 = vmatprep.mubr.bf16.mxu0 0
      %2690 = vmatmul.mubr.bf16.gmra.mrb[0].mxu0 %v2562
      %v2691 = vpop.f32.mrb[0].mxu0
      %v2692 = vadd.f32 %v2546, %v2691
      %v2693 = vpop.f32.mrb[0].mxu0
      %v2694 = vpop.f32.mrb[0].mxu0
      %v2695 = vadd.f32 %v2546, %v2694
      %v2696 = vpop.f32.mrb[0].mxu0
      %2697 = vmatprep.mubr.bf16.mxu0 0
      %2698 = vmatmul.mubr.bf16.gmra.mrb[0].mxu0 %v2565
      %v2699 = vpop.f32.mrb[0].mxu0
      %v2700 = vadd.f32 %v2546, %v2699
      %v2701 = vpop.f32.mrb[0].mxu0
      %v2702 = vpop.f32.mrb[0].mxu0
      %v2703 = vadd.f32 %v2546, %v2702
      %v2704 = vpop.f32.mrb[0].mxu0
      %2705 = vmatprep.mubr.bf16.mxu0 0
      %2706 = vmatmul.mubr.bf16.gmra.mrb[0].mxu0 %v2568
      %v2707 = vpop.f32.mrb[0].mxu0
      %v2708 = vadd.f32 %v2546, %v2707
      %v2709 = vpop.f32.mrb[0].mxu0
      %v2710 = vpop.f32.mrb[0].mxu0
      %v2711 = vadd.f32 %v2546, %v2710
      %v2712 = vpop.f32.mrb[0].mxu0
      %2713 = vmatprep.mubr.bf16.mxu0 0
      %2714 = vmatmul.mubr.bf16.gmra.mrb[0].mxu0 %v2571
      %v2715 = vpop.f32.mrb[0].mxu0
      %v2716 = vadd.f32 %v2546, %v2715
      %v2717 = vpop.f32.mrb[0].mxu0
      %v2718 = vpop.f32.mrb[0].mxu0
      %v2719 = vadd.f32 %v2546, %v2718
      %v2720 = vpop.f32.mrb[0].mxu0
      %2721 = vmatprep.mubr.bf16.mxu0 0
      %2722 = vmatmul.mubr.bf16.gmra.mrb[0].mxu0 %v2574
      %v2723 = vpop.f32.mrb[0].mxu0
      %v2724 = vadd.f32 %v2546, %v2723
      %v2725 = vpop.f32.mrb[0].mxu0
      %v2726 = vpop.f32.mrb[0].mxu0
      %v2727 = vadd.f32 %v2546, %v2726
      %v2728 = vpop.f32.mrb[0].mxu0
      %2729 = vmatprep.mubr.bf16.mxu0 0
      %2730 = vmatmul.mubr.bf16.gmra.mrb[0].mxu0 %v2577
      %v2731 = vpop.f32.mrb[0].mxu0
      %v2732 = vadd.f32 %v2546, %v2731
      %v2733 = vpop.f32.mrb[0].mxu0
      %v2734 = vpop.f32.mrb[0].mxu0
      %v2735 = vadd.f32 %v2546, %v2734
      %v2736 = vpop.f32.mrb[0].mxu0
      %2737 = vmatprep.mubr.bf16.mxu0 0
      %2738 = vmatmul.mubr.bf16.gmra.mrb[0].mxu0 %v2580
      %v2739 = vpop.f32.mrb[0].mxu0
      %v2740 = vadd.f32 %v2546, %v2739
      %v2741 = vpop.f32.mrb[0].mxu0
      %v2742 = vpop.f32.mrb[0].mxu0
      %v2743 = vadd.f32 %v2546, %v2742
      %v2744 = vpop.f32.mrb[0].mxu0
      %2745 = vmatprep.mubr.bf16.mxu0 0
      %2746 = vmatmul.mubr.bf16.gmra.mrb[0].mxu0 %v2583
      %v2747 = vpop.f32.mrb[0].mxu0
      %v2748 = vadd.f32 %v2546, %v2747
      %v2749 = vpop.f32.mrb[0].mxu0
      %v2750 = vpop.f32.mrb[0].mxu0
      %v2751 = vadd.f32 %v2546, %v2750
      %v2752 = vpop.f32.mrb[0].mxu0
      %2753 = vmatprep.mubr.bf16.mxu0 0
      %2754 = vmatmul.mubr.bf16.gmra.mrb[0].mxu0 %v2586
      %v2755 = vpop.f32.mrb[0].mxu0
      %v2756 = vadd.f32 %v2546, %v2755
      %v2757 = vpop.f32.mrb[0].mxu0
      %v2758 = vpop.f32.mrb[0].mxu0
      %v2759 = vadd.f32 %v2546, %v2758
      %v2760 = vpop.f32.mrb[0].mxu0
      %2761 = vmatprep.mubr.bf16.mxu0 0
      %2762 = vmatmul.mubr.bf16.gmra.mrb[0].mxu0 %v2589
      %v2763 = vpop.f32.mrb[0].mxu0
      %v2764 = vadd.f32 %v2546, %v2763
      %v2765 = vpop.f32.mrb[0].mxu0
      %v2766 = vpop.f32.mrb[0].mxu0
      %v2767 = vadd.f32 %v2546, %v2766
      %v2768 = vpop.f32.mrb[0].mxu0
      %2769 = vmatprep.mubr.bf16.mxu0 0
      %2770 = vmatmul.mubr.bf16.gmra.mrb[0].mxu0 %v2592
      %v2771 = vpop.f32.mrb[0].mxu0
      %v2772 = vadd.f32 %v2546, %v2771
      %v2773 = vpop.f32.mrb[0].mxu0
      %v2774 = vpop.f32.mrb[0].mxu0
      %v2775 = vadd.f32 %v2546, %v2774
      %v2776 = vpop.f32.mrb[0].mxu0
      %2777 = vmatprep.mubr.bf16.mxu0 0
      %2778 = vmatmul.mubr.bf16.gmra.mrb[0].mxu0 %v2595
      %v2779 = vpop.f32.mrb[0].mxu0
      %v2780 = vadd.f32 %v2546, %v2779
      %v2781 = vpop.f32.mrb[0].mxu0
      %v2782 = vpop.f32.mrb[0].mxu0
      %v2783 = vadd.f32 %v2546, %v2782
      %v2784 = vpop.f32.mrb[0].mxu0
      %2785 = vmatprep.mubr.bf16.mxu0 0
      %2786 = vmatmul.mubr.bf16.gmra.mrb[0].mxu0 %v2598
      %v2787 = vpop.f32.mrb[0].mxu0
      %v2788 = vadd.f32 %v2546, %v2787
      %v2789 = vpop.f32.mrb[0].mxu0
      %v2790 = vpop.f32.mrb[0].mxu0
      %v2791 = vadd.f32 %v2546, %v2790
      %v2792 = vpop.f32.mrb[0].mxu0
      %2793 = vmatprep.mubr.bf16.mxu0 0
      %2794 = vmatmul.mubr.bf16.gmra.mrb[0].mxu0 %v2601
      %v2795 = vpop.f32.mrb[0].mxu0
      %v2796 = vadd.f32 %v2546, %v2795
      %v2797 = vpop.f32.mrb[0].mxu0
      %v2798 = vpop.f32.mrb[0].mxu0
      %v2799 = vadd.f32 %v2546, %v2798
      %v2800 = vpop.f32.mrb[0].mxu0
      %2801 = vmatprep.mubr.bf16.mxu0 0
      %2802 = vmatmul.mubr.bf16.gmra.mrb[0].mxu0 %v2604
      %v2803 = vpop.f32.mrb[0].mxu0
      %v2804 = vadd.f32 %v2546, %v2803
      %v2805 = vpop.f32.mrb[0].mxu0
      %v2806 = vpop.f32.mrb[0].mxu0
      %v2807 = vadd.f32 %v2546, %v2806
      %v2808 = vpop.f32.mrb[0].mxu0
      %2809 = vmatprep.mubr.bf16.mxu0 0
      %2810 = vmatmul.mubr.bf16.gmra.mrb[0].mxu0 %v2607
      %v2811 = vpop.f32.mrb[0].mxu0
      %v2812 = vadd.f32 %v2546, %v2811
      %v2813 = vpop.f32.mrb[0].mxu0
      %v2814 = vpop.f32.mrb[0].mxu0
      %v2815 = vadd.f32 %v2546, %v2814
      %v2816 = vpop.f32.mrb[0].mxu0
      %2817 = vmatprep.mubr.bf16.mxu0 0
      %2818 = vmatmul.mubr.bf16.gmra.mrb[0].mxu0 %v2610
      %v2819 = vpop.f32.mrb[0].mxu0
      %v2820 = vadd.f32 %v2546, %v2819
      %v2821 = vpop.f32.mrb[0].mxu0
      %v2822 = vpop.f32.mrb[0].mxu0
      %v2823 = vadd.f32 %v2546, %v2822
      %v2824 = vpop.f32.mrb[0].mxu0
      %2825 = vmatprep.mubr.bf16.mxu0 0
      %2826 = vmatmul.mubr.bf16.gmra.mrb[0].mxu0 %v2613
      %v2827 = vpop.f32.mrb[0].mxu0
      %v2828 = vadd.f32 %v2546, %v2827
      %v2829 = vpop.f32.mrb[0].mxu0
      %v2830 = vpop.f32.mrb[0].mxu0
      %v2831 = vadd.f32 %v2546, %v2830
      %v2832 = vpop.f32.mrb[0].mxu0
      %2833 = vmatprep.mubr.bf16.mxu0 0
      %2834 = vmatmul.mubr.bf16.gmra.mrb[0].mxu0 %v2616
      %v2835 = vpop.f32.mrb[0].mxu0
      %v2836 = vadd.f32 %v2546, %v2835
      %v2837 = vpop.f32.mrb[0].mxu0
      %v2838 = vpop.f32.mrb[0].mxu0
      %v2839 = vadd.f32 %v2546, %v2838
      %v2840 = vpop.f32.mrb[0].mxu0
      %2841 = vmatprep.mubr.bf16.mxu0 0
      %2842 = vmatmul.mubr.bf16.gmra.mrb[0].mxu0 %v2619
      %v2843 = vpop.f32.mrb[0].mxu0
      %v2844 = vadd.f32 %v2546, %v2843
      %v2845 = vpop.f32.mrb[0].mxu0
      %v2846 = vpop.f32.mrb[0].mxu0
      %v2847 = vadd.f32 %v2546, %v2846
      %v2848 = vpop.f32.mrb[0].mxu0
      %2849 = vmatprep.mubr.bf16.mxu0 0
      %2850 = vmatmul.mubr.bf16.gmra.mrb[0].mxu0 %v2622
      %v2851 = vpop.f32.mrb[0].mxu0
      %v2852 = vadd.f32 %v2546, %v2851
      %v2853 = vpop.f32.mrb[0].mxu0
      %v2854 = vpop.f32.mrb[0].mxu0
      %v2855 = vadd.f32 %v2546, %v2854
      %v2856 = vpop.f32.mrb[0].mxu0
      %2857 = vmatprep.mubr.bf16.mxu0 0
      %2858 = vmatmul.mubr.bf16.gmra.mrb[0].mxu0 %v2625
      %v2859 = vpop.f32.mrb[0].mxu0
      %v2860 = vadd.f32 %v2546, %v2859
      %v2861 = vpop.f32.mrb[0].mxu0
      %v2862 = vpop.f32.mrb[0].mxu0
      %v2863 = vadd.f32 %v2546, %v2862
      %v2864 = vpop.f32.mrb[0].mxu0
      %2865 = vmatprep.mubr.bf16.mxu0 0
      %2866 = vmatmul.mubr.bf16.gmra.mrb[0].mxu0 %v2628
      %v2867 = vpop.f32.mrb[0].mxu0
      %v2868 = vadd.f32 %v2546, %v2867
      %v2869 = vpop.f32.mrb[0].mxu0
      %v2870 = vpop.f32.mrb[0].mxu0
      %v2871 = vadd.f32 %v2546, %v2870
      %v2872 = vpop.f32.mrb[0].mxu0
      %2873 = vmatprep.mubr.bf16.mxu0 0
      %2874 = vmatmul.mubr.bf16.gmra.mrb[0].mxu0 %v2631
      %v2875 = vpop.f32.mrb[0].mxu0
      %v2876 = vadd.f32 %v2546, %v2875
      %v2877 = vpop.f32.mrb[0].mxu0
      %v2878 = vpop.f32.mrb[0].mxu0
      %v2879 = vadd.f32 %v2546, %v2878
      %v2880 = vpop.f32.mrb[0].mxu0
      %2881 = vmatprep.mubr.bf16.mxu0 0
      %2882 = vmatmul.mubr.bf16.gmra.mrb[0].mxu0 %v2634
      %v2883 = vpop.f32.mrb[0].mxu0
      %v2884 = vadd.f32 %v2546, %v2883
      %v2885 = vpop.f32.mrb[0].mxu0
      %v2886 = vpop.f32.mrb[0].mxu0
      %v2887 = vadd.f32 %v2546, %v2886
      %v2888 = vpop.f32.mrb[0].mxu0
      %2889 = vmatprep.mubr.bf16.mxu0 0
      %2890 = vmatmul.mubr.bf16.gmra.mrb[0].mxu0 %v2637
      %v2891 = vpop.f32.mrb[0].mxu0
      %v2892 = vadd.f32 %v2546, %v2891
      %v2893 = vpop.f32.mrb[0].mxu0
      %v2894 = vpop.f32.mrb[0].mxu0
      %v2895 = vadd.f32 %v2546, %v2894
      %v2896 = vpop.f32.mrb[0].mxu0
      %2897 = vmatprep.mubr.bf16.mxu0 0
      %2898 = vmatmul.mubr.bf16.gmra.mrb[0].mxu0 %v2640
      %v2899 = vpop.f32.mrb[0].mxu0
      %v2900 = vadd.f32 %v2546, %v2899
      %v2901 = vpop.f32.mrb[0].mxu0
      %v2902 = vpop.f32.mrb[0].mxu0
      %v2903 = vadd.f32 %v2546, %v2902
      %v2904 = vpop.f32.mrb[0].mxu0
      %2905 = vmatprep.mubr.bf16.mxu0 0
      %2906 = vmatmul.mubr.bf16.gmra.mrb[0].mxu0 %v2643
      %v2907 = vpop.f32.mrb[0].mxu0
      %v2908 = vadd.f32 %v2546, %v2907
      %v2909 = vpop.f32.mrb[0].mxu0
      %v2910 = vpop.f32.mrb[0].mxu0
      %v2911 = vadd.f32 %v2546, %v2910
      %v2912 = vpop.f32.mrb[0].mxu0
      %2913 = vmatprep.mubr.bf16.mxu0 0
      %2914 = vmatmul.mubr.bf16.gmra.mrb[0].mxu0 %v2646
      %v2915 = vpop.f32.mrb[0].mxu0
      %v2916 = vadd.f32 %v2546, %v2915
      %v2917 = vpop.f32.mrb[0].mxu0
      %v2918 = vpop.f32.mrb[0].mxu0
      %v2919 = vadd.f32 %v2546, %v2918
      %v2920 = vpop.f32.mrb[0].mxu0
      %2921 = vmatprep.mubr.bf16.mxu0 0
      %2922 = vmatmul.mubr.bf16.gmra.mrb[0].mxu0 %v2649
      %v2923 = vpop.f32.mrb[0].mxu0
      %v2924 = vadd.f32 %v2546, %v2923
      %v2925 = vpop.f32.mrb[0].mxu0
      %v2926 = vpop.f32.mrb[0].mxu0
      %v2927 = vadd.f32 %v2546, %v2926
      %v2928 = vpop.f32.mrb[0].mxu0
      %2929 = vmatprep.mubr.bf16.mxu0 0
      %2930 = vmatmul.mubr.bf16.gmra.mrb[0].mxu0 %v2652
      %v2931 = vpop.f32.mrb[0].mxu0
      %v2932 = vadd.f32 %v2546, %v2931
      %v2933 = vpop.f32.mrb[0].mxu0
      %v2934 = vpop.f32.mrb[0].mxu0
      %v2935 = vadd.f32 %v2546, %v2934
      %v2936 = vpop.f32.mrb[0].mxu0
      %2937 = vmatprep.mubr.bf16.mxu0 0
      %2938 = vmatmul.mubr.bf16.gmra.mrb[0].mxu0 %v2655
      %v2939 = vpop.f32.mrb[0].mxu0
      %v2940 = vadd.f32 %v2546, %v2939
      %v2941 = vpop.f32.mrb[0].mxu0
      %v2942 = vpop.f32.mrb[0].mxu0
      %v2943 = vadd.f32 %v2546, %v2942
      %v2944 = vpop.f32.mrb[0].mxu0
      %2945 = vdwg.mxu0
      %v2946 = vmax.f32 %v2692, 0.0
      %v2947 = vmax.f32 %v2695, 0.0
      %v2948 = vmax.f32 %v2700, 0.0
      %v2949 = vmax.f32 %v2703, 0.0
      %v2950 = vmax.f32 %v2708, 0.0
      %v2951 = vmax.f32 %v2711, 0.0
      %v2952 = vmax.f32 %v2716, 0.0
      %v2953 = vmax.f32 %v2719, 0.0
      %v2954 = vmax.f32 %v2724, 0.0
      %v2955 = vmax.f32 %v2727, 0.0
      %v2956 = vmax.f32 %v2732, 0.0
      %v2957 = vmax.f32 %v2735, 0.0
      %v2958 = vmax.f32 %v2740, 0.0
      %v2959 = vmax.f32 %v2743, 0.0
      %v2960 = vmax.f32 %v2748, 0.0
      %v2961 = vmax.f32 %v2751, 0.0
      %v2962 = vmax.f32 %v2756, 0.0
      %v2963 = vmax.f32 %v2759, 0.0
      %v2964 = vmax.f32 %v2764, 0.0
      %v2965 = vmax.f32 %v2767, 0.0
      %v2966 = vmax.f32 %v2772, 0.0
      %v2967 = vmax.f32 %v2775, 0.0
      %v2968 = vmax.f32 %v2780, 0.0
      %v2969 = vmax.f32 %v2783, 0.0
      %v2970 = vmax.f32 %v2788, 0.0
      %v2971 = vmax.f32 %v2791, 0.0
      %v2972 = vmax.f32 %v2796, 0.0
      %v2973 = vmax.f32 %v2799, 0.0
      %v2974 = vmax.f32 %v2804, 0.0
      %v2975 = vmax.f32 %v2807, 0.0
      %v2976 = vmax.f32 %v2812, 0.0
      %v2977 = vmax.f32 %v2815, 0.0
      %v2978 = vmax.f32 %v2820, 0.0
      %v2979 = vmax.f32 %v2823, 0.0
      %v2980 = vmax.f32 %v2828, 0.0
      %v2981 = vmax.f32 %v2831, 0.0
      %v2982 = vmax.f32 %v2836, 0.0
      %v2983 = vmax.f32 %v2839, 0.0
      %v2984 = vmax.f32 %v2844, 0.0
      %v2985 = vmax.f32 %v2847, 0.0
      %v2986 = vmax.f32 %v2852, 0.0
      %v2987 = vmax.f32 %v2855, 0.0
      %v2988 = vmax.f32 %v2860, 0.0
      %v2989 = vmax.f32 %v2863, 0.0
      %v2990 = vmax.f32 %v2868, 0.0
      %v2991 = vmax.f32 %v2871, 0.0
      %v2992 = vmax.f32 %v2876, 0.0
      %v2993 = vmax.f32 %v2879, 0.0
      %v2994 = vmax.f32 %v2884, 0.0
      %v2995 = vmax.f32 %v2887, 0.0
      %v2996 = vmax.f32 %v2892, 0.0
      %v2997 = vmax.f32 %v2895, 0.0
      %v2998 = vmax.f32 %v2900, 0.0
      %v2999 = vmax.f32 %v2903, 0.0
      %v3000 = vmax.f32 %v2908, 0.0
      %v3001 = vmax.f32 %v2911, 0.0
      %v3002 = vmax.f32 %v2916, 0.0
      %v3003 = vmax.f32 %v2919, 0.0
      %v3004 = vmax.f32 %v2924, 0.0
      %v3005 = vmax.f32 %v2927, 0.0
      %v3006 = vmax.f32 %v2932, 0.0
      %v3007 = vmax.f32 %v2935, 0.0
      %v3008 = vmax.f32 %v2940, 0.0
      %v3009 = vmax.f32 %v2943, 0.0
      %v3010 = vmax.f32 %v2946, %v2954
      %v3011 = vmax.f32 %v2947, %v2955
      %v3012 = vmax.f32 %v2948, %v2956
      %v3013 = vmax.f32 %v2949, %v2957
      %v3014 = vmax.f32 %v2950, %v2958
      %v3015 = vmax.f32 %v2951, %v2959
      %v3016 = vmax.f32 %v2952, %v2960
      %v3017 = vmax.f32 %v2953, %v2961
      %v3018 = vmax.f32 %v3010, %v2962
      %v3019 = vmax.f32 %v3011, %v2963
      %v3020 = vmax.f32 %v3012, %v2964
      %v3021 = vmax.f32 %v3013, %v2965
      %v3022 = vmax.f32 %v3014, %v2966
      %v3023 = vmax.f32 %v3015, %v2967
      %v3024 = vmax.f32 %v3016, %v2968
      %v3025 = vmax.f32 %v3017, %v2969
      %v3026 = vmax.f32 %v3018, %v2970
      %v3027 = vmax.f32 %v3019, %v2971
      %v3028 = vmax.f32 %v3020, %v2972
      %v3029 = vmax.f32 %v3021, %v2973
      %v3030 = vmax.f32 %v3022, %v2974
      %v3031 = vmax.f32 %v3023, %v2975
      %v3032 = vmax.f32 %v3024, %v2976
      %v3033 = vmax.f32 %v3025, %v2977
      %v3034 = vmax.f32 %v3026, %v2978
      %v3035 = vmax.f32 %v3027, %v2979
      %v3036 = vmax.f32 %v3028, %v2980
      %v3037 = vmax.f32 %v3029, %v2981
      %v3038 = vmax.f32 %v3030, %v2982
      %v3039 = vmax.f32 %v3031, %v2983
      %v3040 = vmax.f32 %v3032, %v2984
      %v3041 = vmax.f32 %v3033, %v2985
      %v3042 = vmax.f32 %v3034, %v2986
      %v3043 = vmax.f32 %v3035, %v2987
      %v3044 = vmax.f32 %v3036, %v2988
      %v3045 = vmax.f32 %v3037, %v2989
      %v3046 = vmax.f32 %v3038, %v2990
      %v3047 = vmax.f32 %v3039, %v2991
      %v3048 = vmax.f32 %v3040, %v2992
      %v3049 = vmax.f32 %v3041, %v2993
      %v3050 = vmax.f32 %v3042, %v2994
      %v3051 = vmax.f32 %v3043, %v2995
      %v3052 = vmax.f32 %v3044, %v2996
      %v3053 = vmax.f32 %v3045, %v2997
      %v3054 = vmax.f32 %v3046, %v2998
      %v3055 = vmax.f32 %v3047, %v2999
      %v3056 = vmax.f32 %v3048, %v3000
      %v3057 = vmax.f32 %v3049, %v3001
      %v3058 = vmax.f32 %v3050, %v3002
      %v3059 = vmax.f32 %v3051, %v3003
      %v3060 = vmax.f32 %v3052, %v3004
      %v3061 = vmax.f32 %v3053, %v3005
      %v3062 = vmax.f32 %v3054, %v3006
      %v3063 = vmax.f32 %v3055, %v3007
      %v3064 = vmax.f32 %v3056, %v3008
      %v3065 = vmax.f32 %v3057, %v3009
      %3066 = vst.msk [vmem:[%s443] sm:$0xff] %vm2560, %v3058
      %3067 = vst.msk [vmem:[%s443 + $0x8] sm:$0xff] %vm2560, %v3059
      %3068 = vst.msk [vmem:[%s443 + $0x10] sm:$0xff] %vm2560, %v3060
      %3069 = vst.msk [vmem:[%s443 + $0x18] sm:$0xff] %vm2560, %v3061
      %3070 = vst.msk [vmem:[%s443 + $0x20] sm:$0xff] %vm2560, %v3062
      %3071 = vst.msk [vmem:[%s443 + $0x28] sm:$0xff] %vm2560, %v3063
      %3072 = vst.msk [vmem:[%s443 + $0x30] sm:$0xff] %vm2560, %v3064
      %3073 = vst.msk [vmem:[%s443 + $0x38] sm:$0xff] %vm2560, %v3065
      %s3074 = smul.u32 8, %s25
      %p3075 = scmp.lt.s32.totalorder %s24, 1
      %s3076 = scalar_select %p3075, %s24, 1
      %p3077 = scmp.lt.s32.totalorder %s3074, 7
      %s3078 = scalar_select %p3077, %s3074, 7
      %s3079 = smul.addr %s3076, 8
      %s3080 = sadd.s32 %s3078, %s3079
      %s3081 = smul.addr %s3080, 8
      %s3082 = scalar_lea.vmem %s9, %s3081
      // Predicated region
      $region57: #{_lambda_.4} parent=55 // pred_check
        %p3083 = pneg %p265
      $region58: #{_lambda_.4} parent=55 // pred_check_branch
        %3085 = sbr.rel (%p3083) target = $region60
      $region59: #{_lambda_.4} parent=55 // pred_region
        %s3086 = smul.u32 8, %s25
      $region60: #{_lambda_.4} parent=55 // pred_fallthru
        _
    $region56: #{_lambda_.4} parent=5 // pred_fallthru
      _
    %p3087 = scmp.le.s32.totalorder 2, %s15
    // Predicated region
    $region61: #{_lambda_.4} parent=5 // pred_check
      %p3088 = pneg %p3087
    $region62: #{_lambda_.4} parent=5 // pred_check_branch
      %3090 = sbr.rel (%p3088) target = $region64
    $region63: #{_lambda_.4} parent=5 // pred_region
      %s3091 = ssub.s32 %s15, 2
      // Predicated region
      $region65: #{_lambda_.4} parent=63 // pred_check
        %p3092 = pneg %p271
      $region66: #{_lambda_.4} parent=63 // pred_check_branch
        %3094 = sbr.rel (%p3092) target = $region68
      $region67: #{_lambda_.4} parent=63 // pred_region
        %s3095 = smul.u32 8, %s27
        %p3096 = scmp.lt.s32.totalorder %s26, 1
        %s3097 = scalar_select %p3096, %s26, 1
        %p3098 = scmp.lt.s32.totalorder %s3095, 7
        %s3099 = scalar_select %p3098, %s3095, 7
        %s3100 = smul.addr %s3097, 8
        %s3101 = sadd.s32 %s3099, %s3100
        %s3102 = smul.addr %s3101, 8
        %s3103 = scalar_lea.vmem %s9, %s3102
      $region68: #{_lambda_.4} parent=63 // pred_fallthru
        _
    $region64: #{_lambda_.4} parent=5 // pred_fallthru
      _
  $region6: #{_lambda_.4} parent=0 // loop_footer
    %s19 = sadd.s32 1, %s15
  $region7: #{_lambda_.4} parent=0 // loop_footer_branch
    %14 = sbr.rel target = $region3
  $region8: #{_lambda_.4} parent=0 // loop_exit
    _

// kernel: _lambda_.3
$region0: #{_lambda_.3}
  #allocation0 [shape = 'u32[]', space=smem, size = 0x4, offset = 0x4, fixed_abs, tag = 'smem constant byte address 0x4 - core index']
  #allocation1 [shape = 'u32[144,128]{1,0:T(1,128)}', space=vmem, size = 0x12000, scoped, tag = 'internal scratch']
  %s0 = inlined_call_operand.vmem [shape: f32[2,128,3], index: 0, kind: input, shape index: {}, may-alias: {0,2,3}]
  %s1 = inlined_call_operand.vmem [shape: f32[2,3,128], index: 1, kind: input, shape index: {}]
  %s2 = inlined_call_operand.vmem [shape: f32[2,128,3], index: 2, kind: input, shape index: {}, may-alias: {0,2,3}]
  %s3 = inlined_call_operand.vmem [shape: f32[2,128,3], index: 3, kind: input, shape index: {}, may-alias: {0,2,3}]
  %s4 = inlined_call_operand.vmem [shape: f32[3,32], index: 4, kind: input, shape index: {}]
  %s5 = inlined_call_operand.vmem [shape: f32[3,32], index: 5, kind: input, shape index: {}]
  %s6 = inlined_call_operand.vmem [shape: f32[1,32], index: 6, kind: input, shape index: {}]
  %s7 = inlined_call_operand.vmem [shape: bf16[32,32], index: 7, kind: input, shape index: {}]
  %s8 = inlined_call_operand.vmem [shape: f32[1,32], index: 8, kind: input, shape index: {}]
  %s9 = inlined_call_operand.vmem [shape: f32[2,128,32], index: 9, kind: output, shape index: {}]
  %s10 = sld [smem:[#allocation0]]
  $region69: #{_lambda_.3} parent=0
    _
  %s12 = ssub.s32 1, %s10
  %s13 = scalar_select 0, %s12, %s10
  loop: start=0, step=1, limit=4
  $region2: #{_lambda_.3} parent=0 // loop_pre_header
    _
  $region3: #{_lambda_.3} parent=0 // loop_header
    %s15 = sphi 0, %s19
    %p16 = scmp.ge.s32.totalorder %s15, 4
    %s22 = sphi 0, %s34
    %s23 = sphi 0, %s30
    %s24 = sphi 0, %s22
    %s25 = sphi 0, %s23
    %s26 = sphi 0, %s24
    %s27 = sphi 0, %s25
    %s39 = sphi 0, %s41
    %s42 = sphi 0, %s39
    %s43 = sphi 0, %s42
    %s59 = sphi 0, %s43
    %s65 = sphi 0, %s67
    %s68 = sphi 0, %s65
    %s69 = sphi 0, %s68
    %s85 = sphi 0, %s69
    %s93 = sphi 0, %s95
    %s96 = sphi 0, %s93
    %s97 = sphi 0, %s96
    %s113 = sphi 0, %s97
    %s119 = sphi 0, %s121
    %s122 = sphi 0, %s119
    %s123 = sphi 0, %s122
    %s139 = sphi 0, %s123
    %s143 = sphi 0, %s143
    %s145 = sphi 0, %s143
    %s146 = sphi 0, %s145
    %s160 = sphi 0, %s146
    %s164 = sphi 0, %s164
    %s166 = sphi 0, %s164
    %s167 = sphi 0, %s166
    %s181 = sphi 0, %s167
    %s185 = sphi 0, %s185
    %s187 = sphi 0, %s185
    %s188 = sphi 0, %s187
    %s202 = sphi 0, %s188
    %s206 = sphi 0, %s206
    %s208 = sphi 0, %s206
    %s209 = sphi 0, %s208
    %s223 = sphi 0, %s209
    %s227 = sphi 0, %s227
    %s229 = sphi 0, %s227
    %s230 = sphi 0, %s229
    %s244 = sphi 0, %s230
    %s252 = sphi 0, %s254
    %s255 = sphi 0, %s252
    %s256 = sphi 0, %s255
    %s272 = sphi 0, %s256
  $region4: #{_lambda_.3} parent=0 // loop_header_branch
    %18 = sbr.rel (%p16) target = $region8
  $region5: #{_lambda_.3} parent=0 // loop_body
    %s20 = ssub.s32 %s15, 1
    %s21 = ssub.s32 %s15, 2
    %s28 = sadd.s32 1, %s23
    %p29 = scmp.ge.s32.totalorder %s28, 1
    %s30 = scalar_select %p29, 0, %s28
    %s31 = sadd.s32 1, %s22
    %s32 = scalar_select %p29, %s31, %s22
    %p33 = scmp.ge.s32.totalorder %s32, 2
    %s34 = scalar_select %p33, 0, %s32
    %s35 = ssub.s32 %s22, %s34
    %s36 = ssub.s32 %s23, %s30
    %s37 = sor.u32 %s35, %s36
    %p38 = scmp.eq.s32.totalorder %s37, 0
    %s40 = sadd.s32 %s39, 1
    %s41 = scalar_select %p38, %s39, %s40
    %p44 = pneg %p38
    %p45 = scmp.eq.s32.totalorder %s15, 1
    %p46 = por %p44, %p45
    %p47 = scmp.ne.s32.totalorder %s39, %s42
    %p48 = scmp.eq.s32.totalorder %s15, 0
    %p49 = por %p47, %p48
    %p50 = scmp.ne.s32.totalorder %s39, %s42
    %p51 = scmp.eq.s32.totalorder %s20, 1
    %p52 = por %p50, %p51
    %p53 = scmp.ne.s32.totalorder %s42, %s43
    %p54 = scmp.eq.s32.totalorder %s20, 0
    %p55 = por %p53, %p54
    %p56 = scmp.ne.s32.totalorder %s42, %s43
    %p57 = scmp.eq.s32.totalorder %s21, 1
    %p58 = por %p56, %p57
    %p60 = scmp.ne.s32.totalorder %s43, %s59
    %p61 = scmp.eq.s32.totalorder %s21, 0
    %p62 = por %p60, %p61
    %s63 = ssub.s32 %s22, %s34
    %p64 = scmp.eq.s32.totalorder %s63, 0
    %s66 = sadd.s32 %s65, 1
    %s67 = scalar_select %p64, %s65, %s66
    %p70 = pneg %p64
    %p71 = scmp.eq.s32.totalorder %s15, 1
    %p72 = por %p70, %p71
    %p73 = scmp.ne.s32.totalorder %s65, %s68
    %p74 = scmp.eq.s32.totalorder %s15, 0
    %p75 = por %p73, %p74
    %p76 = scmp.ne.s32.totalorder %s65, %s68
    %p77 = scmp.eq.s32.totalorder %s20, 1
    %p78 = por %p76, %p77
    %p79 = scmp.ne.s32.totalorder %s68, %s69
    %p80 = scmp.eq.s32.totalorder %s20, 0
    %p81 = por %p79, %p80
    %p82 = scmp.ne.s32.totalorder %s68, %s69
    %p83 = scmp.eq.s32.totalorder %s21, 1
    %p84 = por %p82, %p83
    %p86 = scmp.ne.s32.totalorder %s69, %s85
    %p87 = scmp.eq.s32.totalorder %s21, 0
    %p88 = por %p86, %p87
    %s89 = ssub.s32 %s22, %s34
    %s90 = ssub.s32 %s23, %s30
    %s91 = sor.u32 %s89, %s90
    %p92 = scmp.eq.s32.totalorder %s91, 0
    %s94 = sadd.s32 %s93, 1
    %s95 = scalar_select %p92, %s93, %s94
    %p98 = pneg %p92
    %p99 = scmp.eq.s32.totalorder %s15, 1
    %p100 = por %p98, %p99
    %p101 = scmp.ne.s32.totalorder %s93, %s96
    %p102 = scmp.eq.s32.totalorder %s15, 0
    %p103 = por %p101, %p102
    %p104 = scmp.ne.s32.totalorder %s93, %s96
    %p105 = scmp.eq.s32.totalorder %s20, 1
    %p106 = por %p104, %p105
    %p107 = scmp.ne.s32.totalorder %s96, %s97
    %p108 = scmp.eq.s32.totalorder %s20, 0
    %p109 = por %p107, %p108
    %p110 = scmp.ne.s32.totalorder %s96, %s97
    %p111 = scmp.eq.s32.totalorder %s21, 1
    %p112 = por %p110, %p111
    %p114 = scmp.ne.s32.totalorder %s97, %s113
    %p115 = scmp.eq.s32.totalorder %s21, 0
    %p116 = por %p114, %p115
    %s117 = ssub.s32 %s22, %s34
    %p118 = scmp.eq.s32.totalorder %s117, 0
    %s120 = sadd.s32 %s119, 1
    %s121 = scalar_select %p118, %s119, %s120
    %p124 = pneg %p118
    %p125 = scmp.eq.s32.totalorder %s15, 1
    %p126 = por %p124, %p125
    %p127 = scmp.ne.s32.totalorder %s119, %s122
    %p128 = scmp.eq.s32.totalorder %s15, 0
    %p129 = por %p127, %p128
    %p130 = scmp.ne.s32.totalorder %s119, %s122
    %p131 = scmp.eq.s32.totalorder %s20, 1
    %p132 = por %p130, %p131
    %p133 = scmp.ne.s32.totalorder %s122, %s123
    %p134 = scmp.eq.s32.totalorder %s20, 0
    %p135 = por %p133, %p134
    %p136 = scmp.ne.s32.totalorder %s122, %s123
    %p137 = scmp.eq.s32.totalorder %s21, 1
    %p138 = por %p136, %p137
    %p140 = scmp.ne.s32.totalorder %s123, %s139
    %p141 = scmp.eq.s32.totalorder %s21, 0
    %p142 = por %p140, %p141
    %s144 = sadd.s32 %s143, 1
    %p147 = scmp.eq.s32.totalorder %s15, 1
    %p148 = scmp.ne.s32.totalorder %s143, %s145
    %p149 = scmp.eq.s32.totalorder %s15, 0
    %p150 = por %p148, %p149
    %p151 = scmp.ne.s32.totalorder %s143, %s145
    %p152 = scmp.eq.s32.totalorder %s20, 1
    %p153 = por %p151, %p152
    %p154 = scmp.ne.s32.totalorder %s145, %s146
    %p155 = scmp.eq.s32.totalorder %s20, 0
    %p156 = por %p154, %p155
    %p157 = scmp.ne.s32.totalorder %s145, %s146
    %p158 = scmp.eq.s32.totalorder %s21, 1
    %p159 = por %p157, %p158
    %p161 = scmp.ne.s32.totalorder %s146, %s160
    %p162 = scmp.eq.s32.totalorder %s21, 0
    %p163 = por %p161, %p162
    %s165 = sadd.s32 %s164, 1
    %p168 = scmp.eq.s32.totalorder %s15, 1
    %p169 = scmp.ne.s32.totalorder %s164, %s166
    %p170 = scmp.eq.s32.totalorder %s15, 0
    %p171 = por %p169, %p170
    %p172 = scmp.ne.s32.totalorder %s164, %s166
    %p173 = scmp.eq.s32.totalorder %s20, 1
    %p174 = por %p172, %p173
    %p175 = scmp.ne.s32.totalorder %s166, %s167
    %p176 = scmp.eq.s32.totalorder %s20, 0
    %p177 = por %p175, %p176
    %p178 = scmp.ne.s32.totalorder %s166, %s167
    %p179 = scmp.eq.s32.totalorder %s21, 1
    %p180 = por %p178, %p179
    %p182 = scmp.ne.s32.totalorder %s167, %s181
    %p183 = scmp.eq.s32.totalorder %s21, 0
    %p184 = por %p182, %p183
    %s186 = sadd.s32 %s185, 1
    %p189 = scmp.eq.s32.totalorder %s15, 1
    %p190 = scmp.ne.s32.totalorder %s185, %s187
    %p191 = scmp.eq.s32.totalorder %s15, 0
    %p192 = por %p190, %p191
    %p193 = scmp.ne.s32.totalorder %s185, %s187
    %p194 = scmp.eq.s32.totalorder %s20, 1
    %p195 = por %p193, %p194
    %p196 = scmp.ne.s32.totalorder %s187, %s188
    %p197 = scmp.eq.s32.totalorder %s20, 0
    %p198 = por %p196, %p197
    %p199 = scmp.ne.s32.totalorder %s187, %s188
    %p200 = scmp.eq.s32.totalorder %s21, 1
    %p201 = por %p199, %p200
    %p203 = scmp.ne.s32.totalorder %s188, %s202
    %p204 = scmp.eq.s32.totalorder %s21, 0
    %p205 = por %p203, %p204
    %s207 = sadd.s32 %s206, 1
    %p210 = scmp.eq.s32.totalorder %s15, 1
    %p211 = scmp.ne.s32.totalorder %s206, %s208
    %p212 = scmp.eq.s32.totalorder %s15, 0
    %p213 = por %p211, %p212
    %p214 = scmp.ne.s32.totalorder %s206, %s208
    %p215 = scmp.eq.s32.totalorder %s20, 1
    %p216 = por %p214, %p215
    %p217 = scmp.ne.s32.totalorder %s208, %s209
    %p218 = scmp.eq.s32.totalorder %s20, 0
    %p219 = por %p217, %p218
    %p220 = scmp.ne.s32.totalorder %s208, %s209
    %p221 = scmp.eq.s32.totalorder %s21, 1
    %p222 = por %p220, %p221
    %p224 = scmp.ne.s32.totalorder %s209, %s223
    %p225 = scmp.eq.s32.totalorder %s21, 0
    %p226 = por %p224, %p225
    %s228 = sadd.s32 %s227, 1
    %p231 = scmp.eq.s32.totalorder %s15, 1
    %p232 = scmp.ne.s32.totalorder %s227, %s229
    %p233 = scmp.eq.s32.totalorder %s15, 0
    %p234 = por %p232, %p233
    %p235 = scmp.ne.s32.totalorder %s227, %s229
    %p236 = scmp.eq.s32.totalorder %s20, 1
    %p237 = por %p235, %p236
    %p238 = scmp.ne.s32.totalorder %s229, %s230
    %p239 = scmp.eq.s32.totalorder %s20, 0
    %p240 = por %p238, %p239
    %p241 = scmp.ne.s32.totalorder %s229, %s230
    %p242 = scmp.eq.s32.totalorder %s21, 1
    %p243 = por %p241, %p242
    %p245 = scmp.ne.s32.totalorder %s230, %s244
    %p246 = scmp.eq.s32.totalorder %s21, 0
    %p247 = por %p245, %p246
    %s248 = ssub.s32 %s22, %s34
    %s249 = ssub.s32 %s23, %s30
    %s250 = sor.u32 %s248, %s249
    %p251 = scmp.eq.s32.totalorder %s250, 0
    %s253 = sadd.s32 %s252, 1
    %s254 = scalar_select %p251, %s252, %s253
    %p257 = pneg %p251
    %p258 = scmp.eq.s32.totalorder %s15, 1
    %p259 = por %p257, %p258
    %p260 = scmp.ne.s32.totalorder %s252, %s255
    %p261 = scmp.eq.s32.totalorder %s15, 0
    %p262 = por %p260, %p261
    %p263 = scmp.ne.s32.totalorder %s252, %s255
    %p264 = scmp.eq.s32.totalorder %s20, 1
    %p265 = por %p263, %p264
    %p266 = scmp.ne.s32.totalorder %s255, %s256
    %p267 = scmp.eq.s32.totalorder %s20, 0
    %p268 = por %p266, %p267
    %p269 = scmp.ne.s32.totalorder %s255, %s256
    %p270 = scmp.eq.s32.totalorder %s21, 1
    %p271 = por %p269, %p270
    %p273 = scmp.ne.s32.totalorder %s256, %s272
    %p274 = scmp.eq.s32.totalorder %s21, 0
    %p275 = por %p273, %p274
    %p276 = scmp.le.s32.totalorder 1, %s15
    %p277 = scmp.lt.s32.totalorder %s15, 3
    %p278 = pnand %p276, %p277
    %p279 = pneg %p278
    // Predicated region
    $region9: #{_lambda_.3} parent=5 // pred_check
      _
    $region10: #{_lambda_.3} parent=5 // pred_check_branch
      %281 = sbr.rel (%p278) target = $region12
    $region11: #{_lambda_.3} parent=5 // pred_region
      %s282 = ssub.s32 %s15, 1
      // Predicated region
      $region13: #{_lambda_.3} parent=11 // pred_check
        %p283 = pneg %p156
      $region14: #{_lambda_.3} parent=11 // pred_check_branch
        %285 = sbr.rel (%p283) target = $region16
      $region15: #{_lambda_.3} parent=11 // pred_region
        _
      $region16: #{_lambda_.3} parent=11 // pred_fallthru
        _
      // Predicated region
      $region17: #{_lambda_.3} parent=11 // pred_check
        %p286 = pneg %p177
      $region18: #{_lambda_.3} parent=11 // pred_check_branch
        %288 = sbr.rel (%p286) target = $region20
      $region19: #{_lambda_.3} parent=11 // pred_region
        _
      $region20: #{_lambda_.3} parent=11 // pred_fallthru
        _
      // Predicated region
      $region21: #{_lambda_.3} parent=11 // pred_check
        %p289 = pneg %p198
      $region22: #{_lambda_.3} parent=11 // pred_check_branch
        %291 = sbr.rel (%p289) target = $region24
      $region23: #{_lambda_.3} parent=11 // pred_region
        _
      $region24: #{_lambda_.3} parent=11 // pred_fallthru
        _
      // Predicated region
      $region25: #{_lambda_.3} parent=11 // pred_check
        %p292 = pneg %p219
      $region26: #{_lambda_.3} parent=11 // pred_check_branch
        %294 = sbr.rel (%p292) target = $region28
      $region27: #{_lambda_.3} parent=11 // pred_region
        _
      $region28: #{_lambda_.3} parent=11 // pred_fallthru
        _
      // Predicated region
      $region29: #{_lambda_.3} parent=11 // pred_check
        %p295 = pneg %p240
      $region30: #{_lambda_.3} parent=11 // pred_check_branch
        %297 = sbr.rel (%p295) target = $region32
      $region31: #{_lambda_.3} parent=11 // pred_region
        _
      $region32: #{_lambda_.3} parent=11 // pred_fallthru
        _
    $region12: #{_lambda_.3} parent=5 // pred_fallthru
      _
    %p298 = scmp.lt.s32.totalorder %s15, 2
    // Predicated region
    $region33: #{_lambda_.3} parent=5 // pred_check
      %p299 = pneg %p298
    $region34: #{_lambda_.3} parent=5 // pred_check_branch
      %301 = sbr.rel (%p299) target = $region36
    $region35: #{_lambda_.3} parent=5 // pred_region
      // Predicated region
      $region37: #{_lambda_.3} parent=35 // pred_check
        %p302 = pneg %p49
      $region38: #{_lambda_.3} parent=35 // pred_check_branch
        %304 = sbr.rel (%p302) target = $region40
      $region39: #{_lambda_.3} parent=35 // pred_region
        %s305 = smul.u32 16, %s23
        %p306 = scmp.lt.s32.totalorder %s22, 1
        %s307 = scalar_select %p306, %s22, 1
        %p308 = scmp.lt.s32.totalorder %s305, 15
        %s309 = scalar_select %p308, %s305, 15
        %s310 = smul.addr %s307, 16
        %s311 = sadd.s32 %s309, %s310
        %s312 = smul.addr %s311, 8
        %s313 = scalar_lea.vmem %s0, %s312
        %s314 = smul.u32 16, %s23
      $region40: #{_lambda_.3} parent=35 // pred_fallthru
        _
      // Predicated region
      $region41: #{_lambda_.3} parent=35 // pred_check
        %p315 = pneg %p75
      $region42: #{_lambda_.3} parent=35 // pred_check_branch
        %317 = sbr.rel (%p315) target = $region44
      $region43: #{_lambda_.3} parent=35 // pred_region
        %p318 = scmp.lt.s32.totalorder %s22, 1
        %s319 = scalar_select %p318, %s22, 1
        %s320 = smul.addr %s319, 4
        %s321 = scalar_lea.vmem %s1, %s320
      $region44: #{_lambda_.3} parent=35 // pred_fallthru
        _
      // Predicated region
      $region45: #{_lambda_.3} parent=35 // pred_check
        %p322 = pneg %p103
      $region46: #{_lambda_.3} parent=35 // pred_check_branch
        %324 = sbr.rel (%p322) target = $region48
      $region47: #{_lambda_.3} parent=35 // pred_region
        %s325 = smul.u32 16, %s23
        %p326 = scmp.lt.s32.totalorder %s22, 1
        %s327 = scalar_select %p326, %s22, 1
        %p328 = scmp.lt.s32.totalorder %s325, 15
        %s329 = scalar_select %p328, %s325, 15
        %s330 = smul.addr %s327, 16
        %s331 = sadd.s32 %s329, %s330
        %s332 = smul.addr %s331, 8
        %s333 = scalar_lea.vmem %s2, %s332
        %s334 = smul.u32 16, %s23
      $region48: #{_lambda_.3} parent=35 // pred_fallthru
        _
      // Predicated region
      $region49: #{_lambda_.3} parent=35 // pred_check
        %p335 = pneg %p129
      $region50: #{_lambda_.3} parent=35 // pred_check_branch
        %337 = sbr.rel (%p335) target = $region52
      $region51: #{_lambda_.3} parent=35 // pred_region
        %p338 = scmp.lt.s32.totalorder %s22, 1
        %s339 = scalar_select %p338, %s22, 1
        %s340 = smul.addr %s339, 16
        %s341 = smul.addr %s340, 8
        %s342 = scalar_lea.vmem %s3, %s341
      $region52: #{_lambda_.3} parent=35 // pred_fallthru
        _
    $region36: #{_lambda_.3} parent=5 // pred_fallthru
      _
    %p343 = scmp.le.s32.totalorder 1, %s15
    %p344 = scmp.lt.s32.totalorder %s15, 3
    %p345 = pnand %p343, %p344
    %p346 = pneg %p345
    // Predicated region
    $region53: #{_lambda_.3} parent=5 // pred_check
      _
    $region54: #{_lambda_.3} parent=5 // pred_check_branch
      %348 = sbr.rel (%p345) target = $region56
    $region55: #{_lambda_.3} parent=5 // pred_region
      %s349 = ssub.s32 %s15, 1
      %s350 = smul.u32 16, %s25
      %p351 = scmp.lt.s32.totalorder %s24, 1
      %s352 = scalar_select %p351, %s24, 1
      %p353 = scmp.lt.s32.totalorder %s350, 15
      %s354 = scalar_select %p353, %s350, 15
      %s355 = smul.addr %s352, 16
      %s356 = sadd.s32 %s354, %s355
      %s357 = smul.addr %s356, 8
      %s358 = scalar_lea.vmem %s0, %s357
      %p359 = pneg %p55
      %p360 = pneg %p52
      %p361 = scmp.lt.s32.totalorder %s24, 1
      %s362 = scalar_select %p361, %s24, 1
      %s363 = smul.addr %s362, 4
      %s364 = scalar_lea.vmem %s1, %s363
      %p365 = pneg %p81
      %p366 = pneg %p78
      %s367 = smul.u32 16, %s25
      %p368 = scmp.lt.s32.totalorder %s24, 1
      %s369 = scalar_select %p368, %s24, 1
      %p370 = scmp.lt.s32.totalorder %s367, 15
      %s371 = scalar_select %p370, %s367, 15
      %s372 = smul.addr %s369, 16
      %s373 = sadd.s32 %s371, %s372
      %s374 = smul.addr %s373, 8
      %s375 = scalar_lea.vmem %s2, %s374
      %p376 = pneg %p109
      %p377 = pneg %p106
      %p378 = scmp.lt.s32.totalorder %s24, 1
      %s379 = scalar_select %p378, %s24, 1
      %s380 = smul.addr %s379, 16
      %s381 = smul.addr %s380, 8
      %s382 = scalar_lea.vmem %s3, %s381
      %p383 = pneg %p135
      %p384 = pneg %p132
      %p385 = pneg %p156
      %p386 = pneg %p153
      %p387 = pneg %p177
      %p388 = pneg %p174
      %p389 = pneg %p198
      %p390 = pneg %p195
      %p391 = pneg %p219
      %p392 = pneg %p216
      %p393 = pneg %p240
      %p394 = pneg %p237
      %p395 = pneg %p268
      %p396 = pneg %p265
      %s397 = smul.u32 16, %s25
      %p398 = scmp.lt.s32.totalorder %s24, 1
      %s399 = scalar_select %p398, %s24, 1
      %p400 = scmp.lt.s32.totalorder %s397, 15
      %s401 = scalar_select %p400, %s397, 15
      %s402 = smul.addr %s399, 16
      %s403 = sadd.s32 %s401, %s402
      %s404 = smul.addr %s403, 8
      %s405 = scalar_lea.vmem %s9, %s404
      %s406 = smul.u32 16, %s25
      %p407 = scmp.lt.s32.totalorder %s24, 1
      %s408 = scalar_select %p407, %s24, 1
      %p409 = scmp.lt.s32.totalorder %s406, 15
      %s410 = scalar_select %p409, %s406, 15
      %s411 = smul.addr %s408, 16
      %s412 = sadd.s32 %s410, %s411
      %s413 = smul.addr %s412, 8
      %s414 = scalar_lea.vmem %s0, %s413
      %s415 = smul.u32 16, %s25
      %p416 = scmp.lt.s32.totalorder %s24, 1
      %s417 = scalar_select %p416, %s24, 1
      %s418 = smul.addr %s417, 4
      %s419 = scalar_lea.vmem %s1, %s418
      %s420 = smul.u32 16, %s25
      %p421 = scmp.lt.s32.totalorder %s24, 1
      %s422 = scalar_select %p421, %s24, 1
      %p423 = scmp.lt.s32.totalorder %s420, 15
      %s424 = scalar_select %p423, %s420, 15
      %s425 = smul.addr %s422, 16
      %s426 = sadd.s32 %s424, %s425
      %s427 = smul.addr %s426, 8
      %s428 = scalar_lea.vmem %s2, %s427
      %s429 = smul.u32 16, %s25
      %p430 = scmp.lt.s32.totalorder %s24, 1
      %s431 = scalar_select %p430, %s24, 1
      %s432 = smul.addr %s431, 16
      %s433 = smul.addr %s432, 8
      %s434 = scalar_lea.vmem %s3, %s433
      %s435 = smul.u32 16, %s25
      %p436 = scmp.lt.s32.totalorder %s24, 1
      %s437 = scalar_select %p436, %s24, 1
      %p438 = scmp.lt.s32.totalorder %s435, 15
      %s439 = scalar_select %p438, %s435, 15
      %s440 = smul.addr %s437, 16
      %s441 = sadd.s32 %s439, %s440
      %s442 = smul.addr %s441, 8
      %s443 = scalar_lea.vmem %s9, %s442
      %s444 = smul.u32 16, %s25
      %v446 = vld [vmem:[%s414] sm:$0xff]
      %v447 = vld [vmem:[%s414 + $0x8] sm:$0xff]
      %v448 = vld [vmem:[%s414 + $0x10] sm:$0xff]
      %v449 = vld [vmem:[%s414 + $0x18] sm:$0xff]
      %v450 = vld [vmem:[%s414 + $0x20] sm:$0xff]
      %v451 = vld [vmem:[%s414 + $0x28] sm:$0xff]
      %v452 = vld [vmem:[%s414 + $0x30] sm:$0xff]
      %v453 = vld [vmem:[%s414 + $0x38] sm:$0xff]
      %v454 = vld [vmem:[%s414 + $0x40] sm:$0xff]
      %v455 = vld [vmem:[%s414 + $0x48] sm:$0xff]
      %v456 = vld [vmem:[%s414 + $0x50] sm:$0xff]
      %v457 = vld [vmem:[%s414 + $0x58] sm:$0xff]
      %v458 = vld [vmem:[%s414 + $0x60] sm:$0xff]
      %v459 = vld [vmem:[%s414 + $0x68] sm:$0xff]
      %v460 = vld [vmem:[%s414 + $0x70] sm:$0xff]
      %v461 = vld [vmem:[%s414 + $0x78] sm:$0xff]
      %v462 = vld [vmem:[%s419] sm:$0x7]
      %v463 = vld [vmem:[%s428] sm:$0xff]
      %v464 = vld [vmem:[%s428 + $0x8] sm:$0xff]
      %v465 = vld [vmem:[%s428 + $0x10] sm:$0xff]
      %v466 = vld [vmem:[%s428 + $0x18] sm:$0xff]
      %v467 = vld [vmem:[%s428 + $0x20] sm:$0xff]
      %v468 = vld [vmem:[%s428 + $0x28] sm:$0xff]
      %v469 = vld [vmem:[%s428 + $0x30] sm:$0xff]
      %v470 = vld [vmem:[%s428 + $0x38] sm:$0xff]
      %v471 = vld [vmem:[%s428 + $0x40] sm:$0xff]
      %v472 = vld [vmem:[%s428 + $0x48] sm:$0xff]
      %v473 = vld [vmem:[%s428 + $0x50] sm:$0xff]
      %v474 = vld [vmem:[%s428 + $0x58] sm:$0xff]
      %v475 = vld [vmem:[%s428 + $0x60] sm:$0xff]
      %v476 = vld [vmem:[%s428 + $0x68] sm:$0xff]
      %v477 = vld [vmem:[%s428 + $0x70] sm:$0xff]
      %v478 = vld [vmem:[%s428 + $0x78] sm:$0xff]
      %v479 = vld [vmem:[%s434] sm:$0xff]
      %v480 = vld [vmem:[%s434 + $0x8] sm:$0xff]
      %v481 = vld [vmem:[%s434 + $0x10] sm:$0xff]
      %v482 = vld [vmem:[%s434 + $0x18] sm:$0xff]
      %v483 = vld [vmem:[%s434 + $0x20] sm:$0xff]
      %v484 = vld [vmem:[%s434 + $0x28] sm:$0xff]
      %v485 = vld [vmem:[%s434 + $0x30] sm:$0xff]
      %v486 = vld [vmem:[%s434 + $0x38] sm:$0xff]
      %v487 = vld [vmem:[%s434 + $0x40] sm:$0xff]
      %v488 = vld [vmem:[%s434 + $0x48] sm:$0xff]
      %v489 = vld [vmem:[%s434 + $0x50] sm:$0xff]
      %v490 = vld [vmem:[%s434 + $0x58] sm:$0xff]
      %v491 = vld [vmem:[%s434 + $0x60] sm:$0xff]
      %v492 = vld [vmem:[%s434 + $0x68] sm:$0xff]
      %v493 = vld [vmem:[%s434 + $0x70] sm:$0xff]
      %v494 = vld [vmem:[%s434 + $0x78] sm:$0xff]
      %496 = vset.pattern.permute.xlu0 0
      %497 = vperm.xlu0 %496, %v446
      %v498 = vpop.permute.xlu0 %497
      %501 = vset.pattern.permute.xlu0 0
      %502 = vperm.xlu0 %501, %v447
      %v503 = vpop.permute.xlu0 %502
      %506 = vset.pattern.permute.xlu0 0
      %507 = vperm.xlu0 %506, %v448
      %v508 = vpop.permute.xlu0 %507
      %511 = vset.pattern.permute.xlu0 0
      %512 = vperm.xlu0 %511, %v449
      %v513 = vpop.permute.xlu0 %512
      %516 = vset.pattern.permute.xlu0 0
      %517 = vperm.xlu0 %516, %v450
      %v518 = vpop.permute.xlu0 %517
      %521 = vset.pattern.permute.xlu0 0
      %522 = vperm.xlu0 %521, %v451
      %v523 = vpop.permute.xlu0 %522
      %526 = vset.pattern.permute.xlu0 0
      %527 = vperm.xlu0 %526, %v452
      %v528 = vpop.permute.xlu0 %527
      %531 = vset.pattern.permute.xlu0 0
      %532 = vperm.xlu0 %531, %v453
      %v533 = vpop.permute.xlu0 %532
      %536 = vset.pattern.permute.xlu0 0
      %537 = vperm.xlu0 %536, %v454
      %v538 = vpop.permute.xlu0 %537
      %541 = vset.pattern.permute.xlu0 0
      %542 = vperm.xlu0 %541, %v455
      %v543 = vpop.permute.xlu0 %542
      %546 = vset.pattern.permute.xlu0 0
      %547 = vperm.xlu0 %546, %v456
      %v548 = vpop.permute.xlu0 %547
      %551 = vset.pattern.permute.xlu0 0
      %552 = vperm.xlu0 %551, %v457
      %v553 = vpop.permute.xlu0 %552
      %556 = vset.pattern.permute.xlu0 0
      %557 = vperm.xlu0 %556, %v458
      %v558 = vpop.permute.xlu0 %557
      %561 = vset.pattern.permute.xlu0 0
      %562 = vperm.xlu0 %561, %v459
      %v563 = vpop.permute.xlu0 %562
      %566 = vset.pattern.permute.xlu0 0
      %567 = vperm.xlu0 %566, %v460
      %v568 = vpop.permute.xlu0 %567
      %571 = vset.pattern.permute.xlu0 0
      %572 = vperm.xlu0 %571, %v461
      %v573 = vpop.permute.xlu0 %572
      %v575 = vlaneseq
      %v576 = vshrl.u32 %v575, 7
      %v577 = vsub.s32 0, %v576
      %v578 = vrot.slane %v462, %v577
      %v579 = vsub.f32 %v498, %v578
      %v580 = vsub.f32 %v503, %v578
      %v581 = vsub.f32 %v508, %v578
      %v582 = vsub.f32 %v513, %v578
      %v583 = vsub.f32 %v518, %v578
      %v584 = vsub.f32 %v523, %v578
      %v585 = vsub.f32 %v528, %v578
      %v586 = vsub.f32 %v533, %v578
      %v587 = vsub.f32 %v538, %v578
      %v588 = vsub.f32 %v543, %v578
      %v589 = vsub.f32 %v548, %v578
      %v590 = vsub.f32 %v553, %v578
      %v591 = vsub.f32 %v558, %v578
      %v592 = vsub.f32 %v563, %v578
      %v593 = vsub.f32 %v568, %v578
      %v594 = vsub.f32 %v573, %v578
      %595 = vset.pattern.permute.xlu0 1
      %596 = vperm.xlu0 %595, %v446
      %v597 = vpop.permute.xlu0 %596
      %599 = vset.pattern.permute.xlu0 1
      %600 = vperm.xlu0 %599, %v447
      %v601 = vpop.permute.xlu0 %600
      %603 = vset.pattern.permute.xlu0 1
      %604 = vperm.xlu0 %603, %v448
      %v605 = vpop.permute.xlu0 %604
      %607 = vset.pattern.permute.xlu0 1
      %608 = vperm.xlu0 %607, %v449
      %v609 = vpop.permute.xlu0 %608
      %611 = vset.pattern.permute.xlu0 1
      %612 = vperm.xlu0 %611, %v450
      %v613 = vpop.permute.xlu0 %612
      %615 = vset.pattern.permute.xlu0 1
      %616 = vperm.xlu0 %615, %v451
      %v617 = vpop.permute.xlu0 %616
      %619 = vset.pattern.permute.xlu0 1
      %620 = vperm.xlu0 %619, %v452
      %v621 = vpop.permute.xlu0 %620
      %623 = vset.pattern.permute.xlu0 1
      %624 = vperm.xlu0 %623, %v453
      %v625 = vpop.permute.xlu0 %624
      %627 = vset.pattern.permute.xlu0 1
      %628 = vperm.xlu0 %627, %v454
      %v629 = vpop.permute.xlu0 %628
      %631 = vset.pattern.permute.xlu0 1
      %632 = vperm.xlu0 %631, %v455
      %v633 = vpop.permute.xlu0 %632
      %635 = vset.pattern.permute.xlu0 1
      %636 = vperm.xlu0 %635, %v456
      %v637 = vpop.permute.xlu0 %636
      %639 = vset.pattern.permute.xlu0 1
      %640 = vperm.xlu0 %639, %v457
      %v641 = vpop.permute.xlu0 %640
      %643 = vset.pattern.permute.xlu0 1
      %644 = vperm.xlu0 %643, %v458
      %v645 = vpop.permute.xlu0 %644
      %647 = vset.pattern.permute.xlu0 1
      %648 = vperm.xlu0 %647, %v459
      %v649 = vpop.permute.xlu0 %648
      %651 = vset.pattern.permute.xlu0 1
      %652 = vperm.xlu0 %651, %v460
      %v653 = vpop.permute.xlu0 %652
      %655 = vset.pattern.permute.xlu0 1
      %656 = vperm.xlu0 %655, %v461
      %v657 = vpop.permute.xlu0 %656
      %v659 = vlaneseq
      %v660 = vshrl.u32 %v659, 7
      %v661 = vsub.s32 1, %v660
      %v662 = vrot.slane %v462, %v661
      %v663 = vsub.f32 %v597, %v662
      %v664 = vsub.f32 %v601, %v662
      %v665 = vsub.f32 %v605, %v662
      %v666 = vsub.f32 %v609, %v662
      %v667 = vsub.f32 %v613, %v662
      %v668 = vsub.f32 %v617, %v662
      %v669 = vsub.f32 %v621, %v662
      %v670 = vsub.f32 %v625, %v662
      %v671 = vsub.f32 %v629, %v662
      %v672 = vsub.f32 %v633, %v662
      %v673 = vsub.f32 %v637, %v662
      %v674 = vsub.f32 %v641, %v662
      %v675 = vsub.f32 %v645, %v662
      %v676 = vsub.f32 %v649, %v662
      %v677 = vsub.f32 %v653, %v662
      %v678 = vsub.f32 %v657, %v662
      %679 = vset.pattern.permute.xlu0 2
      %680 = vperm.xlu0 %679, %v446
      %v681 = vpop.permute.xlu0 %680
      %683 = vset.pattern.permute.xlu0 2
      %684 = vperm.xlu0 %683, %v447
      %v685 = vpop.permute.xlu0 %684
      %687 = vset.pattern.permute.xlu0 2
      %688 = vperm.xlu0 %687, %v448
      %v689 = vpop.permute.xlu0 %688
      %691 = vset.pattern.permute.xlu0 2
      %692 = vperm.xlu0 %691, %v449
      %v693 = vpop.permute.xlu0 %692
      %695 = vset.pattern.permute.xlu0 2
      %696 = vperm.xlu0 %695, %v450
      %v697 = vpop.permute.xlu0 %696
      %699 = vset.pattern.permute.xlu0 2
      %700 = vperm.xlu0 %699, %v451
      %v701 = vpop.permute.xlu0 %700
      %703 = vset.pattern.permute.xlu0 2
      %704 = vperm.xlu0 %703, %v452
      %v705 = vpop.permute.xlu0 %704
      %707 = vset.pattern.permute.xlu0 2
      %708 = vperm.xlu0 %707, %v453
      %v709 = vpop.permute.xlu0 %708
      %711 = vset.pattern.permute.xlu0 2
      %712 = vperm.xlu0 %711, %v454
      %v713 = vpop.permute.xlu0 %712
      %715 = vset.pattern.permute.xlu0 2
      %716 = vperm.xlu0 %715, %v455
      %v717 = vpop.permute.xlu0 %716
      %719 = vset.pattern.permute.xlu0 2
      %720 = vperm.xlu0 %719, %v456
      %v721 = vpop.permute.xlu0 %720
      %723 = vset.pattern.permute.xlu0 2
      %724 = vperm.xlu0 %723, %v457
      %v725 = vpop.permute.xlu0 %724
      %727 = vset.pattern.permute.xlu0 2
      %728 = vperm.xlu0 %727, %v458
      %v729 = vpop.permute.xlu0 %728
      %731 = vset.pattern.permute.xlu0 2
      %732 = vperm.xlu0 %731, %v459
      %v733 = vpop.permute.xlu0 %732
      %735 = vset.pattern.permute.xlu0 2
      %736 = vperm.xlu0 %735, %v460
      %v737 = vpop.permute.xlu0 %736
      %739 = vset.pattern.permute.xlu0 2
      %740 = vperm.xlu0 %739, %v461
      %v741 = vpop.permute.xlu0 %740
      %v743 = vlaneseq
      %v744 = vshrl.u32 %v743, 7
      %v745 = vsub.s32 2, %v744
      %v746 = vrot.slane %v462, %v745
      %v747 = vsub.f32 %v681, %v746
      %v748 = vsub.f32 %v685, %v746
      %v749 = vsub.f32 %v689, %v746
      %v750 = vsub.f32 %v693, %v746
      %v751 = vsub.f32 %v697, %v746
      %v752 = vsub.f32 %v701, %v746
      %v753 = vsub.f32 %v705, %v746
      %v754 = vsub.f32 %v709, %v746
      %v755 = vsub.f32 %v713, %v746
      %v756 = vsub.f32 %v717, %v746
      %v757 = vsub.f32 %v721, %v746
      %v758 = vsub.f32 %v725, %v746
      %v759 = vsub.f32 %v729, %v746
      %v760 = vsub.f32 %v733, %v746
      %v761 = vsub.f32 %v737, %v746
      %v762 = vsub.f32 %v741, %v746
      %v763 = vmul.f32 %v579, %v579
      %v764 = vmul.f32 %v580, %v580
      %v765 = vmul.f32 %v581, %v581
      %v766 = vmul.f32 %v582, %v582
      %v767 = vmul.f32 %v583, %v583
      %v768 = vmul.f32 %v584, %v584
      %v769 = vmul.f32 %v585, %v585
      %v770 = vmul.f32 %v586, %v586
      %v771 = vmul.f32 %v587, %v587
      %v772 = vmul.f32 %v588, %v588
      %v773 = vmul.f32 %v589, %v589
      %v774 = vmul.f32 %v590, %v590
      %v775 = vmul.f32 %v591, %v591
      %v776 = vmul.f32 %v592, %v592
      %v777 = vmul.f32 %v593, %v593
      %v778 = vmul.f32 %v594, %v594
      %v779 = vmul.f32 %v663, %v663
      %v780 = vmul.f32 %v664, %v664
      %v781 = vmul.f32 %v665, %v665
      %v782 = vmul.f32 %v666, %v666
      %v783 = vmul.f32 %v667, %v667
      %v784 = vmul.f32 %v668, %v668
      %v785 = vmul.f32 %v669, %v669
      %v786 = vmul.f32 %v670, %v670
      %v787 = vmul.f32 %v671, %v671
      %v788 = vmul.f32 %v672, %v672
      %v789 = vmul.f32 %v673, %v673
      %v790 = vmul.f32 %v674, %v674
      %v791 = vmul.f32 %v675, %v675
      %v792 = vmul.f32 %v676, %v676
      %v793 = vmul.f32 %v677, %v677
      %v794 = vmul.f32 %v678, %v678
      %v795 = vadd.f32 %v763, %v779
      %v796 = vadd.f32 %v764, %v780
      %v797 = vadd.f32 %v765, %v781
      %v798 = vadd.f32 %v766, %v782
      %v799 = vadd.f32 %v767, %v783
      %v800 = vadd.f32 %v768, %v784
      %v801 = vadd.f32 %v769, %v785
      %v802 = vadd.f32 %v770, %v786
      %v803 = vadd.f32 %v771, %v787
      %v804 = vadd.f32 %v772, %v788
      %v805 = vadd.f32 %v773, %v789
      %v806 = vadd.f32 %v774, %v790
      %v807 = vadd.f32 %v775, %v791
      %v808 = vadd.f32 %v776, %v792
      %v809 = vadd.f32 %v777, %v793
      %v810 = vadd.f32 %v778, %v794
      %v811 = vmul.f32 %v747, %v747
      %v812 = vmul.f32 %v748, %v748
      %v813 = vmul.f32 %v749, %v749
      %v814 = vmul.f32 %v750, %v750
      %v815 = vmul.f32 %v751, %v751
      %v816 = vmul.f32 %v752, %v752
      %v817 = vmul.f32 %v753, %v753
      %v818 = vmul.f32 %v754, %v754
      %v819 = vmul.f32 %v755, %v755
      %v820 = vmul.f32 %v756, %v756
      %v821 = vmul.f32 %v757, %v757
      %v822 = vmul.f32 %v758, %v758
      %v823 = vmul.f32 %v759, %v759
      %v824 = vmul.f32 %v760, %v760
      %v825 = vmul.f32 %v761, %v761
      %v826 = vmul.f32 %v762, %v762
      %v827 = vadd.f32 %v795, %v811
      %v828 = vadd.f32 %v796, %v812
      %v829 = vadd.f32 %v797, %v813
      %v830 = vadd.f32 %v798, %v814
      %v831 = vadd.f32 %v799, %v815
      %v832 = vadd.f32 %v800, %v816
      %v833 = vadd.f32 %v801, %v817
      %v834 = vadd.f32 %v802, %v818
      %v835 = vadd.f32 %v803, %v819
      %v836 = vadd.f32 %v804, %v820
      %v837 = vadd.f32 %v805, %v821
      %v838 = vadd.f32 %v806, %v822
      %v839 = vadd.f32 %v807, %v823
      %v840 = vadd.f32 %v808, %v824
      %v841 = vadd.f32 %v809, %v825
      %v842 = vadd.f32 %v810, %v826
      %v843 = vlaneseq
      %v844 = vand.u32 %v843, 127
      %v861 = vand.u32 %v827, 4294967168
      %v862 = vand.u32 %v828, 4294967168
      %v863 = vand.u32 %v829, 4294967168
      %v864 = vand.u32 %v830, 4294967168
      %v865 = vand.u32 %v831, 4294967168
      %v866 = vand.u32 %v832, 4294967168
      %v867 = vand.u32 %v833, 4294967168
      %v868 = vand.u32 %v834, 4294967168
      %v869 = vand.u32 %v835, 4294967168
      %v870 = vand.u32 %v836, 4294967168
      %v871 = vand.u32 %v837, 4294967168
      %v872 = vand.u32 %v838, 4294967168
      %v873 = vand.u32 %v839, 4294967168
      %v874 = vand.u32 %v840, 4294967168
      %v875 = vand.u32 %v841, 4294967168
      %v876 = vand.u32 %v842, 4294967168
      %v877 = vor.u32 %v861, %v844
      %v878 = vor.u32 %v862, %v844
      %v879 = vor.u32 %v863, %v844
      %v880 = vor.u32 %v864, %v844
      %v881 = vor.u32 %v865, %v844
      %v882 = vor.u32 %v866, %v844
      %v883 = vor.u32 %v867, %v844
      %v884 = vor.u32 %v868, %v844
      %v885 = vor.u32 %v869, %v844
      %v886 = vor.u32 %v870, %v844
      %v887 = vor.u32 %v871, %v844
      %v888 = vor.u32 %v872, %v844
      %v889 = vor.u32 %v873, %v844
      %v890 = vor.u32 %v874, %v844
      %v891 = vor.u32 %v875, %v844
      %v892 = vor.u32 %v876, %v844
      %v893 = vand.u32 %v877, 65535
      %v894 = vshra.s32 %v877, 16
      %v895 = vcvt.s32.f32 %v893
      %v896 = vcvt.s32.f32 %v894
      %897 = vmin.xlane.f32.xlu0 %v896
      %v898 = vpop.xlane.xlu0 %897
      %vm899 = vcmp.eq.f32.partialorder %v896, %v898
      %v900 = vsel %vm899, %v895, inf
      %901 = vmin.xlane.f32.xlu0 %v900
      %v902 = vpop.xlane.xlu0 %901
      %v903 = vcvt.f32.s32 %v902
      %v904 = vcvt.f32.s32 %v898
      %v905 = vshll.u32 %v904, 16
      %v906 = vadd.s32 %v905, %v903
      %v907 = vand.u32 %v878, 65535
      %v908 = vshra.s32 %v878, 16
      %v909 = vcvt.s32.f32 %v907
      %v910 = vcvt.s32.f32 %v908
      %911 = vmin.xlane.f32.xlu0 %v910
      %v912 = vpop.xlane.xlu0 %911
      %vm913 = vcmp.eq.f32.partialorder %v910, %v912
      %v914 = vsel %vm913, %v909, inf
      %915 = vmin.xlane.f32.xlu0 %v914
      %v916 = vpop.xlane.xlu0 %915
      %v917 = vcvt.f32.s32 %v916
      %v918 = vcvt.f32.s32 %v912
      %v919 = vshll.u32 %v918, 16
      %v920 = vadd.s32 %v919, %v917
      %v921 = vand.u32 %v879, 65535
      %v922 = vshra.s32 %v879, 16
      %v923 = vcvt.s32.f32 %v921
      %v924 = vcvt.s32.f32 %v922
      %925 = vmin.xlane.f32.xlu0 %v924
      %v926 = vpop.xlane.xlu0 %925
      %vm927 = vcmp.eq.f32.partialorder %v924, %v926
      %v928 = vsel %vm927, %v923, inf
      %929 = vmin.xlane.f32.xlu0 %v928
      %v930 = vpop.xlane.xlu0 %929
      %v931 = vcvt.f32.s32 %v930
      %v932 = vcvt.f32.s32 %v926
      %v933 = vshll.u32 %v932, 16
      %v934 = vadd.s32 %v933, %v931
      %v935 = vand.u32 %v880, 65535
      %v936 = vshra.s32 %v880, 16
      %v937 = vcvt.s32.f32 %v935
      %v938 = vcvt.s32.f32 %v936
      %939 = vmin.xlane.f32.xlu0 %v938
      %v940 = vpop.xlane.xlu0 %939
      %vm941 = vcmp.eq.f32.partialorder %v938, %v940
      %v942 = vsel %vm941, %v937, inf
      %943 = vmin.xlane.f32.xlu0 %v942
      %v944 = vpop.xlane.xlu0 %943
      %v945 = vcvt.f32.s32 %v944
      %v946 = vcvt.f32.s32 %v940
      %v947 = vshll.u32 %v946, 16
      %v948 = vadd.s32 %v947, %v945
      %v949 = vand.u32 %v881, 65535
      %v950 = vshra.s32 %v881, 16
      %v951 = vcvt.s32.f32 %v949
      %v952 = vcvt.s32.f32 %v950
      %953 = vmin.xlane.f32.xlu0 %v952
      %v954 = vpop.xlane.xlu0 %953
      %vm955 = vcmp.eq.f32.partialorder %v952, %v954
      %v956 = vsel %vm955, %v951, inf
      %957 = vmin.xlane.f32.xlu0 %v956
      %v958 = vpop.xlane.xlu0 %957
      %v959 = vcvt.f32.s32 %v958
      %v960 = vcvt.f32.s32 %v954
      %v961 = vshll.u32 %v960, 16
      %v962 = vadd.s32 %v961, %v959
      %v963 = vand.u32 %v882, 65535
      %v964 = vshra.s32 %v882, 16
      %v965 = vcvt.s32.f32 %v963
      %v966 = vcvt.s32.f32 %v964
      %967 = vmin.xlane.f32.xlu0 %v966
      %v968 = vpop.xlane.xlu0 %967
      %vm969 = vcmp.eq.f32.partialorder %v966, %v968
      %v970 = vsel %vm969, %v965, inf
      %971 = vmin.xlane.f32.xlu0 %v970
      %v972 = vpop.xlane.xlu0 %971
      %v973 = vcvt.f32.s32 %v972
      %v974 = vcvt.f32.s32 %v968
      %v975 = vshll.u32 %v974, 16
      %v976 = vadd.s32 %v975, %v973
      %v977 = vand.u32 %v883, 65535
      %v978 = vshra.s32 %v883, 16
      %v979 = vcvt.s32.f32 %v977
      %v980 = vcvt.s32.f32 %v978
      %981 = vmin.xlane.f32.xlu0 %v980
      %v982 = vpop.xlane.xlu0 %981
      %vm983 = vcmp.eq.f32.partialorder %v980, %v982
      %v984 = vsel %vm983, %v979, inf
      %985 = vmin.xlane.f32.xlu0 %v984
      %v986 = vpop.xlane.xlu0 %985
      %v987 = vcvt.f32.s32 %v986
      %v988 = vcvt.f32.s32 %v982
      %v989 = vshll.u32 %v988, 16
      %v990 = vadd.s32 %v989, %v987
      %v991 = vand.u32 %v884, 65535
      %v992 = vshra.s32 %v884, 16
      %v993 = vcvt.s32.f32 %v991
      %v994 = vcvt.s32.f32 %v992
      %995 = vmin.xlane.f32.xlu0 %v994
      %v996 = vpop.xlane.xlu0 %995
      %vm997 = vcmp.eq.f32.partialorder %v994, %v996
      %v998 = vsel %vm997, %v993, inf
      %999 = vmin.xlane.f32.xlu0 %v998
      %v1000 = vpop.xlane.xlu0 %999
      %v1001 = vcvt.f32.s32 %v1000
      %v1002 = vcvt.f32.s32 %v996
      %v1003 = vshll.u32 %v1002, 16
      %v1004 = vadd.s32 %v1003, %v1001
      %v1005 = vand.u32 %v885, 65535
      %v1006 = vshra.s32 %v885, 16
      %v1007 = vcvt.s32.f32 %v1005
      %v1008 = vcvt.s32.f32 %v1006
      %1009 = vmin.xlane.f32.xlu0 %v1008
      %v1010 = vpop.xlane.xlu0 %1009
      %vm1011 = vcmp.eq.f32.partialorder %v1008, %v1010
      %v1012 = vsel %vm1011, %v1007, inf
      %1013 = vmin.xlane.f32.xlu0 %v1012
      %v1014 = vpop.xlane.xlu0 %1013
      %v1015 = vcvt.f32.s32 %v1014
      %v1016 = vcvt.f32.s32 %v1010
      %v1017 = vshll.u32 %v1016, 16
      %v1018 = vadd.s32 %v1017, %v1015
      %v1019 = vand.u32 %v886, 65535
      %v1020 = vshra.s32 %v886, 16
      %v1021 = vcvt.s32.f32 %v1019
      %v1022 = vcvt.s32.f32 %v1020
      %1023 = vmin.xlane.f32.xlu0 %v1022
      %v1024 = vpop.xlane.xlu0 %1023
      %vm1025 = vcmp.eq.f32.partialorder %v1022, %v1024
      %v1026 = vsel %vm1025, %v1021, inf
      %1027 = vmin.xlane.f32.xlu0 %v1026
      %v1028 = vpop.xlane.xlu0 %1027
      %v1029 = vcvt.f32.s32 %v1028
      %v1030 = vcvt.f32.s32 %v1024
      %v1031 = vshll.u32 %v1030, 16
      %v1032 = vadd.s32 %v1031, %v1029
      %v1033 = vand.u32 %v887, 65535
      %v1034 = vshra.s32 %v887, 16
      %v1035 = vcvt.s32.f32 %v1033
      %v1036 = vcvt.s32.f32 %v1034
      %1037 = vmin.xlane.f32.xlu0 %v1036
      %v1038 = vpop.xlane.xlu0 %1037
      %vm1039 = vcmp.eq.f32.partialorder %v1036, %v1038
      %v1040 = vsel %vm1039, %v1035, inf
      %1041 = vmin.xlane.f32.xlu0 %v1040
      %v1042 = vpop.xlane.xlu0 %1041
      %v1043 = vcvt.f32.s32 %v1042
      %v1044 = vcvt.f32.s32 %v1038
      %v1045 = vshll.u32 %v1044, 16
      %v1046 = vadd.s32 %v1045, %v1043
      %v1047 = vand.u32 %v888, 65535
      %v1048 = vshra.s32 %v888, 16
      %v1049 = vcvt.s32.f32 %v1047
      %v1050 = vcvt.s32.f32 %v1048
      %1051 = vmin.xlane.f32.xlu0 %v1050
      %v1052 = vpop.xlane.xlu0 %1051
      %vm1053 = vcmp.eq.f32.partialorder %v1050, %v1052
      %v1054 = vsel %vm1053, %v1049, inf
      %1055 = vmin.xlane.f32.xlu0 %v1054
      %v1056 = vpop.xlane.xlu0 %1055
      %v1057 = vcvt.f32.s32 %v1056
      %v1058 = vcvt.f32.s32 %v1052
      %v1059 = vshll.u32 %v1058, 16
      %v1060 = vadd.s32 %v1059, %v1057
      %v1061 = vand.u32 %v889, 65535
      %v1062 = vshra.s32 %v889, 16
      %v1063 = vcvt.s32.f32 %v1061
      %v1064 = vcvt.s32.f32 %v1062
      %1065 = vmin.xlane.f32.xlu0 %v1064
      %v1066 = vpop.xlane.xlu0 %1065
      %vm1067 = vcmp.eq.f32.partialorder %v1064, %v1066
      %v1068 = vsel %vm1067, %v1063, inf
      %1069 = vmin.xlane.f32.xlu0 %v1068
      %v1070 = vpop.xlane.xlu0 %1069
      %v1071 = vcvt.f32.s32 %v1070
      %v1072 = vcvt.f32.s32 %v1066
      %v1073 = vshll.u32 %v1072, 16
      %v1074 = vadd.s32 %v1073, %v1071
      %v1075 = vand.u32 %v890, 65535
      %v1076 = vshra.s32 %v890, 16
      %v1077 = vcvt.s32.f32 %v1075
      %v1078 = vcvt.s32.f32 %v1076
      %1079 = vmin.xlane.f32.xlu0 %v1078
      %v1080 = vpop.xlane.xlu0 %1079
      %vm1081 = vcmp.eq.f32.partialorder %v1078, %v1080
      %v1082 = vsel %vm1081, %v1077, inf
      %1083 = vmin.xlane.f32.xlu0 %v1082
      %v1084 = vpop.xlane.xlu0 %1083
      %v1085 = vcvt.f32.s32 %v1084
      %v1086 = vcvt.f32.s32 %v1080
      %v1087 = vshll.u32 %v1086, 16
      %v1088 = vadd.s32 %v1087, %v1085
      %v1089 = vand.u32 %v891, 65535
      %v1090 = vshra.s32 %v891, 16
      %v1091 = vcvt.s32.f32 %v1089
      %v1092 = vcvt.s32.f32 %v1090
      %1093 = vmin.xlane.f32.xlu0 %v1092
      %v1094 = vpop.xlane.xlu0 %1093
      %vm1095 = vcmp.eq.f32.partialorder %v1092, %v1094
      %v1096 = vsel %vm1095, %v1091, inf
      %1097 = vmin.xlane.f32.xlu0 %v1096
      %v1098 = vpop.xlane.xlu0 %1097
      %v1099 = vcvt.f32.s32 %v1098
      %v1100 = vcvt.f32.s32 %v1094
      %v1101 = vshll.u32 %v1100, 16
      %v1102 = vadd.s32 %v1101, %v1099
      %v1103 = vand.u32 %v892, 65535
      %v1104 = vshra.s32 %v892, 16
      %v1105 = vcvt.s32.f32 %v1103
      %v1106 = vcvt.s32.f32 %v1104
      %1107 = vmin.xlane.f32.xlu0 %v1106
      %v1108 = vpop.xlane.xlu0 %1107
      %vm1109 = vcmp.eq.f32.partialorder %v1106, %v1108
      %v1110 = vsel %vm1109, %v1105, inf
      %1111 = vmin.xlane.f32.xlu0 %v1110
      %v1112 = vpop.xlane.xlu0 %1111
      %v1113 = vcvt.f32.s32 %v1112
      %v1114 = vcvt.f32.s32 %v1108
      %v1115 = vshll.u32 %v1114, 16
      %v1116 = vadd.s32 %v1115, %v1113
      %vm1117 = vcmp.eq.s32.totalorder %v877, %v906
      %vm1118 = vcmp.eq.s32.totalorder %v878, %v920
      %vm1119 = vcmp.eq.s32.totalorder %v879, %v934
      %vm1120 = vcmp.eq.s32.totalorder %v880, %v948
      %vm1121 = vcmp.eq.s32.totalorder %v881, %v962
      %vm1122 = vcmp.eq.s32.totalorder %v882, %v976
      %vm1123 = vcmp.eq.s32.totalorder %v883, %v990
      %vm1124 = vcmp.eq.s32.totalorder %v884, %v1004
      %vm1125 = vcmp.eq.s32.totalorder %v885, %v1018
      %vm1126 = vcmp.eq.s32.totalorder %v886, %v1032
      %vm1127 = vcmp.eq.s32.totalorder %v887, %v1046
      %vm1128 = vcmp.eq.s32.totalorder %v888, %v1060
      %vm1129 = vcmp.eq.s32.totalorder %v889, %v1074
      %vm1130 = vcmp.eq.s32.totalorder %v890, %v1088
      %vm1131 = vcmp.eq.s32.totalorder %v891, %v1102
      %vm1132 = vcmp.eq.s32.totalorder %v892, %v1116
      %v1133 = vsel %vm1117, 1.0, 0.0
      %v1134 = vsel %vm1118, 1.0, 0.0
      %v1135 = vsel %vm1119, 1.0, 0.0
      %v1136 = vsel %vm1120, 1.0, 0.0
      %v1137 = vsel %vm1121, 1.0, 0.0
      %v1138 = vsel %vm1122, 1.0, 0.0
      %v1139 = vsel %vm1123, 1.0, 0.0
      %v1140 = vsel %vm1124, 1.0, 0.0
      %v1141 = vsel %vm1125, 1.0, 0.0
      %v1142 = vsel %vm1126, 1.0, 0.0
      %v1143 = vsel %vm1127, 1.0, 0.0
      %v1144 = vsel %vm1128, 1.0, 0.0
      %v1145 = vsel %vm1129, 1.0, 0.0
      %v1146 = vsel %vm1130, 1.0, 0.0
      %v1147 = vsel %vm1131, 1.0, 0.0
      %v1148 = vsel %vm1132, 1.0, 0.0
      %v1149 = vpack.c.bf16 %v1134, %v1133
      %v1150 = vpack.c.bf16 %v1136, %v1135
      %v1151 = vpack.c.bf16 %v1138, %v1137
      %v1152 = vpack.c.bf16 %v1140, %v1139
      %v1153 = vpack.c.bf16 %v1142, %v1141
      %v1154 = vpack.c.bf16 %v1144, %v1143
      %v1155 = vpack.c.bf16 %v1146, %v1145
      %v1156 = vpack.c.bf16 %v1148, %v1147
      %v1157 = vsel %vm1117, 2147483647, %v877
      %v1158 = vsel %vm1118, 2147483647, %v878
      %v1159 = vsel %vm1119, 2147483647, %v879
      %v1160 = vsel %vm1120, 2147483647, %v880
      %v1161 = vsel %vm1121, 2147483647, %v881
      %v1162 = vsel %vm1122, 2147483647, %v882
      %v1163 = vsel %vm1123, 2147483647, %v883
      %v1164 = vsel %vm1124, 2147483647, %v884
      %v1165 = vsel %vm1125, 2147483647, %v885
      %v1166 = vsel %vm1126, 2147483647, %v886
      %v1167 = vsel %vm1127, 2147483647, %v887
      %v1168 = vsel %vm1128, 2147483647, %v888
      %v1169 = vsel %vm1129, 2147483647, %v889
      %v1170 = vsel %vm1130, 2147483647, %v890
      %v1171 = vsel %vm1131, 2147483647, %v891
      %v1172 = vsel %vm1132, 2147483647, %v892
      %v1173 = vand.u32 %v1157, 65535
      %v1174 = vshra.s32 %v1157, 16
      %v1175 = vcvt.s32.f32 %v1173
      %v1176 = vcvt.s32.f32 %v1174
      %1177 = vmin.xlane.f32.xlu0 %v1176
      %v1178 = vpop.xlane.xlu0 %1177
      %vm1179 = vcmp.eq.f32.partialorder %v1176, %v1178
      %v1180 = vsel %vm1179, %v1175, inf
      %1181 = vmin.xlane.f32.xlu0 %v1180
      %v1182 = vpop.xlane.xlu0 %1181
      %v1183 = vcvt.f32.s32 %v1182
      %v1184 = vcvt.f32.s32 %v1178
      %v1185 = vshll.u32 %v1184, 16
      %v1186 = vadd.s32 %v1185, %v1183
      %v1187 = vand.u32 %v1158, 65535
      %v1188 = vshra.s32 %v1158, 16
      %v1189 = vcvt.s32.f32 %v1187
      %v1190 = vcvt.s32.f32 %v1188
      %1191 = vmin.xlane.f32.xlu0 %v1190
      %v1192 = vpop.xlane.xlu0 %1191
      %vm1193 = vcmp.eq.f32.partialorder %v1190, %v1192
      %v1194 = vsel %vm1193, %v1189, inf
      %1195 = vmin.xlane.f32.xlu0 %v1194
      %v1196 = vpop.xlane.xlu0 %1195
      %v1197 = vcvt.f32.s32 %v1196
      %v1198 = vcvt.f32.s32 %v1192
      %v1199 = vshll.u32 %v1198, 16
      %v1200 = vadd.s32 %v1199, %v1197
      %v1201 = vand.u32 %v1159, 65535
      %v1202 = vshra.s32 %v1159, 16
      %v1203 = vcvt.s32.f32 %v1201
      %v1204 = vcvt.s32.f32 %v1202
      %1205 = vmin.xlane.f32.xlu0 %v1204
      %v1206 = vpop.xlane.xlu0 %1205
      %vm1207 = vcmp.eq.f32.partialorder %v1204, %v1206
      %v1208 = vsel %vm1207, %v1203, inf
      %1209 = vmin.xlane.f32.xlu0 %v1208
      %v1210 = vpop.xlane.xlu0 %1209
      %v1211 = vcvt.f32.s32 %v1210
      %v1212 = vcvt.f32.s32 %v1206
      %v1213 = vshll.u32 %v1212, 16
      %v1214 = vadd.s32 %v1213, %v1211
      %v1215 = vand.u32 %v1160, 65535
      %v1216 = vshra.s32 %v1160, 16
      %v1217 = vcvt.s32.f32 %v1215
      %v1218 = vcvt.s32.f32 %v1216
      %1219 = vmin.xlane.f32.xlu0 %v1218
      %v1220 = vpop.xlane.xlu0 %1219
      %vm1221 = vcmp.eq.f32.partialorder %v1218, %v1220
      %v1222 = vsel %vm1221, %v1217, inf
      %1223 = vmin.xlane.f32.xlu0 %v1222
      %v1224 = vpop.xlane.xlu0 %1223
      %v1225 = vcvt.f32.s32 %v1224
      %v1226 = vcvt.f32.s32 %v1220
      %v1227 = vshll.u32 %v1226, 16
      %v1228 = vadd.s32 %v1227, %v1225
      %v1229 = vand.u32 %v1161, 65535
      %v1230 = vshra.s32 %v1161, 16
      %v1231 = vcvt.s32.f32 %v1229
      %v1232 = vcvt.s32.f32 %v1230
      %1233 = vmin.xlane.f32.xlu0 %v1232
      %v1234 = vpop.xlane.xlu0 %1233
      %vm1235 = vcmp.eq.f32.partialorder %v1232, %v1234
      %v1236 = vsel %vm1235, %v1231, inf
      %1237 = vmin.xlane.f32.xlu0 %v1236
      %v1238 = vpop.xlane.xlu0 %1237
      %v1239 = vcvt.f32.s32 %v1238
      %v1240 = vcvt.f32.s32 %v1234
      %v1241 = vshll.u32 %v1240, 16
      %v1242 = vadd.s32 %v1241, %v1239
      %v1243 = vand.u32 %v1162, 65535
      %v1244 = vshra.s32 %v1162, 16
      %v1245 = vcvt.s32.f32 %v1243
      %v1246 = vcvt.s32.f32 %v1244
      %1247 = vmin.xlane.f32.xlu0 %v1246
      %v1248 = vpop.xlane.xlu0 %1247
      %vm1249 = vcmp.eq.f32.partialorder %v1246, %v1248
      %v1250 = vsel %vm1249, %v1245, inf
      %1251 = vmin.xlane.f32.xlu0 %v1250
      %v1252 = vpop.xlane.xlu0 %1251
      %v1253 = vcvt.f32.s32 %v1252
      %v1254 = vcvt.f32.s32 %v1248
      %v1255 = vshll.u32 %v1254, 16
      %v1256 = vadd.s32 %v1255, %v1253
      %v1257 = vand.u32 %v1163, 65535
      %v1258 = vshra.s32 %v1163, 16
      %v1259 = vcvt.s32.f32 %v1257
      %v1260 = vcvt.s32.f32 %v1258
      %1261 = vmin.xlane.f32.xlu0 %v1260
      %v1262 = vpop.xlane.xlu0 %1261
      %vm1263 = vcmp.eq.f32.partialorder %v1260, %v1262
      %v1264 = vsel %vm1263, %v1259, inf
      %1265 = vmin.xlane.f32.xlu0 %v1264
      %v1266 = vpop.xlane.xlu0 %1265
      %v1267 = vcvt.f32.s32 %v1266
      %v1268 = vcvt.f32.s32 %v1262
      %v1269 = vshll.u32 %v1268, 16
      %v1270 = vadd.s32 %v1269, %v1267
      %v1271 = vand.u32 %v1164, 65535
      %v1272 = vshra.s32 %v1164, 16
      %v1273 = vcvt.s32.f32 %v1271
      %v1274 = vcvt.s32.f32 %v1272
      %1275 = vmin.xlane.f32.xlu0 %v1274
      %v1276 = vpop.xlane.xlu0 %1275
      %vm1277 = vcmp.eq.f32.partialorder %v1274, %v1276
      %v1278 = vsel %vm1277, %v1273, inf
      %1279 = vmin.xlane.f32.xlu0 %v1278
      %v1280 = vpop.xlane.xlu0 %1279
      %v1281 = vcvt.f32.s32 %v1280
      %v1282 = vcvt.f32.s32 %v1276
      %v1283 = vshll.u32 %v1282, 16
      %v1284 = vadd.s32 %v1283, %v1281
      %v1285 = vand.u32 %v1165, 65535
      %v1286 = vshra.s32 %v1165, 16
      %v1287 = vcvt.s32.f32 %v1285
      %v1288 = vcvt.s32.f32 %v1286
      %1289 = vmin.xlane.f32.xlu0 %v1288
      %v1290 = vpop.xlane.xlu0 %1289
      %vm1291 = vcmp.eq.f32.partialorder %v1288, %v1290
      %v1292 = vsel %vm1291, %v1287, inf
      %1293 = vmin.xlane.f32.xlu0 %v1292
      %v1294 = vpop.xlane.xlu0 %1293
      %v1295 = vcvt.f32.s32 %v1294
      %v1296 = vcvt.f32.s32 %v1290
      %v1297 = vshll.u32 %v1296, 16
      %v1298 = vadd.s32 %v1297, %v1295
      %v1299 = vand.u32 %v1166, 65535
      %v1300 = vshra.s32 %v1166, 16
      %v1301 = vcvt.s32.f32 %v1299
      %v1302 = vcvt.s32.f32 %v1300
      %1303 = vmin.xlane.f32.xlu0 %v1302
      %v1304 = vpop.xlane.xlu0 %1303
      %vm1305 = vcmp.eq.f32.partialorder %v1302, %v1304
      %v1306 = vsel %vm1305, %v1301, inf
      %1307 = vmin.xlane.f32.xlu0 %v1306
      %v1308 = vpop.xlane.xlu0 %1307
      %v1309 = vcvt.f32.s32 %v1308
      %v1310 = vcvt.f32.s32 %v1304
      %v1311 = vshll.u32 %v1310, 16
      %v1312 = vadd.s32 %v1311, %v1309
      %v1313 = vand.u32 %v1167, 65535
      %v1314 = vshra.s32 %v1167, 16
      %v1315 = vcvt.s32.f32 %v1313
      %v1316 = vcvt.s32.f32 %v1314
      %1317 = vmin.xlane.f32.xlu0 %v1316
      %v1318 = vpop.xlane.xlu0 %1317
      %vm1319 = vcmp.eq.f32.partialorder %v1316, %v1318
      %v1320 = vsel %vm1319, %v1315, inf
      %1321 = vmin.xlane.f32.xlu0 %v1320
      %v1322 = vpop.xlane.xlu0 %1321
      %v1323 = vcvt.f32.s32 %v1322
      %v1324 = vcvt.f32.s32 %v1318
      %v1325 = vshll.u32 %v1324, 16
      %v1326 = vadd.s32 %v1325, %v1323
      %v1327 = vand.u32 %v1168, 65535
      %v1328 = vshra.s32 %v1168, 16
      %v1329 = vcvt.s32.f32 %v1327
      %v1330 = vcvt.s32.f32 %v1328
      %1331 = vmin.xlane.f32.xlu0 %v1330
      %v1332 = vpop.xlane.xlu0 %1331
      %vm1333 = vcmp.eq.f32.partialorder %v1330, %v1332
      %v1334 = vsel %vm1333, %v1329, inf
      %1335 = vmin.xlane.f32.xlu0 %v1334
      %v1336 = vpop.xlane.xlu0 %1335
      %v1337 = vcvt.f32.s32 %v1336
      %v1338 = vcvt.f32.s32 %v1332
      %v1339 = vshll.u32 %v1338, 16
      %v1340 = vadd.s32 %v1339, %v1337
      %v1341 = vand.u32 %v1169, 65535
      %v1342 = vshra.s32 %v1169, 16
      %v1343 = vcvt.s32.f32 %v1341
      %v1344 = vcvt.s32.f32 %v1342
      %1345 = vmin.xlane.f32.xlu0 %v1344
      %v1346 = vpop.xlane.xlu0 %1345
      %vm1347 = vcmp.eq.f32.partialorder %v1344, %v1346
      %v1348 = vsel %vm1347, %v1343, inf
      %1349 = vmin.xlane.f32.xlu0 %v1348
      %v1350 = vpop.xlane.xlu0 %1349
      %v1351 = vcvt.f32.s32 %v1350
      %v1352 = vcvt.f32.s32 %v1346
      %v1353 = vshll.u32 %v1352, 16
      %v1354 = vadd.s32 %v1353, %v1351
      %v1355 = vand.u32 %v1170, 65535
      %v1356 = vshra.s32 %v1170, 16
      %v1357 = vcvt.s32.f32 %v1355
      %v1358 = vcvt.s32.f32 %v1356
      %1359 = vmin.xlane.f32.xlu0 %v1358
      %v1360 = vpop.xlane.xlu0 %1359
      %vm1361 = vcmp.eq.f32.partialorder %v1358, %v1360
      %v1362 = vsel %vm1361, %v1357, inf
      %1363 = vmin.xlane.f32.xlu0 %v1362
      %v1364 = vpop.xlane.xlu0 %1363
      %v1365 = vcvt.f32.s32 %v1364
      %v1366 = vcvt.f32.s32 %v1360
      %v1367 = vshll.u32 %v1366, 16
      %v1368 = vadd.s32 %v1367, %v1365
      %v1369 = vand.u32 %v1171, 65535
      %v1370 = vshra.s32 %v1171, 16
      %v1371 = vcvt.s32.f32 %v1369
      %v1372 = vcvt.s32.f32 %v1370
      %1373 = vmin.xlane.f32.xlu0 %v1372
      %v1374 = vpop.xlane.xlu0 %1373
      %vm1375 = vcmp.eq.f32.partialorder %v1372, %v1374
      %v1376 = vsel %vm1375, %v1371, inf
      %1377 = vmin.xlane.f32.xlu0 %v1376
      %v1378 = vpop.xlane.xlu0 %1377
      %v1379 = vcvt.f32.s32 %v1378
      %v1380 = vcvt.f32.s32 %v1374
      %v1381 = vshll.u32 %v1380, 16
      %v1382 = vadd.s32 %v1381, %v1379
      %v1383 = vand.u32 %v1172, 65535
      %v1384 = vshra.s32 %v1172, 16
      %v1385 = vcvt.s32.f32 %v1383
      %v1386 = vcvt.s32.f32 %v1384
      %1387 = vmin.xlane.f32.xlu0 %v1386
      %v1388 = vpop.xlane.xlu0 %1387
      %vm1389 = vcmp.eq.f32.partialorder %v1386, %v1388
      %v1390 = vsel %vm1389, %v1385, inf
      %1391 = vmin.xlane.f32.xlu0 %v1390
      %v1392 = vpop.xlane.xlu0 %1391
      %v1393 = vcvt.f32.s32 %v1392
      %v1394 = vcvt.f32.s32 %v1388
      %v1395 = vshll.u32 %v1394, 16
      %v1396 = vadd.s32 %v1395, %v1393
      %vm1397 = vcmp.eq.s32.totalorder %v1157, %v1186
      %vm1398 = vcmp.eq.s32.totalorder %v1158, %v1200
      %vm1399 = vcmp.eq.s32.totalorder %v1159, %v1214
      %vm1400 = vcmp.eq.s32.totalorder %v1160, %v1228
      %vm1401 = vcmp.eq.s32.totalorder %v1161, %v1242
      %vm1402 = vcmp.eq.s32.totalorder %v1162, %v1256
      %vm1403 = vcmp.eq.s32.totalorder %v1163, %v1270
      %vm1404 = vcmp.eq.s32.totalorder %v1164, %v1284
      %vm1405 = vcmp.eq.s32.totalorder %v1165, %v1298
      %vm1406 = vcmp.eq.s32.totalorder %v1166, %v1312
      %vm1407 = vcmp.eq.s32.totalorder %v1167, %v1326
      %vm1408 = vcmp.eq.s32.totalorder %v1168, %v1340
      %vm1409 = vcmp.eq.s32.totalorder %v1169, %v1354
      %vm1410 = vcmp.eq.s32.totalorder %v1170, %v1368
      %vm1411 = vcmp.eq.s32.totalorder %v1171, %v1382
      %vm1412 = vcmp.eq.s32.totalorder %v1172, %v1396
      %v1413 = vsel %vm1397, 1.0, 0.0
      %v1414 = vsel %vm1398, 1.0, 0.0
      %v1415 = vsel %vm1399, 1.0, 0.0
      %v1416 = vsel %vm1400, 1.0, 0.0
      %v1417 = vsel %vm1401, 1.0, 0.0
      %v1418 = vsel %vm1402, 1.0, 0.0
      %v1419 = vsel %vm1403, 1.0, 0.0
      %v1420 = vsel %vm1404, 1.0, 0.0
      %v1421 = vsel %vm1405, 1.0, 0.0
      %v1422 = vsel %vm1406, 1.0, 0.0
      %v1423 = vsel %vm1407, 1.0, 0.0
      %v1424 = vsel %vm1408, 1.0, 0.0
      %v1425 = vsel %vm1409, 1.0, 0.0
      %v1426 = vsel %vm1410, 1.0, 0.0
      %v1427 = vsel %vm1411, 1.0, 0.0
      %v1428 = vsel %vm1412, 1.0, 0.0
      %v1429 = vpack.c.bf16 %v1414, %v1413
      %v1430 = vpack.c.bf16 %v1416, %v1415
      %v1431 = vpack.c.bf16 %v1418, %v1417
      %v1432 = vpack.c.bf16 %v1420, %v1419
      %v1433 = vpack.c.bf16 %v1422, %v1421
      %v1434 = vpack.c.bf16 %v1424, %v1423
      %v1435 = vpack.c.bf16 %v1426, %v1425
      %v1436 = vpack.c.bf16 %v1428, %v1427
      %v1437 = vsel %vm1397, 2147483647, %v1157
      %v1438 = vsel %vm1398, 2147483647, %v1158
      %v1439 = vsel %vm1399, 2147483647, %v1159
      %v1440 = vsel %vm1400, 2147483647, %v1160
      %v1441 = vsel %vm1401, 2147483647, %v1161
      %v1442 = vsel %vm1402, 2147483647, %v1162
      %v1443 = vsel %vm1403, 2147483647, %v1163
      %v1444 = vsel %vm1404, 2147483647, %v1164
      %v1445 = vsel %vm1405, 2147483647, %v1165
      %v1446 = vsel %vm1406, 2147483647, %v1166
      %v1447 = vsel %vm1407, 2147483647, %v1167
      %v1448 = vsel %vm1408, 2147483647, %v1168
      %v1449 = vsel %vm1409, 2147483647, %v1169
      %v1450 = vsel %vm1410, 2147483647, %v1170
      %v1451 = vsel %vm1411, 2147483647, %v1171
      %v1452 = vsel %vm1412, 2147483647, %v1172
      %v1453 = vand.u32 %v1437, 65535
      %v1454 = vshra.s32 %v1437, 16
      %v1455 = vcvt.s32.f32 %v1453
      %v1456 = vcvt.s32.f32 %v1454
      %1457 = vmin.xlane.f32.xlu0 %v1456
      %v1458 = vpop.xlane.xlu0 %1457
      %vm1459 = vcmp.eq.f32.partialorder %v1456, %v1458
      %v1460 = vsel %vm1459, %v1455, inf
      %1461 = vmin.xlane.f32.xlu0 %v1460
      %v1462 = vpop.xlane.xlu0 %1461
      %v1463 = vcvt.f32.s32 %v1462
      %v1464 = vcvt.f32.s32 %v1458
      %v1465 = vshll.u32 %v1464, 16
      %v1466 = vadd.s32 %v1465, %v1463
      %v1467 = vand.u32 %v1438, 65535
      %v1468 = vshra.s32 %v1438, 16
      %v1469 = vcvt.s32.f32 %v1467
      %v1470 = vcvt.s32.f32 %v1468
      %1471 = vmin.xlane.f32.xlu0 %v1470
      %v1472 = vpop.xlane.xlu0 %1471
      %vm1473 = vcmp.eq.f32.partialorder %v1470, %v1472
      %v1474 = vsel %vm1473, %v1469, inf
      %1475 = vmin.xlane.f32.xlu0 %v1474
      %v1476 = vpop.xlane.xlu0 %1475
      %v1477 = vcvt.f32.s32 %v1476
      %v1478 = vcvt.f32.s32 %v1472
      %v1479 = vshll.u32 %v1478, 16
      %v1480 = vadd.s32 %v1479, %v1477
      %v1481 = vand.u32 %v1439, 65535
      %v1482 = vshra.s32 %v1439, 16
      %v1483 = vcvt.s32.f32 %v1481
      %v1484 = vcvt.s32.f32 %v1482
      %1485 = vmin.xlane.f32.xlu0 %v1484
      %v1486 = vpop.xlane.xlu0 %1485
      %vm1487 = vcmp.eq.f32.partialorder %v1484, %v1486
      %v1488 = vsel %vm1487, %v1483, inf
      %1489 = vmin.xlane.f32.xlu0 %v1488
      %v1490 = vpop.xlane.xlu0 %1489
      %v1491 = vcvt.f32.s32 %v1490
      %v1492 = vcvt.f32.s32 %v1486
      %v1493 = vshll.u32 %v1492, 16
      %v1494 = vadd.s32 %v1493, %v1491
      %v1495 = vand.u32 %v1440, 65535
      %v1496 = vshra.s32 %v1440, 16
      %v1497 = vcvt.s32.f32 %v1495
      %v1498 = vcvt.s32.f32 %v1496
      %1499 = vmin.xlane.f32.xlu0 %v1498
      %v1500 = vpop.xlane.xlu0 %1499
      %vm1501 = vcmp.eq.f32.partialorder %v1498, %v1500
      %v1502 = vsel %vm1501, %v1497, inf
      %1503 = vmin.xlane.f32.xlu0 %v1502
      %v1504 = vpop.xlane.xlu0 %1503
      %v1505 = vcvt.f32.s32 %v1504
      %v1506 = vcvt.f32.s32 %v1500
      %v1507 = vshll.u32 %v1506, 16
      %v1508 = vadd.s32 %v1507, %v1505
      %v1509 = vand.u32 %v1441, 65535
      %v1510 = vshra.s32 %v1441, 16
      %v1511 = vcvt.s32.f32 %v1509
      %v1512 = vcvt.s32.f32 %v1510
      %1513 = vmin.xlane.f32.xlu0 %v1512
      %v1514 = vpop.xlane.xlu0 %1513
      %vm1515 = vcmp.eq.f32.partialorder %v1512, %v1514
      %v1516 = vsel %vm1515, %v1511, inf
      %1517 = vmin.xlane.f32.xlu0 %v1516
      %v1518 = vpop.xlane.xlu0 %1517
      %v1519 = vcvt.f32.s32 %v1518
      %v1520 = vcvt.f32.s32 %v1514
      %v1521 = vshll.u32 %v1520, 16
      %v1522 = vadd.s32 %v1521, %v1519
      %v1523 = vand.u32 %v1442, 65535
      %v1524 = vshra.s32 %v1442, 16
      %v1525 = vcvt.s32.f32 %v1523
      %v1526 = vcvt.s32.f32 %v1524
      %1527 = vmin.xlane.f32.xlu0 %v1526
      %v1528 = vpop.xlane.xlu0 %1527
      %vm1529 = vcmp.eq.f32.partialorder %v1526, %v1528
      %v1530 = vsel %vm1529, %v1525, inf
      %1531 = vmin.xlane.f32.xlu0 %v1530
      %v1532 = vpop.xlane.xlu0 %1531
      %v1533 = vcvt.f32.s32 %v1532
      %v1534 = vcvt.f32.s32 %v1528
      %v1535 = vshll.u32 %v1534, 16
      %v1536 = vadd.s32 %v1535, %v1533
      %v1537 = vand.u32 %v1443, 65535
      %v1538 = vshra.s32 %v1443, 16
      %v1539 = vcvt.s32.f32 %v1537
      %v1540 = vcvt.s32.f32 %v1538
      %1541 = vmin.xlane.f32.xlu0 %v1540
      %v1542 = vpop.xlane.xlu0 %1541
      %vm1543 = vcmp.eq.f32.partialorder %v1540, %v1542
      %v1544 = vsel %vm1543, %v1539, inf
      %1545 = vmin.xlane.f32.xlu0 %v1544
      %v1546 = vpop.xlane.xlu0 %1545
      %v1547 = vcvt.f32.s32 %v1546
      %v1548 = vcvt.f32.s32 %v1542
      %v1549 = vshll.u32 %v1548, 16
      %v1550 = vadd.s32 %v1549, %v1547
      %v1551 = vand.u32 %v1444, 65535
      %v1552 = vshra.s32 %v1444, 16
      %v1553 = vcvt.s32.f32 %v1551
      %v1554 = vcvt.s32.f32 %v1552
      %1555 = vmin.xlane.f32.xlu0 %v1554
      %v1556 = vpop.xlane.xlu0 %1555
      %vm1557 = vcmp.eq.f32.partialorder %v1554, %v1556
      %v1558 = vsel %vm1557, %v1553, inf
      %1559 = vmin.xlane.f32.xlu0 %v1558
      %v1560 = vpop.xlane.xlu0 %1559
      %v1561 = vcvt.f32.s32 %v1560
      %v1562 = vcvt.f32.s32 %v1556
      %v1563 = vshll.u32 %v1562, 16
      %v1564 = vadd.s32 %v1563, %v1561
      %v1565 = vand.u32 %v1445, 65535
      %v1566 = vshra.s32 %v1445, 16
      %v1567 = vcvt.s32.f32 %v1565
      %v1568 = vcvt.s32.f32 %v1566
      %1569 = vmin.xlane.f32.xlu0 %v1568
      %v1570 = vpop.xlane.xlu0 %1569
      %vm1571 = vcmp.eq.f32.partialorder %v1568, %v1570
      %v1572 = vsel %vm1571, %v1567, inf
      %1573 = vmin.xlane.f32.xlu0 %v1572
      %v1574 = vpop.xlane.xlu0 %1573
      %v1575 = vcvt.f32.s32 %v1574
      %v1576 = vcvt.f32.s32 %v1570
      %v1577 = vshll.u32 %v1576, 16
      %v1578 = vadd.s32 %v1577, %v1575
      %v1579 = vand.u32 %v1446, 65535
      %v1580 = vshra.s32 %v1446, 16
      %v1581 = vcvt.s32.f32 %v1579
      %v1582 = vcvt.s32.f32 %v1580
      %1583 = vmin.xlane.f32.xlu0 %v1582
      %v1584 = vpop.xlane.xlu0 %1583
      %vm1585 = vcmp.eq.f32.partialorder %v1582, %v1584
      %v1586 = vsel %vm1585, %v1581, inf
      %1587 = vmin.xlane.f32.xlu0 %v1586
      %v1588 = vpop.xlane.xlu0 %1587
      %v1589 = vcvt.f32.s32 %v1588
      %v1590 = vcvt.f32.s32 %v1584
      %v1591 = vshll.u32 %v1590, 16
      %v1592 = vadd.s32 %v1591, %v1589
      %v1593 = vand.u32 %v1447, 65535
      %v1594 = vshra.s32 %v1447, 16
      %v1595 = vcvt.s32.f32 %v1593
      %v1596 = vcvt.s32.f32 %v1594
      %1597 = vmin.xlane.f32.xlu0 %v1596
      %v1598 = vpop.xlane.xlu0 %1597
      %vm1599 = vcmp.eq.f32.partialorder %v1596, %v1598
      %v1600 = vsel %vm1599, %v1595, inf
      %1601 = vmin.xlane.f32.xlu0 %v1600
      %v1602 = vpop.xlane.xlu0 %1601
      %v1603 = vcvt.f32.s32 %v1602
      %v1604 = vcvt.f32.s32 %v1598
      %v1605 = vshll.u32 %v1604, 16
      %v1606 = vadd.s32 %v1605, %v1603
      %v1607 = vand.u32 %v1448, 65535
      %v1608 = vshra.s32 %v1448, 16
      %v1609 = vcvt.s32.f32 %v1607
      %v1610 = vcvt.s32.f32 %v1608
      %1611 = vmin.xlane.f32.xlu0 %v1610
      %v1612 = vpop.xlane.xlu0 %1611
      %vm1613 = vcmp.eq.f32.partialorder %v1610, %v1612
      %v1614 = vsel %vm1613, %v1609, inf
      %1615 = vmin.xlane.f32.xlu0 %v1614
      %v1616 = vpop.xlane.xlu0 %1615
      %v1617 = vcvt.f32.s32 %v1616
      %v1618 = vcvt.f32.s32 %v1612
      %v1619 = vshll.u32 %v1618, 16
      %v1620 = vadd.s32 %v1619, %v1617
      %v1621 = vand.u32 %v1449, 65535
      %v1622 = vshra.s32 %v1449, 16
      %v1623 = vcvt.s32.f32 %v1621
      %v1624 = vcvt.s32.f32 %v1622
      %1625 = vmin.xlane.f32.xlu0 %v1624
      %v1626 = vpop.xlane.xlu0 %1625
      %vm1627 = vcmp.eq.f32.partialorder %v1624, %v1626
      %v1628 = vsel %vm1627, %v1623, inf
      %1629 = vmin.xlane.f32.xlu0 %v1628
      %v1630 = vpop.xlane.xlu0 %1629
      %v1631 = vcvt.f32.s32 %v1630
      %v1632 = vcvt.f32.s32 %v1626
      %v1633 = vshll.u32 %v1632, 16
      %v1634 = vadd.s32 %v1633, %v1631
      %v1635 = vand.u32 %v1450, 65535
      %v1636 = vshra.s32 %v1450, 16
      %v1637 = vcvt.s32.f32 %v1635
      %v1638 = vcvt.s32.f32 %v1636
      %1639 = vmin.xlane.f32.xlu0 %v1638
      %v1640 = vpop.xlane.xlu0 %1639
      %vm1641 = vcmp.eq.f32.partialorder %v1638, %v1640
      %v1642 = vsel %vm1641, %v1637, inf
      %1643 = vmin.xlane.f32.xlu0 %v1642
      %v1644 = vpop.xlane.xlu0 %1643
      %v1645 = vcvt.f32.s32 %v1644
      %v1646 = vcvt.f32.s32 %v1640
      %v1647 = vshll.u32 %v1646, 16
      %v1648 = vadd.s32 %v1647, %v1645
      %v1649 = vand.u32 %v1451, 65535
      %v1650 = vshra.s32 %v1451, 16
      %v1651 = vcvt.s32.f32 %v1649
      %v1652 = vcvt.s32.f32 %v1650
      %1653 = vmin.xlane.f32.xlu0 %v1652
      %v1654 = vpop.xlane.xlu0 %1653
      %vm1655 = vcmp.eq.f32.partialorder %v1652, %v1654
      %v1656 = vsel %vm1655, %v1651, inf
      %1657 = vmin.xlane.f32.xlu0 %v1656
      %v1658 = vpop.xlane.xlu0 %1657
      %v1659 = vcvt.f32.s32 %v1658
      %v1660 = vcvt.f32.s32 %v1654
      %v1661 = vshll.u32 %v1660, 16
      %v1662 = vadd.s32 %v1661, %v1659
      %v1663 = vand.u32 %v1452, 65535
      %v1664 = vshra.s32 %v1452, 16
      %v1665 = vcvt.s32.f32 %v1663
      %v1666 = vcvt.s32.f32 %v1664
      %1667 = vmin.xlane.f32.xlu0 %v1666
      %v1668 = vpop.xlane.xlu0 %1667
      %vm1669 = vcmp.eq.f32.partialorder %v1666, %v1668
      %v1670 = vsel %vm1669, %v1665, inf
      %1671 = vmin.xlane.f32.xlu0 %v1670
      %v1672 = vpop.xlane.xlu0 %1671
      %v1673 = vcvt.f32.s32 %v1672
      %v1674 = vcvt.f32.s32 %v1668
      %v1675 = vshll.u32 %v1674, 16
      %v1676 = vadd.s32 %v1675, %v1673
      %vm1677 = vcmp.eq.s32.totalorder %v1437, %v1466
      %vm1678 = vcmp.eq.s32.totalorder %v1438, %v1480
      %vm1679 = vcmp.eq.s32.totalorder %v1439, %v1494
      %vm1680 = vcmp.eq.s32.totalorder %v1440, %v1508
      %vm1681 = vcmp.eq.s32.totalorder %v1441, %v1522
      %vm1682 = vcmp.eq.s32.totalorder %v1442, %v1536
      %vm1683 = vcmp.eq.s32.totalorder %v1443, %v1550
      %vm1684 = vcmp.eq.s32.totalorder %v1444, %v1564
      %vm1685 = vcmp.eq.s32.totalorder %v1445, %v1578
      %vm1686 = vcmp.eq.s32.totalorder %v1446, %v1592
      %vm1687 = vcmp.eq.s32.totalorder %v1447, %v1606
      %vm1688 = vcmp.eq.s32.totalorder %v1448, %v1620
      %vm1689 = vcmp.eq.s32.totalorder %v1449, %v1634
      %vm1690 = vcmp.eq.s32.totalorder %v1450, %v1648
      %vm1691 = vcmp.eq.s32.totalorder %v1451, %v1662
      %vm1692 = vcmp.eq.s32.totalorder %v1452, %v1676
      %v1693 = vsel %vm1677, 1.0, 0.0
      %v1694 = vsel %vm1678, 1.0, 0.0
      %v1695 = vsel %vm1679, 1.0, 0.0
      %v1696 = vsel %vm1680, 1.0, 0.0
      %v1697 = vsel %vm1681, 1.0, 0.0
      %v1698 = vsel %vm1682, 1.0, 0.0
      %v1699 = vsel %vm1683, 1.0, 0.0
      %v1700 = vsel %vm1684, 1.0, 0.0
      %v1701 = vsel %vm1685, 1.0, 0.0
      %v1702 = vsel %vm1686, 1.0, 0.0
      %v1703 = vsel %vm1687, 1.0, 0.0
      %v1704 = vsel %vm1688, 1.0, 0.0
      %v1705 = vsel %vm1689, 1.0, 0.0
      %v1706 = vsel %vm1690, 1.0, 0.0
      %v1707 = vsel %vm1691, 1.0, 0.0
      %v1708 = vsel %vm1692, 1.0, 0.0
      %v1709 = vpack.c.bf16 %v1694, %v1693
      %v1710 = vpack.c.bf16 %v1696, %v1695
      %v1711 = vpack.c.bf16 %v1698, %v1697
      %v1712 = vpack.c.bf16 %v1700, %v1699
      %v1713 = vpack.c.bf16 %v1702, %v1701
      %v1714 = vpack.c.bf16 %v1704, %v1703
      %v1715 = vpack.c.bf16 %v1706, %v1705
      %v1716 = vpack.c.bf16 %v1708, %v1707
      %v1717 = vsel %vm1677, 2147483647, %v1437
      %v1718 = vsel %vm1678, 2147483647, %v1438
      %v1719 = vsel %vm1679, 2147483647, %v1439
      %v1720 = vsel %vm1680, 2147483647, %v1440
      %v1721 = vsel %vm1681, 2147483647, %v1441
      %v1722 = vsel %vm1682, 2147483647, %v1442
      %v1723 = vsel %vm1683, 2147483647, %v1443
      %v1724 = vsel %vm1684, 2147483647, %v1444
      %v1725 = vsel %vm1685, 2147483647, %v1445
      %v1726 = vsel %vm1686, 2147483647, %v1446
      %v1727 = vsel %vm1687, 2147483647, %v1447
      %v1728 = vsel %vm1688, 2147483647, %v1448
      %v1729 = vsel %vm1689, 2147483647, %v1449
      %v1730 = vsel %vm1690, 2147483647, %v1450
      %v1731 = vsel %vm1691, 2147483647, %v1451
      %v1732 = vsel %vm1692, 2147483647, %v1452
      %v1733 = vand.u32 %v1717, 65535
      %v1734 = vshra.s32 %v1717, 16
      %v1735 = vcvt.s32.f32 %v1733
      %v1736 = vcvt.s32.f32 %v1734
      %1737 = vmin.xlane.f32.xlu0 %v1736
      %v1738 = vpop.xlane.xlu0 %1737
      %vm1739 = vcmp.eq.f32.partialorder %v1736, %v1738
      %v1740 = vsel %vm1739, %v1735, inf
      %1741 = vmin.xlane.f32.xlu0 %v1740
      %v1742 = vpop.xlane.xlu0 %1741
      %v1743 = vcvt.f32.s32 %v1742
      %v1744 = vcvt.f32.s32 %v1738
      %v1745 = vshll.u32 %v1744, 16
      %v1746 = vadd.s32 %v1745, %v1743
      %v1747 = vand.u32 %v1718, 65535
      %v1748 = vshra.s32 %v1718, 16
      %v1749 = vcvt.s32.f32 %v1747
      %v1750 = vcvt.s32.f32 %v1748
      %1751 = vmin.xlane.f32.xlu0 %v1750
      %v1752 = vpop.xlane.xlu0 %1751
      %vm1753 = vcmp.eq.f32.partialorder %v1750, %v1752
      %v1754 = vsel %vm1753, %v1749, inf
      %1755 = vmin.xlane.f32.xlu0 %v1754
      %v1756 = vpop.xlane.xlu0 %1755
      %v1757 = vcvt.f32.s32 %v1756
      %v1758 = vcvt.f32.s32 %v1752
      %v1759 = vshll.u32 %v1758, 16
      %v1760 = vadd.s32 %v1759, %v1757
      %v1761 = vand.u32 %v1719, 65535
      %v1762 = vshra.s32 %v1719, 16
      %v1763 = vcvt.s32.f32 %v1761
      %v1764 = vcvt.s32.f32 %v1762
      %1765 = vmin.xlane.f32.xlu0 %v1764
      %v1766 = vpop.xlane.xlu0 %1765
      %vm1767 = vcmp.eq.f32.partialorder %v1764, %v1766
      %v1768 = vsel %vm1767, %v1763, inf
      %1769 = vmin.xlane.f32.xlu0 %v1768
      %v1770 = vpop.xlane.xlu0 %1769
      %v1771 = vcvt.f32.s32 %v1770
      %v1772 = vcvt.f32.s32 %v1766
      %v1773 = vshll.u32 %v1772, 16
      %v1774 = vadd.s32 %v1773, %v1771
      %v1775 = vand.u32 %v1720, 65535
      %v1776 = vshra.s32 %v1720, 16
      %v1777 = vcvt.s32.f32 %v1775
      %v1778 = vcvt.s32.f32 %v1776
      %1779 = vmin.xlane.f32.xlu0 %v1778
      %v1780 = vpop.xlane.xlu0 %1779
      %vm1781 = vcmp.eq.f32.partialorder %v1778, %v1780
      %v1782 = vsel %vm1781, %v1777, inf
      %1783 = vmin.xlane.f32.xlu0 %v1782
      %v1784 = vpop.xlane.xlu0 %1783
      %v1785 = vcvt.f32.s32 %v1784
      %v1786 = vcvt.f32.s32 %v1780
      %v1787 = vshll.u32 %v1786, 16
      %v1788 = vadd.s32 %v1787, %v1785
      %v1789 = vand.u32 %v1721, 65535
      %v1790 = vshra.s32 %v1721, 16
      %v1791 = vcvt.s32.f32 %v1789
      %v1792 = vcvt.s32.f32 %v1790
      %1793 = vmin.xlane.f32.xlu0 %v1792
      %v1794 = vpop.xlane.xlu0 %1793
      %vm1795 = vcmp.eq.f32.partialorder %v1792, %v1794
      %v1796 = vsel %vm1795, %v1791, inf
      %1797 = vmin.xlane.f32.xlu0 %v1796
      %v1798 = vpop.xlane.xlu0 %1797
      %v1799 = vcvt.f32.s32 %v1798
      %v1800 = vcvt.f32.s32 %v1794
      %v1801 = vshll.u32 %v1800, 16
      %v1802 = vadd.s32 %v1801, %v1799
      %v1803 = vand.u32 %v1722, 65535
      %v1804 = vshra.s32 %v1722, 16
      %v1805 = vcvt.s32.f32 %v1803
      %v1806 = vcvt.s32.f32 %v1804
      %1807 = vmin.xlane.f32.xlu0 %v1806
      %v1808 = vpop.xlane.xlu0 %1807
      %vm1809 = vcmp.eq.f32.partialorder %v1806, %v1808
      %v1810 = vsel %vm1809, %v1805, inf
      %1811 = vmin.xlane.f32.xlu0 %v1810
      %v1812 = vpop.xlane.xlu0 %1811
      %v1813 = vcvt.f32.s32 %v1812
      %v1814 = vcvt.f32.s32 %v1808
      %v1815 = vshll.u32 %v1814, 16
      %v1816 = vadd.s32 %v1815, %v1813
      %v1817 = vand.u32 %v1723, 65535
      %v1818 = vshra.s32 %v1723, 16
      %v1819 = vcvt.s32.f32 %v1817
      %v1820 = vcvt.s32.f32 %v1818
      %1821 = vmin.xlane.f32.xlu0 %v1820
      %v1822 = vpop.xlane.xlu0 %1821
      %vm1823 = vcmp.eq.f32.partialorder %v1820, %v1822
      %v1824 = vsel %vm1823, %v1819, inf
      %1825 = vmin.xlane.f32.xlu0 %v1824
      %v1826 = vpop.xlane.xlu0 %1825
      %v1827 = vcvt.f32.s32 %v1826
      %v1828 = vcvt.f32.s32 %v1822
      %v1829 = vshll.u32 %v1828, 16
      %v1830 = vadd.s32 %v1829, %v1827
      %v1831 = vand.u32 %v1724, 65535
      %v1832 = vshra.s32 %v1724, 16
      %v1833 = vcvt.s32.f32 %v1831
      %v1834 = vcvt.s32.f32 %v1832
      %1835 = vmin.xlane.f32.xlu0 %v1834
      %v1836 = vpop.xlane.xlu0 %1835
      %vm1837 = vcmp.eq.f32.partialorder %v1834, %v1836
      %v1838 = vsel %vm1837, %v1833, inf
      %1839 = vmin.xlane.f32.xlu0 %v1838
      %v1840 = vpop.xlane.xlu0 %1839
      %v1841 = vcvt.f32.s32 %v1840
      %v1842 = vcvt.f32.s32 %v1836
      %v1843 = vshll.u32 %v1842, 16
      %v1844 = vadd.s32 %v1843, %v1841
      %v1845 = vand.u32 %v1725, 65535
      %v1846 = vshra.s32 %v1725, 16
      %v1847 = vcvt.s32.f32 %v1845
      %v1848 = vcvt.s32.f32 %v1846
      %1849 = vmin.xlane.f32.xlu0 %v1848
      %v1850 = vpop.xlane.xlu0 %1849
      %vm1851 = vcmp.eq.f32.partialorder %v1848, %v1850
      %v1852 = vsel %vm1851, %v1847, inf
      %1853 = vmin.xlane.f32.xlu0 %v1852
      %v1854 = vpop.xlane.xlu0 %1853
      %v1855 = vcvt.f32.s32 %v1854
      %v1856 = vcvt.f32.s32 %v1850
      %v1857 = vshll.u32 %v1856, 16
      %v1858 = vadd.s32 %v1857, %v1855
      %v1859 = vand.u32 %v1726, 65535
      %v1860 = vshra.s32 %v1726, 16
      %v1861 = vcvt.s32.f32 %v1859
      %v1862 = vcvt.s32.f32 %v1860
      %1863 = vmin.xlane.f32.xlu0 %v1862
      %v1864 = vpop.xlane.xlu0 %1863
      %vm1865 = vcmp.eq.f32.partialorder %v1862, %v1864
      %v1866 = vsel %vm1865, %v1861, inf
      %1867 = vmin.xlane.f32.xlu0 %v1866
      %v1868 = vpop.xlane.xlu0 %1867
      %v1869 = vcvt.f32.s32 %v1868
      %v1870 = vcvt.f32.s32 %v1864
      %v1871 = vshll.u32 %v1870, 16
      %v1872 = vadd.s32 %v1871, %v1869
      %v1873 = vand.u32 %v1727, 65535
      %v1874 = vshra.s32 %v1727, 16
      %v1875 = vcvt.s32.f32 %v1873
      %v1876 = vcvt.s32.f32 %v1874
      %1877 = vmin.xlane.f32.xlu0 %v1876
      %v1878 = vpop.xlane.xlu0 %1877
      %vm1879 = vcmp.eq.f32.partialorder %v1876, %v1878
      %v1880 = vsel %vm1879, %v1875, inf
      %1881 = vmin.xlane.f32.xlu0 %v1880
      %v1882 = vpop.xlane.xlu0 %1881
      %v1883 = vcvt.f32.s32 %v1882
      %v1884 = vcvt.f32.s32 %v1878
      %v1885 = vshll.u32 %v1884, 16
      %v1886 = vadd.s32 %v1885, %v1883
      %v1887 = vand.u32 %v1728, 65535
      %v1888 = vshra.s32 %v1728, 16
      %v1889 = vcvt.s32.f32 %v1887
      %v1890 = vcvt.s32.f32 %v1888
      %1891 = vmin.xlane.f32.xlu0 %v1890
      %v1892 = vpop.xlane.xlu0 %1891
      %vm1893 = vcmp.eq.f32.partialorder %v1890, %v1892
      %v1894 = vsel %vm1893, %v1889, inf
      %1895 = vmin.xlane.f32.xlu0 %v1894
      %v1896 = vpop.xlane.xlu0 %1895
      %v1897 = vcvt.f32.s32 %v1896
      %v1898 = vcvt.f32.s32 %v1892
      %v1899 = vshll.u32 %v1898, 16
      %v1900 = vadd.s32 %v1899, %v1897
      %v1901 = vand.u32 %v1729, 65535
      %v1902 = vshra.s32 %v1729, 16
      %v1903 = vcvt.s32.f32 %v1901
      %v1904 = vcvt.s32.f32 %v1902
      %1905 = vmin.xlane.f32.xlu0 %v1904
      %v1906 = vpop.xlane.xlu0 %1905
      %vm1907 = vcmp.eq.f32.partialorder %v1904, %v1906
      %v1908 = vsel %vm1907, %v1903, inf
      %1909 = vmin.xlane.f32.xlu0 %v1908
      %v1910 = vpop.xlane.xlu0 %1909
      %v1911 = vcvt.f32.s32 %v1910
      %v1912 = vcvt.f32.s32 %v1906
      %v1913 = vshll.u32 %v1912, 16
      %v1914 = vadd.s32 %v1913, %v1911
      %v1915 = vand.u32 %v1730, 65535
      %v1916 = vshra.s32 %v1730, 16
      %v1917 = vcvt.s32.f32 %v1915
      %v1918 = vcvt.s32.f32 %v1916
      %1919 = vmin.xlane.f32.xlu0 %v1918
      %v1920 = vpop.xlane.xlu0 %1919
      %vm1921 = vcmp.eq.f32.partialorder %v1918, %v1920
      %v1922 = vsel %vm1921, %v1917, inf
      %1923 = vmin.xlane.f32.xlu0 %v1922
      %v1924 = vpop.xlane.xlu0 %1923
      %v1925 = vcvt.f32.s32 %v1924
      %v1926 = vcvt.f32.s32 %v1920
      %v1927 = vshll.u32 %v1926, 16
      %v1928 = vadd.s32 %v1927, %v1925
      %v1929 = vand.u32 %v1731, 65535
      %v1930 = vshra.s32 %v1731, 16
      %v1931 = vcvt.s32.f32 %v1929
      %v1932 = vcvt.s32.f32 %v1930
      %1933 = vmin.xlane.f32.xlu0 %v1932
      %v1934 = vpop.xlane.xlu0 %1933
      %vm1935 = vcmp.eq.f32.partialorder %v1932, %v1934
      %v1936 = vsel %vm1935, %v1931, inf
      %1937 = vmin.xlane.f32.xlu0 %v1936
      %v1938 = vpop.xlane.xlu0 %1937
      %v1939 = vcvt.f32.s32 %v1938
      %v1940 = vcvt.f32.s32 %v1934
      %v1941 = vshll.u32 %v1940, 16
      %v1942 = vadd.s32 %v1941, %v1939
      %v1943 = vand.u32 %v1732, 65535
      %v1944 = vshra.s32 %v1732, 16
      %v1945 = vcvt.s32.f32 %v1943
      %v1946 = vcvt.s32.f32 %v1944
      %1947 = vmin.xlane.f32.xlu0 %v1946
      %v1948 = vpop.xlane.xlu0 %1947
      %vm1949 = vcmp.eq.f32.partialorder %v1946, %v1948
      %v1950 = vsel %vm1949, %v1945, inf
      %1951 = vmin.xlane.f32.xlu0 %v1950
      %v1952 = vpop.xlane.xlu0 %1951
      %v1953 = vcvt.f32.s32 %v1952
      %v1954 = vcvt.f32.s32 %v1948
      %v1955 = vshll.u32 %v1954, 16
      %v1956 = vadd.s32 %v1955, %v1953
      %vm1957 = vcmp.eq.s32.totalorder %v1717, %v1746
      %vm1958 = vcmp.eq.s32.totalorder %v1718, %v1760
      %vm1959 = vcmp.eq.s32.totalorder %v1719, %v1774
      %vm1960 = vcmp.eq.s32.totalorder %v1720, %v1788
      %vm1961 = vcmp.eq.s32.totalorder %v1721, %v1802
      %vm1962 = vcmp.eq.s32.totalorder %v1722, %v1816
      %vm1963 = vcmp.eq.s32.totalorder %v1723, %v1830
      %vm1964 = vcmp.eq.s32.totalorder %v1724, %v1844
      %vm1965 = vcmp.eq.s32.totalorder %v1725, %v1858
      %vm1966 = vcmp.eq.s32.totalorder %v1726, %v1872
      %vm1967 = vcmp.eq.s32.totalorder %v1727, %v1886
      %vm1968 = vcmp.eq.s32.totalorder %v1728, %v1900
      %vm1969 = vcmp.eq.s32.totalorder %v1729, %v1914
      %vm1970 = vcmp.eq.s32.totalorder %v1730, %v1928
      %vm1971 = vcmp.eq.s32.totalorder %v1731, %v1942
      %vm1972 = vcmp.eq.s32.totalorder %v1732, %v1956
      %v1973 = vsel %vm1957, 1.0, 0.0
      %v1974 = vsel %vm1958, 1.0, 0.0
      %v1975 = vsel %vm1959, 1.0, 0.0
      %v1976 = vsel %vm1960, 1.0, 0.0
      %v1977 = vsel %vm1961, 1.0, 0.0
      %v1978 = vsel %vm1962, 1.0, 0.0
      %v1979 = vsel %vm1963, 1.0, 0.0
      %v1980 = vsel %vm1964, 1.0, 0.0
      %v1981 = vsel %vm1965, 1.0, 0.0
      %v1982 = vsel %vm1966, 1.0, 0.0
      %v1983 = vsel %vm1967, 1.0, 0.0
      %v1984 = vsel %vm1968, 1.0, 0.0
      %v1985 = vsel %vm1969, 1.0, 0.0
      %v1986 = vsel %vm1970, 1.0, 0.0
      %v1987 = vsel %vm1971, 1.0, 0.0
      %v1988 = vsel %vm1972, 1.0, 0.0
      %v1989 = vpack.c.bf16 %v1974, %v1973
      %v1990 = vpack.c.bf16 %v1976, %v1975
      %v1991 = vpack.c.bf16 %v1978, %v1977
      %v1992 = vpack.c.bf16 %v1980, %v1979
      %v1993 = vpack.c.bf16 %v1982, %v1981
      %v1994 = vpack.c.bf16 %v1984, %v1983
      %v1995 = vpack.c.bf16 %v1986, %v1985
      %v1996 = vpack.c.bf16 %v1988, %v1987
      %v1997 = vsel %vm1957, 2147483647, %v1717
      %v1998 = vsel %vm1958, 2147483647, %v1718
      %v1999 = vsel %vm1959, 2147483647, %v1719
      %v2000 = vsel %vm1960, 2147483647, %v1720
      %v2001 = vsel %vm1961, 2147483647, %v1721
      %v2002 = vsel %vm1962, 2147483647, %v1722
      %v2003 = vsel %vm1963, 2147483647, %v1723
      %v2004 = vsel %vm1964, 2147483647, %v1724
      %v2005 = vsel %vm1965, 2147483647, %v1725
      %v2006 = vsel %vm1966, 2147483647, %v1726
      %v2007 = vsel %vm1967, 2147483647, %v1727
      %v2008 = vsel %vm1968, 2147483647, %v1728
      %v2009 = vsel %vm1969, 2147483647, %v1729
      %v2010 = vsel %vm1970, 2147483647, %v1730
      %v2011 = vsel %vm1971, 2147483647, %v1731
      %v2012 = vsel %vm1972, 2147483647, %v1732
      %v2013 = vand.u32 %v1997, 65535
      %v2014 = vshra.s32 %v1997, 16
      %v2015 = vcvt.s32.f32 %v2013
      %v2016 = vcvt.s32.f32 %v2014
      %2017 = vmin.xlane.f32.xlu0 %v2016
      %v2018 = vpop.xlane.xlu0 %2017
      %vm2019 = vcmp.eq.f32.partialorder %v2016, %v2018
      %v2020 = vsel %vm2019, %v2015, inf
      %2021 = vmin.xlane.f32.xlu0 %v2020
      %v2022 = vpop.xlane.xlu0 %2021
      %v2023 = vcvt.f32.s32 %v2022
      %v2024 = vcvt.f32.s32 %v2018
      %v2025 = vshll.u32 %v2024, 16
      %v2026 = vadd.s32 %v2025, %v2023
      %v2027 = vand.u32 %v1998, 65535
      %v2028 = vshra.s32 %v1998, 16
      %v2029 = vcvt.s32.f32 %v2027
      %v2030 = vcvt.s32.f32 %v2028
      %2031 = vmin.xlane.f32.xlu0 %v2030
      %v2032 = vpop.xlane.xlu0 %2031
      %vm2033 = vcmp.eq.f32.partialorder %v2030, %v2032
      %v2034 = vsel %vm2033, %v2029, inf
      %2035 = vmin.xlane.f32.xlu0 %v2034
      %v2036 = vpop.xlane.xlu0 %2035
      %v2037 = vcvt.f32.s32 %v2036
      %v2038 = vcvt.f32.s32 %v2032
      %v2039 = vshll.u32 %v2038, 16
      %v2040 = vadd.s32 %v2039, %v2037
      %v2041 = vand.u32 %v1999, 65535
      %v2042 = vshra.s32 %v1999, 16
      %v2043 = vcvt.s32.f32 %v2041
      %v2044 = vcvt.s32.f32 %v2042
      %2045 = vmin.xlane.f32.xlu0 %v2044
      %v2046 = vpop.xlane.xlu0 %2045
      %vm2047 = vcmp.eq.f32.partialorder %v2044, %v2046
      %v2048 = vsel %vm2047, %v2043, inf
      %2049 = vmin.xlane.f32.xlu0 %v2048
      %v2050 = vpop.xlane.xlu0 %2049
      %v2051 = vcvt.f32.s32 %v2050
      %v2052 = vcvt.f32.s32 %v2046
      %v2053 = vshll.u32 %v2052, 16
      %v2054 = vadd.s32 %v2053, %v2051
      %v2055 = vand.u32 %v2000, 65535
      %v2056 = vshra.s32 %v2000, 16
      %v2057 = vcvt.s32.f32 %v2055
      %v2058 = vcvt.s32.f32 %v2056
      %2059 = vmin.xlane.f32.xlu0 %v2058
      %v2060 = vpop.xlane.xlu0 %2059
      %vm2061 = vcmp.eq.f32.partialorder %v2058, %v2060
      %v2062 = vsel %vm2061, %v2057, inf
      %2063 = vmin.xlane.f32.xlu0 %v2062
      %v2064 = vpop.xlane.xlu0 %2063
      %v2065 = vcvt.f32.s32 %v2064
      %v2066 = vcvt.f32.s32 %v2060
      %v2067 = vshll.u32 %v2066, 16
      %v2068 = vadd.s32 %v2067, %v2065
      %v2069 = vand.u32 %v2001, 65535
      %v2070 = vshra.s32 %v2001, 16
      %v2071 = vcvt.s32.f32 %v2069
      %v2072 = vcvt.s32.f32 %v2070
      %2073 = vmin.xlane.f32.xlu0 %v2072
      %v2074 = vpop.xlane.xlu0 %2073
      %vm2075 = vcmp.eq.f32.partialorder %v2072, %v2074
      %v2076 = vsel %vm2075, %v2071, inf
      %2077 = vmin.xlane.f32.xlu0 %v2076
      %v2078 = vpop.xlane.xlu0 %2077
      %v2079 = vcvt.f32.s32 %v2078
      %v2080 = vcvt.f32.s32 %v2074
      %v2081 = vshll.u32 %v2080, 16
      %v2082 = vadd.s32 %v2081, %v2079
      %v2083 = vand.u32 %v2002, 65535
      %v2084 = vshra.s32 %v2002, 16
      %v2085 = vcvt.s32.f32 %v2083
      %v2086 = vcvt.s32.f32 %v2084
      %2087 = vmin.xlane.f32.xlu0 %v2086
      %v2088 = vpop.xlane.xlu0 %2087
      %vm2089 = vcmp.eq.f32.partialorder %v2086, %v2088
      %v2090 = vsel %vm2089, %v2085, inf
      %2091 = vmin.xlane.f32.xlu0 %v2090
      %v2092 = vpop.xlane.xlu0 %2091
      %v2093 = vcvt.f32.s32 %v2092
      %v2094 = vcvt.f32.s32 %v2088
      %v2095 = vshll.u32 %v2094, 16
      %v2096 = vadd.s32 %v2095, %v2093
      %v2097 = vand.u32 %v2003, 65535
      %v2098 = vshra.s32 %v2003, 16
      %v2099 = vcvt.s32.f32 %v2097
      %v2100 = vcvt.s32.f32 %v2098
      %2101 = vmin.xlane.f32.xlu0 %v2100
      %v2102 = vpop.xlane.xlu0 %2101
      %vm2103 = vcmp.eq.f32.partialorder %v2100, %v2102
      %v2104 = vsel %vm2103, %v2099, inf
      %2105 = vmin.xlane.f32.xlu0 %v2104
      %v2106 = vpop.xlane.xlu0 %2105
      %v2107 = vcvt.f32.s32 %v2106
      %v2108 = vcvt.f32.s32 %v2102
      %v2109 = vshll.u32 %v2108, 16
      %v2110 = vadd.s32 %v2109, %v2107
      %v2111 = vand.u32 %v2004, 65535
      %v2112 = vshra.s32 %v2004, 16
      %v2113 = vcvt.s32.f32 %v2111
      %v2114 = vcvt.s32.f32 %v2112
      %2115 = vmin.xlane.f32.xlu0 %v2114
      %v2116 = vpop.xlane.xlu0 %2115
      %vm2117 = vcmp.eq.f32.partialorder %v2114, %v2116
      %v2118 = vsel %vm2117, %v2113, inf
      %2119 = vmin.xlane.f32.xlu0 %v2118
      %v2120 = vpop.xlane.xlu0 %2119
      %v2121 = vcvt.f32.s32 %v2120
      %v2122 = vcvt.f32.s32 %v2116
      %v2123 = vshll.u32 %v2122, 16
      %v2124 = vadd.s32 %v2123, %v2121
      %v2125 = vand.u32 %v2005, 65535
      %v2126 = vshra.s32 %v2005, 16
      %v2127 = vcvt.s32.f32 %v2125
      %v2128 = vcvt.s32.f32 %v2126
      %2129 = vmin.xlane.f32.xlu0 %v2128
      %v2130 = vpop.xlane.xlu0 %2129
      %vm2131 = vcmp.eq.f32.partialorder %v2128, %v2130
      %v2132 = vsel %vm2131, %v2127, inf
      %2133 = vmin.xlane.f32.xlu0 %v2132
      %v2134 = vpop.xlane.xlu0 %2133
      %v2135 = vcvt.f32.s32 %v2134
      %v2136 = vcvt.f32.s32 %v2130
      %v2137 = vshll.u32 %v2136, 16
      %v2138 = vadd.s32 %v2137, %v2135
      %v2139 = vand.u32 %v2006, 65535
      %v2140 = vshra.s32 %v2006, 16
      %v2141 = vcvt.s32.f32 %v2139
      %v2142 = vcvt.s32.f32 %v2140
      %2143 = vmin.xlane.f32.xlu0 %v2142
      %v2144 = vpop.xlane.xlu0 %2143
      %vm2145 = vcmp.eq.f32.partialorder %v2142, %v2144
      %v2146 = vsel %vm2145, %v2141, inf
      %2147 = vmin.xlane.f32.xlu0 %v2146
      %v2148 = vpop.xlane.xlu0 %2147
      %v2149 = vcvt.f32.s32 %v2148
      %v2150 = vcvt.f32.s32 %v2144
      %v2151 = vshll.u32 %v2150, 16
      %v2152 = vadd.s32 %v2151, %v2149
      %v2153 = vand.u32 %v2007, 65535
      %v2154 = vshra.s32 %v2007, 16
      %v2155 = vcvt.s32.f32 %v2153
      %v2156 = vcvt.s32.f32 %v2154
      %2157 = vmin.xlane.f32.xlu0 %v2156
      %v2158 = vpop.xlane.xlu0 %2157
      %vm2159 = vcmp.eq.f32.partialorder %v2156, %v2158
      %v2160 = vsel %vm2159, %v2155, inf
      %2161 = vmin.xlane.f32.xlu0 %v2160
      %v2162 = vpop.xlane.xlu0 %2161
      %v2163 = vcvt.f32.s32 %v2162
      %v2164 = vcvt.f32.s32 %v2158
      %v2165 = vshll.u32 %v2164, 16
      %v2166 = vadd.s32 %v2165, %v2163
      %v2167 = vand.u32 %v2008, 65535
      %v2168 = vshra.s32 %v2008, 16
      %v2169 = vcvt.s32.f32 %v2167
      %v2170 = vcvt.s32.f32 %v2168
      %2171 = vmin.xlane.f32.xlu0 %v2170
      %v2172 = vpop.xlane.xlu0 %2171
      %vm2173 = vcmp.eq.f32.partialorder %v2170, %v2172
      %v2174 = vsel %vm2173, %v2169, inf
      %2175 = vmin.xlane.f32.xlu0 %v2174
      %v2176 = vpop.xlane.xlu0 %2175
      %v2177 = vcvt.f32.s32 %v2176
      %v2178 = vcvt.f32.s32 %v2172
      %v2179 = vshll.u32 %v2178, 16
      %v2180 = vadd.s32 %v2179, %v2177
      %v2181 = vand.u32 %v2009, 65535
      %v2182 = vshra.s32 %v2009, 16
      %v2183 = vcvt.s32.f32 %v2181
      %v2184 = vcvt.s32.f32 %v2182
      %2185 = vmin.xlane.f32.xlu0 %v2184
      %v2186 = vpop.xlane.xlu0 %2185
      %vm2187 = vcmp.eq.f32.partialorder %v2184, %v2186
      %v2188 = vsel %vm2187, %v2183, inf
      %2189 = vmin.xlane.f32.xlu0 %v2188
      %v2190 = vpop.xlane.xlu0 %2189
      %v2191 = vcvt.f32.s32 %v2190
      %v2192 = vcvt.f32.s32 %v2186
      %v2193 = vshll.u32 %v2192, 16
      %v2194 = vadd.s32 %v2193, %v2191
      %v2195 = vand.u32 %v2010, 65535
      %v2196 = vshra.s32 %v2010, 16
      %v2197 = vcvt.s32.f32 %v2195
      %v2198 = vcvt.s32.f32 %v2196
      %2199 = vmin.xlane.f32.xlu0 %v2198
      %v2200 = vpop.xlane.xlu0 %2199
      %vm2201 = vcmp.eq.f32.partialorder %v2198, %v2200
      %v2202 = vsel %vm2201, %v2197, inf
      %2203 = vmin.xlane.f32.xlu0 %v2202
      %v2204 = vpop.xlane.xlu0 %2203
      %v2205 = vcvt.f32.s32 %v2204
      %v2206 = vcvt.f32.s32 %v2200
      %v2207 = vshll.u32 %v2206, 16
      %v2208 = vadd.s32 %v2207, %v2205
      %v2209 = vand.u32 %v2011, 65535
      %v2210 = vshra.s32 %v2011, 16
      %v2211 = vcvt.s32.f32 %v2209
      %v2212 = vcvt.s32.f32 %v2210
      %2213 = vmin.xlane.f32.xlu0 %v2212
      %v2214 = vpop.xlane.xlu0 %2213
      %vm2215 = vcmp.eq.f32.partialorder %v2212, %v2214
      %v2216 = vsel %vm2215, %v2211, inf
      %2217 = vmin.xlane.f32.xlu0 %v2216
      %v2218 = vpop.xlane.xlu0 %2217
      %v2219 = vcvt.f32.s32 %v2218
      %v2220 = vcvt.f32.s32 %v2214
      %v2221 = vshll.u32 %v2220, 16
      %v2222 = vadd.s32 %v2221, %v2219
      %v2223 = vand.u32 %v2012, 65535
      %v2224 = vshra.s32 %v2012, 16
      %v2225 = vcvt.s32.f32 %v2223
      %v2226 = vcvt.s32.f32 %v2224
      %2227 = vmin.xlane.f32.xlu0 %v2226
      %v2228 = vpop.xlane.xlu0 %2227
      %vm2229 = vcmp.eq.f32.partialorder %v2226, %v2228
      %v2230 = vsel %vm2229, %v2225, inf
      %2231 = vmin.xlane.f32.xlu0 %v2230
      %v2232 = vpop.xlane.xlu0 %2231
      %v2233 = vcvt.f32.s32 %v2232
      %v2234 = vcvt.f32.s32 %v2228
      %v2235 = vshll.u32 %v2234, 16
      %v2236 = vadd.s32 %v2235, %v2233
      %vm2237 = vcmp.eq.s32.totalorder %v1997, %v2026
      %vm2238 = vcmp.eq.s32.totalorder %v1998, %v2040
      %vm2239 = vcmp.eq.s32.totalorder %v1999, %v2054
      %vm2240 = vcmp.eq.s32.totalorder %v2000, %v2068
      %vm2241 = vcmp.eq.s32.totalorder %v2001, %v2082
      %vm2242 = vcmp.eq.s32.totalorder %v2002, %v2096
      %vm2243 = vcmp.eq.s32.totalorder %v2003, %v2110
      %vm2244 = vcmp.eq.s32.totalorder %v2004, %v2124
      %vm2245 = vcmp.eq.s32.totalorder %v2005, %v2138
      %vm2246 = vcmp.eq.s32.totalorder %v2006, %v2152
      %vm2247 = vcmp.eq.s32.totalorder %v2007, %v2166
      %vm2248 = vcmp.eq.s32.totalorder %v2008, %v2180
      %vm2249 = vcmp.eq.s32.totalorder %v2009, %v2194
      %vm2250 = vcmp.eq.s32.totalorder %v2010, %v2208
      %vm2251 = vcmp.eq.s32.totalorder %v2011, %v2222
      %vm2252 = vcmp.eq.s32.totalorder %v2012, %v2236
      %v2253 = vsel %vm2237, 1.0, 0.0
      %v2254 = vsel %vm2238, 1.0, 0.0
      %v2255 = vsel %vm2239, 1.0, 0.0
      %v2256 = vsel %vm2240, 1.0, 0.0
      %v2257 = vsel %vm2241, 1.0, 0.0
      %v2258 = vsel %vm2242, 1.0, 0.0
      %v2259 = vsel %vm2243, 1.0, 0.0
      %v2260 = vsel %vm2244, 1.0, 0.0
      %v2261 = vsel %vm2245, 1.0, 0.0
      %v2262 = vsel %vm2246, 1.0, 0.0
      %v2263 = vsel %vm2247, 1.0, 0.0
      %v2264 = vsel %vm2248, 1.0, 0.0
      %v2265 = vsel %vm2249, 1.0, 0.0
      %v2266 = vsel %vm2250, 1.0, 0.0
      %v2267 = vsel %vm2251, 1.0, 0.0
      %v2268 = vsel %vm2252, 1.0, 0.0
      %v2269 = vpack.c.bf16 %v2254, %v2253
      %v2270 = vpack.c.bf16 %v2256, %v2255
      %v2271 = vpack.c.bf16 %v2258, %v2257
      %v2272 = vpack.c.bf16 %v2260, %v2259
      %v2273 = vpack.c.bf16 %v2262, %v2261
      %v2274 = vpack.c.bf16 %v2264, %v2263
      %v2275 = vpack.c.bf16 %v2266, %v2265
      %v2276 = vpack.c.bf16 %v2268, %v2267
      %v2277 = vsel %vm2237, 2147483647, %v1997
      %v2278 = vsel %vm2238, 2147483647, %v1998
      %v2279 = vsel %vm2239, 2147483647, %v1999
      %v2280 = vsel %vm2240, 2147483647, %v2000
      %v2281 = vsel %vm2241, 2147483647, %v2001
      %v2282 = vsel %vm2242, 2147483647, %v2002
      %v2283 = vsel %vm2243, 2147483647, %v2003
      %v2284 = vsel %vm2244, 2147483647, %v2004
      %v2285 = vsel %vm2245, 2147483647, %v2005
      %v2286 = vsel %vm2246, 2147483647, %v2006
      %v2287 = vsel %vm2247, 2147483647, %v2007
      %v2288 = vsel %vm2248, 2147483647, %v2008
      %v2289 = vsel %vm2249, 2147483647, %v2009
      %v2290 = vsel %vm2250, 2147483647, %v2010
      %v2291 = vsel %vm2251, 2147483647, %v2011
      %v2292 = vsel %vm2252, 2147483647, %v2012
      %v2293 = vand.u32 %v2277, 65535
      %v2294 = vshra.s32 %v2277, 16
      %v2295 = vcvt.s32.f32 %v2293
      %v2296 = vcvt.s32.f32 %v2294
      %2297 = vmin.xlane.f32.xlu0 %v2296
      %v2298 = vpop.xlane.xlu0 %2297
      %vm2299 = vcmp.eq.f32.partialorder %v2296, %v2298
      %v2300 = vsel %vm2299, %v2295, inf
      %2301 = vmin.xlane.f32.xlu0 %v2300
      %v2302 = vpop.xlane.xlu0 %2301
      %v2303 = vcvt.f32.s32 %v2302
      %v2304 = vcvt.f32.s32 %v2298
      %v2305 = vshll.u32 %v2304, 16
      %v2306 = vadd.s32 %v2305, %v2303
      %v2307 = vand.u32 %v2278, 65535
      %v2308 = vshra.s32 %v2278, 16
      %v2309 = vcvt.s32.f32 %v2307
      %v2310 = vcvt.s32.f32 %v2308
      %2311 = vmin.xlane.f32.xlu0 %v2310
      %v2312 = vpop.xlane.xlu0 %2311
      %vm2313 = vcmp.eq.f32.partialorder %v2310, %v2312
      %v2314 = vsel %vm2313, %v2309, inf
      %2315 = vmin.xlane.f32.xlu0 %v2314
      %v2316 = vpop.xlane.xlu0 %2315
      %v2317 = vcvt.f32.s32 %v2316
      %v2318 = vcvt.f32.s32 %v2312
      %v2319 = vshll.u32 %v2318, 16
      %v2320 = vadd.s32 %v2319, %v2317
      %v2321 = vand.u32 %v2279, 65535
      %v2322 = vshra.s32 %v2279, 16
      %v2323 = vcvt.s32.f32 %v2321
      %v2324 = vcvt.s32.f32 %v2322
      %2325 = vmin.xlane.f32.xlu0 %v2324
      %v2326 = vpop.xlane.xlu0 %2325
      %vm2327 = vcmp.eq.f32.partialorder %v2324, %v2326
      %v2328 = vsel %vm2327, %v2323, inf
      %2329 = vmin.xlane.f32.xlu0 %v2328
      %v2330 = vpop.xlane.xlu0 %2329
      %v2331 = vcvt.f32.s32 %v2330
      %v2332 = vcvt.f32.s32 %v2326
      %v2333 = vshll.u32 %v2332, 16
      %v2334 = vadd.s32 %v2333, %v2331
      %v2335 = vand.u32 %v2280, 65535
      %v2336 = vshra.s32 %v2280, 16
      %v2337 = vcvt.s32.f32 %v2335
      %v2338 = vcvt.s32.f32 %v2336
      %2339 = vmin.xlane.f32.xlu0 %v2338
      %v2340 = vpop.xlane.xlu0 %2339
      %vm2341 = vcmp.eq.f32.partialorder %v2338, %v2340
      %v2342 = vsel %vm2341, %v2337, inf
      %2343 = vmin.xlane.f32.xlu0 %v2342
      %v2344 = vpop.xlane.xlu0 %2343
      %v2345 = vcvt.f32.s32 %v2344
      %v2346 = vcvt.f32.s32 %v2340
      %v2347 = vshll.u32 %v2346, 16
      %v2348 = vadd.s32 %v2347, %v2345
      %v2349 = vand.u32 %v2281, 65535
      %v2350 = vshra.s32 %v2281, 16
      %v2351 = vcvt.s32.f32 %v2349
      %v2352 = vcvt.s32.f32 %v2350
      %2353 = vmin.xlane.f32.xlu0 %v2352
      %v2354 = vpop.xlane.xlu0 %2353
      %vm2355 = vcmp.eq.f32.partialorder %v2352, %v2354
      %v2356 = vsel %vm2355, %v2351, inf
      %2357 = vmin.xlane.f32.xlu0 %v2356
      %v2358 = vpop.xlane.xlu0 %2357
      %v2359 = vcvt.f32.s32 %v2358
      %v2360 = vcvt.f32.s32 %v2354
      %v2361 = vshll.u32 %v2360, 16
      %v2362 = vadd.s32 %v2361, %v2359
      %v2363 = vand.u32 %v2282, 65535
      %v2364 = vshra.s32 %v2282, 16
      %v2365 = vcvt.s32.f32 %v2363
      %v2366 = vcvt.s32.f32 %v2364
      %2367 = vmin.xlane.f32.xlu0 %v2366
      %v2368 = vpop.xlane.xlu0 %2367
      %vm2369 = vcmp.eq.f32.partialorder %v2366, %v2368
      %v2370 = vsel %vm2369, %v2365, inf
      %2371 = vmin.xlane.f32.xlu0 %v2370
      %v2372 = vpop.xlane.xlu0 %2371
      %v2373 = vcvt.f32.s32 %v2372
      %v2374 = vcvt.f32.s32 %v2368
      %v2375 = vshll.u32 %v2374, 16
      %v2376 = vadd.s32 %v2375, %v2373
      %v2377 = vand.u32 %v2283, 65535
      %v2378 = vshra.s32 %v2283, 16
      %v2379 = vcvt.s32.f32 %v2377
      %v2380 = vcvt.s32.f32 %v2378
      %2381 = vmin.xlane.f32.xlu0 %v2380
      %v2382 = vpop.xlane.xlu0 %2381
      %vm2383 = vcmp.eq.f32.partialorder %v2380, %v2382
      %v2384 = vsel %vm2383, %v2379, inf
      %2385 = vmin.xlane.f32.xlu0 %v2384
      %v2386 = vpop.xlane.xlu0 %2385
      %v2387 = vcvt.f32.s32 %v2386
      %v2388 = vcvt.f32.s32 %v2382
      %v2389 = vshll.u32 %v2388, 16
      %v2390 = vadd.s32 %v2389, %v2387
      %v2391 = vand.u32 %v2284, 65535
      %v2392 = vshra.s32 %v2284, 16
      %v2393 = vcvt.s32.f32 %v2391
      %v2394 = vcvt.s32.f32 %v2392
      %2395 = vmin.xlane.f32.xlu0 %v2394
      %v2396 = vpop.xlane.xlu0 %2395
      %vm2397 = vcmp.eq.f32.partialorder %v2394, %v2396
      %v2398 = vsel %vm2397, %v2393, inf
      %2399 = vmin.xlane.f32.xlu0 %v2398
      %v2400 = vpop.xlane.xlu0 %2399
      %v2401 = vcvt.f32.s32 %v2400
      %v2402 = vcvt.f32.s32 %v2396
      %v2403 = vshll.u32 %v2402, 16
      %v2404 = vadd.s32 %v2403, %v2401
      %v2405 = vand.u32 %v2285, 65535
      %v2406 = vshra.s32 %v2285, 16
      %v2407 = vcvt.s32.f32 %v2405
      %v2408 = vcvt.s32.f32 %v2406
      %2409 = vmin.xlane.f32.xlu0 %v2408
      %v2410 = vpop.xlane.xlu0 %2409
      %vm2411 = vcmp.eq.f32.partialorder %v2408, %v2410
      %v2412 = vsel %vm2411, %v2407, inf
      %2413 = vmin.xlane.f32.xlu0 %v2412
      %v2414 = vpop.xlane.xlu0 %2413
      %v2415 = vcvt.f32.s32 %v2414
      %v2416 = vcvt.f32.s32 %v2410
      %v2417 = vshll.u32 %v2416, 16
      %v2418 = vadd.s32 %v2417, %v2415
      %v2419 = vand.u32 %v2286, 65535
      %v2420 = vshra.s32 %v2286, 16
      %v2421 = vcvt.s32.f32 %v2419
      %v2422 = vcvt.s32.f32 %v2420
      %2423 = vmin.xlane.f32.xlu0 %v2422
      %v2424 = vpop.xlane.xlu0 %2423
      %vm2425 = vcmp.eq.f32.partialorder %v2422, %v2424
      %v2426 = vsel %vm2425, %v2421, inf
      %2427 = vmin.xlane.f32.xlu0 %v2426
      %v2428 = vpop.xlane.xlu0 %2427
      %v2429 = vcvt.f32.s32 %v2428
      %v2430 = vcvt.f32.s32 %v2424
      %v2431 = vshll.u32 %v2430, 16
      %v2432 = vadd.s32 %v2431, %v2429
      %v2433 = vand.u32 %v2287, 65535
      %v2434 = vshra.s32 %v2287, 16
      %v2435 = vcvt.s32.f32 %v2433
      %v2436 = vcvt.s32.f32 %v2434
      %2437 = vmin.xlane.f32.xlu0 %v2436
      %v2438 = vpop.xlane.xlu0 %2437
      %vm2439 = vcmp.eq.f32.partialorder %v2436, %v2438
      %v2440 = vsel %vm2439, %v2435, inf
      %2441 = vmin.xlane.f32.xlu0 %v2440
      %v2442 = vpop.xlane.xlu0 %2441
      %v2443 = vcvt.f32.s32 %v2442
      %v2444 = vcvt.f32.s32 %v2438
      %v2445 = vshll.u32 %v2444, 16
      %v2446 = vadd.s32 %v2445, %v2443
      %v2447 = vand.u32 %v2288, 65535
      %v2448 = vshra.s32 %v2288, 16
      %v2449 = vcvt.s32.f32 %v2447
      %v2450 = vcvt.s32.f32 %v2448
      %2451 = vmin.xlane.f32.xlu0 %v2450
      %v2452 = vpop.xlane.xlu0 %2451
      %vm2453 = vcmp.eq.f32.partialorder %v2450, %v2452
      %v2454 = vsel %vm2453, %v2449, inf
      %2455 = vmin.xlane.f32.xlu0 %v2454
      %v2456 = vpop.xlane.xlu0 %2455
      %v2457 = vcvt.f32.s32 %v2456
      %v2458 = vcvt.f32.s32 %v2452
      %v2459 = vshll.u32 %v2458, 16
      %v2460 = vadd.s32 %v2459, %v2457
      %v2461 = vand.u32 %v2289, 65535
      %v2462 = vshra.s32 %v2289, 16
      %v2463 = vcvt.s32.f32 %v2461
      %v2464 = vcvt.s32.f32 %v2462
      %2465 = vmin.xlane.f32.xlu0 %v2464
      %v2466 = vpop.xlane.xlu0 %2465
      %vm2467 = vcmp.eq.f32.partialorder %v2464, %v2466
      %v2468 = vsel %vm2467, %v2463, inf
      %2469 = vmin.xlane.f32.xlu0 %v2468
      %v2470 = vpop.xlane.xlu0 %2469
      %v2471 = vcvt.f32.s32 %v2470
      %v2472 = vcvt.f32.s32 %v2466
      %v2473 = vshll.u32 %v2472, 16
      %v2474 = vadd.s32 %v2473, %v2471
      %v2475 = vand.u32 %v2290, 65535
      %v2476 = vshra.s32 %v2290, 16
      %v2477 = vcvt.s32.f32 %v2475
      %v2478 = vcvt.s32.f32 %v2476
      %2479 = vmin.xlane.f32.xlu0 %v2478
      %v2480 = vpop.xlane.xlu0 %2479
      %vm2481 = vcmp.eq.f32.partialorder %v2478, %v2480
      %v2482 = vsel %vm2481, %v2477, inf
      %2483 = vmin.xlane.f32.xlu0 %v2482
      %v2484 = vpop.xlane.xlu0 %2483
      %v2485 = vcvt.f32.s32 %v2484
      %v2486 = vcvt.f32.s32 %v2480
      %v2487 = vshll.u32 %v2486, 16
      %v2488 = vadd.s32 %v2487, %v2485
      %v2489 = vand.u32 %v2291, 65535
      %v2490 = vshra.s32 %v2291, 16
      %v2491 = vcvt.s32.f32 %v2489
      %v2492 = vcvt.s32.f32 %v2490
      %2493 = vmin.xlane.f32.xlu0 %v2492
      %v2494 = vpop.xlane.xlu0 %2493
      %vm2495 = vcmp.eq.f32.partialorder %v2492, %v2494
      %v2496 = vsel %vm2495, %v2491, inf
      %2497 = vmin.xlane.f32.xlu0 %v2496
      %v2498 = vpop.xlane.xlu0 %2497
      %v2499 = vcvt.f32.s32 %v2498
      %v2500 = vcvt.f32.s32 %v2494
      %v2501 = vshll.u32 %v2500, 16
      %v2502 = vadd.s32 %v2501, %v2499
      %v2503 = vand.u32 %v2292, 65535
      %v2504 = vshra.s32 %v2292, 16
      %v2505 = vcvt.s32.f32 %v2503
      %v2506 = vcvt.s32.f32 %v2504
      %2507 = vmin.xlane.f32.xlu0 %v2506
      %v2508 = vpop.xlane.xlu0 %2507
      %vm2509 = vcmp.eq.f32.partialorder %v2506, %v2508
      %v2510 = vsel %vm2509, %v2505, inf
      %2511 = vmin.xlane.f32.xlu0 %v2510
      %v2512 = vpop.xlane.xlu0 %2511
      %v2513 = vcvt.f32.s32 %v2512
      %v2514 = vcvt.f32.s32 %v2508
      %v2515 = vshll.u32 %v2514, 16
      %v2516 = vadd.s32 %v2515, %v2513
      %vm2517 = vcmp.eq.s32.totalorder %v2277, %v2306
      %vm2518 = vcmp.eq.s32.totalorder %v2278, %v2320
      %vm2519 = vcmp.eq.s32.totalorder %v2279, %v2334
      %vm2520 = vcmp.eq.s32.totalorder %v2280, %v2348
      %vm2521 = vcmp.eq.s32.totalorder %v2281, %v2362
      %vm2522 = vcmp.eq.s32.totalorder %v2282, %v2376
      %vm2523 = vcmp.eq.s32.totalorder %v2283, %v2390
      %vm2524 = vcmp.eq.s32.totalorder %v2284, %v2404
      %vm2525 = vcmp.eq.s32.totalorder %v2285, %v2418
      %vm2526 = vcmp.eq.s32.totalorder %v2286, %v2432
      %vm2527 = vcmp.eq.s32.totalorder %v2287, %v2446
      %vm2528 = vcmp.eq.s32.totalorder %v2288, %v2460
      %vm2529 = vcmp.eq.s32.totalorder %v2289, %v2474
      %vm2530 = vcmp.eq.s32.totalorder %v2290, %v2488
      %vm2531 = vcmp.eq.s32.totalorder %v2291, %v2502
      %vm2532 = vcmp.eq.s32.totalorder %v2292, %v2516
      %v2533 = vsel %vm2517, 1.0, 0.0
      %v2534 = vsel %vm2518, 1.0, 0.0
      %v2535 = vsel %vm2519, 1.0, 0.0
      %v2536 = vsel %vm2520, 1.0, 0.0
      %v2537 = vsel %vm2521, 1.0, 0.0
      %v2538 = vsel %vm2522, 1.0, 0.0
      %v2539 = vsel %vm2523, 1.0, 0.0
      %v2540 = vsel %vm2524, 1.0, 0.0
      %v2541 = vsel %vm2525, 1.0, 0.0
      %v2542 = vsel %vm2526, 1.0, 0.0
      %v2543 = vsel %vm2527, 1.0, 0.0
      %v2544 = vsel %vm2528, 1.0, 0.0
      %v2545 = vsel %vm2529, 1.0, 0.0
      %v2546 = vsel %vm2530, 1.0, 0.0
      %v2547 = vsel %vm2531, 1.0, 0.0
      %v2548 = vsel %vm2532, 1.0, 0.0
      %v2549 = vpack.c.bf16 %v2534, %v2533
      %v2550 = vpack.c.bf16 %v2536, %v2535
      %v2551 = vpack.c.bf16 %v2538, %v2537
      %v2552 = vpack.c.bf16 %v2540, %v2539
      %v2553 = vpack.c.bf16 %v2542, %v2541
      %v2554 = vpack.c.bf16 %v2544, %v2543
      %v2555 = vpack.c.bf16 %v2546, %v2545
      %v2556 = vpack.c.bf16 %v2548, %v2547
      %v2557 = vsel %vm2517, 2147483647, %v2277
      %v2558 = vsel %vm2518, 2147483647, %v2278
      %v2559 = vsel %vm2519, 2147483647, %v2279
      %v2560 = vsel %vm2520, 2147483647, %v2280
      %v2561 = vsel %vm2521, 2147483647, %v2281
      %v2562 = vsel %vm2522, 2147483647, %v2282
      %v2563 = vsel %vm2523, 2147483647, %v2283
      %v2564 = vsel %vm2524, 2147483647, %v2284
      %v2565 = vsel %vm2525, 2147483647, %v2285
      %v2566 = vsel %vm2526, 2147483647, %v2286
      %v2567 = vsel %vm2527, 2147483647, %v2287
      %v2568 = vsel %vm2528, 2147483647, %v2288
      %v2569 = vsel %vm2529, 2147483647, %v2289
      %v2570 = vsel %vm2530, 2147483647, %v2290
      %v2571 = vsel %vm2531, 2147483647, %v2291
      %v2572 = vsel %vm2532, 2147483647, %v2292
      %v2573 = vand.u32 %v2557, 65535
      %v2574 = vshra.s32 %v2557, 16
      %v2575 = vcvt.s32.f32 %v2573
      %v2576 = vcvt.s32.f32 %v2574
      %2577 = vmin.xlane.f32.xlu0 %v2576
      %v2578 = vpop.xlane.xlu0 %2577
      %vm2579 = vcmp.eq.f32.partialorder %v2576, %v2578
      %v2580 = vsel %vm2579, %v2575, inf
      %2581 = vmin.xlane.f32.xlu0 %v2580
      %v2582 = vpop.xlane.xlu0 %2581
      %v2583 = vcvt.f32.s32 %v2582
      %v2584 = vcvt.f32.s32 %v2578
      %v2585 = vshll.u32 %v2584, 16
      %v2586 = vadd.s32 %v2585, %v2583
      %v2587 = vand.u32 %v2558, 65535
      %v2588 = vshra.s32 %v2558, 16
      %v2589 = vcvt.s32.f32 %v2587
      %v2590 = vcvt.s32.f32 %v2588
      %2591 = vmin.xlane.f32.xlu0 %v2590
      %v2592 = vpop.xlane.xlu0 %2591
      %vm2593 = vcmp.eq.f32.partialorder %v2590, %v2592
      %v2594 = vsel %vm2593, %v2589, inf
      %2595 = vmin.xlane.f32.xlu0 %v2594
      %v2596 = vpop.xlane.xlu0 %2595
      %v2597 = vcvt.f32.s32 %v2596
      %v2598 = vcvt.f32.s32 %v2592
      %v2599 = vshll.u32 %v2598, 16
      %v2600 = vadd.s32 %v2599, %v2597
      %v2601 = vand.u32 %v2559, 65535
      %v2602 = vshra.s32 %v2559, 16
      %v2603 = vcvt.s32.f32 %v2601
      %v2604 = vcvt.s32.f32 %v2602
      %2605 = vmin.xlane.f32.xlu0 %v2604
      %v2606 = vpop.xlane.xlu0 %2605
      %vm2607 = vcmp.eq.f32.partialorder %v2604, %v2606
      %v2608 = vsel %vm2607, %v2603, inf
      %2609 = vmin.xlane.f32.xlu0 %v2608
      %v2610 = vpop.xlane.xlu0 %2609
      %v2611 = vcvt.f32.s32 %v2610
      %v2612 = vcvt.f32.s32 %v2606
      %v2613 = vshll.u32 %v2612, 16
      %v2614 = vadd.s32 %v2613, %v2611
      %v2615 = vand.u32 %v2560, 65535
      %v2616 = vshra.s32 %v2560, 16
      %v2617 = vcvt.s32.f32 %v2615
      %v2618 = vcvt.s32.f32 %v2616
      %2619 = vmin.xlane.f32.xlu0 %v2618
      %v2620 = vpop.xlane.xlu0 %2619
      %vm2621 = vcmp.eq.f32.partialorder %v2618, %v2620
      %v2622 = vsel %vm2621, %v2617, inf
      %2623 = vmin.xlane.f32.xlu0 %v2622
      %v2624 = vpop.xlane.xlu0 %2623
      %v2625 = vcvt.f32.s32 %v2624
      %v2626 = vcvt.f32.s32 %v2620
      %v2627 = vshll.u32 %v2626, 16
      %v2628 = vadd.s32 %v2627, %v2625
      %v2629 = vand.u32 %v2561, 65535
      %v2630 = vshra.s32 %v2561, 16
      %v2631 = vcvt.s32.f32 %v2629
      %v2632 = vcvt.s32.f32 %v2630
      %2633 = vmin.xlane.f32.xlu0 %v2632
      %v2634 = vpop.xlane.xlu0 %2633
      %vm2635 = vcmp.eq.f32.partialorder %v2632, %v2634
      %v2636 = vsel %vm2635, %v2631, inf
      %2637 = vmin.xlane.f32.xlu0 %v2636
      %v2638 = vpop.xlane.xlu0 %2637
      %v2639 = vcvt.f32.s32 %v2638
      %v2640 = vcvt.f32.s32 %v2634
      %v2641 = vshll.u32 %v2640, 16
      %v2642 = vadd.s32 %v2641, %v2639
      %v2643 = vand.u32 %v2562, 65535
      %v2644 = vshra.s32 %v2562, 16
      %v2645 = vcvt.s32.f32 %v2643
      %v2646 = vcvt.s32.f32 %v2644
      %2647 = vmin.xlane.f32.xlu0 %v2646
      %v2648 = vpop.xlane.xlu0 %2647
      %vm2649 = vcmp.eq.f32.partialorder %v2646, %v2648
      %v2650 = vsel %vm2649, %v2645, inf
      %2651 = vmin.xlane.f32.xlu0 %v2650
      %v2652 = vpop.xlane.xlu0 %2651
      %v2653 = vcvt.f32.s32 %v2652
      %v2654 = vcvt.f32.s32 %v2648
      %v2655 = vshll.u32 %v2654, 16
      %v2656 = vadd.s32 %v2655, %v2653
      %v2657 = vand.u32 %v2563, 65535
      %v2658 = vshra.s32 %v2563, 16
      %v2659 = vcvt.s32.f32 %v2657
      %v2660 = vcvt.s32.f32 %v2658
      %2661 = vmin.xlane.f32.xlu0 %v2660
      %v2662 = vpop.xlane.xlu0 %2661
      %vm2663 = vcmp.eq.f32.partialorder %v2660, %v2662
      %v2664 = vsel %vm2663, %v2659, inf
      %2665 = vmin.xlane.f32.xlu0 %v2664
      %v2666 = vpop.xlane.xlu0 %2665
      %v2667 = vcvt.f32.s32 %v2666
      %v2668 = vcvt.f32.s32 %v2662
      %v2669 = vshll.u32 %v2668, 16
      %v2670 = vadd.s32 %v2669, %v2667
      %v2671 = vand.u32 %v2564, 65535
      %v2672 = vshra.s32 %v2564, 16
      %v2673 = vcvt.s32.f32 %v2671
      %v2674 = vcvt.s32.f32 %v2672
      %2675 = vmin.xlane.f32.xlu0 %v2674
      %v2676 = vpop.xlane.xlu0 %2675
      %vm2677 = vcmp.eq.f32.partialorder %v2674, %v2676
      %v2678 = vsel %vm2677, %v2673, inf
      %2679 = vmin.xlane.f32.xlu0 %v2678
      %v2680 = vpop.xlane.xlu0 %2679
      %v2681 = vcvt.f32.s32 %v2680
      %v2682 = vcvt.f32.s32 %v2676
      %v2683 = vshll.u32 %v2682, 16
      %v2684 = vadd.s32 %v2683, %v2681
      %v2685 = vand.u32 %v2565, 65535
      %v2686 = vshra.s32 %v2565, 16
      %v2687 = vcvt.s32.f32 %v2685
      %v2688 = vcvt.s32.f32 %v2686
      %2689 = vmin.xlane.f32.xlu0 %v2688
      %v2690 = vpop.xlane.xlu0 %2689
      %vm2691 = vcmp.eq.f32.partialorder %v2688, %v2690
      %v2692 = vsel %vm2691, %v2687, inf
      %2693 = vmin.xlane.f32.xlu0 %v2692
      %v2694 = vpop.xlane.xlu0 %2693
      %v2695 = vcvt.f32.s32 %v2694
      %v2696 = vcvt.f32.s32 %v2690
      %v2697 = vshll.u32 %v2696, 16
      %v2698 = vadd.s32 %v2697, %v2695
      %v2699 = vand.u32 %v2566, 65535
      %v2700 = vshra.s32 %v2566, 16
      %v2701 = vcvt.s32.f32 %v2699
      %v2702 = vcvt.s32.f32 %v2700
      %2703 = vmin.xlane.f32.xlu0 %v2702
      %v2704 = vpop.xlane.xlu0 %2703
      %vm2705 = vcmp.eq.f32.partialorder %v2702, %v2704
      %v2706 = vsel %vm2705, %v2701, inf
      %2707 = vmin.xlane.f32.xlu0 %v2706
      %v2708 = vpop.xlane.xlu0 %2707
      %v2709 = vcvt.f32.s32 %v2708
      %v2710 = vcvt.f32.s32 %v2704
      %v2711 = vshll.u32 %v2710, 16
      %v2712 = vadd.s32 %v2711, %v2709
      %v2713 = vand.u32 %v2567, 65535
      %v2714 = vshra.s32 %v2567, 16
      %v2715 = vcvt.s32.f32 %v2713
      %v2716 = vcvt.s32.f32 %v2714
      %2717 = vmin.xlane.f32.xlu0 %v2716
      %v2718 = vpop.xlane.xlu0 %2717
      %vm2719 = vcmp.eq.f32.partialorder %v2716, %v2718
      %v2720 = vsel %vm2719, %v2715, inf
      %2721 = vmin.xlane.f32.xlu0 %v2720
      %v2722 = vpop.xlane.xlu0 %2721
      %v2723 = vcvt.f32.s32 %v2722
      %v2724 = vcvt.f32.s32 %v2718
      %v2725 = vshll.u32 %v2724, 16
      %v2726 = vadd.s32 %v2725, %v2723
      %v2727 = vand.u32 %v2568, 65535
      %v2728 = vshra.s32 %v2568, 16
      %v2729 = vcvt.s32.f32 %v2727
      %v2730 = vcvt.s32.f32 %v2728
      %2731 = vmin.xlane.f32.xlu0 %v2730
      %v2732 = vpop.xlane.xlu0 %2731
      %vm2733 = vcmp.eq.f32.partialorder %v2730, %v2732
      %v2734 = vsel %vm2733, %v2729, inf
      %2735 = vmin.xlane.f32.xlu0 %v2734
      %v2736 = vpop.xlane.xlu0 %2735
      %v2737 = vcvt.f32.s32 %v2736
      %v2738 = vcvt.f32.s32 %v2732
      %v2739 = vshll.u32 %v2738, 16
      %v2740 = vadd.s32 %v2739, %v2737
      %v2741 = vand.u32 %v2569, 65535
      %v2742 = vshra.s32 %v2569, 16
      %v2743 = vcvt.s32.f32 %v2741
      %v2744 = vcvt.s32.f32 %v2742
      %2745 = vmin.xlane.f32.xlu0 %v2744
      %v2746 = vpop.xlane.xlu0 %2745
      %vm2747 = vcmp.eq.f32.partialorder %v2744, %v2746
      %v2748 = vsel %vm2747, %v2743, inf
      %2749 = vmin.xlane.f32.xlu0 %v2748
      %v2750 = vpop.xlane.xlu0 %2749
      %v2751 = vcvt.f32.s32 %v2750
      %v2752 = vcvt.f32.s32 %v2746
      %v2753 = vshll.u32 %v2752, 16
      %v2754 = vadd.s32 %v2753, %v2751
      %v2755 = vand.u32 %v2570, 65535
      %v2756 = vshra.s32 %v2570, 16
      %v2757 = vcvt.s32.f32 %v2755
      %v2758 = vcvt.s32.f32 %v2756
      %2759 = vmin.xlane.f32.xlu0 %v2758
      %v2760 = vpop.xlane.xlu0 %2759
      %vm2761 = vcmp.eq.f32.partialorder %v2758, %v2760
      %v2762 = vsel %vm2761, %v2757, inf
      %2763 = vmin.xlane.f32.xlu0 %v2762
      %v2764 = vpop.xlane.xlu0 %2763
      %v2765 = vcvt.f32.s32 %v2764
      %v2766 = vcvt.f32.s32 %v2760
      %v2767 = vshll.u32 %v2766, 16
      %v2768 = vadd.s32 %v2767, %v2765
      %v2769 = vand.u32 %v2571, 65535
      %v2770 = vshra.s32 %v2571, 16
      %v2771 = vcvt.s32.f32 %v2769
      %v2772 = vcvt.s32.f32 %v2770
      %2773 = vmin.xlane.f32.xlu0 %v2772
      %v2774 = vpop.xlane.xlu0 %2773
      %vm2775 = vcmp.eq.f32.partialorder %v2772, %v2774
      %v2776 = vsel %vm2775, %v2771, inf
      %2777 = vmin.xlane.f32.xlu0 %v2776
      %v2778 = vpop.xlane.xlu0 %2777
      %v2779 = vcvt.f32.s32 %v2778
      %v2780 = vcvt.f32.s32 %v2774
      %v2781 = vshll.u32 %v2780, 16
      %v2782 = vadd.s32 %v2781, %v2779
      %v2783 = vand.u32 %v2572, 65535
      %v2784 = vshra.s32 %v2572, 16
      %v2785 = vcvt.s32.f32 %v2783
      %v2786 = vcvt.s32.f32 %v2784
      %2787 = vmin.xlane.f32.xlu0 %v2786
      %v2788 = vpop.xlane.xlu0 %2787
      %vm2789 = vcmp.eq.f32.partialorder %v2786, %v2788
      %v2790 = vsel %vm2789, %v2785, inf
      %2791 = vmin.xlane.f32.xlu0 %v2790
      %v2792 = vpop.xlane.xlu0 %2791
      %v2793 = vcvt.f32.s32 %v2792
      %v2794 = vcvt.f32.s32 %v2788
      %v2795 = vshll.u32 %v2794, 16
      %v2796 = vadd.s32 %v2795, %v2793
      %vm2797 = vcmp.eq.s32.totalorder %v2557, %v2586
      %vm2798 = vcmp.eq.s32.totalorder %v2558, %v2600
      %vm2799 = vcmp.eq.s32.totalorder %v2559, %v2614
      %vm2800 = vcmp.eq.s32.totalorder %v2560, %v2628
      %vm2801 = vcmp.eq.s32.totalorder %v2561, %v2642
      %vm2802 = vcmp.eq.s32.totalorder %v2562, %v2656
      %vm2803 = vcmp.eq.s32.totalorder %v2563, %v2670
      %vm2804 = vcmp.eq.s32.totalorder %v2564, %v2684
      %vm2805 = vcmp.eq.s32.totalorder %v2565, %v2698
      %vm2806 = vcmp.eq.s32.totalorder %v2566, %v2712
      %vm2807 = vcmp.eq.s32.totalorder %v2567, %v2726
      %vm2808 = vcmp.eq.s32.totalorder %v2568, %v2740
      %vm2809 = vcmp.eq.s32.totalorder %v2569, %v2754
      %vm2810 = vcmp.eq.s32.totalorder %v2570, %v2768
      %vm2811 = vcmp.eq.s32.totalorder %v2571, %v2782
      %vm2812 = vcmp.eq.s32.totalorder %v2572, %v2796
      %v2813 = vsel %vm2797, 1.0, 0.0
      %v2814 = vsel %vm2798, 1.0, 0.0
      %v2815 = vsel %vm2799, 1.0, 0.0
      %v2816 = vsel %vm2800, 1.0, 0.0
      %v2817 = vsel %vm2801, 1.0, 0.0
      %v2818 = vsel %vm2802, 1.0, 0.0
      %v2819 = vsel %vm2803, 1.0, 0.0
      %v2820 = vsel %vm2804, 1.0, 0.0
      %v2821 = vsel %vm2805, 1.0, 0.0
      %v2822 = vsel %vm2806, 1.0, 0.0
      %v2823 = vsel %vm2807, 1.0, 0.0
      %v2824 = vsel %vm2808, 1.0, 0.0
      %v2825 = vsel %vm2809, 1.0, 0.0
      %v2826 = vsel %vm2810, 1.0, 0.0
      %v2827 = vsel %vm2811, 1.0, 0.0
      %v2828 = vsel %vm2812, 1.0, 0.0
      %v2829 = vpack.c.bf16 %v2814, %v2813
      %v2830 = vpack.c.bf16 %v2816, %v2815
      %v2831 = vpack.c.bf16 %v2818, %v2817
      %v2832 = vpack.c.bf16 %v2820, %v2819
      %v2833 = vpack.c.bf16 %v2822, %v2821
      %v2834 = vpack.c.bf16 %v2824, %v2823
      %v2835 = vpack.c.bf16 %v2826, %v2825
      %v2836 = vpack.c.bf16 %v2828, %v2827
      %v2837 = vsel %vm2797, 2147483647, %v2557
      %v2838 = vsel %vm2798, 2147483647, %v2558
      %v2839 = vsel %vm2799, 2147483647, %v2559
      %v2840 = vsel %vm2800, 2147483647, %v2560
      %v2841 = vsel %vm2801, 2147483647, %v2561
      %v2842 = vsel %vm2802, 2147483647, %v2562
      %v2843 = vsel %vm2803, 2147483647, %v2563
      %v2844 = vsel %vm2804, 2147483647, %v2564
      %v2845 = vsel %vm2805, 2147483647, %v2565
      %v2846 = vsel %vm2806, 2147483647, %v2566
      %v2847 = vsel %vm2807, 2147483647, %v2567
      %v2848 = vsel %vm2808, 2147483647, %v2568
      %v2849 = vsel %vm2809, 2147483647, %v2569
      %v2850 = vsel %vm2810, 2147483647, %v2570
      %v2851 = vsel %vm2811, 2147483647, %v2571
      %v2852 = vsel %vm2812, 2147483647, %v2572
      %v2853 = vand.u32 %v2837, 65535
      %v2854 = vshra.s32 %v2837, 16
      %v2855 = vcvt.s32.f32 %v2853
      %v2856 = vcvt.s32.f32 %v2854
      %2857 = vmin.xlane.f32.xlu0 %v2856
      %v2858 = vpop.xlane.xlu0 %2857
      %vm2859 = vcmp.eq.f32.partialorder %v2856, %v2858
      %v2860 = vsel %vm2859, %v2855, inf
      %2861 = vmin.xlane.f32.xlu0 %v2860
      %v2862 = vpop.xlane.xlu0 %2861
      %v2863 = vcvt.f32.s32 %v2862
      %v2864 = vcvt.f32.s32 %v2858
      %v2865 = vshll.u32 %v2864, 16
      %v2866 = vadd.s32 %v2865, %v2863
      %v2867 = vand.u32 %v2838, 65535
      %v2868 = vshra.s32 %v2838, 16
      %v2869 = vcvt.s32.f32 %v2867
      %v2870 = vcvt.s32.f32 %v2868
      %2871 = vmin.xlane.f32.xlu0 %v2870
      %v2872 = vpop.xlane.xlu0 %2871
      %vm2873 = vcmp.eq.f32.partialorder %v2870, %v2872
      %v2874 = vsel %vm2873, %v2869, inf
      %2875 = vmin.xlane.f32.xlu0 %v2874
      %v2876 = vpop.xlane.xlu0 %2875
      %v2877 = vcvt.f32.s32 %v2876
      %v2878 = vcvt.f32.s32 %v2872
      %v2879 = vshll.u32 %v2878, 16
      %v2880 = vadd.s32 %v2879, %v2877
      %v2881 = vand.u32 %v2839, 65535
      %v2882 = vshra.s32 %v2839, 16
      %v2883 = vcvt.s32.f32 %v2881
      %v2884 = vcvt.s32.f32 %v2882
      %2885 = vmin.xlane.f32.xlu0 %v2884
      %v2886 = vpop.xlane.xlu0 %2885
      %vm2887 = vcmp.eq.f32.partialorder %v2884, %v2886
      %v2888 = vsel %vm2887, %v2883, inf
      %2889 = vmin.xlane.f32.xlu0 %v2888
      %v2890 = vpop.xlane.xlu0 %2889
      %v2891 = vcvt.f32.s32 %v2890
      %v2892 = vcvt.f32.s32 %v2886
      %v2893 = vshll.u32 %v2892, 16
      %v2894 = vadd.s32 %v2893, %v2891
      %v2895 = vand.u32 %v2840, 65535
      %v2896 = vshra.s32 %v2840, 16
      %v2897 = vcvt.s32.f32 %v2895
      %v2898 = vcvt.s32.f32 %v2896
      %2899 = vmin.xlane.f32.xlu0 %v2898
      %v2900 = vpop.xlane.xlu0 %2899
      %vm2901 = vcmp.eq.f32.partialorder %v2898, %v2900
      %v2902 = vsel %vm2901, %v2897, inf
      %2903 = vmin.xlane.f32.xlu0 %v2902
      %v2904 = vpop.xlane.xlu0 %2903
      %v2905 = vcvt.f32.s32 %v2904
      %v2906 = vcvt.f32.s32 %v2900
      %v2907 = vshll.u32 %v2906, 16
      %v2908 = vadd.s32 %v2907, %v2905
      %v2909 = vand.u32 %v2841, 65535
      %v2910 = vshra.s32 %v2841, 16
      %v2911 = vcvt.s32.f32 %v2909
      %v2912 = vcvt.s32.f32 %v2910
      %2913 = vmin.xlane.f32.xlu0 %v2912
      %v2914 = vpop.xlane.xlu0 %2913
      %vm2915 = vcmp.eq.f32.partialorder %v2912, %v2914
      %v2916 = vsel %vm2915, %v2911, inf
      %2917 = vmin.xlane.f32.xlu0 %v2916
      %v2918 = vpop.xlane.xlu0 %2917
      %v2919 = vcvt.f32.s32 %v2918
      %v2920 = vcvt.f32.s32 %v2914
      %v2921 = vshll.u32 %v2920, 16
      %v2922 = vadd.s32 %v2921, %v2919
      %v2923 = vand.u32 %v2842, 65535
      %v2924 = vshra.s32 %v2842, 16
      %v2925 = vcvt.s32.f32 %v2923
      %v2926 = vcvt.s32.f32 %v2924
      %2927 = vmin.xlane.f32.xlu0 %v2926
      %v2928 = vpop.xlane.xlu0 %2927
      %vm2929 = vcmp.eq.f32.partialorder %v2926, %v2928
      %v2930 = vsel %vm2929, %v2925, inf
      %2931 = vmin.xlane.f32.xlu0 %v2930
      %v2932 = vpop.xlane.xlu0 %2931
      %v2933 = vcvt.f32.s32 %v2932
      %v2934 = vcvt.f32.s32 %v2928
      %v2935 = vshll.u32 %v2934, 16
      %v2936 = vadd.s32 %v2935, %v2933
      %v2937 = vand.u32 %v2843, 65535
      %v2938 = vshra.s32 %v2843, 16
      %v2939 = vcvt.s32.f32 %v2937
      %v2940 = vcvt.s32.f32 %v2938
      %2941 = vmin.xlane.f32.xlu0 %v2940
      %v2942 = vpop.xlane.xlu0 %2941
      %vm2943 = vcmp.eq.f32.partialorder %v2940, %v2942
      %v2944 = vsel %vm2943, %v2939, inf
      %2945 = vmin.xlane.f32.xlu0 %v2944
      %v2946 = vpop.xlane.xlu0 %2945
      %v2947 = vcvt.f32.s32 %v2946
      %v2948 = vcvt.f32.s32 %v2942
      %v2949 = vshll.u32 %v2948, 16
      %v2950 = vadd.s32 %v2949, %v2947
      %v2951 = vand.u32 %v2844, 65535
      %v2952 = vshra.s32 %v2844, 16
      %v2953 = vcvt.s32.f32 %v2951
      %v2954 = vcvt.s32.f32 %v2952
      %2955 = vmin.xlane.f32.xlu0 %v2954
      %v2956 = vpop.xlane.xlu0 %2955
      %vm2957 = vcmp.eq.f32.partialorder %v2954, %v2956
      %v2958 = vsel %vm2957, %v2953, inf
      %2959 = vmin.xlane.f32.xlu0 %v2958
      %v2960 = vpop.xlane.xlu0 %2959
      %v2961 = vcvt.f32.s32 %v2960
      %v2962 = vcvt.f32.s32 %v2956
      %v2963 = vshll.u32 %v2962, 16
      %v2964 = vadd.s32 %v2963, %v2961
      %v2965 = vand.u32 %v2845, 65535
      %v2966 = vshra.s32 %v2845, 16
      %v2967 = vcvt.s32.f32 %v2965
      %v2968 = vcvt.s32.f32 %v2966
      %2969 = vmin.xlane.f32.xlu0 %v2968
      %v2970 = vpop.xlane.xlu0 %2969
      %vm2971 = vcmp.eq.f32.partialorder %v2968, %v2970
      %v2972 = vsel %vm2971, %v2967, inf
      %2973 = vmin.xlane.f32.xlu0 %v2972
      %v2974 = vpop.xlane.xlu0 %2973
      %v2975 = vcvt.f32.s32 %v2974
      %v2976 = vcvt.f32.s32 %v2970
      %v2977 = vshll.u32 %v2976, 16
      %v2978 = vadd.s32 %v2977, %v2975
      %v2979 = vand.u32 %v2846, 65535
      %v2980 = vshra.s32 %v2846, 16
      %v2981 = vcvt.s32.f32 %v2979
      %v2982 = vcvt.s32.f32 %v2980
      %2983 = vmin.xlane.f32.xlu0 %v2982
      %v2984 = vpop.xlane.xlu0 %2983
      %vm2985 = vcmp.eq.f32.partialorder %v2982, %v2984
      %v2986 = vsel %vm2985, %v2981, inf
      %2987 = vmin.xlane.f32.xlu0 %v2986
      %v2988 = vpop.xlane.xlu0 %2987
      %v2989 = vcvt.f32.s32 %v2988
      %v2990 = vcvt.f32.s32 %v2984
      %v2991 = vshll.u32 %v2990, 16
      %v2992 = vadd.s32 %v2991, %v2989
      %v2993 = vand.u32 %v2847, 65535
      %v2994 = vshra.s32 %v2847, 16
      %v2995 = vcvt.s32.f32 %v2993
      %v2996 = vcvt.s32.f32 %v2994
      %2997 = vmin.xlane.f32.xlu0 %v2996
      %v2998 = vpop.xlane.xlu0 %2997
      %vm2999 = vcmp.eq.f32.partialorder %v2996, %v2998
      %v3000 = vsel %vm2999, %v2995, inf
      %3001 = vmin.xlane.f32.xlu0 %v3000
      %v3002 = vpop.xlane.xlu0 %3001
      %v3003 = vcvt.f32.s32 %v3002
      %v3004 = vcvt.f32.s32 %v2998
      %v3005 = vshll.u32 %v3004, 16
      %v3006 = vadd.s32 %v3005, %v3003
      %v3007 = vand.u32 %v2848, 65535
      %v3008 = vshra.s32 %v2848, 16
      %v3009 = vcvt.s32.f32 %v3007
      %v3010 = vcvt.s32.f32 %v3008
      %3011 = vmin.xlane.f32.xlu0 %v3010
      %v3012 = vpop.xlane.xlu0 %3011
      %vm3013 = vcmp.eq.f32.partialorder %v3010, %v3012
      %v3014 = vsel %vm3013, %v3009, inf
      %3015 = vmin.xlane.f32.xlu0 %v3014
      %v3016 = vpop.xlane.xlu0 %3015
      %v3017 = vcvt.f32.s32 %v3016
      %v3018 = vcvt.f32.s32 %v3012
      %v3019 = vshll.u32 %v3018, 16
      %v3020 = vadd.s32 %v3019, %v3017
      %v3021 = vand.u32 %v2849, 65535
      %v3022 = vshra.s32 %v2849, 16
      %v3023 = vcvt.s32.f32 %v3021
      %v3024 = vcvt.s32.f32 %v3022
      %3025 = vmin.xlane.f32.xlu0 %v3024
      %v3026 = vpop.xlane.xlu0 %3025
      %vm3027 = vcmp.eq.f32.partialorder %v3024, %v3026
      %v3028 = vsel %vm3027, %v3023, inf
      %3029 = vmin.xlane.f32.xlu0 %v3028
      %v3030 = vpop.xlane.xlu0 %3029
      %v3031 = vcvt.f32.s32 %v3030
      %v3032 = vcvt.f32.s32 %v3026
      %v3033 = vshll.u32 %v3032, 16
      %v3034 = vadd.s32 %v3033, %v3031
      %v3035 = vand.u32 %v2850, 65535
      %v3036 = vshra.s32 %v2850, 16
      %v3037 = vcvt.s32.f32 %v3035
      %v3038 = vcvt.s32.f32 %v3036
      %3039 = vmin.xlane.f32.xlu0 %v3038
      %v3040 = vpop.xlane.xlu0 %3039
      %vm3041 = vcmp.eq.f32.partialorder %v3038, %v3040
      %v3042 = vsel %vm3041, %v3037, inf
      %3043 = vmin.xlane.f32.xlu0 %v3042
      %v3044 = vpop.xlane.xlu0 %3043
      %v3045 = vcvt.f32.s32 %v3044
      %v3046 = vcvt.f32.s32 %v3040
      %v3047 = vshll.u32 %v3046, 16
      %v3048 = vadd.s32 %v3047, %v3045
      %v3049 = vand.u32 %v2851, 65535
      %v3050 = vshra.s32 %v2851, 16
      %v3051 = vcvt.s32.f32 %v3049
      %v3052 = vcvt.s32.f32 %v3050
      %3053 = vmin.xlane.f32.xlu0 %v3052
      %v3054 = vpop.xlane.xlu0 %3053
      %vm3055 = vcmp.eq.f32.partialorder %v3052, %v3054
      %v3056 = vsel %vm3055, %v3051, inf
      %3057 = vmin.xlane.f32.xlu0 %v3056
      %v3058 = vpop.xlane.xlu0 %3057
      %v3059 = vcvt.f32.s32 %v3058
      %v3060 = vcvt.f32.s32 %v3054
      %v3061 = vshll.u32 %v3060, 16
      %v3062 = vadd.s32 %v3061, %v3059
      %v3063 = vand.u32 %v2852, 65535
      %v3064 = vshra.s32 %v2852, 16
      %v3065 = vcvt.s32.f32 %v3063
      %v3066 = vcvt.s32.f32 %v3064
      %3067 = vmin.xlane.f32.xlu0 %v3066
      %v3068 = vpop.xlane.xlu0 %3067
      %vm3069 = vcmp.eq.f32.partialorder %v3066, %v3068
      %v3070 = vsel %vm3069, %v3065, inf
      %3071 = vmin.xlane.f32.xlu0 %v3070
      %v3072 = vpop.xlane.xlu0 %3071
      %v3073 = vcvt.f32.s32 %v3072
      %v3074 = vcvt.f32.s32 %v3068
      %v3075 = vshll.u32 %v3074, 16
      %v3076 = vadd.s32 %v3075, %v3073
      %vm3077 = vcmp.eq.s32.totalorder %v2837, %v2866
      %vm3078 = vcmp.eq.s32.totalorder %v2838, %v2880
      %vm3079 = vcmp.eq.s32.totalorder %v2839, %v2894
      %vm3080 = vcmp.eq.s32.totalorder %v2840, %v2908
      %vm3081 = vcmp.eq.s32.totalorder %v2841, %v2922
      %vm3082 = vcmp.eq.s32.totalorder %v2842, %v2936
      %vm3083 = vcmp.eq.s32.totalorder %v2843, %v2950
      %vm3084 = vcmp.eq.s32.totalorder %v2844, %v2964
      %vm3085 = vcmp.eq.s32.totalorder %v2845, %v2978
      %vm3086 = vcmp.eq.s32.totalorder %v2846, %v2992
      %vm3087 = vcmp.eq.s32.totalorder %v2847, %v3006
      %vm3088 = vcmp.eq.s32.totalorder %v2848, %v3020
      %vm3089 = vcmp.eq.s32.totalorder %v2849, %v3034
      %vm3090 = vcmp.eq.s32.totalorder %v2850, %v3048
      %vm3091 = vcmp.eq.s32.totalorder %v2851, %v3062
      %vm3092 = vcmp.eq.s32.totalorder %v2852, %v3076
      %v3093 = vsel %vm3077, 1.0, 0.0
      %v3094 = vsel %vm3078, 1.0, 0.0
      %v3095 = vsel %vm3079, 1.0, 0.0
      %v3096 = vsel %vm3080, 1.0, 0.0
      %v3097 = vsel %vm3081, 1.0, 0.0
      %v3098 = vsel %vm3082, 1.0, 0.0
      %v3099 = vsel %vm3083, 1.0, 0.0
      %v3100 = vsel %vm3084, 1.0, 0.0
      %v3101 = vsel %vm3085, 1.0, 0.0
      %v3102 = vsel %vm3086, 1.0, 0.0
      %v3103 = vsel %vm3087, 1.0, 0.0
      %v3104 = vsel %vm3088, 1.0, 0.0
      %v3105 = vsel %vm3089, 1.0, 0.0
      %v3106 = vsel %vm3090, 1.0, 0.0
      %v3107 = vsel %vm3091, 1.0, 0.0
      %v3108 = vsel %vm3092, 1.0, 0.0
      %v3109 = vpack.c.bf16 %v3094, %v3093
      %v3110 = vpack.c.bf16 %v3096, %v3095
      %v3111 = vpack.c.bf16 %v3098, %v3097
      %v3112 = vpack.c.bf16 %v3100, %v3099
      %v3113 = vpack.c.bf16 %v3102, %v3101
      %v3114 = vpack.c.bf16 %v3104, %v3103
      %v3115 = vpack.c.bf16 %v3106, %v3105
      %v3116 = vpack.c.bf16 %v3108, %v3107
      %v3117 = vld [vmem:[%s4] sm:$0x7]
      %v3118 = vld [vmem:[%s5] sm:$0x7]
      %v3119 = vld [vmem:[%s6] sm:$0x1]
      %vm3120 = vcmask 23552
      %v3122 = vsel %vm3120, %v479, 0
      %v3125 = vsel %vm3120, %v480, 0
      %v3128 = vsel %vm3120, %v481, 0
      %v3131 = vsel %vm3120, %v482, 0
      %v3134 = vsel %vm3120, %v483, 0
      %v3137 = vsel %vm3120, %v484, 0
      %v3140 = vsel %vm3120, %v485, 0
      %v3143 = vsel %vm3120, %v486, 0
      %v3146 = vsel %vm3120, %v487, 0
      %v3149 = vsel %vm3120, %v488, 0
      %v3152 = vsel %vm3120, %v489, 0
      %v3155 = vsel %vm3120, %v490, 0
      %v3158 = vsel %vm3120, %v491, 0
      %v3161 = vsel %vm3120, %v492, 0
      %v3164 = vsel %vm3120, %v493, 0
      %v3167 = vsel %vm3120, %v494, 0
      %vm3169 = vcmask 1042432
      %v3171 = vsel %vm3169, %v3117, 0
      %3173 = vmatprep.subr.mxu0 0.0
      %3174 = vmatpush1.msra.mxu0 %v3171
      %3175 = vmatprep.subr.mxu0 0.0
      %3176 = vmatpush1.msra.mxu0 0.0
      %3177 = vmatprep.subr.mxu0 0.0
      %3178 = vmatpush1.msra.mxu0 0.0
      %3179 = vmatprep.subr.mxu0 0.0
      %3180 = vmatpush1.msra.mxu0 0.0
      %3181 = vmatprep.subr.mxu0 0.0
      %3182 = vmatpush1.msra.mxu0 0.0
      %3183 = vmatprep.subr.mxu0 0.0
      %3184 = vmatpush1.msra.mxu0 0.0
      %3185 = vmatprep.subr.mxu0 0.0
      %3186 = vmatpush1.msra.mxu0 0.0
      %3187 = vmatprep.subr.mxu0 0.0
      %3188 = vmatpush1.msra.mxu0 0.0
      %3189 = vmatprep.subr.mxu0 0.0
      %3190 = vmatpush1.msra.mxu0 0.0
      %3191 = vmatprep.subr.mxu0 0.0
      %3192 = vmatpush1.msra.mxu0 0.0
      %3193 = vmatprep.subr.mxu0 0.0
      %3194 = vmatpush1.msra.mxu0 0.0
      %3195 = vmatprep.subr.mxu0 0.0
      %3196 = vmatpush1.msra.mxu0 0.0
      %3197 = vmatprep.subr.mxu0 0.0
      %3198 = vmatpush1.msra.mxu0 0.0
      %3199 = vmatprep.subr.mxu0 0.0
      %3200 = vmatpush1.msra.mxu0 0.0
      %3201 = vmatprep.subr.mxu0 0.0
      %3202 = vmatpush1.msra.mxu0 0.0
      %3203 = vmatprep.subr.mxu0 0.0
      %3204 = vmatpush1.msra.mxu0 0.0
      %3205 = vmatprep.subr.mxu0 0.0
      %3206 = vmatpush1.msra.mxu0 0.0
      %3207 = vmatprep.subr.mxu0 0.0
      %3208 = vmatpush1.msra.mxu0 0.0
      %3209 = vmatprep.subr.mxu0 0.0
      %3210 = vmatpush1.msra.mxu0 0.0
      %3211 = vmatprep.subr.mxu0 0.0
      %3212 = vmatpush1.msra.mxu0 0.0
      %3213 = vmatprep.subr.mxu0 0.0
      %3214 = vmatpush1.msra.mxu0 0.0
      %3215 = vmatprep.subr.mxu0 0.0
      %3216 = vmatpush1.msra.mxu0 0.0
      %3217 = vmatprep.subr.mxu0 0.0
      %3218 = vmatpush1.msra.mxu0 0.0
      %3219 = vmatprep.subr.mxu0 0.0
      %3220 = vmatpush1.msra.mxu0 0.0
      %3221 = vmatprep.subr.mxu0 0.0
      %3222 = vmatpush1.msra.mxu0 0.0
      %3223 = vmatprep.subr.mxu0 0.0
      %3224 = vmatpush1.msra.mxu0 0.0
      %3225 = vmatprep.subr.mxu0 0.0
      %3226 = vmatpush1.msra.mxu0 0.0
      %3227 = vmatprep.subr.mxu0 0.0
      %3228 = vmatpush1.msra.mxu0 0.0
      %3229 = vmatprep.subr.mxu0 0.0
      %3230 = vmatpush1.msra.mxu0 0.0
      %3231 = vmatprep.subr.mxu0 0.0
      %3232 = vmatpush1.msra.mxu0 0.0
      %3233 = vmatprep.subr.mxu0 0.0
      %3234 = vmatpush1.msra.mxu0 0.0
      %3235 = vmatprep.subr.mxu0 0.0
      %3236 = vmatpush1.msra.mxu0 0.0
      %3237 = vmatprep.mubr.f32.mxu0 0.0
      %3238 = vmatmul.mubr.f32.gmra.mrb[0].mxu0 %v3122
      %v3239 = vpop.f32.mrb[0].mxu0
      %v3240 = vadd.f32 0.0, %v3239
      %v3241 = vpop.f32.mrb[0].mxu0
      %3242 = vmatprep.mubr.f32.mxu0 0.0
      %3243 = vmatmul.mubr.f32.gmra.mrb[0].mxu0 %v3125
      %v3244 = vpop.f32.mrb[0].mxu0
      %v3245 = vadd.f32 0.0, %v3244
      %v3246 = vpop.f32.mrb[0].mxu0
      %3247 = vmatprep.mubr.f32.mxu0 0.0
      %3248 = vmatmul.mubr.f32.gmra.mrb[0].mxu0 %v3128
      %v3249 = vpop.f32.mrb[0].mxu0
      %v3250 = vadd.f32 0.0, %v3249
      %v3251 = vpop.f32.mrb[0].mxu0
      %3252 = vmatprep.mubr.f32.mxu0 0.0
      %3253 = vmatmul.mubr.f32.gmra.mrb[0].mxu0 %v3131
      %v3254 = vpop.f32.mrb[0].mxu0
      %v3255 = vadd.f32 0.0, %v3254
      %v3256 = vpop.f32.mrb[0].mxu0
      %3257 = vmatprep.mubr.f32.mxu0 0.0
      %3258 = vmatmul.mubr.f32.gmra.mrb[0].mxu0 %v3134
      %v3259 = vpop.f32.mrb[0].mxu0
      %v3260 = vadd.f32 0.0, %v3259
      %v3261 = vpop.f32.mrb[0].mxu0
      %3262 = vmatprep.mubr.f32.mxu0 0.0
      %3263 = vmatmul.mubr.f32.gmra.mrb[0].mxu0 %v3137
      %v3264 = vpop.f32.mrb[0].mxu0
      %v3265 = vadd.f32 0.0, %v3264
      %v3266 = vpop.f32.mrb[0].mxu0
      %3267 = vmatprep.mubr.f32.mxu0 0.0
      %3268 = vmatmul.mubr.f32.gmra.mrb[0].mxu0 %v3140
      %v3269 = vpop.f32.mrb[0].mxu0
      %v3270 = vadd.f32 0.0, %v3269
      %v3271 = vpop.f32.mrb[0].mxu0
      %3272 = vmatprep.mubr.f32.mxu0 0.0
      %3273 = vmatmul.mubr.f32.gmra.mrb[0].mxu0 %v3143
      %v3274 = vpop.f32.mrb[0].mxu0
      %v3275 = vadd.f32 0.0, %v3274
      %v3276 = vpop.f32.mrb[0].mxu0
      %3277 = vmatprep.mubr.f32.mxu0 0.0
      %3278 = vmatmul.mubr.f32.gmra.mrb[0].mxu0 %v3146
      %v3279 = vpop.f32.mrb[0].mxu0
      %v3280 = vadd.f32 0.0, %v3279
      %v3281 = vpop.f32.mrb[0].mxu0
      %3282 = vmatprep.mubr.f32.mxu0 0.0
      %3283 = vmatmul.mubr.f32.gmra.mrb[0].mxu0 %v3149
      %v3284 = vpop.f32.mrb[0].mxu0
      %v3285 = vadd.f32 0.0, %v3284
      %v3286 = vpop.f32.mrb[0].mxu0
      %3287 = vmatprep.mubr.f32.mxu0 0.0
      %3288 = vmatmul.mubr.f32.gmra.mrb[0].mxu0 %v3152
      %v3289 = vpop.f32.mrb[0].mxu0
      %v3290 = vadd.f32 0.0, %v3289
      %v3291 = vpop.f32.mrb[0].mxu0
      %3292 = vmatprep.mubr.f32.mxu0 0.0
      %3293 = vmatmul.mubr.f32.gmra.mrb[0].mxu0 %v3155
      %v3294 = vpop.f32.mrb[0].mxu0
      %v3295 = vadd.f32 0.0, %v3294
      %v3296 = vpop.f32.mrb[0].mxu0
      %3297 = vmatprep.mubr.f32.mxu0 0.0
      %3298 = vmatmul.mubr.f32.gmra.mrb[0].mxu0 %v3158
      %v3299 = vpop.f32.mrb[0].mxu0
      %v3300 = vadd.f32 0.0, %v3299
      %v3301 = vpop.f32.mrb[0].mxu0
      %3302 = vmatprep.mubr.f32.mxu0 0.0
      %3303 = vmatmul.mubr.f32.gmra.mrb[0].mxu0 %v3161
      %v3304 = vpop.f32.mrb[0].mxu0
      %v3305 = vadd.f32 0.0, %v3304
      %v3306 = vpop.f32.mrb[0].mxu0
      %3307 = vmatprep.mubr.f32.mxu0 0.0
      %3308 = vmatmul.mubr.f32.gmra.mrb[0].mxu0 %v3164
      %v3309 = vpop.f32.mrb[0].mxu0
      %v3310 = vadd.f32 0.0, %v3309
      %v3311 = vpop.f32.mrb[0].mxu0
      %3312 = vmatprep.mubr.f32.mxu0 0.0
      %3313 = vmatmul.mubr.f32.gmra.mrb[0].mxu0 %v3167
      %v3314 = vpop.f32.mrb[0].mxu0
      %v3315 = vadd.f32 0.0, %v3314
      %v3316 = vpop.f32.mrb[0].mxu0
      %3317 = vdwg.mxu0
      %v3319 = vlaneseq
      %v3320 = vshrl.u32 %v3319, 7
      %v3321 = vsub.s32 0, %v3320
      %v3322 = vrot.slane %v3119, %v3321
      %v3325 = vsel %vm3120, %v463, 0
      %v3328 = vsel %vm3120, %v464, 0
      %v3331 = vsel %vm3120, %v465, 0
      %v3334 = vsel %vm3120, %v466, 0
      %v3337 = vsel %vm3120, %v467, 0
      %v3340 = vsel %vm3120, %v468, 0
      %v3343 = vsel %vm3120, %v469, 0
      %v3346 = vsel %vm3120, %v470, 0
      %v3349 = vsel %vm3120, %v471, 0
      %v3352 = vsel %vm3120, %v472, 0
      %v3355 = vsel %vm3120, %v473, 0
      %v3358 = vsel %vm3120, %v474, 0
      %v3361 = vsel %vm3120, %v475, 0
      %v3364 = vsel %vm3120, %v476, 0
      %v3367 = vsel %vm3120, %v477, 0
      %v3370 = vsel %vm3120, %v478, 0
      %v3373 = vsel %vm3169, %v3118, 0
      %3375 = vmatprep.subr.mxu0 0.0
      %3376 = vmatpush1.msra.mxu0 %v3373
      %3377 = vmatprep.subr.mxu0 0.0
      %3378 = vmatpush1.msra.mxu0 0.0
      %3379 = vmatprep.subr.mxu0 0.0
      %3380 = vmatpush1.msra.mxu0 0.0
      %3381 = vmatprep.subr.mxu0 0.0
      %3382 = vmatpush1.msra.mxu0 0.0
      %3383 = vmatprep.subr.mxu0 0.0
      %3384 = vmatpush1.msra.mxu0 0.0
      %3385 = vmatprep.subr.mxu0 0.0
      %3386 = vmatpush1.msra.mxu0 0.0
      %3387 = vmatprep.subr.mxu0 0.0
      %3388 = vmatpush1.msra.mxu0 0.0
      %3389 = vmatprep.subr.mxu0 0.0
      %3390 = vmatpush1.msra.mxu0 0.0
      %3391 = vmatprep.subr.mxu0 0.0
      %3392 = vmatpush1.msra.mxu0 0.0
      %3393 = vmatprep.subr.mxu0 0.0
      %3394 = vmatpush1.msra.mxu0 0.0
      %3395 = vmatprep.subr.mxu0 0.0
      %3396 = vmatpush1.msra.mxu0 0.0
      %3397 = vmatprep.subr.mxu0 0.0
      %3398 = vmatpush1.msra.mxu0 0.0
      %3399 = vmatprep.subr.mxu0 0.0
      %3400 = vmatpush1.msra.mxu0 0.0
      %3401 = vmatprep.subr.mxu0 0.0
      %3402 = vmatpush1.msra.mxu0 0.0
      %3403 = vmatprep.subr.mxu0 0.0
      %3404 = vmatpush1.msra.mxu0 0.0
      %3405 = vmatprep.subr.mxu0 0.0
      %3406 = vmatpush1.msra.mxu0 0.0
      %3407 = vmatprep.subr.mxu0 0.0
      %3408 = vmatpush1.msra.mxu0 0.0
      %3409 = vmatprep.subr.mxu0 0.0
      %3410 = vmatpush1.msra.mxu0 0.0
      %3411 = vmatprep.subr.mxu0 0.0
      %3412 = vmatpush1.msra.mxu0 0.0
      %3413 = vmatprep.subr.mxu0 0.0
      %3414 = vmatpush1.msra.mxu0 0.0
      %3415 = vmatprep.subr.mxu0 0.0
      %3416 = vmatpush1.msra.mxu0 0.0
      %3417 = vmatprep.subr.mxu0 0.0
      %3418 = vmatpush1.msra.mxu0 0.0
      %3419 = vmatprep.subr.mxu0 0.0
      %3420 = vmatpush1.msra.mxu0 0.0
      %3421 = vmatprep.subr.mxu0 0.0
      %3422 = vmatpush1.msra.mxu0 0.0
      %3423 = vmatprep.subr.mxu0 0.0
      %3424 = vmatpush1.msra.mxu0 0.0
      %3425 = vmatprep.subr.mxu0 0.0
      %3426 = vmatpush1.msra.mxu0 0.0
      %3427 = vmatprep.subr.mxu0 0.0
      %3428 = vmatpush1.msra.mxu0 0.0
      %3429 = vmatprep.subr.mxu0 0.0
      %3430 = vmatpush1.msra.mxu0 0.0
      %3431 = vmatprep.subr.mxu0 0.0
      %3432 = vmatpush1.msra.mxu0 0.0
      %3433 = vmatprep.subr.mxu0 0.0
      %3434 = vmatpush1.msra.mxu0 0.0
      %3435 = vmatprep.subr.mxu0 0.0
      %3436 = vmatpush1.msra.mxu0 0.0
      %3437 = vmatprep.subr.mxu0 0.0
      %3438 = vmatpush1.msra.mxu0 0.0
      %3439 = vmatprep.mubr.f32.mxu0 0.0
      %3440 = vmatmul.mubr.f32.gmra.mrb[0].mxu0 %v3325
      %v3441 = vpop.f32.mrb[0].mxu0
      %v3442 = vadd.f32 %v3322, %v3441
      %v3443 = vpop.f32.mrb[0].mxu0
      %3444 = vmatprep.mubr.f32.mxu0 0.0
      %3445 = vmatmul.mubr.f32.gmra.mrb[0].mxu0 %v3328
      %v3446 = vpop.f32.mrb[0].mxu0
      %v3447 = vadd.f32 %v3322, %v3446
      %v3448 = vpop.f32.mrb[0].mxu0
      %3449 = vmatprep.mubr.f32.mxu0 0.0
      %3450 = vmatmul.mubr.f32.gmra.mrb[0].mxu0 %v3331
      %v3451 = vpop.f32.mrb[0].mxu0
      %v3452 = vadd.f32 %v3322, %v3451
      %v3453 = vpop.f32.mrb[0].mxu0
      %3454 = vmatprep.mubr.f32.mxu0 0.0
      %3455 = vmatmul.mubr.f32.gmra.mrb[0].mxu0 %v3334
      %v3456 = vpop.f32.mrb[0].mxu0
      %v3457 = vadd.f32 %v3322, %v3456
      %v3458 = vpop.f32.mrb[0].mxu0
      %3459 = vmatprep.mubr.f32.mxu0 0.0
      %3460 = vmatmul.mubr.f32.gmra.mrb[0].mxu0 %v3337
      %v3461 = vpop.f32.mrb[0].mxu0
      %v3462 = vadd.f32 %v3322, %v3461
      %v3463 = vpop.f32.mrb[0].mxu0
      %3464 = vmatprep.mubr.f32.mxu0 0.0
      %3465 = vmatmul.mubr.f32.gmra.mrb[0].mxu0 %v3340
      %v3466 = vpop.f32.mrb[0].mxu0
      %v3467 = vadd.f32 %v3322, %v3466
      %v3468 = vpop.f32.mrb[0].mxu0
      %3469 = vmatprep.mubr.f32.mxu0 0.0
      %3470 = vmatmul.mubr.f32.gmra.mrb[0].mxu0 %v3343
      %v3471 = vpop.f32.mrb[0].mxu0
      %v3472 = vadd.f32 %v3322, %v3471
      %v3473 = vpop.f32.mrb[0].mxu0
      %3474 = vmatprep.mubr.f32.mxu0 0.0
      %3475 = vmatmul.mubr.f32.gmra.mrb[0].mxu0 %v3346
      %v3476 = vpop.f32.mrb[0].mxu0
      %v3477 = vadd.f32 %v3322, %v3476
      %v3478 = vpop.f32.mrb[0].mxu0
      %3479 = vmatprep.mubr.f32.mxu0 0.0
      %3480 = vmatmul.mubr.f32.gmra.mrb[0].mxu0 %v3349
      %v3481 = vpop.f32.mrb[0].mxu0
      %v3482 = vadd.f32 %v3322, %v3481
      %v3483 = vpop.f32.mrb[0].mxu0
      %3484 = vmatprep.mubr.f32.mxu0 0.0
      %3485 = vmatmul.mubr.f32.gmra.mrb[0].mxu0 %v3352
      %v3486 = vpop.f32.mrb[0].mxu0
      %v3487 = vadd.f32 %v3322, %v3486
      %v3488 = vpop.f32.mrb[0].mxu0
      %3489 = vmatprep.mubr.f32.mxu0 0.0
      %3490 = vmatmul.mubr.f32.gmra.mrb[0].mxu0 %v3355
      %v3491 = vpop.f32.mrb[0].mxu0
      %v3492 = vadd.f32 %v3322, %v3491
      %v3493 = vpop.f32.mrb[0].mxu0
      %3494 = vmatprep.mubr.f32.mxu0 0.0
      %3495 = vmatmul.mubr.f32.gmra.mrb[0].mxu0 %v3358
      %v3496 = vpop.f32.mrb[0].mxu0
      %v3497 = vadd.f32 %v3322, %v3496
      %v3498 = vpop.f32.mrb[0].mxu0
      %3499 = vmatprep.mubr.f32.mxu0 0.0
      %3500 = vmatmul.mubr.f32.gmra.mrb[0].mxu0 %v3361
      %v3501 = vpop.f32.mrb[0].mxu0
      %v3502 = vadd.f32 %v3322, %v3501
      %v3503 = vpop.f32.mrb[0].mxu0
      %3504 = vmatprep.mubr.f32.mxu0 0.0
      %3505 = vmatmul.mubr.f32.gmra.mrb[0].mxu0 %v3364
      %v3506 = vpop.f32.mrb[0].mxu0
      %v3507 = vadd.f32 %v3322, %v3506
      %v3508 = vpop.f32.mrb[0].mxu0
      %3509 = vmatprep.mubr.f32.mxu0 0.0
      %3510 = vmatmul.mubr.f32.gmra.mrb[0].mxu0 %v3367
      %v3511 = vpop.f32.mrb[0].mxu0
      %v3512 = vadd.f32 %v3322, %v3511
      %v3513 = vpop.f32.mrb[0].mxu0
      %3514 = vmatprep.mubr.f32.mxu0 0.0
      %3515 = vmatmul.mubr.f32.gmra.mrb[0].mxu0 %v3370
      %v3516 = vpop.f32.mrb[0].mxu0
      %v3517 = vadd.f32 %v3322, %v3516
      %v3518 = vpop.f32.mrb[0].mxu0
      %3519 = vdwg.mxu0
      %v3520 = vpack.c.bf16 %v3245, %v3240
      %v3521 = vpack.c.bf16 %v3255, %v3250
      %v3522 = vpack.c.bf16 %v3265, %v3260
      %v3523 = vpack.c.bf16 %v3275, %v3270
      %v3524 = vpack.c.bf16 %v3285, %v3280
      %v3525 = vpack.c.bf16 %v3295, %v3290
      %v3526 = vpack.c.bf16 %v3305, %v3300
      %v3527 = vpack.c.bf16 %v3315, %v3310
      %3528 = vmatprep.subr.bf16.mxu0 0
      %3529 = vmatpush1.bf16.msra.mxu0 %v3520
      %3530 = vmatprep.subr.bf16.mxu0 0
      %3531 = vmatpush1.bf16.msra.mxu0 %v3521
      %3532 = vmatprep.subr.bf16.mxu0 0
      %3533 = vmatpush1.bf16.msra.mxu0 %v3522
      %3534 = vmatprep.subr.bf16.mxu0 0
      %3535 = vmatpush1.bf16.msra.mxu0 %v3523
      %3536 = vmatprep.subr.bf16.mxu0 0
      %3537 = vmatpush1.bf16.msra.mxu0 %v3524
      %3538 = vmatprep.subr.bf16.mxu0 0
      %3539 = vmatpush1.bf16.msra.mxu0 %v3525
      %3540 = vmatprep.subr.bf16.mxu0 0
      %3541 = vmatpush1.bf16.msra.mxu0 %v3526
      %3542 = vmatprep.subr.bf16.mxu0 0
      %3543 = vmatpush1.bf16.msra.mxu0 %v3527
      %3544 = vmatprep.subr.bf16.mxu0 0
      %3545 = vmatpush1.bf16.msra.mxu0 0
      %3546 = vmatprep.subr.bf16.mxu0 0
      %3547 = vmatpush1.bf16.msra.mxu0 0
      %3548 = vmatprep.subr.bf16.mxu0 0
      %3549 = vmatpush1.bf16.msra.mxu0 0
      %3550 = vmatprep.subr.bf16.mxu0 0
      %3551 = vmatpush1.bf16.msra.mxu0 0
      %3552 = vmatprep.subr.bf16.mxu0 0
      %3553 = vmatpush1.bf16.msra.mxu0 0
      %3554 = vmatprep.subr.bf16.mxu0 0
      %3555 = vmatpush1.bf16.msra.mxu0 0
      %3556 = vmatprep.subr.bf16.mxu0 0
      %3557 = vmatpush1.bf16.msra.mxu0 0
      %3558 = vmatprep.subr.bf16.mxu0 0
      %3559 = vmatpush1.bf16.msra.mxu0 0
      %3560 = vmatprep.mubr.bf16.mxu0 0
      %3561 = vmatmul.mubr.bf16.gmra.mrb[0].mxu0 %v1149
      %v3562 = vpop.f32.mrb[0].mxu0
      %v3563 = vadd.f32 %v3442, %v3562
      %v3564 = vpop.f32.mrb[0].mxu0
      %v3565 = vpop.f32.mrb[0].mxu0
      %v3566 = vadd.f32 %v3447, %v3565
      %v3567 = vpop.f32.mrb[0].mxu0
      %3568 = vmatprep.mubr.bf16.mxu0 0
      %3569 = vmatmul.mubr.bf16.gmra.mrb[0].mxu0 %v1150
      %v3570 = vpop.f32.mrb[0].mxu0
      %v3571 = vadd.f32 %v3452, %v3570
      %v3572 = vpop.f32.mrb[0].mxu0
      %v3573 = vpop.f32.mrb[0].mxu0
      %v3574 = vadd.f32 %v3457, %v3573
      %v3575 = vpop.f32.mrb[0].mxu0
      %3576 = vmatprep.mubr.bf16.mxu0 0
      %3577 = vmatmul.mubr.bf16.gmra.mrb[0].mxu0 %v1151
      %v3578 = vpop.f32.mrb[0].mxu0
      %v3579 = vadd.f32 %v3462, %v3578
      %v3580 = vpop.f32.mrb[0].mxu0
      %v3581 = vpop.f32.mrb[0].mxu0
      %v3582 = vadd.f32 %v3467, %v3581
      %v3583 = vpop.f32.mrb[0].mxu0
      %3584 = vmatprep.mubr.bf16.mxu0 0
      %3585 = vmatmul.mubr.bf16.gmra.mrb[0].mxu0 %v1152
      %v3586 = vpop.f32.mrb[0].mxu0
      %v3587 = vadd.f32 %v3472, %v3586
      %v3588 = vpop.f32.mrb[0].mxu0
      %v3589 = vpop.f32.mrb[0].mxu0
      %v3590 = vadd.f32 %v3477, %v3589
      %v3591 = vpop.f32.mrb[0].mxu0
      %3592 = vmatprep.mubr.bf16.mxu0 0
      %3593 = vmatmul.mubr.bf16.gmra.mrb[0].mxu0 %v1153
      %v3594 = vpop.f32.mrb[0].mxu0
      %v3595 = vadd.f32 %v3482, %v3594
      %v3596 = vpop.f32.mrb[0].mxu0
      %v3597 = vpop.f32.mrb[0].mxu0
      %v3598 = vadd.f32 %v3487, %v3597
      %v3599 = vpop.f32.mrb[0].mxu0
      %3600 = vmatprep.mubr.bf16.mxu0 0
      %3601 = vmatmul.mubr.bf16.gmra.mrb[0].mxu0 %v1154
      %v3602 = vpop.f32.mrb[0].mxu0
      %v3603 = vadd.f32 %v3492, %v3602
      %v3604 = vpop.f32.mrb[0].mxu0
      %v3605 = vpop.f32.mrb[0].mxu0
      %v3606 = vadd.f32 %v3497, %v3605
      %v3607 = vpop.f32.mrb[0].mxu0
      %3608 = vmatprep.mubr.bf16.mxu0 0
      %3609 = vmatmul.mubr.bf16.gmra.mrb[0].mxu0 %v1155
      %v3610 = vpop.f32.mrb[0].mxu0
      %v3611 = vadd.f32 %v3502, %v3610
      %v3612 = vpop.f32.mrb[0].mxu0
      %v3613 = vpop.f32.mrb[0].mxu0
      %v3614 = vadd.f32 %v3507, %v3613
      %v3615 = vpop.f32.mrb[0].mxu0
      %3616 = vmatprep.mubr.bf16.mxu0 0
      %3617 = vmatmul.mubr.bf16.gmra.mrb[0].mxu0 %v1156
      %v3618 = vpop.f32.mrb[0].mxu0
      %v3619 = vadd.f32 %v3512, %v3618
      %v3620 = vpop.f32.mrb[0].mxu0
      %v3621 = vpop.f32.mrb[0].mxu0
      %v3622 = vadd.f32 %v3517, %v3621
      %v3623 = vpop.f32.mrb[0].mxu0
      %3624 = vmatprep.mubr.bf16.mxu0 0
      %3625 = vmatmul.mubr.bf16.gmra.mrb[0].mxu0 %v1429
      %v3626 = vpop.f32.mrb[0].mxu0
      %v3627 = vadd.f32 %v3442, %v3626
      %v3628 = vpop.f32.mrb[0].mxu0
      %v3629 = vpop.f32.mrb[0].mxu0
      %v3630 = vadd.f32 %v3447, %v3629
      %v3631 = vpop.f32.mrb[0].mxu0
      %3632 = vmatprep.mubr.bf16.mxu0 0
      %3633 = vmatmul.mubr.bf16.gmra.mrb[0].mxu0 %v1430
      %v3634 = vpop.f32.mrb[0].mxu0
      %v3635 = vadd.f32 %v3452, %v3634
      %v3636 = vpop.f32.mrb[0].mxu0
      %v3637 = vpop.f32.mrb[0].mxu0
      %v3638 = vadd.f32 %v3457, %v3637
      %v3639 = vpop.f32.mrb[0].mxu0
      %3640 = vmatprep.mubr.bf16.mxu0 0
      %3641 = vmatmul.mubr.bf16.gmra.mrb[0].mxu0 %v1431
      %v3642 = vpop.f32.mrb[0].mxu0
      %v3643 = vadd.f32 %v3462, %v3642
      %v3644 = vpop.f32.mrb[0].mxu0
      %v3645 = vpop.f32.mrb[0].mxu0
      %v3646 = vadd.f32 %v3467, %v3645
      %v3647 = vpop.f32.mrb[0].mxu0
      %3648 = vmatprep.mubr.bf16.mxu0 0
      %3649 = vmatmul.mubr.bf16.gmra.mrb[0].mxu0 %v1432
      %v3650 = vpop.f32.mrb[0].mxu0
      %v3651 = vadd.f32 %v3472, %v3650
      %v3652 = vpop.f32.mrb[0].mxu0
      %v3653 = vpop.f32.mrb[0].mxu0
      %v3654 = vadd.f32 %v3477, %v3653
      %v3655 = vpop.f32.mrb[0].mxu0
      %3656 = vmatprep.mubr.bf16.mxu0 0
      %3657 = vmatmul.mubr.bf16.gmra.mrb[0].mxu0 %v1433
      %v3658 = vpop.f32.mrb[0].mxu0
      %v3659 = vadd.f32 %v3482, %v3658
      %v3660 = vpop.f32.mrb[0].mxu0
      %v3661 = vpop.f32.mrb[0].mxu0
      %v3662 = vadd.f32 %v3487, %v3661
      %v3663 = vpop.f32.mrb[0].mxu0
      %3664 = vmatprep.mubr.bf16.mxu0 0
      %3665 = vmatmul.mubr.bf16.gmra.mrb[0].mxu0 %v1434
      %v3666 = vpop.f32.mrb[0].mxu0
      %v3667 = vadd.f32 %v3492, %v3666
      %v3668 = vpop.f32.mrb[0].mxu0
      %v3669 = vpop.f32.mrb[0].mxu0
      %v3670 = vadd.f32 %v3497, %v3669
      %v3671 = vpop.f32.mrb[0].mxu0
      %3672 = vmatprep.mubr.bf16.mxu0 0
      %3673 = vmatmul.mubr.bf16.gmra.mrb[0].mxu0 %v1435
      %v3674 = vpop.f32.mrb[0].mxu0
      %v3675 = vadd.f32 %v3502, %v3674
      %v3676 = vpop.f32.mrb[0].mxu0
      %v3677 = vpop.f32.mrb[0].mxu0
      %v3678 = vadd.f32 %v3507, %v3677
      %v3679 = vpop.f32.mrb[0].mxu0
      %3680 = vmatprep.mubr.bf16.mxu0 0
      %3681 = vmatmul.mubr.bf16.gmra.mrb[0].mxu0 %v1436
      %v3682 = vpop.f32.mrb[0].mxu0
      %v3683 = vadd.f32 %v3512, %v3682
      %v3684 = vpop.f32.mrb[0].mxu0
      %v3685 = vpop.f32.mrb[0].mxu0
      %v3686 = vadd.f32 %v3517, %v3685
      %v3687 = vpop.f32.mrb[0].mxu0
      %3688 = vmatprep.mubr.bf16.mxu0 0
      %3689 = vmatmul.mubr.bf16.gmra.mrb[0].mxu0 %v1709
      %v3690 = vpop.f32.mrb[0].mxu0
      %v3691 = vadd.f32 %v3442, %v3690
      %v3692 = vpop.f32.mrb[0].mxu0
      %v3693 = vpop.f32.mrb[0].mxu0
      %v3694 = vadd.f32 %v3447, %v3693
      %v3695 = vpop.f32.mrb[0].mxu0
      %3696 = vmatprep.mubr.bf16.mxu0 0
      %3697 = vmatmul.mubr.bf16.gmra.mrb[0].mxu0 %v1710
      %v3698 = vpop.f32.mrb[0].mxu0
      %v3699 = vadd.f32 %v3452, %v3698
      %v3700 = vpop.f32.mrb[0].mxu0
      %v3701 = vpop.f32.mrb[0].mxu0
      %v3702 = vadd.f32 %v3457, %v3701
      %v3703 = vpop.f32.mrb[0].mxu0
      %3704 = vmatprep.mubr.bf16.mxu0 0
      %3705 = vmatmul.mubr.bf16.gmra.mrb[0].mxu0 %v1711
      %v3706 = vpop.f32.mrb[0].mxu0
      %v3707 = vadd.f32 %v3462, %v3706
      %v3708 = vpop.f32.mrb[0].mxu0
      %v3709 = vpop.f32.mrb[0].mxu0
      %v3710 = vadd.f32 %v3467, %v3709
      %v3711 = vpop.f32.mrb[0].mxu0
      %3712 = vmatprep.mubr.bf16.mxu0 0
      %3713 = vmatmul.mubr.bf16.gmra.mrb[0].mxu0 %v1712
      %v3714 = vpop.f32.mrb[0].mxu0
      %v3715 = vadd.f32 %v3472, %v3714
      %v3716 = vpop.f32.mrb[0].mxu0
      %v3717 = vpop.f32.mrb[0].mxu0
      %v3718 = vadd.f32 %v3477, %v3717
      %v3719 = vpop.f32.mrb[0].mxu0
      %3720 = vmatprep.mubr.bf16.mxu0 0
      %3721 = vmatmul.mubr.bf16.gmra.mrb[0].mxu0 %v1713
      %v3722 = vpop.f32.mrb[0].mxu0
      %v3723 = vadd.f32 %v3482, %v3722
      %v3724 = vpop.f32.mrb[0].mxu0
      %v3725 = vpop.f32.mrb[0].mxu0
      %v3726 = vadd.f32 %v3487, %v3725
      %v3727 = vpop.f32.mrb[0].mxu0
      %3728 = vmatprep.mubr.bf16.mxu0 0
      %3729 = vmatmul.mubr.bf16.gmra.mrb[0].mxu0 %v1714
      %v3730 = vpop.f32.mrb[0].mxu0
      %v3731 = vadd.f32 %v3492, %v3730
      %v3732 = vpop.f32.mrb[0].mxu0
      %v3733 = vpop.f32.mrb[0].mxu0
      %v3734 = vadd.f32 %v3497, %v3733
      %v3735 = vpop.f32.mrb[0].mxu0
      %3736 = vmatprep.mubr.bf16.mxu0 0
      %3737 = vmatmul.mubr.bf16.gmra.mrb[0].mxu0 %v1715
      %v3738 = vpop.f32.mrb[0].mxu0
      %v3739 = vadd.f32 %v3502, %v3738
      %v3740 = vpop.f32.mrb[0].mxu0
      %v3741 = vpop.f32.mrb[0].mxu0
      %v3742 = vadd.f32 %v3507, %v3741
      %v3743 = vpop.f32.mrb[0].mxu0
      %3744 = vmatprep.mubr.bf16.mxu0 0
      %3745 = vmatmul.mubr.bf16.gmra.mrb[0].mxu0 %v1716
      %v3746 = vpop.f32.mrb[0].mxu0
      %v3747 = vadd.f32 %v3512, %v3746
      %v3748 = vpop.f32.mrb[0].mxu0
      %v3749 = vpop.f32.mrb[0].mxu0
      %v3750 = vadd.f32 %v3517, %v3749
      %v3751 = vpop.f32.mrb[0].mxu0
      %3752 = vmatprep.mubr.bf16.mxu0 0
      %3753 = vmatmul.mubr.bf16.gmra.mrb[0].mxu0 %v1989
      %v3754 = vpop.f32.mrb[0].mxu0
      %v3755 = vadd.f32 %v3442, %v3754
      %v3756 = vpop.f32.mrb[0].mxu0
      %v3757 = vpop.f32.mrb[0].mxu0
      %v3758 = vadd.f32 %v3447, %v3757
      %v3759 = vpop.f32.mrb[0].mxu0
      %3760 = vmatprep.mubr.bf16.mxu0 0
      %3761 = vmatmul.mubr.bf16.gmra.mrb[0].mxu0 %v1990
      %v3762 = vpop.f32.mrb[0].mxu0
      %v3763 = vadd.f32 %v3452, %v3762
      %v3764 = vpop.f32.mrb[0].mxu0
      %v3765 = vpop.f32.mrb[0].mxu0
      %v3766 = vadd.f32 %v3457, %v3765
      %v3767 = vpop.f32.mrb[0].mxu0
      %3768 = vmatprep.mubr.bf16.mxu0 0
      %3769 = vmatmul.mubr.bf16.gmra.mrb[0].mxu0 %v1991
      %v3770 = vpop.f32.mrb[0].mxu0
      %v3771 = vadd.f32 %v3462, %v3770
      %v3772 = vpop.f32.mrb[0].mxu0
      %v3773 = vpop.f32.mrb[0].mxu0
      %v3774 = vadd.f32 %v3467, %v3773
      %v3775 = vpop.f32.mrb[0].mxu0
      %3776 = vmatprep.mubr.bf16.mxu0 0
      %3777 = vmatmul.mubr.bf16.gmra.mrb[0].mxu0 %v1992
      %v3778 = vpop.f32.mrb[0].mxu0
      %v3779 = vadd.f32 %v3472, %v3778
      %v3780 = vpop.f32.mrb[0].mxu0
      %v3781 = vpop.f32.mrb[0].mxu0
      %v3782 = vadd.f32 %v3477, %v3781
      %v3783 = vpop.f32.mrb[0].mxu0
      %3784 = vmatprep.mubr.bf16.mxu0 0
      %3785 = vmatmul.mubr.bf16.gmra.mrb[0].mxu0 %v1993
      %v3786 = vpop.f32.mrb[0].mxu0
      %v3787 = vadd.f32 %v3482, %v3786
      %v3788 = vpop.f32.mrb[0].mxu0
      %v3789 = vpop.f32.mrb[0].mxu0
      %v3790 = vadd.f32 %v3487, %v3789
      %v3791 = vpop.f32.mrb[0].mxu0
      %3792 = vmatprep.mubr.bf16.mxu0 0
      %3793 = vmatmul.mubr.bf16.gmra.mrb[0].mxu0 %v1994
      %v3794 = vpop.f32.mrb[0].mxu0
      %v3795 = vadd.f32 %v3492, %v3794
      %v3796 = vpop.f32.mrb[0].mxu0
      %v3797 = vpop.f32.mrb[0].mxu0
      %v3798 = vadd.f32 %v3497, %v3797
      %v3799 = vpop.f32.mrb[0].mxu0
      %3800 = vmatprep.mubr.bf16.mxu0 0
      %3801 = vmatmul.mubr.bf16.gmra.mrb[0].mxu0 %v1995
      %v3802 = vpop.f32.mrb[0].mxu0
      %v3803 = vadd.f32 %v3502, %v3802
      %v3804 = vpop.f32.mrb[0].mxu0
      %v3805 = vpop.f32.mrb[0].mxu0
      %v3806 = vadd.f32 %v3507, %v3805
      %v3807 = vpop.f32.mrb[0].mxu0
      %3808 = vmatprep.mubr.bf16.mxu0 0
      %3809 = vmatmul.mubr.bf16.gmra.mrb[0].mxu0 %v1996
      %v3810 = vpop.f32.mrb[0].mxu0
      %v3811 = vadd.f32 %v3512, %v3810
      %v3812 = vpop.f32.mrb[0].mxu0
      %v3813 = vpop.f32.mrb[0].mxu0
      %v3814 = vadd.f32 %v3517, %v3813
      %v3815 = vpop.f32.mrb[0].mxu0
      %3816 = vmatprep.mubr.bf16.mxu0 0
      %3817 = vmatmul.mubr.bf16.gmra.mrb[0].mxu0 %v2269
      %v3818 = vpop.f32.mrb[0].mxu0
      %v3819 = vadd.f32 %v3442, %v3818
      %v3820 = vpop.f32.mrb[0].mxu0
      %v3821 = vpop.f32.mrb[0].mxu0
      %v3822 = vadd.f32 %v3447, %v3821
      %v3823 = vpop.f32.mrb[0].mxu0
      %3824 = vmatprep.mubr.bf16.mxu0 0
      %3825 = vmatmul.mubr.bf16.gmra.mrb[0].mxu0 %v2270
      %v3826 = vpop.f32.mrb[0].mxu0
      %v3827 = vadd.f32 %v3452, %v3826
      %v3828 = vpop.f32.mrb[0].mxu0
      %v3829 = vpop.f32.mrb[0].mxu0
      %v3830 = vadd.f32 %v3457, %v3829
      %v3831 = vpop.f32.mrb[0].mxu0
      %3832 = vmatprep.mubr.bf16.mxu0 0
      %3833 = vmatmul.mubr.bf16.gmra.mrb[0].mxu0 %v2271
      %v3834 = vpop.f32.mrb[0].mxu0
      %v3835 = vadd.f32 %v3462, %v3834
      %v3836 = vpop.f32.mrb[0].mxu0
      %v3837 = vpop.f32.mrb[0].mxu0
      %v3838 = vadd.f32 %v3467, %v3837
      %v3839 = vpop.f32.mrb[0].mxu0
      %3840 = vmatprep.mubr.bf16.mxu0 0
      %3841 = vmatmul.mubr.bf16.gmra.mrb[0].mxu0 %v2272
      %v3842 = vpop.f32.mrb[0].mxu0
      %v3843 = vadd.f32 %v3472, %v3842
      %v3844 = vpop.f32.mrb[0].mxu0
      %v3845 = vpop.f32.mrb[0].mxu0
      %v3846 = vadd.f32 %v3477, %v3845
      %v3847 = vpop.f32.mrb[0].mxu0
      %3848 = vmatprep.mubr.bf16.mxu0 0
      %3849 = vmatmul.mubr.bf16.gmra.mrb[0].mxu0 %v2273
      %v3850 = vpop.f32.mrb[0].mxu0
      %v3851 = vadd.f32 %v3482, %v3850
      %v3852 = vpop.f32.mrb[0].mxu0
      %v3853 = vpop.f32.mrb[0].mxu0
      %v3854 = vadd.f32 %v3487, %v3853
      %v3855 = vpop.f32.mrb[0].mxu0
      %3856 = vmatprep.mubr.bf16.mxu0 0
      %3857 = vmatmul.mubr.bf16.gmra.mrb[0].mxu0 %v2274
      %v3858 = vpop.f32.mrb[0].mxu0
      %v3859 = vadd.f32 %v3492, %v3858
      %v3860 = vpop.f32.mrb[0].mxu0
      %v3861 = vpop.f32.mrb[0].mxu0
      %v3862 = vadd.f32 %v3497, %v3861
      %v3863 = vpop.f32.mrb[0].mxu0
      %3864 = vmatprep.mubr.bf16.mxu0 0
      %3865 = vmatmul.mubr.bf16.gmra.mrb[0].mxu0 %v2275
      %v3866 = vpop.f32.mrb[0].mxu0
      %v3867 = vadd.f32 %v3502, %v3866
      %v3868 = vpop.f32.mrb[0].mxu0
      %v3869 = vpop.f32.mrb[0].mxu0
      %v3870 = vadd.f32 %v3507, %v3869
      %v3871 = vpop.f32.mrb[0].mxu0
      %3872 = vmatprep.mubr.bf16.mxu0 0
      %3873 = vmatmul.mubr.bf16.gmra.mrb[0].mxu0 %v2276
      %v3874 = vpop.f32.mrb[0].mxu0
      %v3875 = vadd.f32 %v3512, %v3874
      %v3876 = vpop.f32.mrb[0].mxu0
      %v3877 = vpop.f32.mrb[0].mxu0
      %v3878 = vadd.f32 %v3517, %v3877
      %v3879 = vpop.f32.mrb[0].mxu0
      %3880 = vmatprep.mubr.bf16.mxu0 0
      %3881 = vmatmul.mubr.bf16.gmra.mrb[0].mxu0 %v2549
      %v3882 = vpop.f32.mrb[0].mxu0
      %v3883 = vadd.f32 %v3442, %v3882
      %v3884 = vpop.f32.mrb[0].mxu0
      %v3885 = vpop.f32.mrb[0].mxu0
      %v3886 = vadd.f32 %v3447, %v3885
      %v3887 = vpop.f32.mrb[0].mxu0
      %3888 = vmatprep.mubr.bf16.mxu0 0
      %3889 = vmatmul.mubr.bf16.gmra.mrb[0].mxu0 %v2550
      %v3890 = vpop.f32.mrb[0].mxu0
      %v3891 = vadd.f32 %v3452, %v3890
      %v3892 = vpop.f32.mrb[0].mxu0
      %v3893 = vpop.f32.mrb[0].mxu0
      %v3894 = vadd.f32 %v3457, %v3893
      %v3895 = vpop.f32.mrb[0].mxu0
      %3896 = vmatprep.mubr.bf16.mxu0 0
      %3897 = vmatmul.mubr.bf16.gmra.mrb[0].mxu0 %v2551
      %v3898 = vpop.f32.mrb[0].mxu0
      %v3899 = vadd.f32 %v3462, %v3898
      %v3900 = vpop.f32.mrb[0].mxu0
      %v3901 = vpop.f32.mrb[0].mxu0
      %v3902 = vadd.f32 %v3467, %v3901
      %v3903 = vpop.f32.mrb[0].mxu0
      %3904 = vmatprep.mubr.bf16.mxu0 0
      %3905 = vmatmul.mubr.bf16.gmra.mrb[0].mxu0 %v2552
      %v3906 = vpop.f32.mrb[0].mxu0
      %v3907 = vadd.f32 %v3472, %v3906
      %v3908 = vpop.f32.mrb[0].mxu0
      %v3909 = vpop.f32.mrb[0].mxu0
      %v3910 = vadd.f32 %v3477, %v3909
      %v3911 = vpop.f32.mrb[0].mxu0
      %3912 = vmatprep.mubr.bf16.mxu0 0
      %3913 = vmatmul.mubr.bf16.gmra.mrb[0].mxu0 %v2553
      %v3914 = vpop.f32.mrb[0].mxu0
      %v3915 = vadd.f32 %v3482, %v3914
      %v3916 = vpop.f32.mrb[0].mxu0
      %v3917 = vpop.f32.mrb[0].mxu0
      %v3918 = vadd.f32 %v3487, %v3917
      %v3919 = vpop.f32.mrb[0].mxu0
      %3920 = vmatprep.mubr.bf16.mxu0 0
      %3921 = vmatmul.mubr.bf16.gmra.mrb[0].mxu0 %v2554
      %v3922 = vpop.f32.mrb[0].mxu0
      %v3923 = vadd.f32 %v3492, %v3922
      %v3924 = vpop.f32.mrb[0].mxu0
      %v3925 = vpop.f32.mrb[0].mxu0
      %v3926 = vadd.f32 %v3497, %v3925
      %v3927 = vpop.f32.mrb[0].mxu0
      %3928 = vmatprep.mubr.bf16.mxu0 0
      %3929 = vmatmul.mubr.bf16.gmra.mrb[0].mxu0 %v2555
      %v3930 = vpop.f32.mrb[0].mxu0
      %v3931 = vadd.f32 %v3502, %v3930
      %v3932 = vpop.f32.mrb[0].mxu0
      %v3933 = vpop.f32.mrb[0].mxu0
      %v3934 = vadd.f32 %v3507, %v3933
      %v3935 = vpop.f32.mrb[0].mxu0
      %3936 = vmatprep.mubr.bf16.mxu0 0
      %3937 = vmatmul.mubr.bf16.gmra.mrb[0].mxu0 %v2556
      %v3938 = vpop.f32.mrb[0].mxu0
      %v3939 = vadd.f32 %v3512, %v3938
      %v3940 = vpop.f32.mrb[0].mxu0
      %v3941 = vpop.f32.mrb[0].mxu0
      %v3942 = vadd.f32 %v3517, %v3941
      %v3943 = vpop.f32.mrb[0].mxu0
      %3944 = vmatprep.mubr.bf16.mxu0 0
      %3945 = vmatmul.mubr.bf16.gmra.mrb[0].mxu0 %v2829
      %v3946 = vpop.f32.mrb[0].mxu0
      %v3947 = vadd.f32 %v3442, %v3946
      %v3948 = vpop.f32.mrb[0].mxu0
      %v3949 = vpop.f32.mrb[0].mxu0
      %v3950 = vadd.f32 %v3447, %v3949
      %v3951 = vpop.f32.mrb[0].mxu0
      %3952 = vmatprep.mubr.bf16.mxu0 0
      %3953 = vmatmul.mubr.bf16.gmra.mrb[0].mxu0 %v2830
      %v3954 = vpop.f32.mrb[0].mxu0
      %v3955 = vadd.f32 %v3452, %v3954
      %v3956 = vpop.f32.mrb[0].mxu0
      %v3957 = vpop.f32.mrb[0].mxu0
      %v3958 = vadd.f32 %v3457, %v3957
      %v3959 = vpop.f32.mrb[0].mxu0
      %3960 = vmatprep.mubr.bf16.mxu0 0
      %3961 = vmatmul.mubr.bf16.gmra.mrb[0].mxu0 %v2831
      %v3962 = vpop.f32.mrb[0].mxu0
      %v3963 = vadd.f32 %v3462, %v3962
      %v3964 = vpop.f32.mrb[0].mxu0
      %v3965 = vpop.f32.mrb[0].mxu0
      %v3966 = vadd.f32 %v3467, %v3965
      %v3967 = vpop.f32.mrb[0].mxu0
      %3968 = vmatprep.mubr.bf16.mxu0 0
      %3969 = vmatmul.mubr.bf16.gmra.mrb[0].mxu0 %v2832
      %v3970 = vpop.f32.mrb[0].mxu0
      %v3971 = vadd.f32 %v3472, %v3970
      %v3972 = vpop.f32.mrb[0].mxu0
      %v3973 = vpop.f32.mrb[0].mxu0
      %v3974 = vadd.f32 %v3477, %v3973
      %v3975 = vpop.f32.mrb[0].mxu0
      %3976 = vmatprep.mubr.bf16.mxu0 0
      %3977 = vmatmul.mubr.bf16.gmra.mrb[0].mxu0 %v2833
      %v3978 = vpop.f32.mrb[0].mxu0
      %v3979 = vadd.f32 %v3482, %v3978
      %v3980 = vpop.f32.mrb[0].mxu0
      %v3981 = vpop.f32.mrb[0].mxu0
      %v3982 = vadd.f32 %v3487, %v3981
      %v3983 = vpop.f32.mrb[0].mxu0
      %3984 = vmatprep.mubr.bf16.mxu0 0
      %3985 = vmatmul.mubr.bf16.gmra.mrb[0].mxu0 %v2834
      %v3986 = vpop.f32.mrb[0].mxu0
      %v3987 = vadd.f32 %v3492, %v3986
      %v3988 = vpop.f32.mrb[0].mxu0
      %v3989 = vpop.f32.mrb[0].mxu0
      %v3990 = vadd.f32 %v3497, %v3989
      %v3991 = vpop.f32.mrb[0].mxu0
      %3992 = vmatprep.mubr.bf16.mxu0 0
      %3993 = vmatmul.mubr.bf16.gmra.mrb[0].mxu0 %v2835
      %v3994 = vpop.f32.mrb[0].mxu0
      %v3995 = vadd.f32 %v3502, %v3994
      %v3996 = vpop.f32.mrb[0].mxu0
      %v3997 = vpop.f32.mrb[0].mxu0
      %v3998 = vadd.f32 %v3507, %v3997
      %v3999 = vpop.f32.mrb[0].mxu0
      %4000 = vmatprep.mubr.bf16.mxu0 0
      %4001 = vmatmul.mubr.bf16.gmra.mrb[0].mxu0 %v2836
      %v4002 = vpop.f32.mrb[0].mxu0
      %v4003 = vadd.f32 %v3512, %v4002
      %v4004 = vpop.f32.mrb[0].mxu0
      %v4005 = vpop.f32.mrb[0].mxu0
      %v4006 = vadd.f32 %v3517, %v4005
      %v4007 = vpop.f32.mrb[0].mxu0
      %4008 = vmatprep.mubr.bf16.mxu0 0
      %4009 = vmatmul.mubr.bf16.gmra.mrb[0].mxu0 %v3109
      %v4010 = vpop.f32.mrb[0].mxu0
      %v4011 = vadd.f32 %v3442, %v4010
      %v4012 = vpop.f32.mrb[0].mxu0
      %v4013 = vpop.f32.mrb[0].mxu0
      %v4014 = vadd.f32 %v3447, %v4013
      %v4015 = vpop.f32.mrb[0].mxu0
      %4016 = vmatprep.mubr.bf16.mxu0 0
      %4017 = vmatmul.mubr.bf16.gmra.mrb[0].mxu0 %v3110
      %v4018 = vpop.f32.mrb[0].mxu0
      %v4019 = vadd.f32 %v3452, %v4018
      %v4020 = vpop.f32.mrb[0].mxu0
      %v4021 = vpop.f32.mrb[0].mxu0
      %v4022 = vadd.f32 %v3457, %v4021
      %v4023 = vpop.f32.mrb[0].mxu0
      %4024 = vmatprep.mubr.bf16.mxu0 0
      %4025 = vmatmul.mubr.bf16.gmra.mrb[0].mxu0 %v3111
      %v4026 = vpop.f32.mrb[0].mxu0
      %v4027 = vadd.f32 %v3462, %v4026
      %v4028 = vpop.f32.mrb[0].mxu0
      %v4029 = vpop.f32.mrb[0].mxu0
      %v4030 = vadd.f32 %v3467, %v4029
      %v4031 = vpop.f32.mrb[0].mxu0
      %4032 = vmatprep.mubr.bf16.mxu0 0
      %4033 = vmatmul.mubr.bf16.gmra.mrb[0].mxu0 %v3112
      %v4034 = vpop.f32.mrb[0].mxu0
      %v4035 = vadd.f32 %v3472, %v4034
      %v4036 = vpop.f32.mrb[0].mxu0
      %v4037 = vpop.f32.mrb[0].mxu0
      %v4038 = vadd.f32 %v3477, %v4037
      %v4039 = vpop.f32.mrb[0].mxu0
      %4040 = vmatprep.mubr.bf16.mxu0 0
      %4041 = vmatmul.mubr.bf16.gmra.mrb[0].mxu0 %v3113
      %v4042 = vpop.f32.mrb[0].mxu0
      %v4043 = vadd.f32 %v3482, %v4042
      %v4044 = vpop.f32.mrb[0].mxu0
      %v4045 = vpop.f32.mrb[0].mxu0
      %v4046 = vadd.f32 %v3487, %v4045
      %v4047 = vpop.f32.mrb[0].mxu0
      %4048 = vmatprep.mubr.bf16.mxu0 0
      %4049 = vmatmul.mubr.bf16.gmra.mrb[0].mxu0 %v3114
      %v4050 = vpop.f32.mrb[0].mxu0
      %v4051 = vadd.f32 %v3492, %v4050
      %v4052 = vpop.f32.mrb[0].mxu0
      %v4053 = vpop.f32.mrb[0].mxu0
      %v4054 = vadd.f32 %v3497, %v4053
      %v4055 = vpop.f32.mrb[0].mxu0
      %4056 = vmatprep.mubr.bf16.mxu0 0
      %4057 = vmatmul.mubr.bf16.gmra.mrb[0].mxu0 %v3115
      %v4058 = vpop.f32.mrb[0].mxu0
      %v4059 = vadd.f32 %v3502, %v4058
      %v4060 = vpop.f32.mrb[0].mxu0
      %v4061 = vpop.f32.mrb[0].mxu0
      %v4062 = vadd.f32 %v3507, %v4061
      %v4063 = vpop.f32.mrb[0].mxu0
      %4064 = vmatprep.mubr.bf16.mxu0 0
      %4065 = vmatmul.mubr.bf16.gmra.mrb[0].mxu0 %v3116
      %v4066 = vpop.f32.mrb[0].mxu0
      %v4067 = vadd.f32 %v3512, %v4066
      %v4068 = vpop.f32.mrb[0].mxu0
      %v4069 = vpop.f32.mrb[0].mxu0
      %v4070 = vadd.f32 %v3517, %v4069
      %v4071 = vpop.f32.mrb[0].mxu0
      %4072 = vdwg.mxu0
      %v4073 = vmax.f32 %v3563, 0.0
      %v4074 = vmax.f32 %v3566, 0.0
      %v4075 = vmax.f32 %v3571, 0.0
      %v4076 = vmax.f32 %v3574, 0.0
      %v4077 = vmax.f32 %v3579, 0.0
      %v4078 = vmax.f32 %v3582, 0.0
      %v4079 = vmax.f32 %v3587, 0.0
      %v4080 = vmax.f32 %v3590, 0.0
      %v4081 = vmax.f32 %v3595, 0.0
      %v4082 = vmax.f32 %v3598, 0.0
      %v4083 = vmax.f32 %v3603, 0.0
      %v4084 = vmax.f32 %v3606, 0.0
      %v4085 = vmax.f32 %v3611, 0.0
      %v4086 = vmax.f32 %v3614, 0.0
      %v4087 = vmax.f32 %v3619, 0.0
      %v4088 = vmax.f32 %v3622, 0.0
      %v4089 = vmax.f32 %v3627, 0.0
      %v4090 = vmax.f32 %v3630, 0.0
      %v4091 = vmax.f32 %v3635, 0.0
      %v4092 = vmax.f32 %v3638, 0.0
      %v4093 = vmax.f32 %v3643, 0.0
      %v4094 = vmax.f32 %v3646, 0.0
      %v4095 = vmax.f32 %v3651, 0.0
      %v4096 = vmax.f32 %v3654, 0.0
      %v4097 = vmax.f32 %v3659, 0.0
      %v4098 = vmax.f32 %v3662, 0.0
      %v4099 = vmax.f32 %v3667, 0.0
      %v4100 = vmax.f32 %v3670, 0.0
      %v4101 = vmax.f32 %v3675, 0.0
      %v4102 = vmax.f32 %v3678, 0.0
      %v4103 = vmax.f32 %v3683, 0.0
      %v4104 = vmax.f32 %v3686, 0.0
      %v4105 = vmax.f32 %v3691, 0.0
      %v4106 = vmax.f32 %v3694, 0.0
      %v4107 = vmax.f32 %v3699, 0.0
      %v4108 = vmax.f32 %v3702, 0.0
      %v4109 = vmax.f32 %v3707, 0.0
      %v4110 = vmax.f32 %v3710, 0.0
      %v4111 = vmax.f32 %v3715, 0.0
      %v4112 = vmax.f32 %v3718, 0.0
      %v4113 = vmax.f32 %v3723, 0.0
      %v4114 = vmax.f32 %v3726, 0.0
      %v4115 = vmax.f32 %v3731, 0.0
      %v4116 = vmax.f32 %v3734, 0.0
      %v4117 = vmax.f32 %v3739, 0.0
      %v4118 = vmax.f32 %v3742, 0.0
      %v4119 = vmax.f32 %v3747, 0.0
      %v4120 = vmax.f32 %v3750, 0.0
      %v4121 = vmax.f32 %v3755, 0.0
      %v4122 = vmax.f32 %v3758, 0.0
      %v4123 = vmax.f32 %v3763, 0.0
      %v4124 = vmax.f32 %v3766, 0.0
      %v4125 = vmax.f32 %v3771, 0.0
      %v4126 = vmax.f32 %v3774, 0.0
      %v4127 = vmax.f32 %v3779, 0.0
      %v4128 = vmax.f32 %v3782, 0.0
      %v4129 = vmax.f32 %v3787, 0.0
      %v4130 = vmax.f32 %v3790, 0.0
      %v4131 = vmax.f32 %v3795, 0.0
      %v4132 = vmax.f32 %v3798, 0.0
      %v4133 = vmax.f32 %v3803, 0.0
      %v4134 = vmax.f32 %v3806, 0.0
      %v4135 = vmax.f32 %v3811, 0.0
      %v4136 = vmax.f32 %v3814, 0.0
      %v4137 = vmax.f32 %v3819, 0.0
      %v4138 = vmax.f32 %v3822, 0.0
      %v4139 = vmax.f32 %v3827, 0.0
      %v4140 = vmax.f32 %v3830, 0.0
      %v4141 = vmax.f32 %v3835, 0.0
      %v4142 = vmax.f32 %v3838, 0.0
      %v4143 = vmax.f32 %v3843, 0.0
      %v4144 = vmax.f32 %v3846, 0.0
      %v4145 = vmax.f32 %v3851, 0.0
      %v4146 = vmax.f32 %v3854, 0.0
      %v4147 = vmax.f32 %v3859, 0.0
      %v4148 = vmax.f32 %v3862, 0.0
      %v4149 = vmax.f32 %v3867, 0.0
      %v4150 = vmax.f32 %v3870, 0.0
      %v4151 = vmax.f32 %v3875, 0.0
      %v4152 = vmax.f32 %v3878, 0.0
      %v4153 = vmax.f32 %v3883, 0.0
      %v4154 = vmax.f32 %v3886, 0.0
      %v4155 = vmax.f32 %v3891, 0.0
      %v4156 = vmax.f32 %v3894, 0.0
      %v4157 = vmax.f32 %v3899, 0.0
      %v4158 = vmax.f32 %v3902, 0.0
      %v4159 = vmax.f32 %v3907, 0.0
      %v4160 = vmax.f32 %v3910, 0.0
      %v4161 = vmax.f32 %v3915, 0.0
      %v4162 = vmax.f32 %v3918, 0.0
      %v4163 = vmax.f32 %v3923, 0.0
      %v4164 = vmax.f32 %v3926, 0.0
      %v4165 = vmax.f32 %v3931, 0.0
      %v4166 = vmax.f32 %v3934, 0.0
      %v4167 = vmax.f32 %v3939, 0.0
      %v4168 = vmax.f32 %v3942, 0.0
      %v4169 = vmax.f32 %v3947, 0.0
      %v4170 = vmax.f32 %v3950, 0.0
      %v4171 = vmax.f32 %v3955, 0.0
      %v4172 = vmax.f32 %v3958, 0.0
      %v4173 = vmax.f32 %v3963, 0.0
      %v4174 = vmax.f32 %v3966, 0.0
      %v4175 = vmax.f32 %v3971, 0.0
      %v4176 = vmax.f32 %v3974, 0.0
      %v4177 = vmax.f32 %v3979, 0.0
      %v4178 = vmax.f32 %v3982, 0.0
      %v4179 = vmax.f32 %v3987, 0.0
      %v4180 = vmax.f32 %v3990, 0.0
      %v4181 = vmax.f32 %v3995, 0.0
      %v4182 = vmax.f32 %v3998, 0.0
      %v4183 = vmax.f32 %v4003, 0.0
      %v4184 = vmax.f32 %v4006, 0.0
      %v4185 = vmax.f32 %v4011, 0.0
      %v4186 = vmax.f32 %v4014, 0.0
      %v4187 = vmax.f32 %v4019, 0.0
      %v4188 = vmax.f32 %v4022, 0.0
      %v4189 = vmax.f32 %v4027, 0.0
      %v4190 = vmax.f32 %v4030, 0.0
      %v4191 = vmax.f32 %v4035, 0.0
      %v4192 = vmax.f32 %v4038, 0.0
      %v4193 = vmax.f32 %v4043, 0.0
      %v4194 = vmax.f32 %v4046, 0.0
      %v4195 = vmax.f32 %v4051, 0.0
      %v4196 = vmax.f32 %v4054, 0.0
      %v4197 = vmax.f32 %v4059, 0.0
      %v4198 = vmax.f32 %v4062, 0.0
      %v4199 = vmax.f32 %v4067, 0.0
      %v4200 = vmax.f32 %v4070, 0.0
      %v4201 = vld [vmem:[%s7] sm:$0xf]
      %v4202 = vld [vmem:[%s7 + $0x4] sm:$0xf]
      %v4203 = vld [vmem:[%s7 + $0x8] sm:$0xf]
      %v4204 = vld [vmem:[%s7 + $0xc] sm:$0xf]
      %v4205 = vld [vmem:[%s8] sm:$0x1]
      %v4206 = vpack.c.bf16 %v4074, %v4073
      %v4207 = vpack.c.bf16 %v4076, %v4075
      %v4208 = vpack.c.bf16 %v4078, %v4077
      %v4209 = vpack.c.bf16 %v4080, %v4079
      %v4210 = vpack.c.bf16 %v4082, %v4081
      %v4211 = vpack.c.bf16 %v4084, %v4083
      %v4212 = vpack.c.bf16 %v4086, %v4085
      %v4213 = vpack.c.bf16 %v4088, %v4087
      %v4214 = vpack.c.bf16 %v4090, %v4089
      %v4215 = vpack.c.bf16 %v4092, %v4091
      %v4216 = vpack.c.bf16 %v4094, %v4093
      %v4217 = vpack.c.bf16 %v4096, %v4095
      %v4218 = vpack.c.bf16 %v4098, %v4097
      %v4219 = vpack.c.bf16 %v4100, %v4099
      %v4220 = vpack.c.bf16 %v4102, %v4101
      %v4221 = vpack.c.bf16 %v4104, %v4103
      %v4222 = vpack.c.bf16 %v4106, %v4105
      %v4223 = vpack.c.bf16 %v4108, %v4107
      %v4224 = vpack.c.bf16 %v4110, %v4109
      %v4225 = vpack.c.bf16 %v4112, %v4111
      %v4226 = vpack.c.bf16 %v4114, %v4113
      %v4227 = vpack.c.bf16 %v4116, %v4115
      %v4228 = vpack.c.bf16 %v4118, %v4117
      %v4229 = vpack.c.bf16 %v4120, %v4119
      %v4230 = vpack.c.bf16 %v4122, %v4121
      %v4231 = vpack.c.bf16 %v4124, %v4123
      %v4232 = vpack.c.bf16 %v4126, %v4125
      %v4233 = vpack.c.bf16 %v4128, %v4127
      %v4234 = vpack.c.bf16 %v4130, %v4129
      %v4235 = vpack.c.bf16 %v4132, %v4131
      %v4236 = vpack.c.bf16 %v4134, %v4133
      %v4237 = vpack.c.bf16 %v4136, %v4135
      %v4238 = vpack.c.bf16 %v4138, %v4137
      %v4239 = vpack.c.bf16 %v4140, %v4139
      %v4240 = vpack.c.bf16 %v4142, %v4141
      %v4241 = vpack.c.bf16 %v4144, %v4143
      %v4242 = vpack.c.bf16 %v4146, %v4145
      %v4243 = vpack.c.bf16 %v4148, %v4147
      %v4244 = vpack.c.bf16 %v4150, %v4149
      %v4245 = vpack.c.bf16 %v4152, %v4151
      %v4246 = vpack.c.bf16 %v4154, %v4153
      %v4247 = vpack.c.bf16 %v4156, %v4155
      %v4248 = vpack.c.bf16 %v4158, %v4157
      %v4249 = vpack.c.bf16 %v4160, %v4159
      %v4250 = vpack.c.bf16 %v4162, %v4161
      %v4251 = vpack.c.bf16 %v4164, %v4163
      %v4252 = vpack.c.bf16 %v4166, %v4165
      %v4253 = vpack.c.bf16 %v4168, %v4167
      %v4254 = vpack.c.bf16 %v4170, %v4169
      %v4255 = vpack.c.bf16 %v4172, %v4171
      %v4256 = vpack.c.bf16 %v4174, %v4173
      %v4257 = vpack.c.bf16 %v4176, %v4175
      %v4258 = vpack.c.bf16 %v4178, %v4177
      %v4259 = vpack.c.bf16 %v4180, %v4179
      %v4260 = vpack.c.bf16 %v4182, %v4181
      %v4261 = vpack.c.bf16 %v4184, %v4183
      %v4262 = vpack.c.bf16 %v4186, %v4185
      %v4263 = vpack.c.bf16 %v4188, %v4187
      %v4264 = vpack.c.bf16 %v4190, %v4189
      %v4265 = vpack.c.bf16 %v4192, %v4191
      %v4266 = vpack.c.bf16 %v4194, %v4193
      %v4267 = vpack.c.bf16 %v4196, %v4195
      %v4268 = vpack.c.bf16 %v4198, %v4197
      %v4269 = vpack.c.bf16 %v4200, %v4199
      %v4271 = vlaneseq
      %v4272 = vshrl.u32 %v4271, 7
      %v4273 = vsub.s32 0, %v4272
      %v4274 = vrot.slane %v4205, %v4273
      %v4280 = vunpack.c.l.b16 %v4201
      %v4281 = vunpack.c.l.b16 %v4202
      %v4282 = vunpack.c.l.b16 %v4203
      %v4283 = vunpack.c.l.b16 %v4204
      %v4284 = vpack.c.b16 %v4281, %v4280
      %v4285 = vpack.c.b16 %v4283, %v4282
      %vm4288 = vcmask 261120
      %v4290 = vsel %vm4288, %v4206, 0
      %v4293 = vsel %vm4288, %v4207, 0
      %v4296 = vsel %vm4288, %v4208, 0
      %v4299 = vsel %vm4288, %v4209, 0
      %v4302 = vsel %vm4288, %v4210, 0
      %v4305 = vsel %vm4288, %v4211, 0
      %v4308 = vsel %vm4288, %v4212, 0
      %v4311 = vsel %vm4288, %v4213, 0
      %v4314 = vsel %vm4288, %v4214, 0
      %v4317 = vsel %vm4288, %v4215, 0
      %v4320 = vsel %vm4288, %v4216, 0
      %v4323 = vsel %vm4288, %v4217, 0
      %v4326 = vsel %vm4288, %v4218, 0
      %v4329 = vsel %vm4288, %v4219, 0
      %v4332 = vsel %vm4288, %v4220, 0
      %v4335 = vsel %vm4288, %v4221, 0
      %v4338 = vsel %vm4288, %v4222, 0
      %v4341 = vsel %vm4288, %v4223, 0
      %v4344 = vsel %vm4288, %v4224, 0
      %v4347 = vsel %vm4288, %v4225, 0
      %v4350 = vsel %vm4288, %v4226, 0
      %v4353 = vsel %vm4288, %v4227, 0
      %v4356 = vsel %vm4288, %v4228, 0
      %v4359 = vsel %vm4288, %v4229, 0
      %v4362 = vsel %vm4288, %v4230, 0
      %v4365 = vsel %vm4288, %v4231, 0
      %v4368 = vsel %vm4288, %v4232, 0
      %v4371 = vsel %vm4288, %v4233, 0
      %v4374 = vsel %vm4288, %v4234, 0
      %v4377 = vsel %vm4288, %v4235, 0
      %v4380 = vsel %vm4288, %v4236, 0
      %v4383 = vsel %vm4288, %v4237, 0
      %v4386 = vsel %vm4288, %v4238, 0
      %v4389 = vsel %vm4288, %v4239, 0
      %v4392 = vsel %vm4288, %v4240, 0
      %v4395 = vsel %vm4288, %v4241, 0
      %v4398 = vsel %vm4288, %v4242, 0
      %v4401 = vsel %vm4288, %v4243, 0
      %v4404 = vsel %vm4288, %v4244, 0
      %v4407 = vsel %vm4288, %v4245, 0
      %v4410 = vsel %vm4288, %v4246, 0
      %v4413 = vsel %vm4288, %v4247, 0
      %v4416 = vsel %vm4288, %v4248, 0
      %v4419 = vsel %vm4288, %v4249, 0
      %v4422 = vsel %vm4288, %v4250, 0
      %v4425 = vsel %vm4288, %v4251, 0
      %v4428 = vsel %vm4288, %v4252, 0
      %v4431 = vsel %vm4288, %v4253, 0
      %v4434 = vsel %vm4288, %v4254, 0
      %v4437 = vsel %vm4288, %v4255, 0
      %v4440 = vsel %vm4288, %v4256, 0
      %v4443 = vsel %vm4288, %v4257, 0
      %v4446 = vsel %vm4288, %v4258, 0
      %v4449 = vsel %vm4288, %v4259, 0
      %v4452 = vsel %vm4288, %v4260, 0
      %v4455 = vsel %vm4288, %v4261, 0
      %v4458 = vsel %vm4288, %v4262, 0
      %v4461 = vsel %vm4288, %v4263, 0
      %v4464 = vsel %vm4288, %v4264, 0
      %v4467 = vsel %vm4288, %v4265, 0
      %v4470 = vsel %vm4288, %v4266, 0
      %v4473 = vsel %vm4288, %v4267, 0
      %v4476 = vsel %vm4288, %v4268, 0
      %v4479 = vsel %vm4288, %v4269, 0
      %4481 = vmatprep.subr.bf16.mxu0 0
      %4482 = vmatpush1.bf16.msra.mxu0 %v4284
      %4483 = vmatprep.subr.bf16.mxu0 0
      %4484 = vmatpush1.bf16.msra.mxu0 %v4285
      %4485 = vmatprep.subr.bf16.mxu0 0
      %4486 = vmatpush1.bf16.msra.mxu0 0
      %4487 = vmatprep.subr.bf16.mxu0 0
      %4488 = vmatpush1.bf16.msra.mxu0 0
      %4489 = vmatprep.subr.bf16.mxu0 0
      %4490 = vmatpush1.bf16.msra.mxu0 0
      %4491 = vmatprep.subr.bf16.mxu0 0
      %4492 = vmatpush1.bf16.msra.mxu0 0
      %4493 = vmatprep.subr.bf16.mxu0 0
      %4494 = vmatpush1.bf16.msra.mxu0 0
      %4495 = vmatprep.subr.bf16.mxu0 0
      %4496 = vmatpush1.bf16.msra.mxu0 0
      %4497 = vmatprep.subr.bf16.mxu0 0
      %4498 = vmatpush1.bf16.msra.mxu0 0
      %4499 = vmatprep.subr.bf16.mxu0 0
      %4500 = vmatpush1.bf16.msra.mxu0 0
      %4501 = vmatprep.subr.bf16.mxu0 0
      %4502 = vmatpush1.bf16.msra.mxu0 0
      %4503 = vmatprep.subr.bf16.mxu0 0
      %4504 = vmatpush1.bf16.msra.mxu0 0
      %4505 = vmatprep.subr.bf16.mxu0 0
      %4506 = vmatpush1.bf16.msra.mxu0 0
      %4507 = vmatprep.subr.bf16.mxu0 0
      %4508 = vmatpush1.bf16.msra.mxu0 0
      %4509 = vmatprep.subr.bf16.mxu0 0
      %4510 = vmatpush1.bf16.msra.mxu0 0
      %4511 = vmatprep.subr.bf16.mxu0 0
      %4512 = vmatpush1.bf16.msra.mxu0 0
      %4513 = vmatprep.mubr.bf16.mxu0 0
      %4514 = vmatmul.mubr.bf16.gmra.mrb[0].mxu0 %v4290
      %v4515 = vpop.f32.mrb[0].mxu0
      %v4516 = vadd.f32 %v4274, %v4515
      %v4517 = vpop.f32.mrb[0].mxu0
      %v4518 = vpop.f32.mrb[0].mxu0
      %v4519 = vadd.f32 %v4274, %v4518
      %v4520 = vpop.f32.mrb[0].mxu0
      %4521 = vmatprep.mubr.bf16.mxu0 0
      %4522 = vmatmul.mubr.bf16.gmra.mrb[0].mxu0 %v4293
      %v4523 = vpop.f32.mrb[0].mxu0
      %v4524 = vadd.f32 %v4274, %v4523
      %v4525 = vpop.f32.mrb[0].mxu0
      %v4526 = vpop.f32.mrb[0].mxu0
      %v4527 = vadd.f32 %v4274, %v4526
      %v4528 = vpop.f32.mrb[0].mxu0
      %4529 = vmatprep.mubr.bf16.mxu0 0
      %4530 = vmatmul.mubr.bf16.gmra.mrb[0].mxu0 %v4296
      %v4531 = vpop.f32.mrb[0].mxu0
      %v4532 = vadd.f32 %v4274, %v4531
      %v4533 = vpop.f32.mrb[0].mxu0
      %v4534 = vpop.f32.mrb[0].mxu0
      %v4535 = vadd.f32 %v4274, %v4534
      %v4536 = vpop.f32.mrb[0].mxu0
      %4537 = vmatprep.mubr.bf16.mxu0 0
      %4538 = vmatmul.mubr.bf16.gmra.mrb[0].mxu0 %v4299
      %v4539 = vpop.f32.mrb[0].mxu0
      %v4540 = vadd.f32 %v4274, %v4539
      %v4541 = vpop.f32.mrb[0].mxu0
      %v4542 = vpop.f32.mrb[0].mxu0
      %v4543 = vadd.f32 %v4274, %v4542
      %v4544 = vpop.f32.mrb[0].mxu0
      %4545 = vmatprep.mubr.bf16.mxu0 0
      %4546 = vmatmul.mubr.bf16.gmra.mrb[0].mxu0 %v4302
      %v4547 = vpop.f32.mrb[0].mxu0
      %v4548 = vadd.f32 %v4274, %v4547
      %v4549 = vpop.f32.mrb[0].mxu0
      %v4550 = vpop.f32.mrb[0].mxu0
      %v4551 = vadd.f32 %v4274, %v4550
      %v4552 = vpop.f32.mrb[0].mxu0
      %4553 = vmatprep.mubr.bf16.mxu0 0
      %4554 = vmatmul.mubr.bf16.gmra.mrb[0].mxu0 %v4305
      %v4555 = vpop.f32.mrb[0].mxu0
      %v4556 = vadd.f32 %v4274, %v4555
      %v4557 = vpop.f32.mrb[0].mxu0
      %v4558 = vpop.f32.mrb[0].mxu0
      %v4559 = vadd.f32 %v4274, %v4558
      %v4560 = vpop.f32.mrb[0].mxu0
      %4561 = vmatprep.mubr.bf16.mxu0 0
      %4562 = vmatmul.mubr.bf16.gmra.mrb[0].mxu0 %v4308
      %v4563 = vpop.f32.mrb[0].mxu0
      %v4564 = vadd.f32 %v4274, %v4563
      %v4565 = vpop.f32.mrb[0].mxu0
      %v4566 = vpop.f32.mrb[0].mxu0
      %v4567 = vadd.f32 %v4274, %v4566
      %v4568 = vpop.f32.mrb[0].mxu0
      %4569 = vmatprep.mubr.bf16.mxu0 0
      %4570 = vmatmul.mubr.bf16.gmra.mrb[0].mxu0 %v4311
      %v4571 = vpop.f32.mrb[0].mxu0
      %v4572 = vadd.f32 %v4274, %v4571
      %v4573 = vpop.f32.mrb[0].mxu0
      %v4574 = vpop.f32.mrb[0].mxu0
      %v4575 = vadd.f32 %v4274, %v4574
      %v4576 = vpop.f32.mrb[0].mxu0
      %4577 = vmatprep.mubr.bf16.mxu0 0
      %4578 = vmatmul.mubr.bf16.gmra.mrb[0].mxu0 %v4314
      %v4579 = vpop.f32.mrb[0].mxu0
      %v4580 = vadd.f32 %v4274, %v4579
      %v4581 = vpop.f32.mrb[0].mxu0
      %v4582 = vpop.f32.mrb[0].mxu0
      %v4583 = vadd.f32 %v4274, %v4582
      %v4584 = vpop.f32.mrb[0].mxu0
      %4585 = vmatprep.mubr.bf16.mxu0 0
      %4586 = vmatmul.mubr.bf16.gmra.mrb[0].mxu0 %v4317
      %v4587 = vpop.f32.mrb[0].mxu0
      %v4588 = vadd.f32 %v4274, %v4587
      %v4589 = vpop.f32.mrb[0].mxu0
      %v4590 = vpop.f32.mrb[0].mxu0
      %v4591 = vadd.f32 %v4274, %v4590
      %v4592 = vpop.f32.mrb[0].mxu0
      %4593 = vmatprep.mubr.bf16.mxu0 0
      %4594 = vmatmul.mubr.bf16.gmra.mrb[0].mxu0 %v4320
      %v4595 = vpop.f32.mrb[0].mxu0
      %v4596 = vadd.f32 %v4274, %v4595
      %v4597 = vpop.f32.mrb[0].mxu0
      %v4598 = vpop.f32.mrb[0].mxu0
      %v4599 = vadd.f32 %v4274, %v4598
      %v4600 = vpop.f32.mrb[0].mxu0
      %4601 = vmatprep.mubr.bf16.mxu0 0
      %4602 = vmatmul.mubr.bf16.gmra.mrb[0].mxu0 %v4323
      %v4603 = vpop.f32.mrb[0].mxu0
      %v4604 = vadd.f32 %v4274, %v4603
      %v4605 = vpop.f32.mrb[0].mxu0
      %v4606 = vpop.f32.mrb[0].mxu0
      %v4607 = vadd.f32 %v4274, %v4606
      %v4608 = vpop.f32.mrb[0].mxu0
      %4609 = vmatprep.mubr.bf16.mxu0 0
      %4610 = vmatmul.mubr.bf16.gmra.mrb[0].mxu0 %v4326
      %v4611 = vpop.f32.mrb[0].mxu0
      %v4612 = vadd.f32 %v4274, %v4611
      %v4613 = vpop.f32.mrb[0].mxu0
      %v4614 = vpop.f32.mrb[0].mxu0
      %v4615 = vadd.f32 %v4274, %v4614
      %v4616 = vpop.f32.mrb[0].mxu0
      %4617 = vmatprep.mubr.bf16.mxu0 0
      %4618 = vmatmul.mubr.bf16.gmra.mrb[0].mxu0 %v4329
      %v4619 = vpop.f32.mrb[0].mxu0
      %v4620 = vadd.f32 %v4274, %v4619
      %v4621 = vpop.f32.mrb[0].mxu0
      %v4622 = vpop.f32.mrb[0].mxu0
      %v4623 = vadd.f32 %v4274, %v4622
      %v4624 = vpop.f32.mrb[0].mxu0
      %4625 = vmatprep.mubr.bf16.mxu0 0
      %4626 = vmatmul.mubr.bf16.gmra.mrb[0].mxu0 %v4332
      %v4627 = vpop.f32.mrb[0].mxu0
      %v4628 = vadd.f32 %v4274, %v4627
      %v4629 = vpop.f32.mrb[0].mxu0
      %v4630 = vpop.f32.mrb[0].mxu0
      %v4631 = vadd.f32 %v4274, %v4630
      %v4632 = vpop.f32.mrb[0].mxu0
      %4633 = vmatprep.mubr.bf16.mxu0 0
      %4634 = vmatmul.mubr.bf16.gmra.mrb[0].mxu0 %v4335
      %v4635 = vpop.f32.mrb[0].mxu0
      %v4636 = vadd.f32 %v4274, %v4635
      %v4637 = vpop.f32.mrb[0].mxu0
      %v4638 = vpop.f32.mrb[0].mxu0
      %v4639 = vadd.f32 %v4274, %v4638
      %v4640 = vpop.f32.mrb[0].mxu0
      %4641 = vmatprep.mubr.bf16.mxu0 0
      %4642 = vmatmul.mubr.bf16.gmra.mrb[0].mxu0 %v4338
      %v4643 = vpop.f32.mrb[0].mxu0
      %v4644 = vadd.f32 %v4274, %v4643
      %v4645 = vpop.f32.mrb[0].mxu0
      %v4646 = vpop.f32.mrb[0].mxu0
      %v4647 = vadd.f32 %v4274, %v4646
      %v4648 = vpop.f32.mrb[0].mxu0
      %4649 = vmatprep.mubr.bf16.mxu0 0
      %4650 = vmatmul.mubr.bf16.gmra.mrb[0].mxu0 %v4341
      %v4651 = vpop.f32.mrb[0].mxu0
      %v4652 = vadd.f32 %v4274, %v4651
      %v4653 = vpop.f32.mrb[0].mxu0
      %v4654 = vpop.f32.mrb[0].mxu0
      %v4655 = vadd.f32 %v4274, %v4654
      %v4656 = vpop.f32.mrb[0].mxu0
      %4657 = vmatprep.mubr.bf16.mxu0 0
      %4658 = vmatmul.mubr.bf16.gmra.mrb[0].mxu0 %v4344
      %v4659 = vpop.f32.mrb[0].mxu0
      %v4660 = vadd.f32 %v4274, %v4659
      %v4661 = vpop.f32.mrb[0].mxu0
      %v4662 = vpop.f32.mrb[0].mxu0
      %v4663 = vadd.f32 %v4274, %v4662
      %v4664 = vpop.f32.mrb[0].mxu0
      %4665 = vmatprep.mubr.bf16.mxu0 0
      %4666 = vmatmul.mubr.bf16.gmra.mrb[0].mxu0 %v4347
      %v4667 = vpop.f32.mrb[0].mxu0
      %v4668 = vadd.f32 %v4274, %v4667
      %v4669 = vpop.f32.mrb[0].mxu0
      %v4670 = vpop.f32.mrb[0].mxu0
      %v4671 = vadd.f32 %v4274, %v4670
      %v4672 = vpop.f32.mrb[0].mxu0
      %4673 = vmatprep.mubr.bf16.mxu0 0
      %4674 = vmatmul.mubr.bf16.gmra.mrb[0].mxu0 %v4350
      %v4675 = vpop.f32.mrb[0].mxu0
      %v4676 = vadd.f32 %v4274, %v4675
      %v4677 = vpop.f32.mrb[0].mxu0
      %v4678 = vpop.f32.mrb[0].mxu0
      %v4679 = vadd.f32 %v4274, %v4678
      %v4680 = vpop.f32.mrb[0].mxu0
      %4681 = vmatprep.mubr.bf16.mxu0 0
      %4682 = vmatmul.mubr.bf16.gmra.mrb[0].mxu0 %v4353
      %v4683 = vpop.f32.mrb[0].mxu0
      %v4684 = vadd.f32 %v4274, %v4683
      %v4685 = vpop.f32.mrb[0].mxu0
      %v4686 = vpop.f32.mrb[0].mxu0
      %v4687 = vadd.f32 %v4274, %v4686
      %v4688 = vpop.f32.mrb[0].mxu0
      %4689 = vmatprep.mubr.bf16.mxu0 0
      %4690 = vmatmul.mubr.bf16.gmra.mrb[0].mxu0 %v4356
      %v4691 = vpop.f32.mrb[0].mxu0
      %v4692 = vadd.f32 %v4274, %v4691
      %v4693 = vpop.f32.mrb[0].mxu0
      %v4694 = vpop.f32.mrb[0].mxu0
      %v4695 = vadd.f32 %v4274, %v4694
      %v4696 = vpop.f32.mrb[0].mxu0
      %4697 = vmatprep.mubr.bf16.mxu0 0
      %4698 = vmatmul.mubr.bf16.gmra.mrb[0].mxu0 %v4359
      %v4699 = vpop.f32.mrb[0].mxu0
      %v4700 = vadd.f32 %v4274, %v4699
      %v4701 = vpop.f32.mrb[0].mxu0
      %v4702 = vpop.f32.mrb[0].mxu0
      %v4703 = vadd.f32 %v4274, %v4702
      %v4704 = vpop.f32.mrb[0].mxu0
      %4705 = vmatprep.mubr.bf16.mxu0 0
      %4706 = vmatmul.mubr.bf16.gmra.mrb[0].mxu0 %v4362
      %v4707 = vpop.f32.mrb[0].mxu0
      %v4708 = vadd.f32 %v4274, %v4707
      %v4709 = vpop.f32.mrb[0].mxu0
      %v4710 = vpop.f32.mrb[0].mxu0
      %v4711 = vadd.f32 %v4274, %v4710
      %v4712 = vpop.f32.mrb[0].mxu0
      %4713 = vmatprep.mubr.bf16.mxu0 0
      %4714 = vmatmul.mubr.bf16.gmra.mrb[0].mxu0 %v4365
      %v4715 = vpop.f32.mrb[0].mxu0
      %v4716 = vadd.f32 %v4274, %v4715
      %v4717 = vpop.f32.mrb[0].mxu0
      %v4718 = vpop.f32.mrb[0].mxu0
      %v4719 = vadd.f32 %v4274, %v4718
      %v4720 = vpop.f32.mrb[0].mxu0
      %4721 = vmatprep.mubr.bf16.mxu0 0
      %4722 = vmatmul.mubr.bf16.gmra.mrb[0].mxu0 %v4368
      %v4723 = vpop.f32.mrb[0].mxu0
      %v4724 = vadd.f32 %v4274, %v4723
      %v4725 = vpop.f32.mrb[0].mxu0
      %v4726 = vpop.f32.mrb[0].mxu0
      %v4727 = vadd.f32 %v4274, %v4726
      %v4728 = vpop.f32.mrb[0].mxu0
      %4729 = vmatprep.mubr.bf16.mxu0 0
      %4730 = vmatmul.mubr.bf16.gmra.mrb[0].mxu0 %v4371
      %v4731 = vpop.f32.mrb[0].mxu0
      %v4732 = vadd.f32 %v4274, %v4731
      %v4733 = vpop.f32.mrb[0].mxu0
      %v4734 = vpop.f32.mrb[0].mxu0
      %v4735 = vadd.f32 %v4274, %v4734
      %v4736 = vpop.f32.mrb[0].mxu0
      %4737 = vmatprep.mubr.bf16.mxu0 0
      %4738 = vmatmul.mubr.bf16.gmra.mrb[0].mxu0 %v4374
      %v4739 = vpop.f32.mrb[0].mxu0
      %v4740 = vadd.f32 %v4274, %v4739
      %v4741 = vpop.f32.mrb[0].mxu0
      %v4742 = vpop.f32.mrb[0].mxu0
      %v4743 = vadd.f32 %v4274, %v4742
      %v4744 = vpop.f32.mrb[0].mxu0
      %4745 = vmatprep.mubr.bf16.mxu0 0
      %4746 = vmatmul.mubr.bf16.gmra.mrb[0].mxu0 %v4377
      %v4747 = vpop.f32.mrb[0].mxu0
      %v4748 = vadd.f32 %v4274, %v4747
      %v4749 = vpop.f32.mrb[0].mxu0
      %v4750 = vpop.f32.mrb[0].mxu0
      %v4751 = vadd.f32 %v4274, %v4750
      %v4752 = vpop.f32.mrb[0].mxu0
      %4753 = vmatprep.mubr.bf16.mxu0 0
      %4754 = vmatmul.mubr.bf16.gmra.mrb[0].mxu0 %v4380
      %v4755 = vpop.f32.mrb[0].mxu0
      %v4756 = vadd.f32 %v4274, %v4755
      %v4757 = vpop.f32.mrb[0].mxu0
      %v4758 = vpop.f32.mrb[0].mxu0
      %v4759 = vadd.f32 %v4274, %v4758
      %v4760 = vpop.f32.mrb[0].mxu0
      %4761 = vmatprep.mubr.bf16.mxu0 0
      %4762 = vmatmul.mubr.bf16.gmra.mrb[0].mxu0 %v4383
      %v4763 = vpop.f32.mrb[0].mxu0
      %v4764 = vadd.f32 %v4274, %v4763
      %v4765 = vpop.f32.mrb[0].mxu0
      %v4766 = vpop.f32.mrb[0].mxu0
      %v4767 = vadd.f32 %v4274, %v4766
      %v4768 = vpop.f32.mrb[0].mxu0
      %4769 = vmatprep.mubr.bf16.mxu0 0
      %4770 = vmatmul.mubr.bf16.gmra.mrb[0].mxu0 %v4386
      %v4771 = vpop.f32.mrb[0].mxu0
      %v4772 = vadd.f32 %v4274, %v4771
      %v4773 = vpop.f32.mrb[0].mxu0
      %v4774 = vpop.f32.mrb[0].mxu0
      %v4775 = vadd.f32 %v4274, %v4774
      %v4776 = vpop.f32.mrb[0].mxu0
      %4777 = vmatprep.mubr.bf16.mxu0 0
      %4778 = vmatmul.mubr.bf16.gmra.mrb[0].mxu0 %v4389
      %v4779 = vpop.f32.mrb[0].mxu0
      %v4780 = vadd.f32 %v4274, %v4779
      %v4781 = vpop.f32.mrb[0].mxu0
      %v4782 = vpop.f32.mrb[0].mxu0
      %v4783 = vadd.f32 %v4274, %v4782
      %v4784 = vpop.f32.mrb[0].mxu0
      %4785 = vmatprep.mubr.bf16.mxu0 0
      %4786 = vmatmul.mubr.bf16.gmra.mrb[0].mxu0 %v4392
      %v4787 = vpop.f32.mrb[0].mxu0
      %v4788 = vadd.f32 %v4274, %v4787
      %v4789 = vpop.f32.mrb[0].mxu0
      %v4790 = vpop.f32.mrb[0].mxu0
      %v4791 = vadd.f32 %v4274, %v4790
      %v4792 = vpop.f32.mrb[0].mxu0
      %4793 = vmatprep.mubr.bf16.mxu0 0
      %4794 = vmatmul.mubr.bf16.gmra.mrb[0].mxu0 %v4395
      %v4795 = vpop.f32.mrb[0].mxu0
      %v4796 = vadd.f32 %v4274, %v4795
      %v4797 = vpop.f32.mrb[0].mxu0
      %v4798 = vpop.f32.mrb[0].mxu0
      %v4799 = vadd.f32 %v4274, %v4798
      %v4800 = vpop.f32.mrb[0].mxu0
      %4801 = vmatprep.mubr.bf16.mxu0 0
      %4802 = vmatmul.mubr.bf16.gmra.mrb[0].mxu0 %v4398
      %v4803 = vpop.f32.mrb[0].mxu0
      %v4804 = vadd.f32 %v4274, %v4803
      %v4805 = vpop.f32.mrb[0].mxu0
      %v4806 = vpop.f32.mrb[0].mxu0
      %v4807 = vadd.f32 %v4274, %v4806
      %v4808 = vpop.f32.mrb[0].mxu0
      %4809 = vmatprep.mubr.bf16.mxu0 0
      %4810 = vmatmul.mubr.bf16.gmra.mrb[0].mxu0 %v4401
      %v4811 = vpop.f32.mrb[0].mxu0
      %v4812 = vadd.f32 %v4274, %v4811
      %v4813 = vpop.f32.mrb[0].mxu0
      %v4814 = vpop.f32.mrb[0].mxu0
      %v4815 = vadd.f32 %v4274, %v4814
      %v4816 = vpop.f32.mrb[0].mxu0
      %4817 = vmatprep.mubr.bf16.mxu0 0
      %4818 = vmatmul.mubr.bf16.gmra.mrb[0].mxu0 %v4404
      %v4819 = vpop.f32.mrb[0].mxu0
      %v4820 = vadd.f32 %v4274, %v4819
      %v4821 = vpop.f32.mrb[0].mxu0
      %v4822 = vpop.f32.mrb[0].mxu0
      %v4823 = vadd.f32 %v4274, %v4822
      %v4824 = vpop.f32.mrb[0].mxu0
      %4825 = vmatprep.mubr.bf16.mxu0 0
      %4826 = vmatmul.mubr.bf16.gmra.mrb[0].mxu0 %v4407
      %v4827 = vpop.f32.mrb[0].mxu0
      %v4828 = vadd.f32 %v4274, %v4827
      %v4829 = vpop.f32.mrb[0].mxu0
      %v4830 = vpop.f32.mrb[0].mxu0
      %v4831 = vadd.f32 %v4274, %v4830
      %v4832 = vpop.f32.mrb[0].mxu0
      %4833 = vmatprep.mubr.bf16.mxu0 0
      %4834 = vmatmul.mubr.bf16.gmra.mrb[0].mxu0 %v4410
      %v4835 = vpop.f32.mrb[0].mxu0
      %v4836 = vadd.f32 %v4274, %v4835
      %v4837 = vpop.f32.mrb[0].mxu0
      %v4838 = vpop.f32.mrb[0].mxu0
      %v4839 = vadd.f32 %v4274, %v4838
      %v4840 = vpop.f32.mrb[0].mxu0
      %4841 = vmatprep.mubr.bf16.mxu0 0
      %4842 = vmatmul.mubr.bf16.gmra.mrb[0].mxu0 %v4413
      %v4843 = vpop.f32.mrb[0].mxu0
      %v4844 = vadd.f32 %v4274, %v4843
      %v4845 = vpop.f32.mrb[0].mxu0
      %v4846 = vpop.f32.mrb[0].mxu0
      %v4847 = vadd.f32 %v4274, %v4846
      %v4848 = vpop.f32.mrb[0].mxu0
      %4849 = vmatprep.mubr.bf16.mxu0 0
      %4850 = vmatmul.mubr.bf16.gmra.mrb[0].mxu0 %v4416
      %v4851 = vpop.f32.mrb[0].mxu0
      %v4852 = vadd.f32 %v4274, %v4851
      %v4853 = vpop.f32.mrb[0].mxu0
      %v4854 = vpop.f32.mrb[0].mxu0
      %v4855 = vadd.f32 %v4274, %v4854
      %v4856 = vpop.f32.mrb[0].mxu0
      %4857 = vmatprep.mubr.bf16.mxu0 0
      %4858 = vmatmul.mubr.bf16.gmra.mrb[0].mxu0 %v4419
      %v4859 = vpop.f32.mrb[0].mxu0
      %v4860 = vadd.f32 %v4274, %v4859
      %v4861 = vpop.f32.mrb[0].mxu0
      %v4862 = vpop.f32.mrb[0].mxu0
      %v4863 = vadd.f32 %v4274, %v4862
      %v4864 = vpop.f32.mrb[0].mxu0
      %4865 = vmatprep.mubr.bf16.mxu0 0
      %4866 = vmatmul.mubr.bf16.gmra.mrb[0].mxu0 %v4422
      %v4867 = vpop.f32.mrb[0].mxu0
      %v4868 = vadd.f32 %v4274, %v4867
      %v4869 = vpop.f32.mrb[0].mxu0
      %v4870 = vpop.f32.mrb[0].mxu0
      %v4871 = vadd.f32 %v4274, %v4870
      %v4872 = vpop.f32.mrb[0].mxu0
      %4873 = vmatprep.mubr.bf16.mxu0 0
      %4874 = vmatmul.mubr.bf16.gmra.mrb[0].mxu0 %v4425
      %v4875 = vpop.f32.mrb[0].mxu0
      %v4876 = vadd.f32 %v4274, %v4875
      %v4877 = vpop.f32.mrb[0].mxu0
      %v4878 = vpop.f32.mrb[0].mxu0
      %v4879 = vadd.f32 %v4274, %v4878
      %v4880 = vpop.f32.mrb[0].mxu0
      %4881 = vmatprep.mubr.bf16.mxu0 0
      %4882 = vmatmul.mubr.bf16.gmra.mrb[0].mxu0 %v4428
      %v4883 = vpop.f32.mrb[0].mxu0
      %v4884 = vadd.f32 %v4274, %v4883
      %v4885 = vpop.f32.mrb[0].mxu0
      %v4886 = vpop.f32.mrb[0].mxu0
      %v4887 = vadd.f32 %v4274, %v4886
      %v4888 = vpop.f32.mrb[0].mxu0
      %4889 = vmatprep.mubr.bf16.mxu0 0
      %4890 = vmatmul.mubr.bf16.gmra.mrb[0].mxu0 %v4431
      %v4891 = vpop.f32.mrb[0].mxu0
      %v4892 = vadd.f32 %v4274, %v4891
      %v4893 = vpop.f32.mrb[0].mxu0
      %v4894 = vpop.f32.mrb[0].mxu0
      %v4895 = vadd.f32 %v4274, %v4894
      %v4896 = vpop.f32.mrb[0].mxu0
      %4897 = vmatprep.mubr.bf16.mxu0 0
      %4898 = vmatmul.mubr.bf16.gmra.mrb[0].mxu0 %v4434
      %v4899 = vpop.f32.mrb[0].mxu0
      %v4900 = vadd.f32 %v4274, %v4899
      %v4901 = vpop.f32.mrb[0].mxu0
      %v4902 = vpop.f32.mrb[0].mxu0
      %v4903 = vadd.f32 %v4274, %v4902
      %v4904 = vpop.f32.mrb[0].mxu0
      %4905 = vmatprep.mubr.bf16.mxu0 0
      %4906 = vmatmul.mubr.bf16.gmra.mrb[0].mxu0 %v4437
      %v4907 = vpop.f32.mrb[0].mxu0
      %v4908 = vadd.f32 %v4274, %v4907
      %v4909 = vpop.f32.mrb[0].mxu0
      %v4910 = vpop.f32.mrb[0].mxu0
      %v4911 = vadd.f32 %v4274, %v4910
      %v4912 = vpop.f32.mrb[0].mxu0
      %4913 = vmatprep.mubr.bf16.mxu0 0
      %4914 = vmatmul.mubr.bf16.gmra.mrb[0].mxu0 %v4440
      %v4915 = vpop.f32.mrb[0].mxu0
      %v4916 = vadd.f32 %v4274, %v4915
      %v4917 = vpop.f32.mrb[0].mxu0
      %v4918 = vpop.f32.mrb[0].mxu0
      %v4919 = vadd.f32 %v4274, %v4918
      %v4920 = vpop.f32.mrb[0].mxu0
      %4921 = vmatprep.mubr.bf16.mxu0 0
      %4922 = vmatmul.mubr.bf16.gmra.mrb[0].mxu0 %v4443
      %v4923 = vpop.f32.mrb[0].mxu0
      %v4924 = vadd.f32 %v4274, %v4923
      %v4925 = vpop.f32.mrb[0].mxu0
      %v4926 = vpop.f32.mrb[0].mxu0
      %v4927 = vadd.f32 %v4274, %v4926
      %v4928 = vpop.f32.mrb[0].mxu0
      %4929 = vmatprep.mubr.bf16.mxu0 0
      %4930 = vmatmul.mubr.bf16.gmra.mrb[0].mxu0 %v4446
      %v4931 = vpop.f32.mrb[0].mxu0
      %v4932 = vadd.f32 %v4274, %v4931
      %v4933 = vpop.f32.mrb[0].mxu0
      %v4934 = vpop.f32.mrb[0].mxu0
      %v4935 = vadd.f32 %v4274, %v4934
      %v4936 = vpop.f32.mrb[0].mxu0
      %4937 = vmatprep.mubr.bf16.mxu0 0
      %4938 = vmatmul.mubr.bf16.gmra.mrb[0].mxu0 %v4449
      %v4939 = vpop.f32.mrb[0].mxu0
      %v4940 = vadd.f32 %v4274, %v4939
      %v4941 = vpop.f32.mrb[0].mxu0
      %v4942 = vpop.f32.mrb[0].mxu0
      %v4943 = vadd.f32 %v4274, %v4942
      %v4944 = vpop.f32.mrb[0].mxu0
      %4945 = vmatprep.mubr.bf16.mxu0 0
      %4946 = vmatmul.mubr.bf16.gmra.mrb[0].mxu0 %v4452
      %v4947 = vpop.f32.mrb[0].mxu0
      %v4948 = vadd.f32 %v4274, %v4947
      %v4949 = vpop.f32.mrb[0].mxu0
      %v4950 = vpop.f32.mrb[0].mxu0
      %v4951 = vadd.f32 %v4274, %v4950
      %v4952 = vpop.f32.mrb[0].mxu0
      %4953 = vmatprep.mubr.bf16.mxu0 0
      %4954 = vmatmul.mubr.bf16.gmra.mrb[0].mxu0 %v4455
      %v4955 = vpop.f32.mrb[0].mxu0
      %v4956 = vadd.f32 %v4274, %v4955
      %v4957 = vpop.f32.mrb[0].mxu0
      %v4958 = vpop.f32.mrb[0].mxu0
      %v4959 = vadd.f32 %v4274, %v4958
      %v4960 = vpop.f32.mrb[0].mxu0
      %4961 = vmatprep.mubr.bf16.mxu0 0
      %4962 = vmatmul.mubr.bf16.gmra.mrb[0].mxu0 %v4458
      %v4963 = vpop.f32.mrb[0].mxu0
      %v4964 = vadd.f32 %v4274, %v4963
      %v4965 = vpop.f32.mrb[0].mxu0
      %v4966 = vpop.f32.mrb[0].mxu0
      %v4967 = vadd.f32 %v4274, %v4966
      %v4968 = vpop.f32.mrb[0].mxu0
      %4969 = vmatprep.mubr.bf16.mxu0 0
      %4970 = vmatmul.mubr.bf16.gmra.mrb[0].mxu0 %v4461
      %v4971 = vpop.f32.mrb[0].mxu0
      %v4972 = vadd.f32 %v4274, %v4971
      %v4973 = vpop.f32.mrb[0].mxu0
      %v4974 = vpop.f32.mrb[0].mxu0
      %v4975 = vadd.f32 %v4274, %v4974
      %v4976 = vpop.f32.mrb[0].mxu0
      %4977 = vmatprep.mubr.bf16.mxu0 0
      %4978 = vmatmul.mubr.bf16.gmra.mrb[0].mxu0 %v4464
      %v4979 = vpop.f32.mrb[0].mxu0
      %v4980 = vadd.f32 %v4274, %v4979
      %v4981 = vpop.f32.mrb[0].mxu0
      %v4982 = vpop.f32.mrb[0].mxu0
      %v4983 = vadd.f32 %v4274, %v4982
      %v4984 = vpop.f32.mrb[0].mxu0
      %4985 = vmatprep.mubr.bf16.mxu0 0
      %4986 = vmatmul.mubr.bf16.gmra.mrb[0].mxu0 %v4467
      %v4987 = vpop.f32.mrb[0].mxu0
      %v4988 = vadd.f32 %v4274, %v4987
      %v4989 = vpop.f32.mrb[0].mxu0
      %v4990 = vpop.f32.mrb[0].mxu0
      %v4991 = vadd.f32 %v4274, %v4990
      %v4992 = vpop.f32.mrb[0].mxu0
      %4993 = vmatprep.mubr.bf16.mxu0 0
      %4994 = vmatmul.mubr.bf16.gmra.mrb[0].mxu0 %v4470
      %v4995 = vpop.f32.mrb[0].mxu0
      %v4996 = vadd.f32 %v4274, %v4995
      %v4997 = vpop.f32.mrb[0].mxu0
      %v4998 = vpop.f32.mrb[0].mxu0
      %v4999 = vadd.f32 %v4274, %v4998
      %v5000 = vpop.f32.mrb[0].mxu0
      %5001 = vmatprep.mubr.bf16.mxu0 0
      %5002 = vmatmul.mubr.bf16.gmra.mrb[0].mxu0 %v4473
      %v5003 = vpop.f32.mrb[0].mxu0
      %v5004 = vadd.f32 %v4274, %v5003
      %v5005 = vpop.f32.mrb[0].mxu0
      %v5006 = vpop.f32.mrb[0].mxu0
      %v5007 = vadd.f32 %v4274, %v5006
      %v5008 = vpop.f32.mrb[0].mxu0
      %5009 = vmatprep.mubr.bf16.mxu0 0
      %5010 = vmatmul.mubr.bf16.gmra.mrb[0].mxu0 %v4476
      %v5011 = vpop.f32.mrb[0].mxu0
      %v5012 = vadd.f32 %v4274, %v5011
      %v5013 = vpop.f32.mrb[0].mxu0
      %v5014 = vpop.f32.mrb[0].mxu0
      %v5015 = vadd.f32 %v4274, %v5014
      %v5016 = vpop.f32.mrb[0].mxu0
      %5017 = vmatprep.mubr.bf16.mxu0 0
      %5018 = vmatmul.mubr.bf16.gmra.mrb[0].mxu0 %v4479
      %v5019 = vpop.f32.mrb[0].mxu0
      %v5020 = vadd.f32 %v4274, %v5019
      %v5021 = vpop.f32.mrb[0].mxu0
      %v5022 = vpop.f32.mrb[0].mxu0
      %v5023 = vadd.f32 %v4274, %v5022
      %v5024 = vpop.f32.mrb[0].mxu0
      %5025 = vdwg.mxu0
      %v5026 = vmax.f32 %v4516, 0.0
      %v5027 = vmax.f32 %v4519, 0.0
      %v5028 = vmax.f32 %v4524, 0.0
      %v5029 = vmax.f32 %v4527, 0.0
      %v5030 = vmax.f32 %v4532, 0.0
      %v5031 = vmax.f32 %v4535, 0.0
      %v5032 = vmax.f32 %v4540, 0.0
      %v5033 = vmax.f32 %v4543, 0.0
      %v5034 = vmax.f32 %v4548, 0.0
      %v5035 = vmax.f32 %v4551, 0.0
      %v5036 = vmax.f32 %v4556, 0.0
      %v5037 = vmax.f32 %v4559, 0.0
      %v5038 = vmax.f32 %v4564, 0.0
      %v5039 = vmax.f32 %v4567, 0.0
      %v5040 = vmax.f32 %v4572, 0.0
      %v5041 = vmax.f32 %v4575, 0.0
      %v5042 = vmax.f32 %v4580, 0.0
      %v5043 = vmax.f32 %v4583, 0.0
      %v5044 = vmax.f32 %v4588, 0.0
      %v5045 = vmax.f32 %v4591, 0.0
      %v5046 = vmax.f32 %v4596, 0.0
      %v5047 = vmax.f32 %v4599, 0.0
      %v5048 = vmax.f32 %v4604, 0.0
      %v5049 = vmax.f32 %v4607, 0.0
      %v5050 = vmax.f32 %v4612, 0.0
      %v5051 = vmax.f32 %v4615, 0.0
      %v5052 = vmax.f32 %v4620, 0.0
      %v5053 = vmax.f32 %v4623, 0.0
      %v5054 = vmax.f32 %v4628, 0.0
      %v5055 = vmax.f32 %v4631, 0.0
      %v5056 = vmax.f32 %v4636, 0.0
      %v5057 = vmax.f32 %v4639, 0.0
      %v5058 = vmax.f32 %v4644, 0.0
      %v5059 = vmax.f32 %v4647, 0.0
      %v5060 = vmax.f32 %v4652, 0.0
      %v5061 = vmax.f32 %v4655, 0.0
      %v5062 = vmax.f32 %v4660, 0.0
      %v5063 = vmax.f32 %v4663, 0.0
      %v5064 = vmax.f32 %v4668, 0.0
      %v5065 = vmax.f32 %v4671, 0.0
      %v5066 = vmax.f32 %v4676, 0.0
      %v5067 = vmax.f32 %v4679, 0.0
      %v5068 = vmax.f32 %v4684, 0.0
      %v5069 = vmax.f32 %v4687, 0.0
      %v5070 = vmax.f32 %v4692, 0.0
      %v5071 = vmax.f32 %v4695, 0.0
      %v5072 = vmax.f32 %v4700, 0.0
      %v5073 = vmax.f32 %v4703, 0.0
      %v5074 = vmax.f32 %v4708, 0.0
      %v5075 = vmax.f32 %v4711, 0.0
      %v5076 = vmax.f32 %v4716, 0.0
      %v5077 = vmax.f32 %v4719, 0.0
      %v5078 = vmax.f32 %v4724, 0.0
      %v5079 = vmax.f32 %v4727, 0.0
      %v5080 = vmax.f32 %v4732, 0.0
      %v5081 = vmax.f32 %v4735, 0.0
      %v5082 = vmax.f32 %v4740, 0.0
      %v5083 = vmax.f32 %v4743, 0.0
      %v5084 = vmax.f32 %v4748, 0.0
      %v5085 = vmax.f32 %v4751, 0.0
      %v5086 = vmax.f32 %v4756, 0.0
      %v5087 = vmax.f32 %v4759, 0.0
      %v5088 = vmax.f32 %v4764, 0.0
      %v5089 = vmax.f32 %v4767, 0.0
      %v5090 = vmax.f32 %v4772, 0.0
      %v5091 = vmax.f32 %v4775, 0.0
      %v5092 = vmax.f32 %v4780, 0.0
      %v5093 = vmax.f32 %v4783, 0.0
      %v5094 = vmax.f32 %v4788, 0.0
      %v5095 = vmax.f32 %v4791, 0.0
      %v5096 = vmax.f32 %v4796, 0.0
      %v5097 = vmax.f32 %v4799, 0.0
      %v5098 = vmax.f32 %v4804, 0.0
      %v5099 = vmax.f32 %v4807, 0.0
      %v5100 = vmax.f32 %v4812, 0.0
      %v5101 = vmax.f32 %v4815, 0.0
      %v5102 = vmax.f32 %v4820, 0.0
      %v5103 = vmax.f32 %v4823, 0.0
      %v5104 = vmax.f32 %v4828, 0.0
      %v5105 = vmax.f32 %v4831, 0.0
      %v5106 = vmax.f32 %v4836, 0.0
      %v5107 = vmax.f32 %v4839, 0.0
      %v5108 = vmax.f32 %v4844, 0.0
      %v5109 = vmax.f32 %v4847, 0.0
      %v5110 = vmax.f32 %v4852, 0.0
      %v5111 = vmax.f32 %v4855, 0.0
      %v5112 = vmax.f32 %v4860, 0.0
      %v5113 = vmax.f32 %v4863, 0.0
      %v5114 = vmax.f32 %v4868, 0.0
      %v5115 = vmax.f32 %v4871, 0.0
      %v5116 = vmax.f32 %v4876, 0.0
      %v5117 = vmax.f32 %v4879, 0.0
      %v5118 = vmax.f32 %v4884, 0.0
      %v5119 = vmax.f32 %v4887, 0.0
      %v5120 = vmax.f32 %v4892, 0.0
      %v5121 = vmax.f32 %v4895, 0.0
      %v5122 = vmax.f32 %v4900, 0.0
      %v5123 = vmax.f32 %v4903, 0.0
      %v5124 = vmax.f32 %v4908, 0.0
      %v5125 = vmax.f32 %v4911, 0.0
      %v5126 = vmax.f32 %v4916, 0.0
      %v5127 = vmax.f32 %v4919, 0.0
      %v5128 = vmax.f32 %v4924, 0.0
      %v5129 = vmax.f32 %v4927, 0.0
      %v5130 = vmax.f32 %v4932, 0.0
      %v5131 = vmax.f32 %v4935, 0.0
      %v5132 = vmax.f32 %v4940, 0.0
      %v5133 = vmax.f32 %v4943, 0.0
      %v5134 = vmax.f32 %v4948, 0.0
      %v5135 = vmax.f32 %v4951, 0.0
      %v5136 = vmax.f32 %v4956, 0.0
      %v5137 = vmax.f32 %v4959, 0.0
      %v5138 = vmax.f32 %v4964, 0.0
      %v5139 = vmax.f32 %v4967, 0.0
      %v5140 = vmax.f32 %v4972, 0.0
      %v5141 = vmax.f32 %v4975, 0.0
      %v5142 = vmax.f32 %v4980, 0.0
      %v5143 = vmax.f32 %v4983, 0.0
      %v5144 = vmax.f32 %v4988, 0.0
      %v5145 = vmax.f32 %v4991, 0.0
      %v5146 = vmax.f32 %v4996, 0.0
      %v5147 = vmax.f32 %v4999, 0.0
      %v5148 = vmax.f32 %v5004, 0.0
      %v5149 = vmax.f32 %v5007, 0.0
      %v5150 = vmax.f32 %v5012, 0.0
      %v5151 = vmax.f32 %v5015, 0.0
      %v5152 = vmax.f32 %v5020, 0.0
      %v5153 = vmax.f32 %v5023, 0.0
      %v5154 = vmax.f32 %v5026, %v5042
      %v5155 = vmax.f32 %v5027, %v5043
      %v5156 = vmax.f32 %v5028, %v5044
      %v5157 = vmax.f32 %v5029, %v5045
      %v5158 = vmax.f32 %v5030, %v5046
      %v5159 = vmax.f32 %v5031, %v5047
      %v5160 = vmax.f32 %v5032, %v5048
      %v5161 = vmax.f32 %v5033, %v5049
      %v5162 = vmax.f32 %v5034, %v5050
      %v5163 = vmax.f32 %v5035, %v5051
      %v5164 = vmax.f32 %v5036, %v5052
      %v5165 = vmax.f32 %v5037, %v5053
      %v5166 = vmax.f32 %v5038, %v5054
      %v5167 = vmax.f32 %v5039, %v5055
      %v5168 = vmax.f32 %v5040, %v5056
      %v5169 = vmax.f32 %v5041, %v5057
      %v5170 = vmax.f32 %v5154, %v5058
      %v5171 = vmax.f32 %v5155, %v5059
      %v5172 = vmax.f32 %v5156, %v5060
      %v5173 = vmax.f32 %v5157, %v5061
      %v5174 = vmax.f32 %v5158, %v5062
      %v5175 = vmax.f32 %v5159, %v5063
      %v5176 = vmax.f32 %v5160, %v5064
      %v5177 = vmax.f32 %v5161, %v5065
      %v5178 = vmax.f32 %v5162, %v5066
      %v5179 = vmax.f32 %v5163, %v5067
      %v5180 = vmax.f32 %v5164, %v5068
      %v5181 = vmax.f32 %v5165, %v5069
      %v5182 = vmax.f32 %v5166, %v5070
      %v5183 = vmax.f32 %v5167, %v5071
      %v5184 = vmax.f32 %v5168, %v5072
      %v5185 = vmax.f32 %v5169, %v5073
      %v5186 = vmax.f32 %v5170, %v5074
      %v5187 = vmax.f32 %v5171, %v5075
      %v5188 = vmax.f32 %v5172, %v5076
      %v5189 = vmax.f32 %v5173, %v5077
      %v5190 = vmax.f32 %v5174, %v5078
      %v5191 = vmax.f32 %v5175, %v5079
      %v5192 = vmax.f32 %v5176, %v5080
      %v5193 = vmax.f32 %v5177, %v5081
      %v5194 = vmax.f32 %v5178, %v5082
      %v5195 = vmax.f32 %v5179, %v5083
      %v5196 = vmax.f32 %v5180, %v5084
      %v5197 = vmax.f32 %v5181, %v5085
      %v5198 = vmax.f32 %v5182, %v5086
      %v5199 = vmax.f32 %v5183, %v5087
      %v5200 = vmax.f32 %v5184, %v5088
      %v5201 = vmax.f32 %v5185, %v5089
      %v5202 = vmax.f32 %v5186, %v5090
      %v5203 = vmax.f32 %v5187, %v5091
      %v5204 = vmax.f32 %v5188, %v5092
      %v5205 = vmax.f32 %v5189, %v5093
      %v5206 = vmax.f32 %v5190, %v5094
      %v5207 = vmax.f32 %v5191, %v5095
      %v5208 = vmax.f32 %v5192, %v5096
      %v5209 = vmax.f32 %v5193, %v5097
      %v5210 = vmax.f32 %v5194, %v5098
      %v5211 = vmax.f32 %v5195, %v5099
      %v5212 = vmax.f32 %v5196, %v5100
      %v5213 = vmax.f32 %v5197, %v5101
      %v5214 = vmax.f32 %v5198, %v5102
      %v5215 = vmax.f32 %v5199, %v5103
      %v5216 = vmax.f32 %v5200, %v5104
      %v5217 = vmax.f32 %v5201, %v5105
      %v5218 = vmax.f32 %v5202, %v5106
      %v5219 = vmax.f32 %v5203, %v5107
      %v5220 = vmax.f32 %v5204, %v5108
      %v5221 = vmax.f32 %v5205, %v5109
      %v5222 = vmax.f32 %v5206, %v5110
      %v5223 = vmax.f32 %v5207, %v5111
      %v5224 = vmax.f32 %v5208, %v5112
      %v5225 = vmax.f32 %v5209, %v5113
      %v5226 = vmax.f32 %v5210, %v5114
      %v5227 = vmax.f32 %v5211, %v5115
      %v5228 = vmax.f32 %v5212, %v5116
      %v5229 = vmax.f32 %v5213, %v5117
      %v5230 = vmax.f32 %v5214, %v5118
      %v5231 = vmax.f32 %v5215, %v5119
      %v5232 = vmax.f32 %v5216, %v5120
      %v5233 = vmax.f32 %v5217, %v5121
      %v5234 = vmax.f32 %v5218, %v5122
      %v5235 = vmax.f32 %v5219, %v5123
      %v5236 = vmax.f32 %v5220, %v5124
      %v5237 = vmax.f32 %v5221, %v5125
      %v5238 = vmax.f32 %v5222, %v5126
      %v5239 = vmax.f32 %v5223, %v5127
      %v5240 = vmax.f32 %v5224, %v5128
      %v5241 = vmax.f32 %v5225, %v5129
      %v5242 = vmax.f32 %v5226, %v5130
      %v5243 = vmax.f32 %v5227, %v5131
      %v5244 = vmax.f32 %v5228, %v5132
      %v5245 = vmax.f32 %v5229, %v5133
      %v5246 = vmax.f32 %v5230, %v5134
      %v5247 = vmax.f32 %v5231, %v5135
      %v5248 = vmax.f32 %v5232, %v5136
      %v5249 = vmax.f32 %v5233, %v5137
      %v5250 = vmax.f32 %v5234, %v5138
      %v5251 = vmax.f32 %v5235, %v5139
      %v5252 = vmax.f32 %v5236, %v5140
      %v5253 = vmax.f32 %v5237, %v5141
      %v5254 = vmax.f32 %v5238, %v5142
      %v5255 = vmax.f32 %v5239, %v5143
      %v5256 = vmax.f32 %v5240, %v5144
      %v5257 = vmax.f32 %v5241, %v5145
      %v5258 = vmax.f32 %v5242, %v5146
      %v5259 = vmax.f32 %v5243, %v5147
      %v5260 = vmax.f32 %v5244, %v5148
      %v5261 = vmax.f32 %v5245, %v5149
      %v5262 = vmax.f32 %v5246, %v5150
      %v5263 = vmax.f32 %v5247, %v5151
      %v5264 = vmax.f32 %v5248, %v5152
      %v5265 = vmax.f32 %v5249, %v5153
      %5266 = vst.msk [vmem:[%s443] sm:$0xff] %vm4288, %v5250
      %5267 = vst.msk [vmem:[%s443 + $0x8] sm:$0xff] %vm4288, %v5251
      %5268 = vst.msk [vmem:[%s443 + $0x10] sm:$0xff] %vm4288, %v5252
      %5269 = vst.msk [vmem:[%s443 + $0x18] sm:$0xff] %vm4288, %v5253
      %5270 = vst.msk [vmem:[%s443 + $0x20] sm:$0xff] %vm4288, %v5254
      %5271 = vst.msk [vmem:[%s443 + $0x28] sm:$0xff] %vm4288, %v5255
      %5272 = vst.msk [vmem:[%s443 + $0x30] sm:$0xff] %vm4288, %v5256
      %5273 = vst.msk [vmem:[%s443 + $0x38] sm:$0xff] %vm4288, %v5257
      %5274 = vst.msk [vmem:[%s443 + $0x40] sm:$0xff] %vm4288, %v5258
      %5275 = vst.msk [vmem:[%s443 + $0x48] sm:$0xff] %vm4288, %v5259
      %5276 = vst.msk [vmem:[%s443 + $0x50] sm:$0xff] %vm4288, %v5260
      %5277 = vst.msk [vmem:[%s443 + $0x58] sm:$0xff] %vm4288, %v5261
      %5278 = vst.msk [vmem:[%s443 + $0x60] sm:$0xff] %vm4288, %v5262
      %5279 = vst.msk [vmem:[%s443 + $0x68] sm:$0xff] %vm4288, %v5263
      %5280 = vst.msk [vmem:[%s443 + $0x70] sm:$0xff] %vm4288, %v5264
      %5281 = vst.msk [vmem:[%s443 + $0x78] sm:$0xff] %vm4288, %v5265
      %s5282 = smul.u32 16, %s25
      %p5283 = scmp.lt.s32.totalorder %s24, 1
      %s5284 = scalar_select %p5283, %s24, 1
      %p5285 = scmp.lt.s32.totalorder %s5282, 15
      %s5286 = scalar_select %p5285, %s5282, 15
      %s5287 = smul.addr %s5284, 16
      %s5288 = sadd.s32 %s5286, %s5287
      %s5289 = smul.addr %s5288, 8
      %s5290 = scalar_lea.vmem %s9, %s5289
      // Predicated region
      $region57: #{_lambda_.3} parent=55 // pred_check
        %p5291 = pneg %p265
      $region58: #{_lambda_.3} parent=55 // pred_check_branch
        %5293 = sbr.rel (%p5291) target = $region60
      $region59: #{_lambda_.3} parent=55 // pred_region
        %s5294 = smul.u32 16, %s25
      $region60: #{_lambda_.3} parent=55 // pred_fallthru
        _
    $region56: #{_lambda_.3} parent=5 // pred_fallthru
      _
    %p5295 = scmp.le.s32.totalorder 2, %s15
    // Predicated region
    $region61: #{_lambda_.3} parent=5 // pred_check
      %p5296 = pneg %p5295
    $region62: #{_lambda_.3} parent=5 // pred_check_branch
      %5298 = sbr.rel (%p5296) target = $region64
    $region63: #{_lambda_.3} parent=5 // pred_region
      %s5299 = ssub.s32 %s15, 2
      // Predicated region
      $region65: #{_lambda_.3} parent=63 // pred_check
        %p5300 = pneg %p271
      $region66: #{_lambda_.3} parent=63 // pred_check_branch
        %5302 = sbr.rel (%p5300) target = $region68
      $region67: #{_lambda_.3} parent=63 // pred_region
        %s5303 = smul.u32 16, %s27
        %p5304 = scmp.lt.s32.totalorder %s26, 1
        %s5305 = scalar_select %p5304, %s26, 1
        %p5306 = scmp.lt.s32.totalorder %s5303, 15
        %s5307 = scalar_select %p5306, %s5303, 15
        %s5308 = smul.addr %s5305, 16
        %s5309 = sadd.s32 %s5307, %s5308
        %s5310 = smul.addr %s5309, 8
        %s5311 = scalar_lea.vmem %s9, %s5310
      $region68: #{_lambda_.3} parent=63 // pred_fallthru
        _
    $region64: #{_lambda_.3} parent=5 // pred_fallthru
      _
  $region6: #{_lambda_.3} parent=0 // loop_footer
    %s19 = sadd.s32 1, %s15
  $region7: #{_lambda_.3} parent=0 // loop_footer_branch
    %14 = sbr.rel target = $region3
  $region8: #{_lambda_.3} parent=0 // loop_exit
    _

// kernel: _lambda_.5
$region0: #{_lambda_.5}
  #allocation0 [shape = 'u32[]', space=smem, size = 0x4, offset = 0x4, fixed_abs, tag = 'smem constant byte address 0x4 - core index']
  #allocation1 [shape = 'u32[144,128]{1,0:T(1,128)}', space=vmem, size = 0x12000, scoped, tag = 'internal scratch']
  %s0 = inlined_call_operand.vmem [shape: f32[2,32,3], index: 0, kind: input, shape index: {}]
  %s1 = inlined_call_operand.vmem [shape: f32[2,3,64], index: 1, kind: input, shape index: {}]
  %s2 = inlined_call_operand.vmem [shape: f32[2,32,35], index: 2, kind: input, shape index: {}]
  %s3 = inlined_call_operand.vmem [shape: f32[2,64,35], index: 3, kind: input, shape index: {}]
  %s4 = inlined_call_operand.vmem [shape: f32[35,32], index: 4, kind: input, shape index: {}]
  %s5 = inlined_call_operand.vmem [shape: f32[35,32], index: 5, kind: input, shape index: {}]
  %s6 = inlined_call_operand.vmem [shape: f32[1,32], index: 6, kind: input, shape index: {}]
  %s7 = inlined_call_operand.vmem [shape: bf16[32,32], index: 7, kind: input, shape index: {}]
  %s8 = inlined_call_operand.vmem [shape: f32[1,32], index: 8, kind: input, shape index: {}]
  %s9 = inlined_call_operand.vmem [shape: f32[32,32], index: 9, kind: input, shape index: {}]
  %s10 = inlined_call_operand.vmem [shape: f32[32,1], index: 10, kind: input, shape index: {}]
  %s11 = inlined_call_operand.hbm [shape: f32[2,32,32], index: 11, kind: output, shape index: {0}]
  %s12 = inlined_call_operand.hbm [shape: f32[2,32,32], index: 12, kind: output, shape index: {1}]
  %13 = xla_tuple %s11, %s12
  %s14 = sld [smem:[#allocation0]]
  $region85: #{_lambda_.5} parent=0
    _
  %s16 = ssub.s32 1, %s14
  %s17 = scalar_select 0, %s16, %s14
  $region1: #{_lambda_.5} parent=0
    #allocation2 [shape = 'u8[32768]{0}', space=vmem, size = 0x8000, scoped, tag = 'output window, operand 0']
    #allocation3 [shape = 's32[2]{0}', space=sflag, size = 0x8, scoped, tag = 'scoped memory for _lambda_.5']
    #allocation4 [shape = 'u8[32768]{0}', space=vmem, size = 0x8000, scoped, tag = 'output window, operand 1']
    #allocation5 [shape = 's32[2]{0}', space=sflag, size = 0x8, scoped, tag = 'scoped memory for _lambda_.5']
    %18 = vsyncpa [#allocation3], 0
    %s19 = scalar_lea.sflag [#allocation3], 1
    %20 = vsyncpa %s19, 0
    %21 = vsyncpa [#allocation5], 0
    %s22 = scalar_lea.sflag [#allocation5], 1
    %23 = vsyncpa %s22, 0
    loop: start=0, step=1, limit=4
    $region2: #{_lambda_.5} parent=1 // loop_pre_header
      _
    $region3: #{_lambda_.5} parent=1 // loop_header
      %s25 = sphi 0, %s29
      %p26 = scmp.ge.s32.totalorder %s25, 4
      %s32 = sphi 0, %s44
      %s33 = sphi 0, %s40
      %s34 = sphi 0, %s32
      %s35 = sphi 0, %s33
      %s36 = sphi 0, %s34
      %s37 = sphi 0, %s35
      %s49 = sphi 0, %s51
      %s52 = sphi 0, %s49
      %s53 = sphi 0, %s52
      %s69 = sphi 0, %s53
      %s75 = sphi 0, %s77
      %s78 = sphi 0, %s75
      %s79 = sphi 0, %s78
      %s95 = sphi 0, %s79
      %s103 = sphi 0, %s105
      %s106 = sphi 0, %s103
      %s107 = sphi 0, %s106
      %s123 = sphi 0, %s107
      %s129 = sphi 0, %s131
      %s132 = sphi 0, %s129
      %s133 = sphi 0, %s132
      %s149 = sphi 0, %s133
      %s153 = sphi 0, %s153
      %s155 = sphi 0, %s153
      %s156 = sphi 0, %s155
      %s170 = sphi 0, %s156
      %s174 = sphi 0, %s174
      %s176 = sphi 0, %s174
      %s177 = sphi 0, %s176
      %s191 = sphi 0, %s177
      %s195 = sphi 0, %s195
      %s197 = sphi 0, %s195
      %s198 = sphi 0, %s197
      %s212 = sphi 0, %s198
      %s216 = sphi 0, %s216
      %s218 = sphi 0, %s216
      %s219 = sphi 0, %s218
      %s233 = sphi 0, %s219
      %s237 = sphi 0, %s237
      %s239 = sphi 0, %s237
      %s240 = sphi 0, %s239
      %s254 = sphi 0, %s240
      %s258 = sphi 0, %s258
      %s260 = sphi 0, %s258
      %s261 = sphi 0, %s260
      %s275 = sphi 0, %s261
      %s279 = sphi 0, %s279
      %s281 = sphi 0, %s279
      %s282 = sphi 0, %s281
      %s296 = sphi 0, %s282
      %s304 = sphi 0, %s306
      %s307 = sphi 0, %s304
      %s308 = sphi 0, %s307
      %s324 = sphi 0, %s308
      %s332 = sphi 0, %s334
      %s335 = sphi 0, %s332
      %s336 = sphi 0, %s335
      %s352 = sphi 0, %s336
    $region4: #{_lambda_.5} parent=1 // loop_header_branch
      %28 = sbr.rel (%p26) target = $region8
    $region5: #{_lambda_.5} parent=1 // loop_body
      %s30 = ssub.s32 %s25, 1
      %s31 = ssub.s32 %s25, 2
      %s38 = sadd.s32 1, %s33
      %p39 = scmp.ge.s32.totalorder %s38, 1
      %s40 = scalar_select %p39, 0, %s38
      %s41 = sadd.s32 1, %s32
      %s42 = scalar_select %p39, %s41, %s32
      %p43 = scmp.ge.s32.totalorder %s42, 2
      %s44 = scalar_select %p43, 0, %s42
      %s45 = ssub.s32 %s32, %s44
      %s46 = ssub.s32 %s33, %s40
      %s47 = sor.u32 %s45, %s46
      %p48 = scmp.eq.s32.totalorder %s47, 0
      %s50 = sadd.s32 %s49, 1
      %s51 = scalar_select %p48, %s49, %s50
      %p54 = pneg %p48
      %p55 = scmp.eq.s32.totalorder %s25, 1
      %p56 = por %p54, %p55
      %p57 = scmp.ne.s32.totalorder %s49, %s52
      %p58 = scmp.eq.s32.totalorder %s25, 0
      %p59 = por %p57, %p58
      %p60 = scmp.ne.s32.totalorder %s49, %s52
      %p61 = scmp.eq.s32.totalorder %s30, 1
      %p62 = por %p60, %p61
      %p63 = scmp.ne.s32.totalorder %s52, %s53
      %p64 = scmp.eq.s32.totalorder %s30, 0
      %p65 = por %p63, %p64
      %p66 = scmp.ne.s32.totalorder %s52, %s53
      %p67 = scmp.eq.s32.totalorder %s31, 1
      %p68 = por %p66, %p67
      %p70 = scmp.ne.s32.totalorder %s53, %s69
      %p71 = scmp.eq.s32.totalorder %s31, 0
      %p72 = por %p70, %p71
      %s73 = ssub.s32 %s32, %s44
      %p74 = scmp.eq.s32.totalorder %s73, 0
      %s76 = sadd.s32 %s75, 1
      %s77 = scalar_select %p74, %s75, %s76
      %p80 = pneg %p74
      %p81 = scmp.eq.s32.totalorder %s25, 1
      %p82 = por %p80, %p81
      %p83 = scmp.ne.s32.totalorder %s75, %s78
      %p84 = scmp.eq.s32.totalorder %s25, 0
      %p85 = por %p83, %p84
      %p86 = scmp.ne.s32.totalorder %s75, %s78
      %p87 = scmp.eq.s32.totalorder %s30, 1
      %p88 = por %p86, %p87
      %p89 = scmp.ne.s32.totalorder %s78, %s79
      %p90 = scmp.eq.s32.totalorder %s30, 0
      %p91 = por %p89, %p90
      %p92 = scmp.ne.s32.totalorder %s78, %s79
      %p93 = scmp.eq.s32.totalorder %s31, 1
      %p94 = por %p92, %p93
      %p96 = scmp.ne.s32.totalorder %s79, %s95
      %p97 = scmp.eq.s32.totalorder %s31, 0
      %p98 = por %p96, %p97
      %s99 = ssub.s32 %s32, %s44
      %s100 = ssub.s32 %s33, %s40
      %s101 = sor.u32 %s99, %s100
      %p102 = scmp.eq.s32.totalorder %s101, 0
      %s104 = sadd.s32 %s103, 1
      %s105 = scalar_select %p102, %s103, %s104
      %p108 = pneg %p102
      %p109 = scmp.eq.s32.totalorder %s25, 1
      %p110 = por %p108, %p109
      %p111 = scmp.ne.s32.totalorder %s103, %s106
      %p112 = scmp.eq.s32.totalorder %s25, 0
      %p113 = por %p111, %p112
      %p114 = scmp.ne.s32.totalorder %s103, %s106
      %p115 = scmp.eq.s32.totalorder %s30, 1
      %p116 = por %p114, %p115
      %p117 = scmp.ne.s32.totalorder %s106, %s107
      %p118 = scmp.eq.s32.totalorder %s30, 0
      %p119 = por %p117, %p118
      %p120 = scmp.ne.s32.totalorder %s106, %s107
      %p121 = scmp.eq.s32.totalorder %s31, 1
      %p122 = por %p120, %p121
      %p124 = scmp.ne.s32.totalorder %s107, %s123
      %p125 = scmp.eq.s32.totalorder %s31, 0
      %p126 = por %p124, %p125
      %s127 = ssub.s32 %s32, %s44
      %p128 = scmp.eq.s32.totalorder %s127, 0
      %s130 = sadd.s32 %s129, 1
      %s131 = scalar_select %p128, %s129, %s130
      %p134 = pneg %p128
      %p135 = scmp.eq.s32.totalorder %s25, 1
      %p136 = por %p134, %p135
      %p137 = scmp.ne.s32.totalorder %s129, %s132
      %p138 = scmp.eq.s32.totalorder %s25, 0
      %p139 = por %p137, %p138
      %p140 = scmp.ne.s32.totalorder %s129, %s132
      %p141 = scmp.eq.s32.totalorder %s30, 1
      %p142 = por %p140, %p141
      %p143 = scmp.ne.s32.totalorder %s132, %s133
      %p144 = scmp.eq.s32.totalorder %s30, 0
      %p145 = por %p143, %p144
      %p146 = scmp.ne.s32.totalorder %s132, %s133
      %p147 = scmp.eq.s32.totalorder %s31, 1
      %p148 = por %p146, %p147
      %p150 = scmp.ne.s32.totalorder %s133, %s149
      %p151 = scmp.eq.s32.totalorder %s31, 0
      %p152 = por %p150, %p151
      %s154 = sadd.s32 %s153, 1
      %p157 = scmp.eq.s32.totalorder %s25, 1
      %p158 = scmp.ne.s32.totalorder %s153, %s155
      %p159 = scmp.eq.s32.totalorder %s25, 0
      %p160 = por %p158, %p159
      %p161 = scmp.ne.s32.totalorder %s153, %s155
      %p162 = scmp.eq.s32.totalorder %s30, 1
      %p163 = por %p161, %p162
      %p164 = scmp.ne.s32.totalorder %s155, %s156
      %p165 = scmp.eq.s32.totalorder %s30, 0
      %p166 = por %p164, %p165
      %p167 = scmp.ne.s32.totalorder %s155, %s156
      %p168 = scmp.eq.s32.totalorder %s31, 1
      %p169 = por %p167, %p168
      %p171 = scmp.ne.s32.totalorder %s156, %s170
      %p172 = scmp.eq.s32.totalorder %s31, 0
      %p173 = por %p171, %p172
      %s175 = sadd.s32 %s174, 1
      %p178 = scmp.eq.s32.totalorder %s25, 1
      %p179 = scmp.ne.s32.totalorder %s174, %s176
      %p180 = scmp.eq.s32.totalorder %s25, 0
      %p181 = por %p179, %p180
      %p182 = scmp.ne.s32.totalorder %s174, %s176
      %p183 = scmp.eq.s32.totalorder %s30, 1
      %p184 = por %p182, %p183
      %p185 = scmp.ne.s32.totalorder %s176, %s177
      %p186 = scmp.eq.s32.totalorder %s30, 0
      %p187 = por %p185, %p186
      %p188 = scmp.ne.s32.totalorder %s176, %s177
      %p189 = scmp.eq.s32.totalorder %s31, 1
      %p190 = por %p188, %p189
      %p192 = scmp.ne.s32.totalorder %s177, %s191
      %p193 = scmp.eq.s32.totalorder %s31, 0
      %p194 = por %p192, %p193
      %s196 = sadd.s32 %s195, 1
      %p199 = scmp.eq.s32.totalorder %s25, 1
      %p200 = scmp.ne.s32.totalorder %s195, %s197
      %p201 = scmp.eq.s32.totalorder %s25, 0
      %p202 = por %p200, %p201
      %p203 = scmp.ne.s32.totalorder %s195, %s197
      %p204 = scmp.eq.s32.totalorder %s30, 1
      %p205 = por %p203, %p204
      %p206 = scmp.ne.s32.totalorder %s197, %s198
      %p207 = scmp.eq.s32.totalorder %s30, 0
      %p208 = por %p206, %p207
      %p209 = scmp.ne.s32.totalorder %s197, %s198
      %p210 = scmp.eq.s32.totalorder %s31, 1
      %p211 = por %p209, %p210
      %p213 = scmp.ne.s32.totalorder %s198, %s212
      %p214 = scmp.eq.s32.totalorder %s31, 0
      %p215 = por %p213, %p214
      %s217 = sadd.s32 %s216, 1
      %p220 = scmp.eq.s32.totalorder %s25, 1
      %p221 = scmp.ne.s32.totalorder %s216, %s218
      %p222 = scmp.eq.s32.totalorder %s25, 0
      %p223 = por %p221, %p222
      %p224 = scmp.ne.s32.totalorder %s216, %s218
      %p225 = scmp.eq.s32.totalorder %s30, 1
      %p226 = por %p224, %p225
      %p227 = scmp.ne.s32.totalorder %s218, %s219
      %p228 = scmp.eq.s32.totalorder %s30, 0
      %p229 = por %p227, %p228
      %p230 = scmp.ne.s32.totalorder %s218, %s219
      %p231 = scmp.eq.s32.totalorder %s31, 1
      %p232 = por %p230, %p231
      %p234 = scmp.ne.s32.totalorder %s219, %s233
      %p235 = scmp.eq.s32.totalorder %s31, 0
      %p236 = por %p234, %p235
      %s238 = sadd.s32 %s237, 1
      %p241 = scmp.eq.s32.totalorder %s25, 1
      %p242 = scmp.ne.s32.totalorder %s237, %s239
      %p243 = scmp.eq.s32.totalorder %s25, 0
      %p244 = por %p242, %p243
      %p245 = scmp.ne.s32.totalorder %s237, %s239
      %p246 = scmp.eq.s32.totalorder %s30, 1
      %p247 = por %p245, %p246
      %p248 = scmp.ne.s32.totalorder %s239, %s240
      %p249 = scmp.eq.s32.totalorder %s30, 0
      %p250 = por %p248, %p249
      %p251 = scmp.ne.s32.totalorder %s239, %s240
      %p252 = scmp.eq.s32.totalorder %s31, 1
      %p253 = por %p251, %p252
      %p255 = scmp.ne.s32.totalorder %s240, %s254
      %p256 = scmp.eq.s32.totalorder %s31, 0
      %p257 = por %p255, %p256
      %s259 = sadd.s32 %s258, 1
      %p262 = scmp.eq.s32.totalorder %s25, 1
      %p263 = scmp.ne.s32.totalorder %s258, %s260
      %p264 = scmp.eq.s32.totalorder %s25, 0
      %p265 = por %p263, %p264
      %p266 = scmp.ne.s32.totalorder %s258, %s260
      %p267 = scmp.eq.s32.totalorder %s30, 1
      %p268 = por %p266, %p267
      %p269 = scmp.ne.s32.totalorder %s260, %s261
      %p270 = scmp.eq.s32.totalorder %s30, 0
      %p271 = por %p269, %p270
      %p272 = scmp.ne.s32.totalorder %s260, %s261
      %p273 = scmp.eq.s32.totalorder %s31, 1
      %p274 = por %p272, %p273
      %p276 = scmp.ne.s32.totalorder %s261, %s275
      %p277 = scmp.eq.s32.totalorder %s31, 0
      %p278 = por %p276, %p277
      %s280 = sadd.s32 %s279, 1
      %p283 = scmp.eq.s32.totalorder %s25, 1
      %p284 = scmp.ne.s32.totalorder %s279, %s281
      %p285 = scmp.eq.s32.totalorder %s25, 0
      %p286 = por %p284, %p285
      %p287 = scmp.ne.s32.totalorder %s279, %s281
      %p288 = scmp.eq.s32.totalorder %s30, 1
      %p289 = por %p287, %p288
      %p290 = scmp.ne.s32.totalorder %s281, %s282
      %p291 = scmp.eq.s32.totalorder %s30, 0
      %p292 = por %p290, %p291
      %p293 = scmp.ne.s32.totalorder %s281, %s282
      %p294 = scmp.eq.s32.totalorder %s31, 1
      %p295 = por %p293, %p294
      %p297 = scmp.ne.s32.totalorder %s282, %s296
      %p298 = scmp.eq.s32.totalorder %s31, 0
      %p299 = por %p297, %p298
      %s300 = ssub.s32 %s32, %s44
      %s301 = ssub.s32 %s33, %s40
      %s302 = sor.u32 %s300, %s301
      %p303 = scmp.eq.s32.totalorder %s302, 0
      %s305 = sadd.s32 %s304, 1
      %s306 = scalar_select %p303, %s304, %s305
      %p309 = pneg %p303
      %p310 = scmp.eq.s32.totalorder %s25, 1
      %p311 = por %p309, %p310
      %p312 = scmp.ne.s32.totalorder %s304, %s307
      %p313 = scmp.eq.s32.totalorder %s25, 0
      %p314 = por %p312, %p313
      %p315 = scmp.ne.s32.totalorder %s304, %s307
      %p316 = scmp.eq.s32.totalorder %s30, 1
      %p317 = por %p315, %p316
      %p318 = scmp.ne.s32.totalorder %s307, %s308
      %p319 = scmp.eq.s32.totalorder %s30, 0
      %p320 = por %p318, %p319
      %p321 = scmp.ne.s32.totalorder %s307, %s308
      %p322 = scmp.eq.s32.totalorder %s31, 1
      %p323 = por %p321, %p322
      %p325 = scmp.ne.s32.totalorder %s308, %s324
      %p326 = scmp.eq.s32.totalorder %s31, 0
      %p327 = por %p325, %p326
      %s328 = ssub.s32 %s32, %s44
      %s329 = ssub.s32 %s33, %s40
      %s330 = sor.u32 %s328, %s329
      %p331 = scmp.eq.s32.totalorder %s330, 0
      %s333 = sadd.s32 %s332, 1
      %s334 = scalar_select %p331, %s332, %s333
      %p337 = pneg %p331
      %p338 = scmp.eq.s32.totalorder %s25, 1
      %p339 = por %p337, %p338
      %p340 = scmp.ne.s32.totalorder %s332, %s335
      %p341 = scmp.eq.s32.totalorder %s25, 0
      %p342 = por %p340, %p341
      %p343 = scmp.ne.s32.totalorder %s332, %s335
      %p344 = scmp.eq.s32.totalorder %s30, 1
      %p345 = por %p343, %p344
      %p346 = scmp.ne.s32.totalorder %s335, %s336
      %p347 = scmp.eq.s32.totalorder %s30, 0
      %p348 = por %p346, %p347
      %p349 = scmp.ne.s32.totalorder %s335, %s336
      %p350 = scmp.eq.s32.totalorder %s31, 1
      %p351 = por %p349, %p350
      %p353 = scmp.ne.s32.totalorder %s336, %s352
      %p354 = scmp.eq.s32.totalorder %s31, 0
      %p355 = por %p353, %p354
      %p356 = scmp.le.s32.totalorder 1, %s25
      %p357 = scmp.lt.s32.totalorder %s25, 3
      %p358 = pnand %p356, %p357
      %p359 = pneg %p358
      // Predicated region
      $region9: #{_lambda_.5} parent=5 // pred_check
        _
      $region10: #{_lambda_.5} parent=5 // pred_check_branch
        %361 = sbr.rel (%p358) target = $region12
      $region11: #{_lambda_.5} parent=5 // pred_region
        %s362 = ssub.s32 %s25, 1
        // Predicated region
        $region13: #{_lambda_.5} parent=11 // pred_check
          %p363 = pneg %p166
        $region14: #{_lambda_.5} parent=11 // pred_check_branch
          %365 = sbr.rel (%p363) target = $region16
        $region15: #{_lambda_.5} parent=11 // pred_region
          _
        $region16: #{_lambda_.5} parent=11 // pred_fallthru
          _
        // Predicated region
        $region17: #{_lambda_.5} parent=11 // pred_check
          %p366 = pneg %p187
        $region18: #{_lambda_.5} parent=11 // pred_check_branch
          %368 = sbr.rel (%p366) target = $region20
        $region19: #{_lambda_.5} parent=11 // pred_region
          _
        $region20: #{_lambda_.5} parent=11 // pred_fallthru
          _
        // Predicated region
        $region21: #{_lambda_.5} parent=11 // pred_check
          %p369 = pneg %p208
        $region22: #{_lambda_.5} parent=11 // pred_check_branch
          %371 = sbr.rel (%p369) target = $region24
        $region23: #{_lambda_.5} parent=11 // pred_region
          _
        $region24: #{_lambda_.5} parent=11 // pred_fallthru
          _
        // Predicated region
        $region25: #{_lambda_.5} parent=11 // pred_check
          %p372 = pneg %p229
        $region26: #{_lambda_.5} parent=11 // pred_check_branch
          %374 = sbr.rel (%p372) target = $region28
        $region27: #{_lambda_.5} parent=11 // pred_region
          _
        $region28: #{_lambda_.5} parent=11 // pred_fallthru
          _
        // Predicated region
        $region29: #{_lambda_.5} parent=11 // pred_check
          %p375 = pneg %p250
        $region30: #{_lambda_.5} parent=11 // pred_check_branch
          %377 = sbr.rel (%p375) target = $region32
        $region31: #{_lambda_.5} parent=11 // pred_region
          _
        $region32: #{_lambda_.5} parent=11 // pred_fallthru
          _
        // Predicated region
        $region33: #{_lambda_.5} parent=11 // pred_check
          %p378 = pneg %p271
        $region34: #{_lambda_.5} parent=11 // pred_check_branch
          %380 = sbr.rel (%p378) target = $region36
        $region35: #{_lambda_.5} parent=11 // pred_region
          _
        $region36: #{_lambda_.5} parent=11 // pred_fallthru
          _
        // Predicated region
        $region37: #{_lambda_.5} parent=11 // pred_check
          %p381 = pneg %p292
        $region38: #{_lambda_.5} parent=11 // pred_check_branch
          %383 = sbr.rel (%p381) target = $region40
        $region39: #{_lambda_.5} parent=11 // pred_region
          _
        $region40: #{_lambda_.5} parent=11 // pred_fallthru
          _
      $region12: #{_lambda_.5} parent=5 // pred_fallthru
        _
      %p384 = scmp.lt.s32.totalorder %s25, 2
      // Predicated region
      $region41: #{_lambda_.5} parent=5 // pred_check
        %p385 = pneg %p384
      $region42: #{_lambda_.5} parent=5 // pred_check_branch
        %387 = sbr.rel (%p385) target = $region44
      $region43: #{_lambda_.5} parent=5 // pred_region
        // Predicated region
        $region45: #{_lambda_.5} parent=43 // pred_check
          %p388 = pneg %p59
        $region46: #{_lambda_.5} parent=43 // pred_check_branch
          %390 = sbr.rel (%p388) target = $region48
        $region47: #{_lambda_.5} parent=43 // pred_region
          %s391 = smul.u32 4, %s33
          %p392 = scmp.lt.s32.totalorder %s32, 1
          %s393 = scalar_select %p392, %s32, 1
          %p394 = scmp.lt.s32.totalorder %s391, 3
          %s395 = scalar_select %p394, %s391, 3
          %s396 = smul.addr %s393, 4
          %s397 = sadd.s32 %s395, %s396
          %s398 = smul.addr %s397, 8
          %s399 = scalar_lea.vmem %s0, %s398
          %s400 = smul.u32 4, %s33
        $region48: #{_lambda_.5} parent=43 // pred_fallthru
          _
        // Predicated region
        $region49: #{_lambda_.5} parent=43 // pred_check
          %p401 = pneg %p85
        $region50: #{_lambda_.5} parent=43 // pred_check_branch
          %403 = sbr.rel (%p401) target = $region52
        $region51: #{_lambda_.5} parent=43 // pred_region
          %p404 = scmp.lt.s32.totalorder %s32, 1
          %s405 = scalar_select %p404, %s32, 1
          %s406 = smul.addr %s405, 4
          %s407 = scalar_lea.vmem %s1, %s406
        $region52: #{_lambda_.5} parent=43 // pred_fallthru
          _
        // Predicated region
        $region53: #{_lambda_.5} parent=43 // pred_check
          %p408 = pneg %p113
        $region54: #{_lambda_.5} parent=43 // pred_check_branch
          %410 = sbr.rel (%p408) target = $region56
        $region55: #{_lambda_.5} parent=43 // pred_region
          %s411 = smul.u32 4, %s33
          %p412 = scmp.lt.s32.totalorder %s32, 1
          %s413 = scalar_select %p412, %s32, 1
          %p414 = scmp.lt.s32.totalorder %s411, 3
          %s415 = scalar_select %p414, %s411, 3
          %s416 = smul.addr %s413, 4
          %s417 = sadd.s32 %s415, %s416
          %s418 = smul.addr %s417, 8
          %s419 = scalar_lea.vmem %s2, %s418
          %s420 = smul.u32 4, %s33
        $region56: #{_lambda_.5} parent=43 // pred_fallthru
          _
        // Predicated region
        $region57: #{_lambda_.5} parent=43 // pred_check
          %p421 = pneg %p139
        $region58: #{_lambda_.5} parent=43 // pred_check_branch
          %423 = sbr.rel (%p421) target = $region60
        $region59: #{_lambda_.5} parent=43 // pred_region
          %p424 = scmp.lt.s32.totalorder %s32, 1
          %s425 = scalar_select %p424, %s32, 1
          %s426 = smul.addr %s425, 8
          %s427 = smul.addr %s426, 8
          %s428 = scalar_lea.vmem %s3, %s427
        $region60: #{_lambda_.5} parent=43 // pred_fallthru
          _
      $region44: #{_lambda_.5} parent=5 // pred_fallthru
        _
      %p429 = scmp.le.s32.totalorder 1, %s25
      %p430 = scmp.lt.s32.totalorder %s25, 3
      %p431 = pnand %p429, %p430
      %p432 = pneg %p431
      // Predicated region
      $region61: #{_lambda_.5} parent=5 // pred_check
        _
      $region62: #{_lambda_.5} parent=5 // pred_check_branch
        %434 = sbr.rel (%p431) target = $region64
      $region63: #{_lambda_.5} parent=5 // pred_region
        %s435 = ssub.s32 %s25, 1
        %s436 = smul.u32 4, %s35
        %p437 = scmp.lt.s32.totalorder %s34, 1
        %s438 = scalar_select %p437, %s34, 1
        %p439 = scmp.lt.s32.totalorder %s436, 3
        %s440 = scalar_select %p439, %s436, 3
        %s441 = smul.addr %s438, 4
        %s442 = sadd.s32 %s440, %s441
        %s443 = smul.addr %s442, 8
        %s444 = scalar_lea.vmem %s0, %s443
        %p445 = pneg %p65
        %p446 = pneg %p62
        %p447 = scmp.lt.s32.totalorder %s34, 1
        %s448 = scalar_select %p447, %s34, 1
        %s449 = smul.addr %s448, 4
        %s450 = scalar_lea.vmem %s1, %s449
        %p451 = pneg %p91
        %p452 = pneg %p88
        %s453 = smul.u32 4, %s35
        %p454 = scmp.lt.s32.totalorder %s34, 1
        %s455 = scalar_select %p454, %s34, 1
        %p456 = scmp.lt.s32.totalorder %s453, 3
        %s457 = scalar_select %p456, %s453, 3
        %s458 = smul.addr %s455, 4
        %s459 = sadd.s32 %s457, %s458
        %s460 = smul.addr %s459, 8
        %s461 = scalar_lea.vmem %s2, %s460
        %p462 = pneg %p119
        %p463 = pneg %p116
        %p464 = scmp.lt.s32.totalorder %s34, 1
        %s465 = scalar_select %p464, %s34, 1
        %s466 = smul.addr %s465, 8
        %s467 = smul.addr %s466, 8
        %s468 = scalar_lea.vmem %s3, %s467
        %p469 = pneg %p145
        %p470 = pneg %p142
        %p471 = pneg %p166
        %p472 = pneg %p163
        %p473 = pneg %p187
        %p474 = pneg %p184
        %p475 = pneg %p208
        %p476 = pneg %p205
        %p477 = pneg %p229
        %p478 = pneg %p226
        %p479 = pneg %p250
        %p480 = pneg %p247
        %p481 = pneg %p271
        %p482 = pneg %p268
        %p483 = pneg %p292
        %p484 = pneg %p289
        %p485 = pneg %p320
        %p486 = pneg %p317
        %s487 = sand.u32 %s307, 1
        %s488 = scalar_lea.sflag [#allocation3], %s487
        %s489 = sand.u32 %s307, 1
        %s490 = smul.addr %s489, 32
        %s491 = scalar_lea.vmem [#allocation2], %s490
        %p492 = pneg %p348
        %p493 = pneg %p345
        %s494 = sand.u32 %s335, 1
        %s495 = scalar_lea.sflag [#allocation5], %s494
        %s496 = sand.u32 %s335, 1
        %s497 = smul.addr %s496, 32
        %s498 = scalar_lea.vmem [#allocation4], %s497
        %s499 = smul.u32 4, %s35
        %p500 = scmp.lt.s32.totalorder %s34, 1
        %s501 = scalar_select %p500, %s34, 1
        %p502 = scmp.lt.s32.totalorder %s499, 3
        %s503 = scalar_select %p502, %s499, 3
        %s504 = smul.addr %s501, 4
        %s505 = sadd.s32 %s503, %s504
        %s506 = smul.addr %s505, 8
        %s507 = scalar_lea.vmem %s0, %s506
        %s508 = smul.u32 4, %s35
        %p509 = scmp.lt.s32.totalorder %s34, 1
        %s510 = scalar_select %p509, %s34, 1
        %s511 = smul.addr %s510, 4
        %s512 = scalar_lea.vmem %s1, %s511
        %s513 = smul.u32 4, %s35
        %p514 = scmp.lt.s32.totalorder %s34, 1
        %s515 = scalar_select %p514, %s34, 1
        %p516 = scmp.lt.s32.totalorder %s513, 3
        %s517 = scalar_select %p516, %s513, 3
        %s518 = smul.addr %s515, 4
        %s519 = sadd.s32 %s517, %s518
        %s520 = smul.addr %s519, 8
        %s521 = scalar_lea.vmem %s2, %s520
        %s522 = smul.u32 4, %s35
        %p523 = scmp.lt.s32.totalorder %s34, 1
        %s524 = scalar_select %p523, %s34, 1
        %s525 = smul.addr %s524, 8
        %s526 = smul.addr %s525, 8
        %s527 = scalar_lea.vmem %s3, %s526
        %v529 = vld [vmem:[%s507] sm:$0xff]
        %v530 = vld [vmem:[%s507 + $0x8] sm:$0xff]
        %v531 = vld [vmem:[%s507 + $0x10] sm:$0xff]
        %v532 = vld [vmem:[%s507 + $0x18] sm:$0xff]
        %v533 = vld [vmem:[%s512] sm:$0x7]
        %v534 = vld [vmem:[%s521] sm:$0xff]
        %v535 = vld [vmem:[%s521 + $0x8] sm:$0xff]
        %v536 = vld [vmem:[%s521 + $0x10] sm:$0xff]
        %v537 = vld [vmem:[%s521 + $0x18] sm:$0xff]
        %v538 = vld [vmem:[%s527] sm:$0xff]
        %v539 = vld [vmem:[%s527 + $0x8] sm:$0xff]
        %v540 = vld [vmem:[%s527 + $0x10] sm:$0xff]
        %v541 = vld [vmem:[%s527 + $0x18] sm:$0xff]
        %v542 = vld [vmem:[%s527 + $0x20] sm:$0xff]
        %v543 = vld [vmem:[%s527 + $0x28] sm:$0xff]
        %v544 = vld [vmem:[%s527 + $0x30] sm:$0xff]
        %v545 = vld [vmem:[%s527 + $0x38] sm:$0xff]
        %547 = vset.pattern.permute.xlu0 0
        %548 = vperm.xlu0 %547, %v529
        %v549 = vpop.permute.xlu0 %548
        %552 = vset.pattern.permute.xlu0 0
        %553 = vperm.xlu0 %552, %v530
        %v554 = vpop.permute.xlu0 %553
        %557 = vset.pattern.permute.xlu0 0
        %558 = vperm.xlu0 %557, %v531
        %v559 = vpop.permute.xlu0 %558
        %562 = vset.pattern.permute.xlu0 0
        %563 = vperm.xlu0 %562, %v532
        %v564 = vpop.permute.xlu0 %563
        %v566 = vlaneseq
        %v567 = vshrl.u32 %v566, 7
        %v568 = vsub.s32 0, %v567
        %v569 = vrot.slane %v533, %v568
        %v570 = vsub.f32 %v549, %v569
        %v571 = vsub.f32 %v554, %v569
        %v572 = vsub.f32 %v559, %v569
        %v573 = vsub.f32 %v564, %v569
        %574 = vset.pattern.permute.xlu0 1
        %575 = vperm.xlu0 %574, %v529
        %v576 = vpop.permute.xlu0 %575
        %578 = vset.pattern.permute.xlu0 1
        %579 = vperm.xlu0 %578, %v530
        %v580 = vpop.permute.xlu0 %579
        %582 = vset.pattern.permute.xlu0 1
        %583 = vperm.xlu0 %582, %v531
        %v584 = vpop.permute.xlu0 %583
        %586 = vset.pattern.permute.xlu0 1
        %587 = vperm.xlu0 %586, %v532
        %v588 = vpop.permute.xlu0 %587
        %v590 = vlaneseq
        %v591 = vshrl.u32 %v590, 7
        %v592 = vsub.s32 1, %v591
        %v593 = vrot.slane %v533, %v592
        %v594 = vsub.f32 %v576, %v593
        %v595 = vsub.f32 %v580, %v593
        %v596 = vsub.f32 %v584, %v593
        %v597 = vsub.f32 %v588, %v593
        %598 = vset.pattern.permute.xlu0 2
        %599 = vperm.xlu0 %598, %v529
        %v600 = vpop.permute.xlu0 %599
        %602 = vset.pattern.permute.xlu0 2
        %603 = vperm.xlu0 %602, %v530
        %v604 = vpop.permute.xlu0 %603
        %606 = vset.pattern.permute.xlu0 2
        %607 = vperm.xlu0 %606, %v531
        %v608 = vpop.permute.xlu0 %607
        %610 = vset.pattern.permute.xlu0 2
        %611 = vperm.xlu0 %610, %v532
        %v612 = vpop.permute.xlu0 %611
        %v614 = vlaneseq
        %v615 = vshrl.u32 %v614, 7
        %v616 = vsub.s32 2, %v615
        %v617 = vrot.slane %v533, %v616
        %v618 = vsub.f32 %v600, %v617
        %v619 = vsub.f32 %v604, %v617
        %v620 = vsub.f32 %v608, %v617
        %v621 = vsub.f32 %v612, %v617
        %v622 = vmul.f32 %v570, %v570
        %v623 = vmul.f32 %v571, %v571
        %v624 = vmul.f32 %v572, %v572
        %v625 = vmul.f32 %v573, %v573
        %v626 = vmul.f32 %v594, %v594
        %v627 = vmul.f32 %v595, %v595
        %v628 = vmul.f32 %v596, %v596
        %v629 = vmul.f32 %v597, %v597
        %v630 = vadd.f32 %v622, %v626
        %v631 = vadd.f32 %v623, %v627
        %v632 = vadd.f32 %v624, %v628
        %v633 = vadd.f32 %v625, %v629
        %v634 = vmul.f32 %v618, %v618
        %v635 = vmul.f32 %v619, %v619
        %v636 = vmul.f32 %v620, %v620
        %v637 = vmul.f32 %v621, %v621
        %v638 = vadd.f32 %v630, %v634
        %v639 = vadd.f32 %v631, %v635
        %v640 = vadd.f32 %v632, %v636
        %v641 = vadd.f32 %v633, %v637
        %v642 = vlaneseq
        %v643 = vand.u32 %v642, 127
        %v648 = vand.u32 %v638, 4294967232
        %v649 = vand.u32 %v639, 4294967232
        %v650 = vand.u32 %v640, 4294967232
        %v651 = vand.u32 %v641, 4294967232
        %v652 = vor.u32 %v648, %v643
        %v653 = vor.u32 %v649, %v643
        %v654 = vor.u32 %v650, %v643
        %v655 = vor.u32 %v651, %v643
        %vm656 = vcmask 523264
        %v657 = vsel %vm656, %v652, 2147483647
        %v658 = vand.u32 %v657, 65535
        %v659 = vshra.s32 %v657, 16
        %v660 = vcvt.s32.f32 %v658
        %v661 = vcvt.s32.f32 %v659
        %662 = vmin.xlane.f32.xlu0 %v661
        %v663 = vpop.xlane.xlu0 %662
        %vm664 = vcmp.eq.f32.partialorder %v661, %v663
        %v665 = vsel %vm664, %v660, inf
        %666 = vmin.xlane.f32.xlu0 %v665
        %v667 = vpop.xlane.xlu0 %666
        %v668 = vcvt.f32.s32 %v667
        %v669 = vcvt.f32.s32 %v663
        %v670 = vshll.u32 %v669, 16
        %v671 = vadd.s32 %v670, %v668
        %v672 = vsel %vm656, %v653, 2147483647
        %v673 = vand.u32 %v672, 65535
        %v674 = vshra.s32 %v672, 16
        %v675 = vcvt.s32.f32 %v673
        %v676 = vcvt.s32.f32 %v674
        %677 = vmin.xlane.f32.xlu0 %v676
        %v678 = vpop.xlane.xlu0 %677
        %vm679 = vcmp.eq.f32.partialorder %v676, %v678
        %v680 = vsel %vm679, %v675, inf
        %681 = vmin.xlane.f32.xlu0 %v680
        %v682 = vpop.xlane.xlu0 %681
        %v683 = vcvt.f32.s32 %v682
        %v684 = vcvt.f32.s32 %v678
        %v685 = vshll.u32 %v684, 16
        %v686 = vadd.s32 %v685, %v683
        %v687 = vsel %vm656, %v654, 2147483647
        %v688 = vand.u32 %v687, 65535
        %v689 = vshra.s32 %v687, 16
        %v690 = vcvt.s32.f32 %v688
        %v691 = vcvt.s32.f32 %v689
        %692 = vmin.xlane.f32.xlu0 %v691
        %v693 = vpop.xlane.xlu0 %692
        %vm694 = vcmp.eq.f32.partialorder %v691, %v693
        %v695 = vsel %vm694, %v690, inf
        %696 = vmin.xlane.f32.xlu0 %v695
        %v697 = vpop.xlane.xlu0 %696
        %v698 = vcvt.f32.s32 %v697
        %v699 = vcvt.f32.s32 %v693
        %v700 = vshll.u32 %v699, 16
        %v701 = vadd.s32 %v700, %v698
        %v702 = vsel %vm656, %v655, 2147483647
        %v703 = vand.u32 %v702, 65535
        %v704 = vshra.s32 %v702, 16
        %v705 = vcvt.s32.f32 %v703
        %v706 = vcvt.s32.f32 %v704
        %707 = vmin.xlane.f32.xlu0 %v706
        %v708 = vpop.xlane.xlu0 %707
        %vm709 = vcmp.eq.f32.partialorder %v706, %v708
        %v710 = vsel %vm709, %v705, inf
        %711 = vmin.xlane.f32.xlu0 %v710
        %v712 = vpop.xlane.xlu0 %711
        %v713 = vcvt.f32.s32 %v712
        %v714 = vcvt.f32.s32 %v708
        %v715 = vshll.u32 %v714, 16
        %v716 = vadd.s32 %v715, %v713
        %vm717 = vcmp.eq.s32.totalorder %v652, %v671
        %vm718 = vcmp.eq.s32.totalorder %v653, %v686
        %vm719 = vcmp.eq.s32.totalorder %v654, %v701
        %vm720 = vcmp.eq.s32.totalorder %v655, %v716
        %v721 = vsel %vm717, 1.0, 0.0
        %v722 = vsel %vm718, 1.0, 0.0
        %v723 = vsel %vm719, 1.0, 0.0
        %v724 = vsel %vm720, 1.0, 0.0
        %v725 = vpack.c.bf16 %v722, %v721
        %v726 = vpack.c.bf16 %v724, %v723
        %v727 = vsel %vm717, 2147483647, %v652
        %v728 = vsel %vm718, 2147483647, %v653
        %v729 = vsel %vm719, 2147483647, %v654
        %v730 = vsel %vm720, 2147483647, %v655
        %v731 = vsel %vm656, %v727, 2147483647
        %v732 = vand.u32 %v731, 65535
        %v733 = vshra.s32 %v731, 16
        %v734 = vcvt.s32.f32 %v732
        %v735 = vcvt.s32.f32 %v733
        %736 = vmin.xlane.f32.xlu0 %v735
        %v737 = vpop.xlane.xlu0 %736
        %vm738 = vcmp.eq.f32.partialorder %v735, %v737
        %v739 = vsel %vm738, %v734, inf
        %740 = vmin.xlane.f32.xlu0 %v739
        %v741 = vpop.xlane.xlu0 %740
        %v742 = vcvt.f32.s32 %v741
        %v743 = vcvt.f32.s32 %v737
        %v744 = vshll.u32 %v743, 16
        %v745 = vadd.s32 %v744, %v742
        %v746 = vsel %vm656, %v728, 2147483647
        %v747 = vand.u32 %v746, 65535
        %v748 = vshra.s32 %v746, 16
        %v749 = vcvt.s32.f32 %v747
        %v750 = vcvt.s32.f32 %v748
        %751 = vmin.xlane.f32.xlu0 %v750
        %v752 = vpop.xlane.xlu0 %751
        %vm753 = vcmp.eq.f32.partialorder %v750, %v752
        %v754 = vsel %vm753, %v749, inf
        %755 = vmin.xlane.f32.xlu0 %v754
        %v756 = vpop.xlane.xlu0 %755
        %v757 = vcvt.f32.s32 %v756
        %v758 = vcvt.f32.s32 %v752
        %v759 = vshll.u32 %v758, 16
        %v760 = vadd.s32 %v759, %v757
        %v761 = vsel %vm656, %v729, 2147483647
        %v762 = vand.u32 %v761, 65535
        %v763 = vshra.s32 %v761, 16
        %v764 = vcvt.s32.f32 %v762
        %v765 = vcvt.s32.f32 %v763
        %766 = vmin.xlane.f32.xlu0 %v765
        %v767 = vpop.xlane.xlu0 %766
        %vm768 = vcmp.eq.f32.partialorder %v765, %v767
        %v769 = vsel %vm768, %v764, inf
        %770 = vmin.xlane.f32.xlu0 %v769
        %v771 = vpop.xlane.xlu0 %770
        %v772 = vcvt.f32.s32 %v771
        %v773 = vcvt.f32.s32 %v767
        %v774 = vshll.u32 %v773, 16
        %v775 = vadd.s32 %v774, %v772
        %v776 = vsel %vm656, %v730, 2147483647
        %v777 = vand.u32 %v776, 65535
        %v778 = vshra.s32 %v776, 16
        %v779 = vcvt.s32.f32 %v777
        %v780 = vcvt.s32.f32 %v778
        %781 = vmin.xlane.f32.xlu0 %v780
        %v782 = vpop.xlane.xlu0 %781
        %vm783 = vcmp.eq.f32.partialorder %v780, %v782
        %v784 = vsel %vm783, %v779, inf
        %785 = vmin.xlane.f32.xlu0 %v784
        %v786 = vpop.xlane.xlu0 %785
        %v787 = vcvt.f32.s32 %v786
        %v788 = vcvt.f32.s32 %v782
        %v789 = vshll.u32 %v788, 16
        %v790 = vadd.s32 %v789, %v787
        %vm791 = vcmp.eq.s32.totalorder %v727, %v745
        %vm792 = vcmp.eq.s32.totalorder %v728, %v760
        %vm793 = vcmp.eq.s32.totalorder %v729, %v775
        %vm794 = vcmp.eq.s32.totalorder %v730, %v790
        %v795 = vsel %vm791, 1.0, 0.0
        %v796 = vsel %vm792, 1.0, 0.0
        %v797 = vsel %vm793, 1.0, 0.0
        %v798 = vsel %vm794, 1.0, 0.0
        %v799 = vpack.c.bf16 %v796, %v795
        %v800 = vpack.c.bf16 %v798, %v797
        %v801 = vsel %vm791, 2147483647, %v727
        %v802 = vsel %vm792, 2147483647, %v728
        %v803 = vsel %vm793, 2147483647, %v729
        %v804 = vsel %vm794, 2147483647, %v730
        %v805 = vsel %vm656, %v801, 2147483647
        %v806 = vand.u32 %v805, 65535
        %v807 = vshra.s32 %v805, 16
        %v808 = vcvt.s32.f32 %v806
        %v809 = vcvt.s32.f32 %v807
        %810 = vmin.xlane.f32.xlu0 %v809
        %v811 = vpop.xlane.xlu0 %810
        %vm812 = vcmp.eq.f32.partialorder %v809, %v811
        %v813 = vsel %vm812, %v808, inf
        %814 = vmin.xlane.f32.xlu0 %v813
        %v815 = vpop.xlane.xlu0 %814
        %v816 = vcvt.f32.s32 %v815
        %v817 = vcvt.f32.s32 %v811
        %v818 = vshll.u32 %v817, 16
        %v819 = vadd.s32 %v818, %v816
        %v820 = vsel %vm656, %v802, 2147483647
        %v821 = vand.u32 %v820, 65535
        %v822 = vshra.s32 %v820, 16
        %v823 = vcvt.s32.f32 %v821
        %v824 = vcvt.s32.f32 %v822
        %825 = vmin.xlane.f32.xlu0 %v824
        %v826 = vpop.xlane.xlu0 %825
        %vm827 = vcmp.eq.f32.partialorder %v824, %v826
        %v828 = vsel %vm827, %v823, inf
        %829 = vmin.xlane.f32.xlu0 %v828
        %v830 = vpop.xlane.xlu0 %829
        %v831 = vcvt.f32.s32 %v830
        %v832 = vcvt.f32.s32 %v826
        %v833 = vshll.u32 %v832, 16
        %v834 = vadd.s32 %v833, %v831
        %v835 = vsel %vm656, %v803, 2147483647
        %v836 = vand.u32 %v835, 65535
        %v837 = vshra.s32 %v835, 16
        %v838 = vcvt.s32.f32 %v836
        %v839 = vcvt.s32.f32 %v837
        %840 = vmin.xlane.f32.xlu0 %v839
        %v841 = vpop.xlane.xlu0 %840
        %vm842 = vcmp.eq.f32.partialorder %v839, %v841
        %v843 = vsel %vm842, %v838, inf
        %844 = vmin.xlane.f32.xlu0 %v843
        %v845 = vpop.xlane.xlu0 %844
        %v846 = vcvt.f32.s32 %v845
        %v847 = vcvt.f32.s32 %v841
        %v848 = vshll.u32 %v847, 16
        %v849 = vadd.s32 %v848, %v846
        %v850 = vsel %vm656, %v804, 2147483647
        %v851 = vand.u32 %v850, 65535
        %v852 = vshra.s32 %v850, 16
        %v853 = vcvt.s32.f32 %v851
        %v854 = vcvt.s32.f32 %v852
        %855 = vmin.xlane.f32.xlu0 %v854
        %v856 = vpop.xlane.xlu0 %855
        %vm857 = vcmp.eq.f32.partialorder %v854, %v856
        %v858 = vsel %vm857, %v853, inf
        %859 = vmin.xlane.f32.xlu0 %v858
        %v860 = vpop.xlane.xlu0 %859
        %v861 = vcvt.f32.s32 %v860
        %v862 = vcvt.f32.s32 %v856
        %v863 = vshll.u32 %v862, 16
        %v864 = vadd.s32 %v863, %v861
        %vm865 = vcmp.eq.s32.totalorder %v801, %v819
        %vm866 = vcmp.eq.s32.totalorder %v802, %v834
        %vm867 = vcmp.eq.s32.totalorder %v803, %v849
        %vm868 = vcmp.eq.s32.totalorder %v804, %v864
        %v869 = vsel %vm865, 1.0, 0.0
        %v870 = vsel %vm866, 1.0, 0.0
        %v871 = vsel %vm867, 1.0, 0.0
        %v872 = vsel %vm868, 1.0, 0.0
        %v873 = vpack.c.bf16 %v870, %v869
        %v874 = vpack.c.bf16 %v872, %v871
        %v875 = vsel %vm865, 2147483647, %v801
        %v876 = vsel %vm866, 2147483647, %v802
        %v877 = vsel %vm867, 2147483647, %v803
        %v878 = vsel %vm868, 2147483647, %v804
        %v879 = vsel %vm656, %v875, 2147483647
        %v880 = vand.u32 %v879, 65535
        %v881 = vshra.s32 %v879, 16
        %v882 = vcvt.s32.f32 %v880
        %v883 = vcvt.s32.f32 %v881
        %884 = vmin.xlane.f32.xlu0 %v883
        %v885 = vpop.xlane.xlu0 %884
        %vm886 = vcmp.eq.f32.partialorder %v883, %v885
        %v887 = vsel %vm886, %v882, inf
        %888 = vmin.xlane.f32.xlu0 %v887
        %v889 = vpop.xlane.xlu0 %888
        %v890 = vcvt.f32.s32 %v889
        %v891 = vcvt.f32.s32 %v885
        %v892 = vshll.u32 %v891, 16
        %v893 = vadd.s32 %v892, %v890
        %v894 = vsel %vm656, %v876, 2147483647
        %v895 = vand.u32 %v894, 65535
        %v896 = vshra.s32 %v894, 16
        %v897 = vcvt.s32.f32 %v895
        %v898 = vcvt.s32.f32 %v896
        %899 = vmin.xlane.f32.xlu0 %v898
        %v900 = vpop.xlane.xlu0 %899
        %vm901 = vcmp.eq.f32.partialorder %v898, %v900
        %v902 = vsel %vm901, %v897, inf
        %903 = vmin.xlane.f32.xlu0 %v902
        %v904 = vpop.xlane.xlu0 %903
        %v905 = vcvt.f32.s32 %v904
        %v906 = vcvt.f32.s32 %v900
        %v907 = vshll.u32 %v906, 16
        %v908 = vadd.s32 %v907, %v905
        %v909 = vsel %vm656, %v877, 2147483647
        %v910 = vand.u32 %v909, 65535
        %v911 = vshra.s32 %v909, 16
        %v912 = vcvt.s32.f32 %v910
        %v913 = vcvt.s32.f32 %v911
        %914 = vmin.xlane.f32.xlu0 %v913
        %v915 = vpop.xlane.xlu0 %914
        %vm916 = vcmp.eq.f32.partialorder %v913, %v915
        %v917 = vsel %vm916, %v912, inf
        %918 = vmin.xlane.f32.xlu0 %v917
        %v919 = vpop.xlane.xlu0 %918
        %v920 = vcvt.f32.s32 %v919
        %v921 = vcvt.f32.s32 %v915
        %v922 = vshll.u32 %v921, 16
        %v923 = vadd.s32 %v922, %v920
        %v924 = vsel %vm656, %v878, 2147483647
        %v925 = vand.u32 %v924, 65535
        %v926 = vshra.s32 %v924, 16
        %v927 = vcvt.s32.f32 %v925
        %v928 = vcvt.s32.f32 %v926
        %929 = vmin.xlane.f32.xlu0 %v928
        %v930 = vpop.xlane.xlu0 %929
        %vm931 = vcmp.eq.f32.partialorder %v928, %v930
        %v932 = vsel %vm931, %v927, inf
        %933 = vmin.xlane.f32.xlu0 %v932
        %v934 = vpop.xlane.xlu0 %933
        %v935 = vcvt.f32.s32 %v934
        %v936 = vcvt.f32.s32 %v930
        %v937 = vshll.u32 %v936, 16
        %v938 = vadd.s32 %v937, %v935
        %vm939 = vcmp.eq.s32.totalorder %v875, %v893
        %vm940 = vcmp.eq.s32.totalorder %v876, %v908
        %vm941 = vcmp.eq.s32.totalorder %v877, %v923
        %vm942 = vcmp.eq.s32.totalorder %v878, %v938
        %v943 = vsel %vm939, 1.0, 0.0
        %v944 = vsel %vm940, 1.0, 0.0
        %v945 = vsel %vm941, 1.0, 0.0
        %v946 = vsel %vm942, 1.0, 0.0
        %v947 = vpack.c.bf16 %v944, %v943
        %v948 = vpack.c.bf16 %v946, %v945
        %v949 = vsel %vm939, 2147483647, %v875
        %v950 = vsel %vm940, 2147483647, %v876
        %v951 = vsel %vm941, 2147483647, %v877
        %v952 = vsel %vm942, 2147483647, %v878
        %v953 = vsel %vm656, %v949, 2147483647
        %v954 = vand.u32 %v953, 65535
        %v955 = vshra.s32 %v953, 16
        %v956 = vcvt.s32.f32 %v954
        %v957 = vcvt.s32.f32 %v955
        %958 = vmin.xlane.f32.xlu0 %v957
        %v959 = vpop.xlane.xlu0 %958
        %vm960 = vcmp.eq.f32.partialorder %v957, %v959
        %v961 = vsel %vm960, %v956, inf
        %962 = vmin.xlane.f32.xlu0 %v961
        %v963 = vpop.xlane.xlu0 %962
        %v964 = vcvt.f32.s32 %v963
        %v965 = vcvt.f32.s32 %v959
        %v966 = vshll.u32 %v965, 16
        %v967 = vadd.s32 %v966, %v964
        %v968 = vsel %vm656, %v950, 2147483647
        %v969 = vand.u32 %v968, 65535
        %v970 = vshra.s32 %v968, 16
        %v971 = vcvt.s32.f32 %v969
        %v972 = vcvt.s32.f32 %v970
        %973 = vmin.xlane.f32.xlu0 %v972
        %v974 = vpop.xlane.xlu0 %973
        %vm975 = vcmp.eq.f32.partialorder %v972, %v974
        %v976 = vsel %vm975, %v971, inf
        %977 = vmin.xlane.f32.xlu0 %v976
        %v978 = vpop.xlane.xlu0 %977
        %v979 = vcvt.f32.s32 %v978
        %v980 = vcvt.f32.s32 %v974
        %v981 = vshll.u32 %v980, 16
        %v982 = vadd.s32 %v981, %v979
        %v983 = vsel %vm656, %v951, 2147483647
        %v984 = vand.u32 %v983, 65535
        %v985 = vshra.s32 %v983, 16
        %v986 = vcvt.s32.f32 %v984
        %v987 = vcvt.s32.f32 %v985
        %988 = vmin.xlane.f32.xlu0 %v987
        %v989 = vpop.xlane.xlu0 %988
        %vm990 = vcmp.eq.f32.partialorder %v987, %v989
        %v991 = vsel %vm990, %v986, inf
        %992 = vmin.xlane.f32.xlu0 %v991
        %v993 = vpop.xlane.xlu0 %992
        %v994 = vcvt.f32.s32 %v993
        %v995 = vcvt.f32.s32 %v989
        %v996 = vshll.u32 %v995, 16
        %v997 = vadd.s32 %v996, %v994
        %v998 = vsel %vm656, %v952, 2147483647
        %v999 = vand.u32 %v998, 65535
        %v1000 = vshra.s32 %v998, 16
        %v1001 = vcvt.s32.f32 %v999
        %v1002 = vcvt.s32.f32 %v1000
        %1003 = vmin.xlane.f32.xlu0 %v1002
        %v1004 = vpop.xlane.xlu0 %1003
        %vm1005 = vcmp.eq.f32.partialorder %v1002, %v1004
        %v1006 = vsel %vm1005, %v1001, inf
        %1007 = vmin.xlane.f32.xlu0 %v1006
        %v1008 = vpop.xlane.xlu0 %1007
        %v1009 = vcvt.f32.s32 %v1008
        %v1010 = vcvt.f32.s32 %v1004
        %v1011 = vshll.u32 %v1010, 16
        %v1012 = vadd.s32 %v1011, %v1009
        %vm1013 = vcmp.eq.s32.totalorder %v949, %v967
        %vm1014 = vcmp.eq.s32.totalorder %v950, %v982
        %vm1015 = vcmp.eq.s32.totalorder %v951, %v997
        %vm1016 = vcmp.eq.s32.totalorder %v952, %v1012
        %v1017 = vsel %vm1013, 1.0, 0.0
        %v1018 = vsel %vm1014, 1.0, 0.0
        %v1019 = vsel %vm1015, 1.0, 0.0
        %v1020 = vsel %vm1016, 1.0, 0.0
        %v1021 = vpack.c.bf16 %v1018, %v1017
        %v1022 = vpack.c.bf16 %v1020, %v1019
        %v1023 = vsel %vm1013, 2147483647, %v949
        %v1024 = vsel %vm1014, 2147483647, %v950
        %v1025 = vsel %vm1015, 2147483647, %v951
        %v1026 = vsel %vm1016, 2147483647, %v952
        %v1027 = vsel %vm656, %v1023, 2147483647
        %v1028 = vand.u32 %v1027, 65535
        %v1029 = vshra.s32 %v1027, 16
        %v1030 = vcvt.s32.f32 %v1028
        %v1031 = vcvt.s32.f32 %v1029
        %1032 = vmin.xlane.f32.xlu0 %v1031
        %v1033 = vpop.xlane.xlu0 %1032
        %vm1034 = vcmp.eq.f32.partialorder %v1031, %v1033
        %v1035 = vsel %vm1034, %v1030, inf
        %1036 = vmin.xlane.f32.xlu0 %v1035
        %v1037 = vpop.xlane.xlu0 %1036
        %v1038 = vcvt.f32.s32 %v1037
        %v1039 = vcvt.f32.s32 %v1033
        %v1040 = vshll.u32 %v1039, 16
        %v1041 = vadd.s32 %v1040, %v1038
        %v1042 = vsel %vm656, %v1024, 2147483647
        %v1043 = vand.u32 %v1042, 65535
        %v1044 = vshra.s32 %v1042, 16
        %v1045 = vcvt.s32.f32 %v1043
        %v1046 = vcvt.s32.f32 %v1044
        %1047 = vmin.xlane.f32.xlu0 %v1046
        %v1048 = vpop.xlane.xlu0 %1047
        %vm1049 = vcmp.eq.f32.partialorder %v1046, %v1048
        %v1050 = vsel %vm1049, %v1045, inf
        %1051 = vmin.xlane.f32.xlu0 %v1050
        %v1052 = vpop.xlane.xlu0 %1051
        %v1053 = vcvt.f32.s32 %v1052
        %v1054 = vcvt.f32.s32 %v1048
        %v1055 = vshll.u32 %v1054, 16
        %v1056 = vadd.s32 %v1055, %v1053
        %v1057 = vsel %vm656, %v1025, 2147483647
        %v1058 = vand.u32 %v1057, 65535
        %v1059 = vshra.s32 %v1057, 16
        %v1060 = vcvt.s32.f32 %v1058
        %v1061 = vcvt.s32.f32 %v1059
        %1062 = vmin.xlane.f32.xlu0 %v1061
        %v1063 = vpop.xlane.xlu0 %1062
        %vm1064 = vcmp.eq.f32.partialorder %v1061, %v1063
        %v1065 = vsel %vm1064, %v1060, inf
        %1066 = vmin.xlane.f32.xlu0 %v1065
        %v1067 = vpop.xlane.xlu0 %1066
        %v1068 = vcvt.f32.s32 %v1067
        %v1069 = vcvt.f32.s32 %v1063
        %v1070 = vshll.u32 %v1069, 16
        %v1071 = vadd.s32 %v1070, %v1068
        %v1072 = vsel %vm656, %v1026, 2147483647
        %v1073 = vand.u32 %v1072, 65535
        %v1074 = vshra.s32 %v1072, 16
        %v1075 = vcvt.s32.f32 %v1073
        %v1076 = vcvt.s32.f32 %v1074
        %1077 = vmin.xlane.f32.xlu0 %v1076
        %v1078 = vpop.xlane.xlu0 %1077
        %vm1079 = vcmp.eq.f32.partialorder %v1076, %v1078
        %v1080 = vsel %vm1079, %v1075, inf
        %1081 = vmin.xlane.f32.xlu0 %v1080
        %v1082 = vpop.xlane.xlu0 %1081
        %v1083 = vcvt.f32.s32 %v1082
        %v1084 = vcvt.f32.s32 %v1078
        %v1085 = vshll.u32 %v1084, 16
        %v1086 = vadd.s32 %v1085, %v1083
        %vm1087 = vcmp.eq.s32.totalorder %v1023, %v1041
        %vm1088 = vcmp.eq.s32.totalorder %v1024, %v1056
        %vm1089 = vcmp.eq.s32.totalorder %v1025, %v1071
        %vm1090 = vcmp.eq.s32.totalorder %v1026, %v1086
        %v1091 = vsel %vm1087, 1.0, 0.0
        %v1092 = vsel %vm1088, 1.0, 0.0
        %v1093 = vsel %vm1089, 1.0, 0.0
        %v1094 = vsel %vm1090, 1.0, 0.0
        %v1095 = vpack.c.bf16 %v1092, %v1091
        %v1096 = vpack.c.bf16 %v1094, %v1093
        %v1097 = vsel %vm1087, 2147483647, %v1023
        %v1098 = vsel %vm1088, 2147483647, %v1024
        %v1099 = vsel %vm1089, 2147483647, %v1025
        %v1100 = vsel %vm1090, 2147483647, %v1026
        %v1101 = vsel %vm656, %v1097, 2147483647
        %v1102 = vand.u32 %v1101, 65535
        %v1103 = vshra.s32 %v1101, 16
        %v1104 = vcvt.s32.f32 %v1102
        %v1105 = vcvt.s32.f32 %v1103
        %1106 = vmin.xlane.f32.xlu0 %v1105
        %v1107 = vpop.xlane.xlu0 %1106
        %vm1108 = vcmp.eq.f32.partialorder %v1105, %v1107
        %v1109 = vsel %vm1108, %v1104, inf
        %1110 = vmin.xlane.f32.xlu0 %v1109
        %v1111 = vpop.xlane.xlu0 %1110
        %v1112 = vcvt.f32.s32 %v1111
        %v1113 = vcvt.f32.s32 %v1107
        %v1114 = vshll.u32 %v1113, 16
        %v1115 = vadd.s32 %v1114, %v1112
        %v1116 = vsel %vm656, %v1098, 2147483647
        %v1117 = vand.u32 %v1116, 65535
        %v1118 = vshra.s32 %v1116, 16
        %v1119 = vcvt.s32.f32 %v1117
        %v1120 = vcvt.s32.f32 %v1118
        %1121 = vmin.xlane.f32.xlu0 %v1120
        %v1122 = vpop.xlane.xlu0 %1121
        %vm1123 = vcmp.eq.f32.partialorder %v1120, %v1122
        %v1124 = vsel %vm1123, %v1119, inf
        %1125 = vmin.xlane.f32.xlu0 %v1124
        %v1126 = vpop.xlane.xlu0 %1125
        %v1127 = vcvt.f32.s32 %v1126
        %v1128 = vcvt.f32.s32 %v1122
        %v1129 = vshll.u32 %v1128, 16
        %v1130 = vadd.s32 %v1129, %v1127
        %v1131 = vsel %vm656, %v1099, 2147483647
        %v1132 = vand.u32 %v1131, 65535
        %v1133 = vshra.s32 %v1131, 16
        %v1134 = vcvt.s32.f32 %v1132
        %v1135 = vcvt.s32.f32 %v1133
        %1136 = vmin.xlane.f32.xlu0 %v1135
        %v1137 = vpop.xlane.xlu0 %1136
        %vm1138 = vcmp.eq.f32.partialorder %v1135, %v1137
        %v1139 = vsel %vm1138, %v1134, inf
        %1140 = vmin.xlane.f32.xlu0 %v1139
        %v1141 = vpop.xlane.xlu0 %1140
        %v1142 = vcvt.f32.s32 %v1141
        %v1143 = vcvt.f32.s32 %v1137
        %v1144 = vshll.u32 %v1143, 16
        %v1145 = vadd.s32 %v1144, %v1142
        %v1146 = vsel %vm656, %v1100, 2147483647
        %v1147 = vand.u32 %v1146, 65535
        %v1148 = vshra.s32 %v1146, 16
        %v1149 = vcvt.s32.f32 %v1147
        %v1150 = vcvt.s32.f32 %v1148
        %1151 = vmin.xlane.f32.xlu0 %v1150
        %v1152 = vpop.xlane.xlu0 %1151
        %vm1153 = vcmp.eq.f32.partialorder %v1150, %v1152
        %v1154 = vsel %vm1153, %v1149, inf
        %1155 = vmin.xlane.f32.xlu0 %v1154
        %v1156 = vpop.xlane.xlu0 %1155
        %v1157 = vcvt.f32.s32 %v1156
        %v1158 = vcvt.f32.s32 %v1152
        %v1159 = vshll.u32 %v1158, 16
        %v1160 = vadd.s32 %v1159, %v1157
        %vm1161 = vcmp.eq.s32.totalorder %v1097, %v1115
        %vm1162 = vcmp.eq.s32.totalorder %v1098, %v1130
        %vm1163 = vcmp.eq.s32.totalorder %v1099, %v1145
        %vm1164 = vcmp.eq.s32.totalorder %v1100, %v1160
        %v1165 = vsel %vm1161, 1.0, 0.0
        %v1166 = vsel %vm1162, 1.0, 0.0
        %v1167 = vsel %vm1163, 1.0, 0.0
        %v1168 = vsel %vm1164, 1.0, 0.0
        %v1169 = vpack.c.bf16 %v1166, %v1165
        %v1170 = vpack.c.bf16 %v1168, %v1167
        %v1171 = vsel %vm1161, 2147483647, %v1097
        %v1172 = vsel %vm1162, 2147483647, %v1098
        %v1173 = vsel %vm1163, 2147483647, %v1099
        %v1174 = vsel %vm1164, 2147483647, %v1100
        %v1175 = vsel %vm656, %v1171, 2147483647
        %v1176 = vand.u32 %v1175, 65535
        %v1177 = vshra.s32 %v1175, 16
        %v1178 = vcvt.s32.f32 %v1176
        %v1179 = vcvt.s32.f32 %v1177
        %1180 = vmin.xlane.f32.xlu0 %v1179
        %v1181 = vpop.xlane.xlu0 %1180
        %vm1182 = vcmp.eq.f32.partialorder %v1179, %v1181
        %v1183 = vsel %vm1182, %v1178, inf
        %1184 = vmin.xlane.f32.xlu0 %v1183
        %v1185 = vpop.xlane.xlu0 %1184
        %v1186 = vcvt.f32.s32 %v1185
        %v1187 = vcvt.f32.s32 %v1181
        %v1188 = vshll.u32 %v1187, 16
        %v1189 = vadd.s32 %v1188, %v1186
        %v1190 = vsel %vm656, %v1172, 2147483647
        %v1191 = vand.u32 %v1190, 65535
        %v1192 = vshra.s32 %v1190, 16
        %v1193 = vcvt.s32.f32 %v1191
        %v1194 = vcvt.s32.f32 %v1192
        %1195 = vmin.xlane.f32.xlu0 %v1194
        %v1196 = vpop.xlane.xlu0 %1195
        %vm1197 = vcmp.eq.f32.partialorder %v1194, %v1196
        %v1198 = vsel %vm1197, %v1193, inf
        %1199 = vmin.xlane.f32.xlu0 %v1198
        %v1200 = vpop.xlane.xlu0 %1199
        %v1201 = vcvt.f32.s32 %v1200
        %v1202 = vcvt.f32.s32 %v1196
        %v1203 = vshll.u32 %v1202, 16
        %v1204 = vadd.s32 %v1203, %v1201
        %v1205 = vsel %vm656, %v1173, 2147483647
        %v1206 = vand.u32 %v1205, 65535
        %v1207 = vshra.s32 %v1205, 16
        %v1208 = vcvt.s32.f32 %v1206
        %v1209 = vcvt.s32.f32 %v1207
        %1210 = vmin.xlane.f32.xlu0 %v1209
        %v1211 = vpop.xlane.xlu0 %1210
        %vm1212 = vcmp.eq.f32.partialorder %v1209, %v1211
        %v1213 = vsel %vm1212, %v1208, inf
        %1214 = vmin.xlane.f32.xlu0 %v1213
        %v1215 = vpop.xlane.xlu0 %1214
        %v1216 = vcvt.f32.s32 %v1215
        %v1217 = vcvt.f32.s32 %v1211
        %v1218 = vshll.u32 %v1217, 16
        %v1219 = vadd.s32 %v1218, %v1216
        %v1220 = vsel %vm656, %v1174, 2147483647
        %v1221 = vand.u32 %v1220, 65535
        %v1222 = vshra.s32 %v1220, 16
        %v1223 = vcvt.s32.f32 %v1221
        %v1224 = vcvt.s32.f32 %v1222
        %1225 = vmin.xlane.f32.xlu0 %v1224
        %v1226 = vpop.xlane.xlu0 %1225
        %vm1227 = vcmp.eq.f32.partialorder %v1224, %v1226
        %v1228 = vsel %vm1227, %v1223, inf
        %1229 = vmin.xlane.f32.xlu0 %v1228
        %v1230 = vpop.xlane.xlu0 %1229
        %v1231 = vcvt.f32.s32 %v1230
        %v1232 = vcvt.f32.s32 %v1226
        %v1233 = vshll.u32 %v1232, 16
        %v1234 = vadd.s32 %v1233, %v1231
        %vm1235 = vcmp.eq.s32.totalorder %v1171, %v1189
        %vm1236 = vcmp.eq.s32.totalorder %v1172, %v1204
        %vm1237 = vcmp.eq.s32.totalorder %v1173, %v1219
        %vm1238 = vcmp.eq.s32.totalorder %v1174, %v1234
        %v1239 = vsel %vm1235, 1.0, 0.0
        %v1240 = vsel %vm1236, 1.0, 0.0
        %v1241 = vsel %vm1237, 1.0, 0.0
        %v1242 = vsel %vm1238, 1.0, 0.0
        %v1243 = vpack.c.bf16 %v1240, %v1239
        %v1244 = vpack.c.bf16 %v1242, %v1241
        %v1245 = vld [vmem:[%s4] sm:$0xff]
        %v1246 = vld [vmem:[%s4 + $0x8] sm:$0xff]
        %v1247 = vld [vmem:[%s4 + $0x10] sm:$0xff]
        %v1248 = vld [vmem:[%s4 + $0x18] sm:$0xff]
        %v1249 = vld [vmem:[%s4 + $0x20] sm:$0x7]
        %v1250 = vld [vmem:[%s5] sm:$0xff]
        %v1251 = vld [vmem:[%s5 + $0x8] sm:$0xff]
        %v1252 = vld [vmem:[%s5 + $0x10] sm:$0xff]
        %v1253 = vld [vmem:[%s5 + $0x18] sm:$0xff]
        %v1254 = vld [vmem:[%s5 + $0x20] sm:$0x7]
        %v1255 = vld [vmem:[%s6] sm:$0x1]
        %vm1256 = vcmask 285696
        %v1258 = vsel %vm1256, %v538, 0
        %v1261 = vsel %vm1256, %v539, 0
        %v1264 = vsel %vm1256, %v540, 0
        %v1267 = vsel %vm1256, %v541, 0
        %v1270 = vsel %vm1256, %v542, 0
        %v1273 = vsel %vm1256, %v543, 0
        %v1276 = vsel %vm1256, %v544, 0
        %v1279 = vsel %vm1256, %v545, 0
        %vm1281 = vcmask 1042432
        %v1283 = vsel %vm1281, %v1249, 0
        %1285 = vmatprep.subr.mxu0 0.0
        %1286 = vmatpush1.msra.mxu0 %v1245
        %1287 = vmatprep.subr.mxu0 0.0
        %1288 = vmatpush1.msra.mxu0 %v1246
        %1289 = vmatprep.subr.mxu0 0.0
        %1290 = vmatpush1.msra.mxu0 %v1247
        %1291 = vmatprep.subr.mxu0 0.0
        %1292 = vmatpush1.msra.mxu0 %v1248
        %1293 = vmatprep.subr.mxu0 0.0
        %1294 = vmatpush1.msra.mxu0 %v1283
        %1295 = vmatprep.subr.mxu0 0.0
        %1296 = vmatpush1.msra.mxu0 0.0
        %1297 = vmatprep.subr.mxu0 0.0
        %1298 = vmatpush1.msra.mxu0 0.0
        %1299 = vmatprep.subr.mxu0 0.0
        %1300 = vmatpush1.msra.mxu0 0.0
        %1301 = vmatprep.subr.mxu0 0.0
        %1302 = vmatpush1.msra.mxu0 0.0
        %1303 = vmatprep.subr.mxu0 0.0
        %1304 = vmatpush1.msra.mxu0 0.0
        %1305 = vmatprep.subr.mxu0 0.0
        %1306 = vmatpush1.msra.mxu0 0.0
        %1307 = vmatprep.subr.mxu0 0.0
        %1308 = vmatpush1.msra.mxu0 0.0
        %1309 = vmatprep.subr.mxu0 0.0
        %1310 = vmatpush1.msra.mxu0 0.0
        %1311 = vmatprep.subr.mxu0 0.0
        %1312 = vmatpush1.msra.mxu0 0.0
        %1313 = vmatprep.subr.mxu0 0.0
        %1314 = vmatpush1.msra.mxu0 0.0
        %1315 = vmatprep.subr.mxu0 0.0
        %1316 = vmatpush1.msra.mxu0 0.0
        %1317 = vmatprep.subr.mxu0 0.0
        %1318 = vmatpush1.msra.mxu0 0.0
        %1319 = vmatprep.subr.mxu0 0.0
        %1320 = vmatpush1.msra.mxu0 0.0
        %1321 = vmatprep.subr.mxu0 0.0
        %1322 = vmatpush1.msra.mxu0 0.0
        %1323 = vmatprep.subr.mxu0 0.0
        %1324 = vmatpush1.msra.mxu0 0.0
        %1325 = vmatprep.subr.mxu0 0.0
        %1326 = vmatpush1.msra.mxu0 0.0
        %1327 = vmatprep.subr.mxu0 0.0
        %1328 = vmatpush1.msra.mxu0 0.0
        %1329 = vmatprep.subr.mxu0 0.0
        %1330 = vmatpush1.msra.mxu0 0.0
        %1331 = vmatprep.subr.mxu0 0.0
        %1332 = vmatpush1.msra.mxu0 0.0
        %1333 = vmatprep.subr.mxu0 0.0
        %1334 = vmatpush1.msra.mxu0 0.0
        %1335 = vmatprep.subr.mxu0 0.0
        %1336 = vmatpush1.msra.mxu0 0.0
        %1337 = vmatprep.subr.mxu0 0.0
        %1338 = vmatpush1.msra.mxu0 0.0
        %1339 = vmatprep.subr.mxu0 0.0
        %1340 = vmatpush1.msra.mxu0 0.0
        %1341 = vmatprep.subr.mxu0 0.0
        %1342 = vmatpush1.msra.mxu0 0.0
        %1343 = vmatprep.subr.mxu0 0.0
        %1344 = vmatpush1.msra.mxu0 0.0
        %1345 = vmatprep.subr.mxu0 0.0
        %1346 = vmatpush1.msra.mxu0 0.0
        %1347 = vmatprep.subr.mxu0 0.0
        %1348 = vmatpush1.msra.mxu0 0.0
        %1349 = vmatprep.mubr.f32.mxu0 0.0
        %1350 = vmatmul.mubr.f32.gmra.mrb[0].mxu0 %v1258
        %v1351 = vpop.f32.mrb[0].mxu0
        %v1352 = vadd.f32 0.0, %v1351
        %v1353 = vpop.f32.mrb[0].mxu0
        %1354 = vmatprep.mubr.f32.mxu0 0.0
        %1355 = vmatmul.mubr.f32.gmra.mrb[0].mxu0 %v1261
        %v1356 = vpop.f32.mrb[0].mxu0
        %v1357 = vadd.f32 0.0, %v1356
        %v1358 = vpop.f32.mrb[0].mxu0
        %1359 = vmatprep.mubr.f32.mxu0 0.0
        %1360 = vmatmul.mubr.f32.gmra.mrb[0].mxu0 %v1264
        %v1361 = vpop.f32.mrb[0].mxu0
        %v1362 = vadd.f32 0.0, %v1361
        %v1363 = vpop.f32.mrb[0].mxu0
        %1364 = vmatprep.mubr.f32.mxu0 0.0
        %1365 = vmatmul.mubr.f32.gmra.mrb[0].mxu0 %v1267
        %v1366 = vpop.f32.mrb[0].mxu0
        %v1367 = vadd.f32 0.0, %v1366
        %v1368 = vpop.f32.mrb[0].mxu0
        %1369 = vmatprep.mubr.f32.mxu0 0.0
        %1370 = vmatmul.mubr.f32.gmra.mrb[0].mxu0 %v1270
        %v1371 = vpop.f32.mrb[0].mxu0
        %v1372 = vadd.f32 0.0, %v1371
        %v1373 = vpop.f32.mrb[0].mxu0
        %1374 = vmatprep.mubr.f32.mxu0 0.0
        %1375 = vmatmul.mubr.f32.gmra.mrb[0].mxu0 %v1273
        %v1376 = vpop.f32.mrb[0].mxu0
        %v1377 = vadd.f32 0.0, %v1376
        %v1378 = vpop.f32.mrb[0].mxu0
        %1379 = vmatprep.mubr.f32.mxu0 0.0
        %1380 = vmatmul.mubr.f32.gmra.mrb[0].mxu0 %v1276
        %v1381 = vpop.f32.mrb[0].mxu0
        %v1382 = vadd.f32 0.0, %v1381
        %v1383 = vpop.f32.mrb[0].mxu0
        %1384 = vmatprep.mubr.f32.mxu0 0.0
        %1385 = vmatmul.mubr.f32.gmra.mrb[0].mxu0 %v1279
        %v1386 = vpop.f32.mrb[0].mxu0
        %v1387 = vadd.f32 0.0, %v1386
        %v1388 = vpop.f32.mrb[0].mxu0
        %1389 = vdwg.mxu0
        %v1391 = vlaneseq
        %v1392 = vshrl.u32 %v1391, 7
        %v1393 = vsub.s32 0, %v1392
        %v1394 = vrot.slane %v1255, %v1393
        %v1397 = vsel %vm1256, %v534, 0
        %v1400 = vsel %vm1256, %v535, 0
        %v1403 = vsel %vm1256, %v536, 0
        %v1406 = vsel %vm1256, %v537, 0
        %v1409 = vsel %vm1281, %v1254, 0
        %1411 = vmatprep.subr.mxu0 0.0
        %1412 = vmatpush1.msra.mxu0 %v1250
        %1413 = vmatprep.subr.mxu0 0.0
        %1414 = vmatpush1.msra.mxu0 %v1251
        %1415 = vmatprep.subr.mxu0 0.0
        %1416 = vmatpush1.msra.mxu0 %v1252
        %1417 = vmatprep.subr.mxu0 0.0
        %1418 = vmatpush1.msra.mxu0 %v1253
        %1419 = vmatprep.subr.mxu0 0.0
        %1420 = vmatpush1.msra.mxu0 %v1409
        %1421 = vmatprep.subr.mxu0 0.0
        %1422 = vmatpush1.msra.mxu0 0.0
        %1423 = vmatprep.subr.mxu0 0.0
        %1424 = vmatpush1.msra.mxu0 0.0
        %1425 = vmatprep.subr.mxu0 0.0
        %1426 = vmatpush1.msra.mxu0 0.0
        %1427 = vmatprep.subr.mxu0 0.0
        %1428 = vmatpush1.msra.mxu0 0.0
        %1429 = vmatprep.subr.mxu0 0.0
        %1430 = vmatpush1.msra.mxu0 0.0
        %1431 = vmatprep.subr.mxu0 0.0
        %1432 = vmatpush1.msra.mxu0 0.0
        %1433 = vmatprep.subr.mxu0 0.0
        %1434 = vmatpush1.msra.mxu0 0.0
        %1435 = vmatprep.subr.mxu0 0.0
        %1436 = vmatpush1.msra.mxu0 0.0
        %1437 = vmatprep.subr.mxu0 0.0
        %1438 = vmatpush1.msra.mxu0 0.0
        %1439 = vmatprep.subr.mxu0 0.0
        %1440 = vmatpush1.msra.mxu0 0.0
        %1441 = vmatprep.subr.mxu0 0.0
        %1442 = vmatpush1.msra.mxu0 0.0
        %1443 = vmatprep.subr.mxu0 0.0
        %1444 = vmatpush1.msra.mxu0 0.0
        %1445 = vmatprep.subr.mxu0 0.0
        %1446 = vmatpush1.msra.mxu0 0.0
        %1447 = vmatprep.subr.mxu0 0.0
        %1448 = vmatpush1.msra.mxu0 0.0
        %1449 = vmatprep.subr.mxu0 0.0
        %1450 = vmatpush1.msra.mxu0 0.0
        %1451 = vmatprep.subr.mxu0 0.0
        %1452 = vmatpush1.msra.mxu0 0.0
        %1453 = vmatprep.subr.mxu0 0.0
        %1454 = vmatpush1.msra.mxu0 0.0
        %1455 = vmatprep.subr.mxu0 0.0
        %1456 = vmatpush1.msra.mxu0 0.0
        %1457 = vmatprep.subr.mxu0 0.0
        %1458 = vmatpush1.msra.mxu0 0.0
        %1459 = vmatprep.subr.mxu0 0.0
        %1460 = vmatpush1.msra.mxu0 0.0
        %1461 = vmatprep.subr.mxu0 0.0
        %1462 = vmatpush1.msra.mxu0 0.0
        %1463 = vmatprep.subr.mxu0 0.0
        %1464 = vmatpush1.msra.mxu0 0.0
        %1465 = vmatprep.subr.mxu0 0.0
        %1466 = vmatpush1.msra.mxu0 0.0
        %1467 = vmatprep.subr.mxu0 0.0
        %1468 = vmatpush1.msra.mxu0 0.0
        %1469 = vmatprep.subr.mxu0 0.0
        %1470 = vmatpush1.msra.mxu0 0.0
        %1471 = vmatprep.subr.mxu0 0.0
        %1472 = vmatpush1.msra.mxu0 0.0
        %1473 = vmatprep.subr.mxu0 0.0
        %1474 = vmatpush1.msra.mxu0 0.0
        %1475 = vmatprep.mubr.f32.mxu0 0.0
        %1476 = vmatmul.mubr.f32.gmra.mrb[0].mxu0 %v1397
        %v1477 = vpop.f32.mrb[0].mxu0
        %v1478 = vadd.f32 %v1394, %v1477
        %v1479 = vpop.f32.mrb[0].mxu0
        %1480 = vmatprep.mubr.f32.mxu0 0.0
        %1481 = vmatmul.mubr.f32.gmra.mrb[0].mxu0 %v1400
        %v1482 = vpop.f32.mrb[0].mxu0
        %v1483 = vadd.f32 %v1394, %v1482
        %v1484 = vpop.f32.mrb[0].mxu0
        %1485 = vmatprep.mubr.f32.mxu0 0.0
        %1486 = vmatmul.mubr.f32.gmra.mrb[0].mxu0 %v1403
        %v1487 = vpop.f32.mrb[0].mxu0
        %v1488 = vadd.f32 %v1394, %v1487
        %v1489 = vpop.f32.mrb[0].mxu0
        %1490 = vmatprep.mubr.f32.mxu0 0.0
        %1491 = vmatmul.mubr.f32.gmra.mrb[0].mxu0 %v1406
        %v1492 = vpop.f32.mrb[0].mxu0
        %v1493 = vadd.f32 %v1394, %v1492
        %v1494 = vpop.f32.mrb[0].mxu0
        %1495 = vdwg.mxu0
        %v1496 = vpack.c.bf16 %v1357, %v1352
        %v1497 = vpack.c.bf16 %v1367, %v1362
        %v1498 = vpack.c.bf16 %v1377, %v1372
        %v1499 = vpack.c.bf16 %v1387, %v1382
        %v1501 = vsel %vm656, %v725, 0
        %v1504 = vsel %vm656, %v726, 0
        %v1507 = vsel %vm656, %v799, 0
        %v1510 = vsel %vm656, %v800, 0
        %v1513 = vsel %vm656, %v873, 0
        %v1516 = vsel %vm656, %v874, 0
        %v1519 = vsel %vm656, %v947, 0
        %v1522 = vsel %vm656, %v948, 0
        %v1525 = vsel %vm656, %v1021, 0
        %v1528 = vsel %vm656, %v1022, 0
        %v1531 = vsel %vm656, %v1095, 0
        %v1534 = vsel %vm656, %v1096, 0
        %v1537 = vsel %vm656, %v1169, 0
        %v1540 = vsel %vm656, %v1170, 0
        %v1543 = vsel %vm656, %v1243, 0
        %v1546 = vsel %vm656, %v1244, 0
        %1548 = vmatprep.subr.bf16.mxu0 0
        %1549 = vmatpush1.bf16.msra.mxu0 %v1496
        %1550 = vmatprep.subr.bf16.mxu0 0
        %1551 = vmatpush1.bf16.msra.mxu0 %v1497
        %1552 = vmatprep.subr.bf16.mxu0 0
        %1553 = vmatpush1.bf16.msra.mxu0 %v1498
        %1554 = vmatprep.subr.bf16.mxu0 0
        %1555 = vmatpush1.bf16.msra.mxu0 %v1499
        %1556 = vmatprep.subr.bf16.mxu0 0
        %1557 = vmatpush1.bf16.msra.mxu0 0
        %1558 = vmatprep.subr.bf16.mxu0 0
        %1559 = vmatpush1.bf16.msra.mxu0 0
        %1560 = vmatprep.subr.bf16.mxu0 0
        %1561 = vmatpush1.bf16.msra.mxu0 0
        %1562 = vmatprep.subr.bf16.mxu0 0
        %1563 = vmatpush1.bf16.msra.mxu0 0
        %1564 = vmatprep.subr.bf16.mxu0 0
        %1565 = vmatpush1.bf16.msra.mxu0 0
        %1566 = vmatprep.subr.bf16.mxu0 0
        %1567 = vmatpush1.bf16.msra.mxu0 0
        %1568 = vmatprep.subr.bf16.mxu0 0
        %1569 = vmatpush1.bf16.msra.mxu0 0
        %1570 = vmatprep.subr.bf16.mxu0 0
        %1571 = vmatpush1.bf16.msra.mxu0 0
        %1572 = vmatprep.subr.bf16.mxu0 0
        %1573 = vmatpush1.bf16.msra.mxu0 0
        %1574 = vmatprep.subr.bf16.mxu0 0
        %1575 = vmatpush1.bf16.msra.mxu0 0
        %1576 = vmatprep.subr.bf16.mxu0 0
        %1577 = vmatpush1.bf16.msra.mxu0 0
        %1578 = vmatprep.subr.bf16.mxu0 0
        %1579 = vmatpush1.bf16.msra.mxu0 0
        %1580 = vmatprep.mubr.bf16.mxu0 0
        %1581 = vmatmul.mubr.bf16.gmra.mrb[0].mxu0 %v1501
        %v1582 = vpop.f32.mrb[0].mxu0
        %v1583 = vadd.f32 %v1478, %v1582
        %v1584 = vpop.f32.mrb[0].mxu0
        %v1585 = vpop.f32.mrb[0].mxu0
        %v1586 = vadd.f32 %v1483, %v1585
        %v1587 = vpop.f32.mrb[0].mxu0
        %1588 = vmatprep.mubr.bf16.mxu0 0
        %1589 = vmatmul.mubr.bf16.gmra.mrb[0].mxu0 %v1504
        %v1590 = vpop.f32.mrb[0].mxu0
        %v1591 = vadd.f32 %v1488, %v1590
        %v1592 = vpop.f32.mrb[0].mxu0
        %v1593 = vpop.f32.mrb[0].mxu0
        %v1594 = vadd.f32 %v1493, %v1593
        %v1595 = vpop.f32.mrb[0].mxu0
        %1596 = vmatprep.mubr.bf16.mxu0 0
        %1597 = vmatmul.mubr.bf16.gmra.mrb[0].mxu0 %v1507
        %v1598 = vpop.f32.mrb[0].mxu0
        %v1599 = vadd.f32 %v1478, %v1598
        %v1600 = vpop.f32.mrb[0].mxu0
        %v1601 = vpop.f32.mrb[0].mxu0
        %v1602 = vadd.f32 %v1483, %v1601
        %v1603 = vpop.f32.mrb[0].mxu0
        %1604 = vmatprep.mubr.bf16.mxu0 0
        %1605 = vmatmul.mubr.bf16.gmra.mrb[0].mxu0 %v1510
        %v1606 = vpop.f32.mrb[0].mxu0
        %v1607 = vadd.f32 %v1488, %v1606
        %v1608 = vpop.f32.mrb[0].mxu0
        %v1609 = vpop.f32.mrb[0].mxu0
        %v1610 = vadd.f32 %v1493, %v1609
        %v1611 = vpop.f32.mrb[0].mxu0
        %1612 = vmatprep.mubr.bf16.mxu0 0
        %1613 = vmatmul.mubr.bf16.gmra.mrb[0].mxu0 %v1513
        %v1614 = vpop.f32.mrb[0].mxu0
        %v1615 = vadd.f32 %v1478, %v1614
        %v1616 = vpop.f32.mrb[0].mxu0
        %v1617 = vpop.f32.mrb[0].mxu0
        %v1618 = vadd.f32 %v1483, %v1617
        %v1619 = vpop.f32.mrb[0].mxu0
        %1620 = vmatprep.mubr.bf16.mxu0 0
        %1621 = vmatmul.mubr.bf16.gmra.mrb[0].mxu0 %v1516
        %v1622 = vpop.f32.mrb[0].mxu0
        %v1623 = vadd.f32 %v1488, %v1622
        %v1624 = vpop.f32.mrb[0].mxu0
        %v1625 = vpop.f32.mrb[0].mxu0
        %v1626 = vadd.f32 %v1493, %v1625
        %v1627 = vpop.f32.mrb[0].mxu0
        %1628 = vmatprep.mubr.bf16.mxu0 0
        %1629 = vmatmul.mubr.bf16.gmra.mrb[0].mxu0 %v1519
        %v1630 = vpop.f32.mrb[0].mxu0
        %v1631 = vadd.f32 %v1478, %v1630
        %v1632 = vpop.f32.mrb[0].mxu0
        %v1633 = vpop.f32.mrb[0].mxu0
        %v1634 = vadd.f32 %v1483, %v1633
        %v1635 = vpop.f32.mrb[0].mxu0
        %1636 = vmatprep.mubr.bf16.mxu0 0
        %1637 = vmatmul.mubr.bf16.gmra.mrb[0].mxu0 %v1522
        %v1638 = vpop.f32.mrb[0].mxu0
        %v1639 = vadd.f32 %v1488, %v1638
        %v1640 = vpop.f32.mrb[0].mxu0
        %v1641 = vpop.f32.mrb[0].mxu0
        %v1642 = vadd.f32 %v1493, %v1641
        %v1643 = vpop.f32.mrb[0].mxu0
        %1644 = vmatprep.mubr.bf16.mxu0 0
        %1645 = vmatmul.mubr.bf16.gmra.mrb[0].mxu0 %v1525
        %v1646 = vpop.f32.mrb[0].mxu0
        %v1647 = vadd.f32 %v1478, %v1646
        %v1648 = vpop.f32.mrb[0].mxu0
        %v1649 = vpop.f32.mrb[0].mxu0
        %v1650 = vadd.f32 %v1483, %v1649
        %v1651 = vpop.f32.mrb[0].mxu0
        %1652 = vmatprep.mubr.bf16.mxu0 0
        %1653 = vmatmul.mubr.bf16.gmra.mrb[0].mxu0 %v1528
        %v1654 = vpop.f32.mrb[0].mxu0
        %v1655 = vadd.f32 %v1488, %v1654
        %v1656 = vpop.f32.mrb[0].mxu0
        %v1657 = vpop.f32.mrb[0].mxu0
        %v1658 = vadd.f32 %v1493, %v1657
        %v1659 = vpop.f32.mrb[0].mxu0
        %1660 = vmatprep.mubr.bf16.mxu0 0
        %1661 = vmatmul.mubr.bf16.gmra.mrb[0].mxu0 %v1531
        %v1662 = vpop.f32.mrb[0].mxu0
        %v1663 = vadd.f32 %v1478, %v1662
        %v1664 = vpop.f32.mrb[0].mxu0
        %v1665 = vpop.f32.mrb[0].mxu0
        %v1666 = vadd.f32 %v1483, %v1665
        %v1667 = vpop.f32.mrb[0].mxu0
        %1668 = vmatprep.mubr.bf16.mxu0 0
        %1669 = vmatmul.mubr.bf16.gmra.mrb[0].mxu0 %v1534
        %v1670 = vpop.f32.mrb[0].mxu0
        %v1671 = vadd.f32 %v1488, %v1670
        %v1672 = vpop.f32.mrb[0].mxu0
        %v1673 = vpop.f32.mrb[0].mxu0
        %v1674 = vadd.f32 %v1493, %v1673
        %v1675 = vpop.f32.mrb[0].mxu0
        %1676 = vmatprep.mubr.bf16.mxu0 0
        %1677 = vmatmul.mubr.bf16.gmra.mrb[0].mxu0 %v1537
        %v1678 = vpop.f32.mrb[0].mxu0
        %v1679 = vadd.f32 %v1478, %v1678
        %v1680 = vpop.f32.mrb[0].mxu0
        %v1681 = vpop.f32.mrb[0].mxu0
        %v1682 = vadd.f32 %v1483, %v1681
        %v1683 = vpop.f32.mrb[0].mxu0
        %1684 = vmatprep.mubr.bf16.mxu0 0
        %1685 = vmatmul.mubr.bf16.gmra.mrb[0].mxu0 %v1540
        %v1686 = vpop.f32.mrb[0].mxu0
        %v1687 = vadd.f32 %v1488, %v1686
        %v1688 = vpop.f32.mrb[0].mxu0
        %v1689 = vpop.f32.mrb[0].mxu0
        %v1690 = vadd.f32 %v1493, %v1689
        %v1691 = vpop.f32.mrb[0].mxu0
        %1692 = vmatprep.mubr.bf16.mxu0 0
        %1693 = vmatmul.mubr.bf16.gmra.mrb[0].mxu0 %v1543
        %v1694 = vpop.f32.mrb[0].mxu0
        %v1695 = vadd.f32 %v1478, %v1694
        %v1696 = vpop.f32.mrb[0].mxu0
        %v1697 = vpop.f32.mrb[0].mxu0
        %v1698 = vadd.f32 %v1483, %v1697
        %v1699 = vpop.f32.mrb[0].mxu0
        %1700 = vmatprep.mubr.bf16.mxu0 0
        %1701 = vmatmul.mubr.bf16.gmra.mrb[0].mxu0 %v1546
        %v1702 = vpop.f32.mrb[0].mxu0
        %v1703 = vadd.f32 %v1488, %v1702
        %v1704 = vpop.f32.mrb[0].mxu0
        %v1705 = vpop.f32.mrb[0].mxu0
        %v1706 = vadd.f32 %v1493, %v1705
        %v1707 = vpop.f32.mrb[0].mxu0
        %1708 = vdwg.mxu0
        %v1709 = vmax.f32 %v1583, 0.0
        %v1710 = vmax.f32 %v1586, 0.0
        %v1711 = vmax.f32 %v1591, 0.0
        %v1712 = vmax.f32 %v1594, 0.0
        %v1713 = vmax.f32 %v1599, 0.0
        %v1714 = vmax.f32 %v1602, 0.0
        %v1715 = vmax.f32 %v1607, 0.0
        %v1716 = vmax.f32 %v1610, 0.0
        %v1717 = vmax.f32 %v1615, 0.0
        %v1718 = vmax.f32 %v1618, 0.0
        %v1719 = vmax.f32 %v1623, 0.0
        %v1720 = vmax.f32 %v1626, 0.0
        %v1721 = vmax.f32 %v1631, 0.0
        %v1722 = vmax.f32 %v1634, 0.0
        %v1723 = vmax.f32 %v1639, 0.0
        %v1724 = vmax.f32 %v1642, 0.0
        %v1725 = vmax.f32 %v1647, 0.0
        %v1726 = vmax.f32 %v1650, 0.0
        %v1727 = vmax.f32 %v1655, 0.0
        %v1728 = vmax.f32 %v1658, 0.0
        %v1729 = vmax.f32 %v1663, 0.0
        %v1730 = vmax.f32 %v1666, 0.0
        %v1731 = vmax.f32 %v1671, 0.0
        %v1732 = vmax.f32 %v1674, 0.0
        %v1733 = vmax.f32 %v1679, 0.0
        %v1734 = vmax.f32 %v1682, 0.0
        %v1735 = vmax.f32 %v1687, 0.0
        %v1736 = vmax.f32 %v1690, 0.0
        %v1737 = vmax.f32 %v1695, 0.0
        %v1738 = vmax.f32 %v1698, 0.0
        %v1739 = vmax.f32 %v1703, 0.0
        %v1740 = vmax.f32 %v1706, 0.0
        %v1741 = vld [vmem:[%s7] sm:$0xf]
        %v1742 = vld [vmem:[%s7 + $0x4] sm:$0xf]
        %v1743 = vld [vmem:[%s7 + $0x8] sm:$0xf]
        %v1744 = vld [vmem:[%s7 + $0xc] sm:$0xf]
        %v1745 = vld [vmem:[%s8] sm:$0x1]
        %v1746 = vpack.c.bf16 %v1710, %v1709
        %v1747 = vpack.c.bf16 %v1712, %v1711
        %v1748 = vpack.c.bf16 %v1714, %v1713
        %v1749 = vpack.c.bf16 %v1716, %v1715
        %v1750 = vpack.c.bf16 %v1718, %v1717
        %v1751 = vpack.c.bf16 %v1720, %v1719
        %v1752 = vpack.c.bf16 %v1722, %v1721
        %v1753 = vpack.c.bf16 %v1724, %v1723
        %v1754 = vpack.c.bf16 %v1726, %v1725
        %v1755 = vpack.c.bf16 %v1728, %v1727
        %v1756 = vpack.c.bf16 %v1730, %v1729
        %v1757 = vpack.c.bf16 %v1732, %v1731
        %v1758 = vpack.c.bf16 %v1734, %v1733
        %v1759 = vpack.c.bf16 %v1736, %v1735
        %v1760 = vpack.c.bf16 %v1738, %v1737
        %v1761 = vpack.c.bf16 %v1740, %v1739
        %v1763 = vlaneseq
        %v1764 = vshrl.u32 %v1763, 7
        %v1765 = vsub.s32 0, %v1764
        %v1766 = vrot.slane %v1745, %v1765
        %v1772 = vunpack.c.l.b16 %v1741
        %v1773 = vunpack.c.l.b16 %v1742
        %v1774 = vunpack.c.l.b16 %v1743
        %v1775 = vunpack.c.l.b16 %v1744
        %v1776 = vpack.c.b16 %v1773, %v1772
        %v1777 = vpack.c.b16 %v1775, %v1774
        %vm1780 = vcmask 261120
        %v1782 = vsel %vm1780, %v1746, 0
        %v1785 = vsel %vm1780, %v1747, 0
        %v1788 = vsel %vm1780, %v1748, 0
        %v1791 = vsel %vm1780, %v1749, 0
        %v1794 = vsel %vm1780, %v1750, 0
        %v1797 = vsel %vm1780, %v1751, 0
        %v1800 = vsel %vm1780, %v1752, 0
        %v1803 = vsel %vm1780, %v1753, 0
        %v1806 = vsel %vm1780, %v1754, 0
        %v1809 = vsel %vm1780, %v1755, 0
        %v1812 = vsel %vm1780, %v1756, 0
        %v1815 = vsel %vm1780, %v1757, 0
        %v1818 = vsel %vm1780, %v1758, 0
        %v1821 = vsel %vm1780, %v1759, 0
        %v1824 = vsel %vm1780, %v1760, 0
        %v1827 = vsel %vm1780, %v1761, 0
        %1829 = vmatprep.subr.bf16.mxu0 0
        %1830 = vmatpush1.bf16.msra.mxu0 %v1776
        %1831 = vmatprep.subr.bf16.mxu0 0
        %1832 = vmatpush1.bf16.msra.mxu0 %v1777
        %1833 = vmatprep.subr.bf16.mxu0 0
        %1834 = vmatpush1.bf16.msra.mxu0 0
        %1835 = vmatprep.subr.bf16.mxu0 0
        %1836 = vmatpush1.bf16.msra.mxu0 0
        %1837 = vmatprep.subr.bf16.mxu0 0
        %1838 = vmatpush1.bf16.msra.mxu0 0
        %1839 = vmatprep.subr.bf16.mxu0 0
        %1840 = vmatpush1.bf16.msra.mxu0 0
        %1841 = vmatprep.subr.bf16.mxu0 0
        %1842 = vmatpush1.bf16.msra.mxu0 0
        %1843 = vmatprep.subr.bf16.mxu0 0
        %1844 = vmatpush1.bf16.msra.mxu0 0
        %1845 = vmatprep.subr.bf16.mxu0 0
        %1846 = vmatpush1.bf16.msra.mxu0 0
        %1847 = vmatprep.subr.bf16.mxu0 0
        %1848 = vmatpush1.bf16.msra.mxu0 0
        %1849 = vmatprep.subr.bf16.mxu0 0
        %1850 = vmatpush1.bf16.msra.mxu0 0
        %1851 = vmatprep.subr.bf16.mxu0 0
        %1852 = vmatpush1.bf16.msra.mxu0 0
        %1853 = vmatprep.subr.bf16.mxu0 0
        %1854 = vmatpush1.bf16.msra.mxu0 0
        %1855 = vmatprep.subr.bf16.mxu0 0
        %1856 = vmatpush1.bf16.msra.mxu0 0
        %1857 = vmatprep.subr.bf16.mxu0 0
        %1858 = vmatpush1.bf16.msra.mxu0 0
        %1859 = vmatprep.subr.bf16.mxu0 0
        %1860 = vmatpush1.bf16.msra.mxu0 0
        %1861 = vmatprep.mubr.bf16.mxu0 0
        %1862 = vmatmul.mubr.bf16.gmra.mrb[0].mxu0 %v1782
        %v1863 = vpop.f32.mrb[0].mxu0
        %v1864 = vadd.f32 %v1766, %v1863
        %v1865 = vpop.f32.mrb[0].mxu0
        %v1866 = vpop.f32.mrb[0].mxu0
        %v1867 = vadd.f32 %v1766, %v1866
        %v1868 = vpop.f32.mrb[0].mxu0
        %1869 = vmatprep.mubr.bf16.mxu0 0
        %1870 = vmatmul.mubr.bf16.gmra.mrb[0].mxu0 %v1785
        %v1871 = vpop.f32.mrb[0].mxu0
        %v1872 = vadd.f32 %v1766, %v1871
        %v1873 = vpop.f32.mrb[0].mxu0
        %v1874 = vpop.f32.mrb[0].mxu0
        %v1875 = vadd.f32 %v1766, %v1874
        %v1876 = vpop.f32.mrb[0].mxu0
        %1877 = vmatprep.mubr.bf16.mxu0 0
        %1878 = vmatmul.mubr.bf16.gmra.mrb[0].mxu0 %v1788
        %v1879 = vpop.f32.mrb[0].mxu0
        %v1880 = vadd.f32 %v1766, %v1879
        %v1881 = vpop.f32.mrb[0].mxu0
        %v1882 = vpop.f32.mrb[0].mxu0
        %v1883 = vadd.f32 %v1766, %v1882
        %v1884 = vpop.f32.mrb[0].mxu0
        %1885 = vmatprep.mubr.bf16.mxu0 0
        %1886 = vmatmul.mubr.bf16.gmra.mrb[0].mxu0 %v1791
        %v1887 = vpop.f32.mrb[0].mxu0
        %v1888 = vadd.f32 %v1766, %v1887
        %v1889 = vpop.f32.mrb[0].mxu0
        %v1890 = vpop.f32.mrb[0].mxu0
        %v1891 = vadd.f32 %v1766, %v1890
        %v1892 = vpop.f32.mrb[0].mxu0
        %1893 = vmatprep.mubr.bf16.mxu0 0
        %1894 = vmatmul.mubr.bf16.gmra.mrb[0].mxu0 %v1794
        %v1895 = vpop.f32.mrb[0].mxu0
        %v1896 = vadd.f32 %v1766, %v1895
        %v1897 = vpop.f32.mrb[0].mxu0
        %v1898 = vpop.f32.mrb[0].mxu0
        %v1899 = vadd.f32 %v1766, %v1898
        %v1900 = vpop.f32.mrb[0].mxu0
        %1901 = vmatprep.mubr.bf16.mxu0 0
        %1902 = vmatmul.mubr.bf16.gmra.mrb[0].mxu0 %v1797
        %v1903 = vpop.f32.mrb[0].mxu0
        %v1904 = vadd.f32 %v1766, %v1903
        %v1905 = vpop.f32.mrb[0].mxu0
        %v1906 = vpop.f32.mrb[0].mxu0
        %v1907 = vadd.f32 %v1766, %v1906
        %v1908 = vpop.f32.mrb[0].mxu0
        %1909 = vmatprep.mubr.bf16.mxu0 0
        %1910 = vmatmul.mubr.bf16.gmra.mrb[0].mxu0 %v1800
        %v1911 = vpop.f32.mrb[0].mxu0
        %v1912 = vadd.f32 %v1766, %v1911
        %v1913 = vpop.f32.mrb[0].mxu0
        %v1914 = vpop.f32.mrb[0].mxu0
        %v1915 = vadd.f32 %v1766, %v1914
        %v1916 = vpop.f32.mrb[0].mxu0
        %1917 = vmatprep.mubr.bf16.mxu0 0
        %1918 = vmatmul.mubr.bf16.gmra.mrb[0].mxu0 %v1803
        %v1919 = vpop.f32.mrb[0].mxu0
        %v1920 = vadd.f32 %v1766, %v1919
        %v1921 = vpop.f32.mrb[0].mxu0
        %v1922 = vpop.f32.mrb[0].mxu0
        %v1923 = vadd.f32 %v1766, %v1922
        %v1924 = vpop.f32.mrb[0].mxu0
        %1925 = vmatprep.mubr.bf16.mxu0 0
        %1926 = vmatmul.mubr.bf16.gmra.mrb[0].mxu0 %v1806
        %v1927 = vpop.f32.mrb[0].mxu0
        %v1928 = vadd.f32 %v1766, %v1927
        %v1929 = vpop.f32.mrb[0].mxu0
        %v1930 = vpop.f32.mrb[0].mxu0
        %v1931 = vadd.f32 %v1766, %v1930
        %v1932 = vpop.f32.mrb[0].mxu0
        %1933 = vmatprep.mubr.bf16.mxu0 0
        %1934 = vmatmul.mubr.bf16.gmra.mrb[0].mxu0 %v1809
        %v1935 = vpop.f32.mrb[0].mxu0
        %v1936 = vadd.f32 %v1766, %v1935
        %v1937 = vpop.f32.mrb[0].mxu0
        %v1938 = vpop.f32.mrb[0].mxu0
        %v1939 = vadd.f32 %v1766, %v1938
        %v1940 = vpop.f32.mrb[0].mxu0
        %1941 = vmatprep.mubr.bf16.mxu0 0
        %1942 = vmatmul.mubr.bf16.gmra.mrb[0].mxu0 %v1812
        %v1943 = vpop.f32.mrb[0].mxu0
        %v1944 = vadd.f32 %v1766, %v1943
        %v1945 = vpop.f32.mrb[0].mxu0
        %v1946 = vpop.f32.mrb[0].mxu0
        %v1947 = vadd.f32 %v1766, %v1946
        %v1948 = vpop.f32.mrb[0].mxu0
        %1949 = vmatprep.mubr.bf16.mxu0 0
        %1950 = vmatmul.mubr.bf16.gmra.mrb[0].mxu0 %v1815
        %v1951 = vpop.f32.mrb[0].mxu0
        %v1952 = vadd.f32 %v1766, %v1951
        %v1953 = vpop.f32.mrb[0].mxu0
        %v1954 = vpop.f32.mrb[0].mxu0
        %v1955 = vadd.f32 %v1766, %v1954
        %v1956 = vpop.f32.mrb[0].mxu0
        %1957 = vmatprep.mubr.bf16.mxu0 0
        %1958 = vmatmul.mubr.bf16.gmra.mrb[0].mxu0 %v1818
        %v1959 = vpop.f32.mrb[0].mxu0
        %v1960 = vadd.f32 %v1766, %v1959
        %v1961 = vpop.f32.mrb[0].mxu0
        %v1962 = vpop.f32.mrb[0].mxu0
        %v1963 = vadd.f32 %v1766, %v1962
        %v1964 = vpop.f32.mrb[0].mxu0
        %1965 = vmatprep.mubr.bf16.mxu0 0
        %1966 = vmatmul.mubr.bf16.gmra.mrb[0].mxu0 %v1821
        %v1967 = vpop.f32.mrb[0].mxu0
        %v1968 = vadd.f32 %v1766, %v1967
        %v1969 = vpop.f32.mrb[0].mxu0
        %v1970 = vpop.f32.mrb[0].mxu0
        %v1971 = vadd.f32 %v1766, %v1970
        %v1972 = vpop.f32.mrb[0].mxu0
        %1973 = vmatprep.mubr.bf16.mxu0 0
        %1974 = vmatmul.mubr.bf16.gmra.mrb[0].mxu0 %v1824
        %v1975 = vpop.f32.mrb[0].mxu0
        %v1976 = vadd.f32 %v1766, %v1975
        %v1977 = vpop.f32.mrb[0].mxu0
        %v1978 = vpop.f32.mrb[0].mxu0
        %v1979 = vadd.f32 %v1766, %v1978
        %v1980 = vpop.f32.mrb[0].mxu0
        %1981 = vmatprep.mubr.bf16.mxu0 0
        %1982 = vmatmul.mubr.bf16.gmra.mrb[0].mxu0 %v1827
        %v1983 = vpop.f32.mrb[0].mxu0
        %v1984 = vadd.f32 %v1766, %v1983
        %v1985 = vpop.f32.mrb[0].mxu0
        %v1986 = vpop.f32.mrb[0].mxu0
        %v1987 = vadd.f32 %v1766, %v1986
        %v1988 = vpop.f32.mrb[0].mxu0
        %1989 = vdwg.mxu0
        %v1990 = vmax.f32 %v1864, 0.0
        %v1991 = vmax.f32 %v1867, 0.0
        %v1992 = vmax.f32 %v1872, 0.0
        %v1993 = vmax.f32 %v1875, 0.0
        %v1994 = vmax.f32 %v1880, 0.0
        %v1995 = vmax.f32 %v1883, 0.0
        %v1996 = vmax.f32 %v1888, 0.0
        %v1997 = vmax.f32 %v1891, 0.0
        %v1998 = vmax.f32 %v1896, 0.0
        %v1999 = vmax.f32 %v1899, 0.0
        %v2000 = vmax.f32 %v1904, 0.0
        %v2001 = vmax.f32 %v1907, 0.0
        %v2002 = vmax.f32 %v1912, 0.0
        %v2003 = vmax.f32 %v1915, 0.0
        %v2004 = vmax.f32 %v1920, 0.0
        %v2005 = vmax.f32 %v1923, 0.0
        %v2006 = vmax.f32 %v1928, 0.0
        %v2007 = vmax.f32 %v1931, 0.0
        %v2008 = vmax.f32 %v1936, 0.0
        %v2009 = vmax.f32 %v1939, 0.0
        %v2010 = vmax.f32 %v1944, 0.0
        %v2011 = vmax.f32 %v1947, 0.0
        %v2012 = vmax.f32 %v1952, 0.0
        %v2013 = vmax.f32 %v1955, 0.0
        %v2014 = vmax.f32 %v1960, 0.0
        %v2015 = vmax.f32 %v1963, 0.0
        %v2016 = vmax.f32 %v1968, 0.0
        %v2017 = vmax.f32 %v1971, 0.0
        %v2018 = vmax.f32 %v1976, 0.0
        %v2019 = vmax.f32 %v1979, 0.0
        %v2020 = vmax.f32 %v1984, 0.0
        %v2021 = vmax.f32 %v1987, 0.0
        %v2022 = vmax.f32 %v1990, %v1994
        %v2023 = vmax.f32 %v1991, %v1995
        %v2024 = vmax.f32 %v1992, %v1996
        %v2025 = vmax.f32 %v1993, %v1997
        %v2026 = vmax.f32 %v2022, %v1998
        %v2027 = vmax.f32 %v2023, %v1999
        %v2028 = vmax.f32 %v2024, %v2000
        %v2029 = vmax.f32 %v2025, %v2001
        %v2030 = vmax.f32 %v2026, %v2002
        %v2031 = vmax.f32 %v2027, %v2003
        %v2032 = vmax.f32 %v2028, %v2004
        %v2033 = vmax.f32 %v2029, %v2005
        %v2034 = vmax.f32 %v2030, %v2006
        %v2035 = vmax.f32 %v2031, %v2007
        %v2036 = vmax.f32 %v2032, %v2008
        %v2037 = vmax.f32 %v2033, %v2009
        %v2038 = vmax.f32 %v2034, %v2010
        %v2039 = vmax.f32 %v2035, %v2011
        %v2040 = vmax.f32 %v2036, %v2012
        %v2041 = vmax.f32 %v2037, %v2013
        %v2042 = vmax.f32 %v2038, %v2014
        %v2043 = vmax.f32 %v2039, %v2015
        %v2044 = vmax.f32 %v2040, %v2016
        %v2045 = vmax.f32 %v2041, %v2017
        %v2046 = vmax.f32 %v2042, %v2018
        %v2047 = vmax.f32 %v2043, %v2019
        %v2048 = vmax.f32 %v2044, %v2020
        %v2049 = vmax.f32 %v2045, %v2021
        %v2050 = vld [vmem:[%s9] sm:$0xff]
        %v2051 = vld [vmem:[%s9 + $0x8] sm:$0xff]
        %v2052 = vld [vmem:[%s9 + $0x10] sm:$0xff]
        %v2053 = vld [vmem:[%s9 + $0x18] sm:$0xff]
        %v2054 = vld [vmem:[%s10] sm:$0xff]
        %v2055 = vld [vmem:[%s10 + $0x8] sm:$0xff]
        %v2056 = vld [vmem:[%s10 + $0x10] sm:$0xff]
        %v2057 = vld [vmem:[%s10 + $0x18] sm:$0xff]
        %2058 = vxpose.xlu0.b32.start [1/16] %v2046, 128
        %2059 = vxpose.xlu0.b32.cont [2/16] %v2047, 128
        %2060 = vxpose.xlu0.b32.cont [3/16] %v2048, 128
        %2061 = vxpose.xlu0.b32.cont [4/16] %v2049, 128
        %2062 = vxpose.xlu0.b32.cont [5/16] 0.0, 128
        %2063 = vxpose.xlu0.b32.cont [6/16] 0.0, 128
        %2064 = vxpose.xlu0.b32.cont [7/16] 0.0, 128
        %2065 = vxpose.xlu0.b32.cont [8/16] 0.0, 128
        %2066 = vxpose.xlu0.b32.cont [9/16] 0.0, 128
        %2067 = vxpose.xlu0.b32.cont [10/16] 0.0, 128
        %2068 = vxpose.xlu0.b32.cont [11/16] 0.0, 128
        %2069 = vxpose.xlu0.b32.cont [12/16] 0.0, 128
        %2070 = vxpose.xlu0.b32.cont [13/16] 0.0, 128
        %2071 = vxpose.xlu0.b32.cont [14/16] 0.0, 128
        %2072 = vxpose.xlu0.b32.cont [15/16] 0.0, 128
        %2073 = vxpose.xlu0.b32.end [16/16] 0.0, 128
        %v2074 = vpop.trf.xlu0
        %v2075 = vpop.trf.xlu0
        %v2076 = vpop.trf.xlu0
        %v2077 = vpop.trf.xlu0
        %v2078 = vpop.trf.xlu0
        %v2079 = vpop.trf.xlu0
        %v2080 = vpop.trf.xlu0
        %v2081 = vpop.trf.xlu0
        %v2082 = vpop.trf.xlu0
        %v2083 = vpop.trf.xlu0
        %v2084 = vpop.trf.xlu0
        %v2085 = vpop.trf.xlu0
        %v2086 = vpop.trf.xlu0
        %v2087 = vpop.trf.xlu0
        %v2088 = vpop.trf.xlu0
        %v2089 = vpop.trf.xlu0
        %2090 = vst.msk [vmem:[%s491] sm:$0xff] %vm1780, %v2074
        %2091 = vst.msk [vmem:[%s491 + $0x8] sm:$0xff] %vm1780, %v2075
        %2092 = vst.msk [vmem:[%s491 + $0x10] sm:$0xff] %vm1780, %v2076
        %2093 = vst.msk [vmem:[%s491 + $0x18] sm:$0xff] %vm1780, %v2077
        %2095 = vset.pattern.permute.xlu0 0
        %2096 = vperm.xlu0 %2095, %v2054
        %v2097 = vpop.permute.xlu0 %2096
        %2100 = vset.pattern.permute.xlu0 0
        %2101 = vperm.xlu0 %2100, %v2055
        %v2102 = vpop.permute.xlu0 %2101
        %2105 = vset.pattern.permute.xlu0 0
        %2106 = vperm.xlu0 %2105, %v2056
        %v2107 = vpop.permute.xlu0 %2106
        %2110 = vset.pattern.permute.xlu0 0
        %2111 = vperm.xlu0 %2110, %v2057
        %v2112 = vpop.permute.xlu0 %2111
        %v2115 = vsel %vm1780, %v2050, 0
        %v2118 = vsel %vm1780, %v2051, 0
        %v2121 = vsel %vm1780, %v2052, 0
        %v2124 = vsel %vm1780, %v2053, 0
        %2126 = vmatprep.subr.mxu0 0.0
        %2127 = vmatpush1.msra.mxu0 %v2074
        %2128 = vmatprep.subr.mxu0 0.0
        %2129 = vmatpush1.msra.mxu0 %v2075
        %2130 = vmatprep.subr.mxu0 0.0
        %2131 = vmatpush1.msra.mxu0 %v2076
        %2132 = vmatprep.subr.mxu0 0.0
        %2133 = vmatpush1.msra.mxu0 %v2077
        %2134 = vmatprep.subr.mxu0 0.0
        %2135 = vmatpush1.msra.mxu0 0.0
        %2136 = vmatprep.subr.mxu0 0.0
        %2137 = vmatpush1.msra.mxu0 0.0
        %2138 = vmatprep.subr.mxu0 0.0
        %2139 = vmatpush1.msra.mxu0 0.0
        %2140 = vmatprep.subr.mxu0 0.0
        %2141 = vmatpush1.msra.mxu0 0.0
        %2142 = vmatprep.subr.mxu0 0.0
        %2143 = vmatpush1.msra.mxu0 0.0
        %2144 = vmatprep.subr.mxu0 0.0
        %2145 = vmatpush1.msra.mxu0 0.0
        %2146 = vmatprep.subr.mxu0 0.0
        %2147 = vmatpush1.msra.mxu0 0.0
        %2148 = vmatprep.subr.mxu0 0.0
        %2149 = vmatpush1.msra.mxu0 0.0
        %2150 = vmatprep.subr.mxu0 0.0
        %2151 = vmatpush1.msra.mxu0 0.0
        %2152 = vmatprep.subr.mxu0 0.0
        %2153 = vmatpush1.msra.mxu0 0.0
        %2154 = vmatprep.subr.mxu0 0.0
        %2155 = vmatpush1.msra.mxu0 0.0
        %2156 = vmatprep.subr.mxu0 0.0
        %2157 = vmatpush1.msra.mxu0 0.0
        %2158 = vmatprep.subr.mxu0 0.0
        %2159 = vmatpush1.msra.mxu0 0.0
        %2160 = vmatprep.subr.mxu0 0.0
        %2161 = vmatpush1.msra.mxu0 0.0
        %2162 = vmatprep.subr.mxu0 0.0
        %2163 = vmatpush1.msra.mxu0 0.0
        %2164 = vmatprep.subr.mxu0 0.0
        %2165 = vmatpush1.msra.mxu0 0.0
        %2166 = vmatprep.subr.mxu0 0.0
        %2167 = vmatpush1.msra.mxu0 0.0
        %2168 = vmatprep.subr.mxu0 0.0
        %2169 = vmatpush1.msra.mxu0 0.0
        %2170 = vmatprep.subr.mxu0 0.0
        %2171 = vmatpush1.msra.mxu0 0.0
        %2172 = vmatprep.subr.mxu0 0.0
        %2173 = vmatpush1.msra.mxu0 0.0
        %2174 = vmatprep.subr.mxu0 0.0
        %2175 = vmatpush1.msra.mxu0 0.0
        %2176 = vmatprep.subr.mxu0 0.0
        %2177 = vmatpush1.msra.mxu0 0.0
        %2178 = vmatprep.subr.mxu0 0.0
        %2179 = vmatpush1.msra.mxu0 0.0
        %2180 = vmatprep.subr.mxu0 0.0
        %2181 = vmatpush1.msra.mxu0 0.0
        %2182 = vmatprep.subr.mxu0 0.0
        %2183 = vmatpush1.msra.mxu0 0.0
        %2184 = vmatprep.subr.mxu0 0.0
        %2185 = vmatpush1.msra.mxu0 0.0
        %2186 = vmatprep.subr.mxu0 0.0
        %2187 = vmatpush1.msra.mxu0 0.0
        %2188 = vmatprep.subr.mxu0 0.0
        %2189 = vmatpush1.msra.mxu0 0.0
        %2190 = vmatprep.mubr.f32.mxu0 0.0
        %2191 = vmatmul.mubr.f32.gmra.mrb[0].mxu0 %v2115
        %v2192 = vpop.f32.mrb[0].mxu0
        %v2193 = vadd.f32 %v2097, %v2192
        %v2194 = vpop.f32.mrb[0].mxu0
        %2195 = vmatprep.mubr.f32.mxu0 0.0
        %2196 = vmatmul.mubr.f32.gmra.mrb[0].mxu0 %v2118
        %v2197 = vpop.f32.mrb[0].mxu0
        %v2198 = vadd.f32 %v2102, %v2197
        %v2199 = vpop.f32.mrb[0].mxu0
        %2200 = vmatprep.mubr.f32.mxu0 0.0
        %2201 = vmatmul.mubr.f32.gmra.mrb[0].mxu0 %v2121
        %v2202 = vpop.f32.mrb[0].mxu0
        %v2203 = vadd.f32 %v2107, %v2202
        %v2204 = vpop.f32.mrb[0].mxu0
        %2205 = vmatprep.mubr.f32.mxu0 0.0
        %2206 = vmatmul.mubr.f32.gmra.mrb[0].mxu0 %v2124
        %v2207 = vpop.f32.mrb[0].mxu0
        %v2208 = vadd.f32 %v2112, %v2207
        %v2209 = vpop.f32.mrb[0].mxu0
        %2210 = vdwg.mxu0
        %2211 = vst.msk [vmem:[%s498] sm:$0xff] %vm1780, %v2193
        %2212 = vst.msk [vmem:[%s498 + $0x8] sm:$0xff] %vm1780, %v2198
        %2213 = vst.msk [vmem:[%s498 + $0x10] sm:$0xff] %vm1780, %v2203
        %2214 = vst.msk [vmem:[%s498 + $0x18] sm:$0xff] %vm1780, %v2208
        %s2215 = sand.u32 %s307, 1
        %s2216 = scalar_lea.sflag [#allocation3], %s2215
        %s2217 = sand.u32 %s307, 1
        %s2218 = smul.addr %s2217, 32
        %s2219 = scalar_lea.vmem [#allocation2], %s2218
        %s2220 = sand.u32 %s335, 1
        %s2221 = scalar_lea.sflag [#allocation5], %s2220
        %s2222 = sand.u32 %s335, 1
        %s2223 = smul.addr %s2222, 32
        %s2224 = scalar_lea.vmem [#allocation4], %s2223
        // Predicated region
        $region65: #{_lambda_.5} parent=63 // pred_check
          %p2225 = pneg %p317
        $region66: #{_lambda_.5} parent=63 // pred_check_branch
          %2227 = sbr.rel (%p2225) target = $region68
        $region67: #{_lambda_.5} parent=63 // pred_region
          %s2229 = ssub.s32 512, 512
          %2230 = vsyncadd %s2216, %s2229
          %s2231 = smul.addr %s34, 4
          %s2232 = sadd.s32 %s35, %s2231
          %s2233 = smul.addr %s2232, 128
          %s2234 = scalar_lea.hbm %s11, %s2233
          %s2235 = sshll.u32 %s2219, 4
          %s2236 = int_to_ptr.vmem [resolvable:$true] %s2235
          %2241 = dma.vmem_to_hbm [thread:$0]  %s2236, 512, %s2234, %s2216, 128, 128, 8
        $region68: #{_lambda_.5} parent=63 // pred_fallthru
          _
        // Predicated region
        $region69: #{_lambda_.5} parent=63 // pred_check
          %p2242 = pneg %p345
        $region70: #{_lambda_.5} parent=63 // pred_check_branch
          %2244 = sbr.rel (%p2242) target = $region72
        $region71: #{_lambda_.5} parent=63 // pred_region
          %s2246 = ssub.s32 512, 512
          %2247 = vsyncadd %s2221, %s2246
          %s2248 = smul.addr %s34, 4
          %s2249 = sadd.s32 %s35, %s2248
          %s2250 = smul.addr %s2249, 128
          %s2251 = scalar_lea.hbm %s12, %s2250
          %s2252 = sshll.u32 %s2224, 4
          %s2253 = int_to_ptr.vmem [resolvable:$true] %s2252
          %2258 = dma.vmem_to_hbm [thread:$0]  %s2253, 512, %s2251, %s2221, 128, 128, 8
        $region72: #{_lambda_.5} parent=63 // pred_fallthru
          _
      $region64: #{_lambda_.5} parent=5 // pred_fallthru
        _
      %p2259 = scmp.le.s32.totalorder 2, %s25
      // Predicated region
      $region73: #{_lambda_.5} parent=5 // pred_check
        %p2260 = pneg %p2259
      $region74: #{_lambda_.5} parent=5 // pred_check_branch
        %2262 = sbr.rel (%p2260) target = $region76
      $region75: #{_lambda_.5} parent=5 // pred_region
        %s2263 = ssub.s32 %s25, 2
        // Predicated region
        $region77: #{_lambda_.5} parent=75 // pred_check
          %p2264 = pneg %p323
        $region78: #{_lambda_.5} parent=75 // pred_check_branch
          %2266 = sbr.rel (%p2264) target = $region80
        $region79: #{_lambda_.5} parent=75 // pred_region
          %s2267 = sand.u32 %s308, 1
          %s2268 = scalar_lea.sflag [#allocation3], %s2267
          %s2269 = sand.u32 %s308, 1
          %s2270 = smul.addr %s2269, 32
          %s2271 = scalar_lea.vmem [#allocation2], %s2270
          %2272 = dma.done %s2268, 512
        $region80: #{_lambda_.5} parent=75 // pred_fallthru
          _
        // Predicated region
        $region81: #{_lambda_.5} parent=75 // pred_check
          %p2273 = pneg %p351
        $region82: #{_lambda_.5} parent=75 // pred_check_branch
          %2275 = sbr.rel (%p2273) target = $region84
        $region83: #{_lambda_.5} parent=75 // pred_region
          %s2276 = sand.u32 %s336, 1
          %s2277 = scalar_lea.sflag [#allocation5], %s2276
          %s2278 = sand.u32 %s336, 1
          %s2279 = smul.addr %s2278, 32
          %s2280 = scalar_lea.vmem [#allocation4], %s2279
          %2281 = dma.done %s2277, 512
        $region84: #{_lambda_.5} parent=75 // pred_fallthru
          _
      $region76: #{_lambda_.5} parent=5 // pred_fallthru
        _
    $region6: #{_lambda_.5} parent=1 // loop_footer
      %s29 = sadd.s32 1, %s25
    $region7: #{_lambda_.5} parent=1 // loop_footer_branch
      %24 = sbr.rel target = $region3
    $region8: #{_lambda_.5} parent=1 // loop_exit
      _
    %2282 = vsyncpa [#allocation3], 1
    %s2283 = scalar_lea.sflag [#allocation3], 1
    %2284 = vsyncpa %s2283, 1
    %2285 = vsyncpa [#allocation5], 1
    %s2286 = scalar_lea.sflag [#allocation5], 1
    %2287 = vsyncpa %s2286, 1

</llo_original>
